<compile_context>
chip_gen: v7x
topology: tpu7x:2x2x1
jax: 0.10.0
libtpu: 0.0.40
codegen_flags: <defaults>
</compile_context>

<pallas_src>
import jax
import jax.numpy as jnp
from jax.experimental import pallas as pl
from jax.experimental.pallas import tpu as pltpu

_BN_EPS = 1e-5
_N_LAST_FILTERS = 32

# (kh, kw, cin, cout, stride, pad) for every conv layer, in order.
ENC_CFG = [
    (3, 3, 1, 8, 1, 1),
    (3, 3, 8, 8, 2, 1),
    (5, 5, 8, 16, 2, 2),
    (5, 5, 16, 32, 2, 2),
    (4, 4, 32, 32, 1, 0),
]
DEC_CFG = [
    (3, 3, 32, 32, 1, 2),
    (3, 3, 32, 32, 1, 2),
    (5, 5, 32, 16, 1, 2),
    (5, 5, 16, 8, 1, 2),
    (5, 5, 8, 8, 1, 2),
    (3, 3, 8, 1, 1, 1),
]


# ---------------------------------------------------------------------------
# Pallas kernels (all lane-dense: outputs are (Cout, M) / (features, batch))
# ---------------------------------------------------------------------------
def _convT_bn_prelu_kernel(p_ref, w_ref, bn_ref, o_ref):
    """PReLU( BN_train( W^T @ patches ) ).

    p_ref : (K, M)      im2col patches, M = N*Ho*Wo on lanes
    w_ref : (Cout, K)   transposed conv weight
    bn_ref: (Cout, 3)   packed [gamma, beta, prelu_alpha]
    o_ref : (Cout, M)
    """
    y = jnp.dot(w_ref[...], p_ref[...], preferred_element_type=jnp.float32)
    m = y.shape[1]
    inv_m = 1.0 / float(m)
    # one-pass batch statistics (biased variance, like PyTorch train mode)
    s1 = jnp.sum(y, axis=1, keepdims=True)
    s2 = jnp.sum(y * y, axis=1, keepdims=True)
    mean = s1 * inv_m
    var = s2 * inv_m - mean * mean
    gamma = bn_ref[:, 0:1]
    beta = bn_ref[:, 1:2]
    alpha = bn_ref[:, 2:3]
    scale = gamma * jax.lax.rsqrt(var + _BN_EPS)
    shift = beta - mean * scale
    yn = y * scale + shift                      # single FMA epilogue
    o_ref[...] = jnp.where(yn >= 0.0, yn, alpha * yn)


def _convT_bias_sigmoid_kernel(p_ref, w_ref, b_ref, o_ref):
    """sigmoid( W^T @ patches + b ) for the last decoder conv (no BN)."""
    y = jnp.dot(w_ref[...], p_ref[...], preferred_element_type=jnp.float32)
    o_ref[...] = jax.nn.sigmoid(y + b_ref[...])


def _latent_kernel(h_ref, wml_ref, bml_ref, eps_ref, wd_ref, bd_ref,
                   mu_ref, logvar_ref, zf_ref):
    """Fused fc21 + fc22 + reparameterize + decoder_fc.

    h_ref  : (32, B)     encoder features (feature-major)
    wml_ref: (2L, 32)    stacked [fc21.W ; fc22.W]
    bml_ref: (2L, 1)
    eps_ref: (L, B)      reparameterization noise
    wd_ref : (288, L)    decoder_fc weight
    bd_ref : (288, 1)
    outputs: mu (L,B), logvar (L,B), zf (288,B)
    """
    ml = jnp.dot(wml_ref[...], h_ref[...],
                 preferred_element_type=jnp.float32) + bml_ref[...]
    L = mu_ref.shape[0]
    mu = ml[:L, :]
    logvar = ml[L:, :]
    mu_ref[...] = mu
    logvar_ref[...] = logvar
    std = jnp.exp(0.5 * logvar)
    z = eps_ref[...] * std + mu
    zf_ref[...] = jnp.dot(wd_ref[...], z,
                          preferred_element_type=jnp.float32) + bd_ref[...]


# ---------------------------------------------------------------------------
# pallas_call wrapper (everything is small enough for full-array blocks)
# ---------------------------------------------------------------------------
def _full_spec(shape):
    return pl.BlockSpec(shape, lambda i: (0,) * len(shape))


def _pallas_apply(kernel_fn, out_shape, *operands):
    multi = isinstance(out_shape, (tuple, list))
    if multi:
        out_specs = tuple(_full_spec(s.shape) for s in out_shape)
        out_shape = tuple(out_shape)
    else:
        out_specs = _full_spec(out_shape.shape)
    return pl.pallas_call(
        kernel_fn,
        grid=(1,),
        in_specs=[_full_spec(o.shape) for o in operands],
        out_specs=out_specs,
        out_shape=out_shape,
        compiler_params=pltpu.CompilerParams(dimension_semantics=("arbitrary",)),
    )(*operands)


# ---------------------------------------------------------------------------
# Plain-JAX glue: transposed im2col (K, M) and bilinear upsample
# ---------------------------------------------------------------------------
def _im2col_t(x, kh, kw, stride, pad):
    # x: (C, N, H, W) channel-first -> patches (kh*kw*C, N*Ho*Wo)
    C, N, H, W = x.shape
    xp = jnp.pad(x, ((0, 0), (0, 0), (pad, pad), (pad, pad)))
    Ho = (H + 2 * pad - kh) // stride + 1
    Wo = (W + 2 * pad - kw) // stride + 1
    cols = []
    for i in range(kh):
        for j in range(kw):
            cols.append(xp[:, :,
                           i:i + stride * (Ho - 1) + 1:stride,
                           j:j + stride * (Wo - 1) + 1:stride])
    patches = jnp.stack(cols, axis=0)                    # (kh*kw, C, N, Ho, Wo)
    return patches.reshape(kh * kw * C, N * Ho * Wo), Ho, Wo


def _conv_bn_prelu(x, wt, bn, kh, kw, stride, pad):
    cout = wt.shape[0]
    N = x.shape[1]
    patches, Ho, Wo = _im2col_t(x, kh, kw, stride, pad)
    out = _pallas_apply(
        _convT_bn_prelu_kernel,
        jax.ShapeDtypeStruct((cout, patches.shape[1]), jnp.float32),
        patches, wt, bn)
    return out.reshape(cout, N, Ho, Wo)


def _conv_sigmoid(x, wt, b, kh, kw, stride, pad):
    cout = wt.shape[0]
    N = x.shape[1]
    patches, Ho, Wo = _im2col_t(x, kh, kw, stride, pad)
    out = _pallas_apply(
        _convT_bias_sigmoid_kernel,
        jax.ShapeDtypeStruct((cout, patches.shape[1]), jnp.float32),
        patches, wt, b)
    return out.reshape(cout, N, Ho, Wo)


def _upsample_bilinear_x2(x):
    # x: (C, N, H, W); matches nn.UpsamplingBilinear2d(scale_factor=2)
    C, N, H, W = x.shape

    def coords(in_size, out_size):
        scale = (in_size - 1) / (out_size - 1)
        src = jnp.arange(out_size, dtype=jnp.float32) * scale
        i0 = jnp.clip(jnp.floor(src).astype(jnp.int32), 0, in_size - 1)
        i1 = jnp.clip(i0 + 1, 0, in_size - 1)
        w1 = src - i0.astype(jnp.float32)
        return i0, i1, 1.0 - w1, w1

    h0, h1, wh0, wh1 = coords(H, 2 * H)
    v0, v1, wv0, wv1 = coords(W, 2 * W)
    xh = (x[:, :, h0, :] * wh0[None, None, :, None]
          + x[:, :, h1, :] * wh1[None, None, :, None])
    return xh[:, :, :, v0] * wv0 + xh[:, :, :, v1] * wv1


# ---------------------------------------------------------------------------
# Parameters (deterministic synthetic init, pre-transposed / pre-packed)
# ---------------------------------------------------------------------------
def init_params(key, latent_size):
    keys = iter(jax.random.split(key, 40))

    def conv_bn(kh, kw, cin, cout):
        # Conv bias omitted: under train-mode BatchNorm it is exactly cancelled
        # by the per-channel mean subtraction (mathematically a no-op).
        w = 0.1 * jax.random.normal(next(keys), (cout, kh, kw, cin), jnp.float32)
        bn = jnp.stack([jnp.ones((cout,), jnp.float32),          # BN gamma
                        jnp.zeros((cout,), jnp.float32),          # BN beta
                        0.25 * jnp.ones((cout,), jnp.float32)],   # PReLU alpha
                       axis=1)                                    # (cout, 3)
        return {"wt": w.reshape(cout, kh * kw * cin), "bn": bn}

    def conv_plain(kh, kw, cin, cout):
        k1, k2 = jax.random.split(next(keys))
        w = 0.1 * jax.random.normal(k1, (cout, kh, kw, cin), jnp.float32)
        b = 0.1 * jax.random.normal(k2, (cout, 1), jnp.float32)
        return {"wt": w.reshape(cout, kh * kw * cin), "b": b}

    def linear(din, dout):
        k1, k2 = jax.random.split(next(keys))
        return (0.1 * jax.random.normal(k1, (dout, din), jnp.float32),
                0.1 * jax.random.normal(k2, (dout, 1), jnp.float32))

    params = {"enc": [], "dec": []}
    for (kh, kw, cin, cout, _, _) in ENC_CFG:
        params["enc"].append(conv_bn(kh, kw, cin, cout))
    for idx, (kh, kw, cin, cout, _, _) in enumerate(DEC_CFG):
        if idx < len(DEC_CFG) - 1:
            params["dec"].append(conv_bn(kh, kw, cin, cout))
        else:
            params["dec"].append(conv_plain(kh, kw, cin, cout))

    w21, b21 = linear(_N_LAST_FILTERS, latent_size)
    w22, b22 = linear(_N_LAST_FILTERS, latent_size)
    wd, bd = linear(latent_size, 3 * 3 * _N_LAST_FILTERS)
    params["wml"] = jnp.concatenate([w21, w22], axis=0)     # (2L, 32)
    params["bml"] = jnp.concatenate([b21, b22], axis=0)     # (2L, 1)
    params["wd"] = wd                                       # (288, L)
    params["bd"] = bd                                       # (288, 1)
    return params


# ---------------------------------------------------------------------------
# Forward pass (matches VAEConv.forward: returns (decoded, mu, logvar))
# ---------------------------------------------------------------------------
def vae_conv_forward(params, x_nchw, eps_noise):
    B = x_nchw.shape[0]
    L = params["wml"].shape[0] // 2

    # x.view(-1, 784).view(-1, 1, 28, 28) ; NCHW -> channel-first (C, N, H, W)
    h = x_nchw.reshape(B, 1, 28, 28).transpose(1, 0, 2, 3)

    # --- encoder_base ---
    for (kh, kw, cin, cout, s, p), layer in zip(ENC_CFG, params["enc"]):
        h = _conv_bn_prelu(h, layer["wt"], layer["bn"], kh, kw, s, p)

    h2 = h.reshape(_N_LAST_FILTERS, B)                       # (32, B)

    # --- fused fc21 / fc22 / reparameterize / decoder_fc (one pallas_call) ---
    out_shapes = (jax.ShapeDtypeStruct((L, B), jnp.float32),
                  jax.ShapeDtypeStruct((L, B), jnp.float32),
                  jax.ShapeDtypeStruct((3 * 3 * _N_LAST_FILTERS, B), jnp.float32))
    mu_t, logvar_t, zf = _pallas_apply(
        _latent_kernel, out_shapes,
        h2, params["wml"], params["bml"], jnp.transpose(eps_noise),
        params["wd"], params["bd"])

    # z.view(-1, 32, 3, 3) (NCHW) -> channel-first (C, N, 3, 3)
    h = zf.reshape(_N_LAST_FILTERS, 3, 3, B).transpose(0, 3, 1, 2)

    # --- decoder ---
    n_dec = len(DEC_CFG)
    for i, ((kh, kw, cin, cout, s, p), layer) in enumerate(zip(DEC_CFG, params["dec"])):
        if i in (2, 3):  # UpsamplingBilinear2d(scale=2) before 3rd and 4th conv
            h = _upsample_bilinear_x2(h)
        if i < n_dec - 1:
            h = _conv_bn_prelu(h, layer["wt"], layer["bn"], kh, kw, s, p)
        else:
            h = _conv_sigmoid(h, layer["wt"], layer["b"], kh, kw, s, p)

    # h: (1, B, 28, 28), C=1 -> identical element order to NCHW flatten
    decoded = h.reshape(B, 28 * 28)
    return decoded, jnp.transpose(mu_t), jnp.transpose(logvar_t)


if __name__ == "__main__":
    latent_size = 16
    B = 2
    key = jax.random.PRNGKey(0)
    kp, kx, ke = jax.random.split(key, 3)

    params = init_params(kp, latent_size)
    x = jax.random.uniform(kx, (B, 1, 28, 28), jnp.float32)           # NCHW input
    eps_noise = jax.random.normal(ke, (B, latent_size), jnp.float32)  # reparam noise

    fwd = jax.jit(vae_conv_forward)
    decoded, mu, logvar = fwd(params, x, eps_noise)
    jax.block_until_ready((decoded, mu, logvar))

    assert decoded.shape == (B, 28 * 28)
    assert mu.shape == (B, latent_size)
    assert logvar.shape == (B, latent_size)
    assert bool(jnp.all(jnp.isfinite(decoded)))
    assert bool(jnp.all((decoded >= 0.0) & (decoded <= 1.0)))  # sigmoid output
    print("KERNEL_OK")
</pallas_src>

<mosaic_0001>
module attributes {stable_mosaic.version = 11 : i64} {
  func.func @_convT_bn_prelu_kernel(%arg0: i32, %arg1: memref<9x1568xf32, #tpu.memory_space<vmem>>, %arg2: memref<8x9xf32, #tpu.memory_space<vmem>>, %arg3: memref<8x3xf32, #tpu.memory_space<vmem>>, %arg4: memref<8x1568xf32, #tpu.memory_space<vmem>>) attributes {dimension_semantics = [#tpu.dimension_semantics<arbitrary>], iteration_bounds = array<i64: 1>, scalar_prefetch = 0 : i64, scratch_operands = 0 : i64, tpu.core_type = #tpu.core_type<tc>, window_params = [{pipeline_mode = #tpu.pipeline_mode<synchronous>, transform_indices = @transform_0, window_bounds = array<i64: 9, 1568>}, {pipeline_mode = #tpu.pipeline_mode<synchronous>, transform_indices = @transform_1, window_bounds = array<i64: 8, 9>}, {pipeline_mode = #tpu.pipeline_mode<synchronous>, transform_indices = @transform_2, window_bounds = array<i64: 8, 3>}, {pipeline_mode = #tpu.pipeline_mode<synchronous>, transform_indices = @transform_3, window_bounds = array<i64: 8, 1568>}]} {
    %c0 = arith.constant 0 : index
    %c0_0 = arith.constant 0 : index
    %0 = vector.load %arg2[%c0, %c0_0] : memref<8x9xf32, #tpu.memory_space<vmem>>, vector<8x9xf32>
    %c0_1 = arith.constant 0 : index
    %c0_2 = arith.constant 0 : index
    %1 = vector.load %arg1[%c0_1, %c0_2] : memref<9x1568xf32, #tpu.memory_space<vmem>>, vector<9x1568xf32>
    %cst = arith.constant dense<0.000000e+00> : vector<8x1568xf32>
    %2 = tpu.matmul %0, %1, %cst {dimension_numbers = #tpu.dot_dimension_numbers<[1], [0], [0], [1], [0, 0, 1, 1], [], []>} : vector<8x9xf32>, vector<9x1568xf32>, vector<8x1568xf32> -> vector<8x1568xf32>
    %cst_3 = arith.constant dense<0.000000e+00> : vector<8xf32>
    %3 = vector.multi_reduction <add>, %2, %cst_3 [1] : vector<8x1568xf32> to vector<8xf32>
    %4 = vector.shape_cast %3 : vector<8xf32> to vector<8x1xf32>
    %5 = arith.mulf %2, %2 : vector<8x1568xf32>
    %cst_4 = arith.constant dense<0.000000e+00> : vector<8xf32>
    %6 = vector.multi_reduction <add>, %5, %cst_4 [1] : vector<8x1568xf32> to vector<8xf32>
    %7 = vector.shape_cast %6 : vector<8xf32> to vector<8x1xf32>
    %cst_5 = arith.constant 6.37755089E-4 : f32
    %8 = vector.broadcast %cst_5 : f32 to vector<8x1xf32>
    %9 = arith.mulf %4, %8 : vector<8x1xf32>
    %cst_6 = arith.constant 6.37755089E-4 : f32
    %10 = vector.broadcast %cst_6 : f32 to vector<8x1xf32>
    %11 = arith.mulf %7, %10 : vector<8x1xf32>
    %12 = arith.mulf %9, %9 : vector<8x1xf32>
    %13 = arith.subf %11, %12 : vector<8x1xf32>
    %c0_7 = arith.constant 0 : index
    %c0_8 = arith.constant 0 : index
    %14 = vector.load %arg3[%c0_7, %c0_8] : memref<8x3xf32, #tpu.memory_space<vmem>>, vector<8x1xf32>
    %c0_9 = arith.constant 0 : index
    %c1 = arith.constant 1 : index
    %15 = vector.load %arg3[%c0_9, %c1] : memref<8x3xf32, #tpu.memory_space<vmem>>, vector<8x1xf32>
    %c0_10 = arith.constant 0 : index
    %c2 = arith.constant 2 : index
    %16 = vector.load %arg3[%c0_10, %c2] : memref<8x3xf32, #tpu.memory_space<vmem>>, vector<8x1xf32>
    %cst_11 = arith.constant 9.99999974E-6 : f32
    %17 = vector.broadcast %cst_11 : f32 to vector<8x1xf32>
    %18 = arith.addf %13, %17 : vector<8x1xf32>
    %19 = math.rsqrt %18 : vector<8x1xf32>
    %20 = arith.mulf %14, %19 : vector<8x1xf32>
    %21 = arith.mulf %9, %20 : vector<8x1xf32>
    %22 = arith.subf %15, %21 : vector<8x1xf32>
    %23 = vector.broadcast %20 : vector<8x1xf32> to vector<8x1568xf32>
    %24 = arith.mulf %2, %23 : vector<8x1568xf32>
    %25 = vector.broadcast %22 : vector<8x1xf32> to vector<8x1568xf32>
    %26 = arith.addf %24, %25 : vector<8x1568xf32>
    %cst_12 = arith.constant 0.000000e+00 : f32
    %27 = vector.broadcast %cst_12 : f32 to vector<8x1568xf32>
    %28 = arith.cmpf oge, %26, %27 : vector<8x1568xf32>
    %29 = vector.broadcast %16 : vector<8x1xf32> to vector<8x1568xf32>
    %30 = arith.mulf %29, %26 : vector<8x1568xf32>
    %31 = arith.select %28, %26, %30 : vector<8x1568xi1>, vector<8x1568xf32>
    %c0_13 = arith.constant 0 : index
    %c0_14 = arith.constant 0 : index
    %32 = vector.load %arg4[%c0_13, %c0_14] : memref<8x1568xf32, #tpu.memory_space<vmem>>, vector<8x1568xf32>
    tpu.vector_store %arg4[%c0_13, %c0_14], %31 {strides = array<i32>} : memref<8x1568xf32, #tpu.memory_space<vmem>>, vector<8x1568xf32>,
    return
  }
  func.func @transform_0(%arg0: i32) -> (i32, i32) {
    %c0_i32 = arith.constant 0 : i32
    %c0_i32_0 = arith.constant 0 : i32
    %c0_i32_1 = arith.constant 0 : i32
    return %c0_i32, %c0_i32_0 : i32, i32
  }
  func.func @transform_1(%arg0: i32) -> (i32, i32) {
    %c0_i32 = arith.constant 0 : i32
    %c0_i32_0 = arith.constant 0 : i32
    %c0_i32_1 = arith.constant 0 : i32
    return %c0_i32, %c0_i32_0 : i32, i32
  }
  func.func @transform_2(%arg0: i32) -> (i32, i32) {
    %c0_i32 = arith.constant 0 : i32
    %c0_i32_0 = arith.constant 0 : i32
    %c0_i32_1 = arith.constant 0 : i32
    return %c0_i32, %c0_i32_0 : i32, i32
  }
  func.func @transform_3(%arg0: i32) -> (i32, i32) {
    %c0_i32 = arith.constant 0 : i32
    %c0_i32_0 = arith.constant 0 : i32
    %c0_i32_1 = arith.constant 0 : i32
    return %c0_i32, %c0_i32_0 : i32, i32
  }
}

module attributes {stable_mosaic.version = 11 : i64} {
  func.func @_convT_bn_prelu_kernel(%arg0: i32, %arg1: memref<72x392xf32, #tpu.memory_space<vmem>>, %arg2: memref<8x72xf32, #tpu.memory_space<vmem>>, %arg3: memref<8x3xf32, #tpu.memory_space<vmem>>, %arg4: memref<8x392xf32, #tpu.memory_space<vmem>>) attributes {dimension_semantics = [#tpu.dimension_semantics<arbitrary>], iteration_bounds = array<i64: 1>, scalar_prefetch = 0 : i64, scratch_operands = 0 : i64, tpu.core_type = #tpu.core_type<tc>, window_params = [{pipeline_mode = #tpu.pipeline_mode<synchronous>, transform_indices = @transform_0, window_bounds = array<i64: 72, 392>}, {pipeline_mode = #tpu.pipeline_mode<synchronous>, transform_indices = @transform_1, window_bounds = array<i64: 8, 72>}, {pipeline_mode = #tpu.pipeline_mode<synchronous>, transform_indices = @transform_2, window_bounds = array<i64: 8, 3>}, {pipeline_mode = #tpu.pipeline_mode<synchronous>, transform_indices = @transform_3, window_bounds = array<i64: 8, 392>}]} {
    %c0 = arith.constant 0 : index
    %c0_0 = arith.constant 0 : index
    %0 = vector.load %arg2[%c0, %c0_0] : memref<8x72xf32, #tpu.memory_space<vmem>>, vector<8x72xf32>
    %c0_1 = arith.constant 0 : index
    %c0_2 = arith.constant 0 : index
    %1 = vector.load %arg1[%c0_1, %c0_2] : memref<72x392xf32, #tpu.memory_space<vmem>>, vector<72x392xf32>
    %cst = arith.constant dense<0.000000e+00> : vector<8x392xf32>
    %2 = tpu.matmul %0, %1, %cst {dimension_numbers = #tpu.dot_dimension_numbers<[1], [0], [0], [1], [0, 0, 1, 1], [], []>} : vector<8x72xf32>, vector<72x392xf32>, vector<8x392xf32> -> vector<8x392xf32>
    %cst_3 = arith.constant dense<0.000000e+00> : vector<8xf32>
    %3 = vector.multi_reduction <add>, %2, %cst_3 [1] : vector<8x392xf32> to vector<8xf32>
    %4 = vector.shape_cast %3 : vector<8xf32> to vector<8x1xf32>
    %5 = arith.mulf %2, %2 : vector<8x392xf32>
    %cst_4 = arith.constant dense<0.000000e+00> : vector<8xf32>
    %6 = vector.multi_reduction <add>, %5, %cst_4 [1] : vector<8x392xf32> to vector<8xf32>
    %7 = vector.shape_cast %6 : vector<8xf32> to vector<8x1xf32>
    %cst_5 = arith.constant 0.00255102036 : f32
    %8 = vector.broadcast %cst_5 : f32 to vector<8x1xf32>
    %9 = arith.mulf %4, %8 : vector<8x1xf32>
    %cst_6 = arith.constant 0.00255102036 : f32
    %10 = vector.broadcast %cst_6 : f32 to vector<8x1xf32>
    %11 = arith.mulf %7, %10 : vector<8x1xf32>
    %12 = arith.mulf %9, %9 : vector<8x1xf32>
    %13 = arith.subf %11, %12 : vector<8x1xf32>
    %c0_7 = arith.constant 0 : index
    %c0_8 = arith.constant 0 : index
    %14 = vector.load %arg3[%c0_7, %c0_8] : memref<8x3xf32, #tpu.memory_space<vmem>>, vector<8x1xf32>
    %c0_9 = arith.constant 0 : index
    %c1 = arith.constant 1 : index
    %15 = vector.load %arg3[%c0_9, %c1] : memref<8x3xf32, #tpu.memory_space<vmem>>, vector<8x1xf32>
    %c0_10 = arith.constant 0 : index
    %c2 = arith.constant 2 : index
    %16 = vector.load %arg3[%c0_10, %c2] : memref<8x3xf32, #tpu.memory_space<vmem>>, vector<8x1xf32>
    %cst_11 = arith.constant 9.99999974E-6 : f32
    %17 = vector.broadcast %cst_11 : f32 to vector<8x1xf32>
    %18 = arith.addf %13, %17 : vector<8x1xf32>
    %19 = math.rsqrt %18 : vector<8x1xf32>
    %20 = arith.mulf %14, %19 : vector<8x1xf32>
    %21 = arith.mulf %9, %20 : vector<8x1xf32>
    %22 = arith.subf %15, %21 : vector<8x1xf32>
    %23 = vector.broadcast %20 : vector<8x1xf32> to vector<8x392xf32>
    %24 = arith.mulf %2, %23 : vector<8x392xf32>
    %25 = vector.broadcast %22 : vector<8x1xf32> to vector<8x392xf32>
    %26 = arith.addf %24, %25 : vector<8x392xf32>
    %cst_12 = arith.constant 0.000000e+00 : f32
    %27 = vector.broadcast %cst_12 : f32 to vector<8x392xf32>
    %28 = arith.cmpf oge, %26, %27 : vector<8x392xf32>
    %29 = vector.broadcast %16 : vector<8x1xf32> to vector<8x392xf32>
    %30 = arith.mulf %29, %26 : vector<8x392xf32>
    %31 = arith.select %28, %26, %30 : vector<8x392xi1>, vector<8x392xf32>
    %c0_13 = arith.constant 0 : index
    %c0_14 = arith.constant 0 : index
    %32 = vector.load %arg4[%c0_13, %c0_14] : memref<8x392xf32, #tpu.memory_space<vmem>>, vector<8x392xf32>
    tpu.vector_store %arg4[%c0_13, %c0_14], %31 {strides = array<i32>} : memref<8x392xf32, #tpu.memory_space<vmem>>, vector<8x392xf32>,
    return
  }
  func.func @transform_0(%arg0: i32) -> (i32, i32) {
    %c0_i32 = arith.constant 0 : i32
    %c0_i32_0 = arith.constant 0 : i32
    %c0_i32_1 = arith.constant 0 : i32
    return %c0_i32, %c0_i32_0 : i32, i32
  }
  func.func @transform_1(%arg0: i32) -> (i32, i32) {
    %c0_i32 = arith.constant 0 : i32
    %c0_i32_0 = arith.constant 0 : i32
    %c0_i32_1 = arith.constant 0 : i32
    return %c0_i32, %c0_i32_0 : i32, i32
  }
  func.func @transform_2(%arg0: i32) -> (i32, i32) {
    %c0_i32 = arith.constant 0 : i32
    %c0_i32_0 = arith.constant 0 : i32
    %c0_i32_1 = arith.constant 0 : i32
    return %c0_i32, %c0_i32_0 : i32, i32
  }
  func.func @transform_3(%arg0: i32) -> (i32, i32) {
    %c0_i32 = arith.constant 0 : i32
    %c0_i32_0 = arith.constant 0 : i32
    %c0_i32_1 = arith.constant 0 : i32
    return %c0_i32, %c0_i32_0 : i32, i32
  }
}

module attributes {stable_mosaic.version = 11 : i64} {
  func.func @_convT_bn_prelu_kernel(%arg0: i32, %arg1: memref<200x98xf32, #tpu.memory_space<vmem>>, %arg2: memref<16x200xf32, #tpu.memory_space<vmem>>, %arg3: memref<16x3xf32, #tpu.memory_space<vmem>>, %arg4: memref<16x98xf32, #tpu.memory_space<vmem>>) attributes {dimension_semantics = [#tpu.dimension_semantics<arbitrary>], iteration_bounds = array<i64: 1>, scalar_prefetch = 0 : i64, scratch_operands = 0 : i64, tpu.core_type = #tpu.core_type<tc>, window_params = [{pipeline_mode = #tpu.pipeline_mode<synchronous>, transform_indices = @transform_0, window_bounds = array<i64: 200, 98>}, {pipeline_mode = #tpu.pipeline_mode<synchronous>, transform_indices = @transform_1, window_bounds = array<i64: 16, 200>}, {pipeline_mode = #tpu.pipeline_mode<synchronous>, transform_indices = @transform_2, window_bounds = array<i64: 16, 3>}, {pipeline_mode = #tpu.pipeline_mode<synchronous>, transform_indices = @transform_3, window_bounds = array<i64: 16, 98>}]} {
    %c0 = arith.constant 0 : index
    %c0_0 = arith.constant 0 : index
    %0 = vector.load %arg2[%c0, %c0_0] : memref<16x200xf32, #tpu.memory_space<vmem>>, vector<16x200xf32>
    %c0_1 = arith.constant 0 : index
    %c0_2 = arith.constant 0 : index
    %1 = vector.load %arg1[%c0_1, %c0_2] : memref<200x98xf32, #tpu.memory_space<vmem>>, vector<200x98xf32>
    %cst = arith.constant dense<0.000000e+00> : vector<16x98xf32>
    %2 = tpu.matmul %0, %1, %cst {dimension_numbers = #tpu.dot_dimension_numbers<[1], [0], [0], [1], [0, 0, 1, 1], [], []>} : vector<16x200xf32>, vector<200x98xf32>, vector<16x98xf32> -> vector<16x98xf32>
    %cst_3 = arith.constant dense<0.000000e+00> : vector<16xf32>
    %3 = vector.multi_reduction <add>, %2, %cst_3 [1] : vector<16x98xf32> to vector<16xf32>
    %4 = vector.shape_cast %3 : vector<16xf32> to vector<16x1xf32>
    %5 = arith.mulf %2, %2 : vector<16x98xf32>
    %cst_4 = arith.constant dense<0.000000e+00> : vector<16xf32>
    %6 = vector.multi_reduction <add>, %5, %cst_4 [1] : vector<16x98xf32> to vector<16xf32>
    %7 = vector.shape_cast %6 : vector<16xf32> to vector<16x1xf32>
    %cst_5 = arith.constant 0.0102040814 : f32
    %8 = vector.broadcast %cst_5 : f32 to vector<16x1xf32>
    %9 = arith.mulf %4, %8 : vector<16x1xf32>
    %cst_6 = arith.constant 0.0102040814 : f32
    %10 = vector.broadcast %cst_6 : f32 to vector<16x1xf32>
    %11 = arith.mulf %7, %10 : vector<16x1xf32>
    %12 = arith.mulf %9, %9 : vector<16x1xf32>
    %13 = arith.subf %11, %12 : vector<16x1xf32>
    %c0_7 = arith.constant 0 : index
    %c0_8 = arith.constant 0 : index
    %14 = vector.load %arg3[%c0_7, %c0_8] : memref<16x3xf32, #tpu.memory_space<vmem>>, vector<16x1xf32>
    %c0_9 = arith.constant 0 : index
    %c1 = arith.constant 1 : index
    %15 = vector.load %arg3[%c0_9, %c1] : memref<16x3xf32, #tpu.memory_space<vmem>>, vector<16x1xf32>
    %c0_10 = arith.constant 0 : index
    %c2 = arith.constant 2 : index
    %16 = vector.load %arg3[%c0_10, %c2] : memref<16x3xf32, #tpu.memory_space<vmem>>, vector<16x1xf32>
    %cst_11 = arith.constant 9.99999974E-6 : f32
    %17 = vector.broadcast %cst_11 : f32 to vector<16x1xf32>
    %18 = arith.addf %13, %17 : vector<16x1xf32>
    %19 = math.rsqrt %18 : vector<16x1xf32>
    %20 = arith.mulf %14, %19 : vector<16x1xf32>
    %21 = arith.mulf %9, %20 : vector<16x1xf32>
    %22 = arith.subf %15, %21 : vector<16x1xf32>
    %23 = vector.broadcast %20 : vector<16x1xf32> to vector<16x98xf32>
    %24 = arith.mulf %2, %23 : vector<16x98xf32>
    %25 = vector.broadcast %22 : vector<16x1xf32> to vector<16x98xf32>
    %26 = arith.addf %24, %25 : vector<16x98xf32>
    %cst_12 = arith.constant 0.000000e+00 : f32
    %27 = vector.broadcast %cst_12 : f32 to vector<16x98xf32>
    %28 = arith.cmpf oge, %26, %27 : vector<16x98xf32>
    %29 = vector.broadcast %16 : vector<16x1xf32> to vector<16x98xf32>
    %30 = arith.mulf %29, %26 : vector<16x98xf32>
    %31 = arith.select %28, %26, %30 : vector<16x98xi1>, vector<16x98xf32>
    %c0_13 = arith.constant 0 : index
    %c0_14 = arith.constant 0 : index
    %32 = vector.load %arg4[%c0_13, %c0_14] : memref<16x98xf32, #tpu.memory_space<vmem>>, vector<16x98xf32>
    tpu.vector_store %arg4[%c0_13, %c0_14], %31 {strides = array<i32>} : memref<16x98xf32, #tpu.memory_space<vmem>>, vector<16x98xf32>,
    return
  }
  func.func @transform_0(%arg0: i32) -> (i32, i32) {
    %c0_i32 = arith.constant 0 : i32
    %c0_i32_0 = arith.constant 0 : i32
    %c0_i32_1 = arith.constant 0 : i32
    return %c0_i32, %c0_i32_0 : i32, i32
  }
  func.func @transform_1(%arg0: i32) -> (i32, i32) {
    %c0_i32 = arith.constant 0 : i32
    %c0_i32_0 = arith.constant 0 : i32
    %c0_i32_1 = arith.constant 0 : i32
    return %c0_i32, %c0_i32_0 : i32, i32
  }
  func.func @transform_2(%arg0: i32) -> (i32, i32) {
    %c0_i32 = arith.constant 0 : i32
    %c0_i32_0 = arith.constant 0 : i32
    %c0_i32_1 = arith.constant 0 : i32
    return %c0_i32, %c0_i32_0 : i32, i32
  }
  func.func @transform_3(%arg0: i32) -> (i32, i32) {
    %c0_i32 = arith.constant 0 : i32
    %c0_i32_0 = arith.constant 0 : i32
    %c0_i32_1 = arith.constant 0 : i32
    return %c0_i32, %c0_i32_0 : i32, i32
  }
}

module attributes {stable_mosaic.version = 11 : i64} {
  func.func @_convT_bn_prelu_kernel(%arg0: i32, %arg1: memref<400x32xf32, #tpu.memory_space<vmem>>, %arg2: memref<32x400xf32, #tpu.memory_space<vmem>>, %arg3: memref<32x3xf32, #tpu.memory_space<vmem>>, %arg4: memref<32x32xf32, #tpu.memory_space<vmem>>) attributes {dimension_semantics = [#tpu.dimension_semantics<arbitrary>], iteration_bounds = array<i64: 1>, scalar_prefetch = 0 : i64, scratch_operands = 0 : i64, tpu.core_type = #tpu.core_type<tc>, window_params = [{pipeline_mode = #tpu.pipeline_mode<synchronous>, transform_indices = @transform_0, window_bounds = array<i64: 400, 32>}, {pipeline_mode = #tpu.pipeline_mode<synchronous>, transform_indices = @transform_1, window_bounds = array<i64: 32, 400>}, {pipeline_mode = #tpu.pipeline_mode<synchronous>, transform_indices = @transform_2, window_bounds = array<i64: 32, 3>}, {pipeline_mode = #tpu.pipeline_mode<synchronous>, transform_indices = @transform_3, window_bounds = array<i64: 32, 32>}]} {
    %c0 = arith.constant 0 : index
    %c0_0 = arith.constant 0 : index
    %0 = vector.load %arg2[%c0, %c0_0] : memref<32x400xf32, #tpu.memory_space<vmem>>, vector<32x400xf32>
    %c0_1 = arith.constant 0 : index
    %c0_2 = arith.constant 0 : index
    %1 = vector.load %arg1[%c0_1, %c0_2] : memref<400x32xf32, #tpu.memory_space<vmem>>, vector<400x32xf32>
    %cst = arith.constant dense<0.000000e+00> : vector<32x32xf32>
    %2 = tpu.matmul %0, %1, %cst {dimension_numbers = #tpu.dot_dimension_numbers<[1], [0], [0], [1], [0, 0, 1, 1], [], []>} : vector<32x400xf32>, vector<400x32xf32>, vector<32x32xf32> -> vector<32x32xf32>
    %cst_3 = arith.constant dense<0.000000e+00> : vector<32xf32>
    %3 = vector.multi_reduction <add>, %2, %cst_3 [1] : vector<32x32xf32> to vector<32xf32>
    %4 = vector.shape_cast %3 : vector<32xf32> to vector<32x1xf32>
    %5 = arith.mulf %2, %2 : vector<32x32xf32>
    %cst_4 = arith.constant dense<0.000000e+00> : vector<32xf32>
    %6 = vector.multi_reduction <add>, %5, %cst_4 [1] : vector<32x32xf32> to vector<32xf32>
    %7 = vector.shape_cast %6 : vector<32xf32> to vector<32x1xf32>
    %cst_5 = arith.constant 3.125000e-02 : f32
    %8 = vector.broadcast %cst_5 : f32 to vector<32x1xf32>
    %9 = arith.mulf %4, %8 : vector<32x1xf32>
    %cst_6 = arith.constant 3.125000e-02 : f32
    %10 = vector.broadcast %cst_6 : f32 to vector<32x1xf32>
    %11 = arith.mulf %7, %10 : vector<32x1xf32>
    %12 = arith.mulf %9, %9 : vector<32x1xf32>
    %13 = arith.subf %11, %12 : vector<32x1xf32>
    %c0_7 = arith.constant 0 : index
    %c0_8 = arith.constant 0 : index
    %14 = vector.load %arg3[%c0_7, %c0_8] : memref<32x3xf32, #tpu.memory_space<vmem>>, vector<32x1xf32>
    %c0_9 = arith.constant 0 : index
    %c1 = arith.constant 1 : index
    %15 = vector.load %arg3[%c0_9, %c1] : memref<32x3xf32, #tpu.memory_space<vmem>>, vector<32x1xf32>
    %c0_10 = arith.constant 0 : index
    %c2 = arith.constant 2 : index
    %16 = vector.load %arg3[%c0_10, %c2] : memref<32x3xf32, #tpu.memory_space<vmem>>, vector<32x1xf32>
    %cst_11 = arith.constant 9.99999974E-6 : f32
    %17 = vector.broadcast %cst_11 : f32 to vector<32x1xf32>
    %18 = arith.addf %13, %17 : vector<32x1xf32>
    %19 = math.rsqrt %18 : vector<32x1xf32>
    %20 = arith.mulf %14, %19 : vector<32x1xf32>
    %21 = arith.mulf %9, %20 : vector<32x1xf32>
    %22 = arith.subf %15, %21 : vector<32x1xf32>
    %23 = vector.broadcast %20 : vector<32x1xf32> to vector<32x32xf32>
    %24 = arith.mulf %2, %23 : vector<32x32xf32>
    %25 = vector.broadcast %22 : vector<32x1xf32> to vector<32x32xf32>
    %26 = arith.addf %24, %25 : vector<32x32xf32>
    %cst_12 = arith.constant 0.000000e+00 : f32
    %27 = vector.broadcast %cst_12 : f32 to vector<32x32xf32>
    %28 = arith.cmpf oge, %26, %27 : vector<32x32xf32>
    %29 = vector.broadcast %16 : vector<32x1xf32> to vector<32x32xf32>
    %30 = arith.mulf %29, %26 : vector<32x32xf32>
    %31 = arith.select %28, %26, %30 : vector<32x32xi1>, vector<32x32xf32>
    %c0_13 = arith.constant 0 : index
    %c0_14 = arith.constant 0 : index
    %32 = vector.load %arg4[%c0_13, %c0_14] : memref<32x32xf32, #tpu.memory_space<vmem>>, vector<32x32xf32>
    tpu.vector_store %arg4[%c0_13, %c0_14], %31 {strides = array<i32>} : memref<32x32xf32, #tpu.memory_space<vmem>>, vector<32x32xf32>,
    return
  }
  func.func @transform_0(%arg0: i32) -> (i32, i32) {
    %c0_i32 = arith.constant 0 : i32
    %c0_i32_0 = arith.constant 0 : i32
    %c0_i32_1 = arith.constant 0 : i32
    return %c0_i32, %c0_i32_0 : i32, i32
  }
  func.func @transform_1(%arg0: i32) -> (i32, i32) {
    %c0_i32 = arith.constant 0 : i32
    %c0_i32_0 = arith.constant 0 : i32
    %c0_i32_1 = arith.constant 0 : i32
    return %c0_i32, %c0_i32_0 : i32, i32
  }
  func.func @transform_2(%arg0: i32) -> (i32, i32) {
    %c0_i32 = arith.constant 0 : i32
    %c0_i32_0 = arith.constant 0 : i32
    %c0_i32_1 = arith.constant 0 : i32
    return %c0_i32, %c0_i32_0 : i32, i32
  }
  func.func @transform_3(%arg0: i32) -> (i32, i32) {
    %c0_i32 = arith.constant 0 : i32
    %c0_i32_0 = arith.constant 0 : i32
    %c0_i32_1 = arith.constant 0 : i32
    return %c0_i32, %c0_i32_0 : i32, i32
  }
}

module attributes {stable_mosaic.version = 11 : i64} {
  func.func @_latent_kernel(%arg0: i32, %arg1: memref<32x2xf32, #tpu.memory_space<vmem>>, %arg2: memref<32x32xf32, #tpu.memory_space<vmem>>, %arg3: memref<32x1xf32, #tpu.memory_space<vmem>>, %arg4: memref<16x2xf32, #tpu.memory_space<vmem>>, %arg5: memref<288x16xf32, #tpu.memory_space<vmem>>, %arg6: memref<288x1xf32, #tpu.memory_space<vmem>>, %arg7: memref<16x2xf32, #tpu.memory_space<vmem>>, %arg8: memref<16x2xf32, #tpu.memory_space<vmem>>, %arg9: memref<288x2xf32, #tpu.memory_space<vmem>>) attributes {dimension_semantics = [#tpu.dimension_semantics<arbitrary>], iteration_bounds = array<i64: 1>, scalar_prefetch = 0 : i64, scratch_operands = 0 : i64, tpu.core_type = #tpu.core_type<tc>, window_params = [{pipeline_mode = #tpu.pipeline_mode<synchronous>, transform_indices = @transform_0, window_bounds = array<i64: 32, 2>}, {pipeline_mode = #tpu.pipeline_mode<synchronous>, transform_indices = @transform_1, window_bounds = array<i64: 32, 32>}, {pipeline_mode = #tpu.pipeline_mode<synchronous>, transform_indices = @transform_2, window_bounds = array<i64: 32, 1>}, {pipeline_mode = #tpu.pipeline_mode<synchronous>, transform_indices = @transform_3, window_bounds = array<i64: 16, 2>}, {pipeline_mode = #tpu.pipeline_mode<synchronous>, transform_indices = @transform_4, window_bounds = array<i64: 288, 16>}, {pipeline_mode = #tpu.pipeline_mode<synchronous>, transform_indices = @transform_5, window_bounds = array<i64: 288, 1>}, {pipeline_mode = #tpu.pipeline_mode<synchronous>, transform_indices = @transform_6, window_bounds = array<i64: 16, 2>}, {pipeline_mode = #tpu.pipeline_mode<synchronous>, transform_indices = @transform_7, window_bounds = array<i64: 16, 2>}, {pipeline_mode = #tpu.pipeline_mode<synchronous>, transform_indices = @transform_8, window_bounds = array<i64: 288, 2>}]} {
    %c0 = arith.constant 0 : index
    %c0_0 = arith.constant 0 : index
    %0 = vector.load %arg2[%c0, %c0_0] : memref<32x32xf32, #tpu.memory_space<vmem>>, vector<32x32xf32>
    %c0_1 = arith.constant 0 : index
    %c0_2 = arith.constant 0 : index
    %1 = vector.load %arg1[%c0_1, %c0_2] : memref<32x2xf32, #tpu.memory_space<vmem>>, vector<32x2xf32>
    %cst = arith.constant dense<0.000000e+00> : vector<32x2xf32>
    %2 = tpu.matmul %0, %1, %cst {dimension_numbers = #tpu.dot_dimension_numbers<[1], [0], [0], [1], [0, 0, 1, 1], [], []>} : vector<32x32xf32>, vector<32x2xf32>, vector<32x2xf32> -> vector<32x2xf32>
    %c0_3 = arith.constant 0 : index
    %c0_4 = arith.constant 0 : index
    %3 = vector.load %arg3[%c0_3, %c0_4] : memref<32x1xf32, #tpu.memory_space<vmem>>, vector<32x1xf32>
    %4 = vector.broadcast %3 : vector<32x1xf32> to vector<32x2xf32>
    %5 = arith.addf %2, %4 : vector<32x2xf32>
    %6 = vector.extract_strided_slice %5 {offsets = [0, 0], sizes = [16, 2], strides = [1, 1]} : vector<32x2xf32> to vector<16x2xf32>
    %7 = vector.extract_strided_slice %5 {offsets = [16, 0], sizes = [16, 2], strides = [1, 1]} : vector<32x2xf32> to vector<16x2xf32>
    %c0_5 = arith.constant 0 : index
    %c0_6 = arith.constant 0 : index
    %8 = vector.load %arg7[%c0_5, %c0_6] : memref<16x2xf32, #tpu.memory_space<vmem>>, vector<16x2xf32>
    tpu.vector_store %arg7[%c0_5, %c0_6], %6 {strides = array<i32>} : memref<16x2xf32, #tpu.memory_space<vmem>>, vector<16x2xf32>,
    %c0_7 = arith.constant 0 : index
    %c0_8 = arith.constant 0 : index
    %9 = vector.load %arg8[%c0_7, %c0_8] : memref<16x2xf32, #tpu.memory_space<vmem>>, vector<16x2xf32>
    tpu.vector_store %arg8[%c0_7, %c0_8], %7 {strides = array<i32>} : memref<16x2xf32, #tpu.memory_space<vmem>>, vector<16x2xf32>,
    %cst_9 = arith.constant 5.000000e-01 : f32
    %10 = vector.broadcast %cst_9 : f32 to vector<16x2xf32>
    %11 = arith.mulf %10, %7 : vector<16x2xf32>
    %12 = math.exp %11 : vector<16x2xf32>
    %c0_10 = arith.constant 0 : index
    %c0_11 = arith.constant 0 : index
    %13 = vector.load %arg4[%c0_10, %c0_11] : memref<16x2xf32, #tpu.memory_space<vmem>>, vector<16x2xf32>
    %14 = arith.mulf %13, %12 : vector<16x2xf32>
    %15 = arith.addf %14, %6 : vector<16x2xf32>
    %c0_12 = arith.constant 0 : index
    %c0_13 = arith.constant 0 : index
    %16 = vector.load %arg5[%c0_12, %c0_13] : memref<288x16xf32, #tpu.memory_space<vmem>>, vector<288x16xf32>
    %cst_14 = arith.constant dense<0.000000e+00> : vector<288x2xf32>
    %17 = tpu.matmul %16, %15, %cst_14 {dimension_numbers = #tpu.dot_dimension_numbers<[1], [0], [0], [1], [0, 0, 1, 1], [], []>} : vector<288x16xf32>, vector<16x2xf32>, vector<288x2xf32> -> vector<288x2xf32>
    %c0_15 = arith.constant 0 : index
    %c0_16 = arith.constant 0 : index
    %18 = vector.load %arg6[%c0_15, %c0_16] : memref<288x1xf32, #tpu.memory_space<vmem>>, vector<288x1xf32>
    %19 = vector.broadcast %18 : vector<288x1xf32> to vector<288x2xf32>
    %20 = arith.addf %17, %19 : vector<288x2xf32>
    %c0_17 = arith.constant 0 : index
    %c0_18 = arith.constant 0 : index
    %21 = vector.load %arg9[%c0_17, %c0_18] : memref<288x2xf32, #tpu.memory_space<vmem>>, vector<288x2xf32>
    tpu.vector_store %arg9[%c0_17, %c0_18], %20 {strides = array<i32>} : memref<288x2xf32, #tpu.memory_space<vmem>>, vector<288x2xf32>,
    return
  }
  func.func @transform_0(%arg0: i32) -> (i32, i32) {
    %c0_i32 = arith.constant 0 : i32
    %c0_i32_0 = arith.constant 0 : i32
    %c0_i32_1 = arith.constant 0 : i32
    return %c0_i32, %c0_i32_0 : i32, i32
  }
  func.func @transform_1(%arg0: i32) -> (i32, i32) {
    %c0_i32 = arith.constant 0 : i32
    %c0_i32_0 = arith.constant 0 : i32
    %c0_i32_1 = arith.constant 0 : i32
    return %c0_i32, %c0_i32_0 : i32, i32
  }
  func.func @transform_2(%arg0: i32) -> (i32, i32) {
    %c0_i32 = arith.constant 0 : i32
    %c0_i32_0 = arith.constant 0 : i32
    %c0_i32_1 = arith.constant 0 : i32
    return %c0_i32, %c0_i32_0 : i32, i32
  }
  func.func @transform_3(%arg0: i32) -> (i32, i32) {
    %c0_i32 = arith.constant 0 : i32
    %c0_i32_0 = arith.constant 0 : i32
    %c0_i32_1 = arith.constant 0 : i32
    return %c0_i32, %c0_i32_0 : i32, i32
  }
  func.func @transform_4(%arg0: i32) -> (i32, i32) {
    %c0_i32 = arith.constant 0 : i32
    %c0_i32_0 = arith.constant 0 : i32
    %c0_i32_1 = arith.constant 0 : i32
    return %c0_i32, %c0_i32_0 : i32, i32
  }
  func.func @transform_5(%arg0: i32) -> (i32, i32) {
    %c0_i32 = arith.constant 0 : i32
    %c0_i32_0 = arith.constant 0 : i32
    %c0_i32_1 = arith.constant 0 : i32
    return %c0_i32, %c0_i32_0 : i32, i32
  }
  func.func @transform_6(%arg0: i32) -> (i32, i32) {
    %c0_i32 = arith.constant 0 : i32
    %c0_i32_0 = arith.constant 0 : i32
    %c0_i32_1 = arith.constant 0 : i32
    return %c0_i32, %c0_i32_0 : i32, i32
  }
  func.func @transform_7(%arg0: i32) -> (i32, i32) {
    %c0_i32 = arith.constant 0 : i32
    %c0_i32_0 = arith.constant 0 : i32
    %c0_i32_1 = arith.constant 0 : i32
    return %c0_i32, %c0_i32_0 : i32, i32
  }
  func.func @transform_8(%arg0: i32) -> (i32, i32) {
    %c0_i32 = arith.constant 0 : i32
    %c0_i32_0 = arith.constant 0 : i32
    %c0_i32_1 = arith.constant 0 : i32
    return %c0_i32, %c0_i32_0 : i32, i32
  }
}

module attributes {stable_mosaic.version = 11 : i64} {
  func.func @_convT_bn_prelu_kernel(%arg0: i32, %arg1: memref<512x2xf32, #tpu.memory_space<vmem>>, %arg2: memref<32x512xf32, #tpu.memory_space<vmem>>, %arg3: memref<32x3xf32, #tpu.memory_space<vmem>>, %arg4: memref<32x2xf32, #tpu.memory_space<vmem>>) attributes {dimension_semantics = [#tpu.dimension_semantics<arbitrary>], iteration_bounds = array<i64: 1>, scalar_prefetch = 0 : i64, scratch_operands = 0 : i64, tpu.core_type = #tpu.core_type<tc>, window_params = [{pipeline_mode = #tpu.pipeline_mode<synchronous>, transform_indices = @transform_0, window_bounds = array<i64: 512, 2>}, {pipeline_mode = #tpu.pipeline_mode<synchronous>, transform_indices = @transform_1, window_bounds = array<i64: 32, 512>}, {pipeline_mode = #tpu.pipeline_mode<synchronous>, transform_indices = @transform_2, window_bounds = array<i64: 32, 3>}, {pipeline_mode = #tpu.pipeline_mode<synchronous>, transform_indices = @transform_3, window_bounds = array<i64: 32, 2>}]} {
    %c0 = arith.constant 0 : index
    %c0_0 = arith.constant 0 : index
    %0 = vector.load %arg2[%c0, %c0_0] : memref<32x512xf32, #tpu.memory_space<vmem>>, vector<32x512xf32>
    %c0_1 = arith.constant 0 : index
    %c0_2 = arith.constant 0 : index
    %1 = vector.load %arg1[%c0_1, %c0_2] : memref<512x2xf32, #tpu.memory_space<vmem>>, vector<512x2xf32>
    %cst = arith.constant dense<0.000000e+00> : vector<32x2xf32>
    %2 = tpu.matmul %0, %1, %cst {dimension_numbers = #tpu.dot_dimension_numbers<[1], [0], [0], [1], [0, 0, 1, 1], [], []>} : vector<32x512xf32>, vector<512x2xf32>, vector<32x2xf32> -> vector<32x2xf32>
    %cst_3 = arith.constant dense<0.000000e+00> : vector<32xf32>
    %3 = vector.multi_reduction <add>, %2, %cst_3 [1] : vector<32x2xf32> to vector<32xf32>
    %4 = vector.shape_cast %3 : vector<32xf32> to vector<32x1xf32>
    %5 = arith.mulf %2, %2 : vector<32x2xf32>
    %cst_4 = arith.constant dense<0.000000e+00> : vector<32xf32>
    %6 = vector.multi_reduction <add>, %5, %cst_4 [1] : vector<32x2xf32> to vector<32xf32>
    %7 = vector.shape_cast %6 : vector<32xf32> to vector<32x1xf32>
    %cst_5 = arith.constant 5.000000e-01 : f32
    %8 = vector.broadcast %cst_5 : f32 to vector<32x1xf32>
    %9 = arith.mulf %4, %8 : vector<32x1xf32>
    %cst_6 = arith.constant 5.000000e-01 : f32
    %10 = vector.broadcast %cst_6 : f32 to vector<32x1xf32>
    %11 = arith.mulf %7, %10 : vector<32x1xf32>
    %12 = arith.mulf %9, %9 : vector<32x1xf32>
    %13 = arith.subf %11, %12 : vector<32x1xf32>
    %c0_7 = arith.constant 0 : index
    %c0_8 = arith.constant 0 : index
    %14 = vector.load %arg3[%c0_7, %c0_8] : memref<32x3xf32, #tpu.memory_space<vmem>>, vector<32x1xf32>
    %c0_9 = arith.constant 0 : index
    %c1 = arith.constant 1 : index
    %15 = vector.load %arg3[%c0_9, %c1] : memref<32x3xf32, #tpu.memory_space<vmem>>, vector<32x1xf32>
    %c0_10 = arith.constant 0 : index
    %c2 = arith.constant 2 : index
    %16 = vector.load %arg3[%c0_10, %c2] : memref<32x3xf32, #tpu.memory_space<vmem>>, vector<32x1xf32>
    %cst_11 = arith.constant 9.99999974E-6 : f32
    %17 = vector.broadcast %cst_11 : f32 to vector<32x1xf32>
    %18 = arith.addf %13, %17 : vector<32x1xf32>
    %19 = math.rsqrt %18 : vector<32x1xf32>
    %20 = arith.mulf %14, %19 : vector<32x1xf32>
    %21 = arith.mulf %9, %20 : vector<32x1xf32>
    %22 = arith.subf %15, %21 : vector<32x1xf32>
    %23 = vector.broadcast %20 : vector<32x1xf32> to vector<32x2xf32>
    %24 = arith.mulf %2, %23 : vector<32x2xf32>
    %25 = vector.broadcast %22 : vector<32x1xf32> to vector<32x2xf32>
    %26 = arith.addf %24, %25 : vector<32x2xf32>
    %cst_12 = arith.constant 0.000000e+00 : f32
    %27 = vector.broadcast %cst_12 : f32 to vector<32x2xf32>
    %28 = arith.cmpf oge, %26, %27 : vector<32x2xf32>
    %29 = vector.broadcast %16 : vector<32x1xf32> to vector<32x2xf32>
    %30 = arith.mulf %29, %26 : vector<32x2xf32>
    %31 = arith.select %28, %26, %30 : vector<32x2xi1>, vector<32x2xf32>
    %c0_13 = arith.constant 0 : index
    %c0_14 = arith.constant 0 : index
    %32 = vector.load %arg4[%c0_13, %c0_14] : memref<32x2xf32, #tpu.memory_space<vmem>>, vector<32x2xf32>
    tpu.vector_store %arg4[%c0_13, %c0_14], %31 {strides = array<i32>} : memref<32x2xf32, #tpu.memory_space<vmem>>, vector<32x2xf32>,
    return
  }
  func.func @transform_0(%arg0: i32) -> (i32, i32) {
    %c0_i32 = arith.constant 0 : i32
    %c0_i32_0 = arith.constant 0 : i32
    %c0_i32_1 = arith.constant 0 : i32
    return %c0_i32, %c0_i32_0 : i32, i32
  }
  func.func @transform_1(%arg0: i32) -> (i32, i32) {
    %c0_i32 = arith.constant 0 : i32
    %c0_i32_0 = arith.constant 0 : i32
    %c0_i32_1 = arith.constant 0 : i32
    return %c0_i32, %c0_i32_0 : i32, i32
  }
  func.func @transform_2(%arg0: i32) -> (i32, i32) {
    %c0_i32 = arith.constant 0 : i32
    %c0_i32_0 = arith.constant 0 : i32
    %c0_i32_1 = arith.constant 0 : i32
    return %c0_i32, %c0_i32_0 : i32, i32
  }
  func.func @transform_3(%arg0: i32) -> (i32, i32) {
    %c0_i32 = arith.constant 0 : i32
    %c0_i32_0 = arith.constant 0 : i32
    %c0_i32_1 = arith.constant 0 : i32
    return %c0_i32, %c0_i32_0 : i32, i32
  }
}

module attributes {stable_mosaic.version = 11 : i64} {
  func.func @_convT_bn_prelu_kernel(%arg0: i32, %arg1: memref<288x50xf32, #tpu.memory_space<vmem>>, %arg2: memref<32x288xf32, #tpu.memory_space<vmem>>, %arg3: memref<32x3xf32, #tpu.memory_space<vmem>>, %arg4: memref<32x50xf32, #tpu.memory_space<vmem>>) attributes {dimension_semantics = [#tpu.dimension_semantics<arbitrary>], iteration_bounds = array<i64: 1>, scalar_prefetch = 0 : i64, scratch_operands = 0 : i64, tpu.core_type = #tpu.core_type<tc>, window_params = [{pipeline_mode = #tpu.pipeline_mode<synchronous>, transform_indices = @transform_0, window_bounds = array<i64: 288, 50>}, {pipeline_mode = #tpu.pipeline_mode<synchronous>, transform_indices = @transform_1, window_bounds = array<i64: 32, 288>}, {pipeline_mode = #tpu.pipeline_mode<synchronous>, transform_indices = @transform_2, window_bounds = array<i64: 32, 3>}, {pipeline_mode = #tpu.pipeline_mode<synchronous>, transform_indices = @transform_3, window_bounds = array<i64: 32, 50>}]} {
    %c0 = arith.constant 0 : index
    %c0_0 = arith.constant 0 : index
    %0 = vector.load %arg2[%c0, %c0_0] : memref<32x288xf32, #tpu.memory_space<vmem>>, vector<32x288xf32>
    %c0_1 = arith.constant 0 : index
    %c0_2 = arith.constant 0 : index
    %1 = vector.load %arg1[%c0_1, %c0_2] : memref<288x50xf32, #tpu.memory_space<vmem>>, vector<288x50xf32>
    %cst = arith.constant dense<0.000000e+00> : vector<32x50xf32>
    %2 = tpu.matmul %0, %1, %cst {dimension_numbers = #tpu.dot_dimension_numbers<[1], [0], [0], [1], [0, 0, 1, 1], [], []>} : vector<32x288xf32>, vector<288x50xf32>, vector<32x50xf32> -> vector<32x50xf32>
    %cst_3 = arith.constant dense<0.000000e+00> : vector<32xf32>
    %3 = vector.multi_reduction <add>, %2, %cst_3 [1] : vector<32x50xf32> to vector<32xf32>
    %4 = vector.shape_cast %3 : vector<32xf32> to vector<32x1xf32>
    %5 = arith.mulf %2, %2 : vector<32x50xf32>
    %cst_4 = arith.constant dense<0.000000e+00> : vector<32xf32>
    %6 = vector.multi_reduction <add>, %5, %cst_4 [1] : vector<32x50xf32> to vector<32xf32>
    %7 = vector.shape_cast %6 : vector<32xf32> to vector<32x1xf32>
    %cst_5 = arith.constant 2.000000e-02 : f32
    %8 = vector.broadcast %cst_5 : f32 to vector<32x1xf32>
    %9 = arith.mulf %4, %8 : vector<32x1xf32>
    %cst_6 = arith.constant 2.000000e-02 : f32
    %10 = vector.broadcast %cst_6 : f32 to vector<32x1xf32>
    %11 = arith.mulf %7, %10 : vector<32x1xf32>
    %12 = arith.mulf %9, %9 : vector<32x1xf32>
    %13 = arith.subf %11, %12 : vector<32x1xf32>
    %c0_7 = arith.constant 0 : index
    %c0_8 = arith.constant 0 : index
    %14 = vector.load %arg3[%c0_7, %c0_8] : memref<32x3xf32, #tpu.memory_space<vmem>>, vector<32x1xf32>
    %c0_9 = arith.constant 0 : index
    %c1 = arith.constant 1 : index
    %15 = vector.load %arg3[%c0_9, %c1] : memref<32x3xf32, #tpu.memory_space<vmem>>, vector<32x1xf32>
    %c0_10 = arith.constant 0 : index
    %c2 = arith.constant 2 : index
    %16 = vector.load %arg3[%c0_10, %c2] : memref<32x3xf32, #tpu.memory_space<vmem>>, vector<32x1xf32>
    %cst_11 = arith.constant 9.99999974E-6 : f32
    %17 = vector.broadcast %cst_11 : f32 to vector<32x1xf32>
    %18 = arith.addf %13, %17 : vector<32x1xf32>
    %19 = math.rsqrt %18 : vector<32x1xf32>
    %20 = arith.mulf %14, %19 : vector<32x1xf32>
    %21 = arith.mulf %9, %20 : vector<32x1xf32>
    %22 = arith.subf %15, %21 : vector<32x1xf32>
    %23 = vector.broadcast %20 : vector<32x1xf32> to vector<32x50xf32>
    %24 = arith.mulf %2, %23 : vector<32x50xf32>
    %25 = vector.broadcast %22 : vector<32x1xf32> to vector<32x50xf32>
    %26 = arith.addf %24, %25 : vector<32x50xf32>
    %cst_12 = arith.constant 0.000000e+00 : f32
    %27 = vector.broadcast %cst_12 : f32 to vector<32x50xf32>
    %28 = arith.cmpf oge, %26, %27 : vector<32x50xf32>
    %29 = vector.broadcast %16 : vector<32x1xf32> to vector<32x50xf32>
    %30 = arith.mulf %29, %26 : vector<32x50xf32>
    %31 = arith.select %28, %26, %30 : vector<32x50xi1>, vector<32x50xf32>
    %c0_13 = arith.constant 0 : index
    %c0_14 = arith.constant 0 : index
    %32 = vector.load %arg4[%c0_13, %c0_14] : memref<32x50xf32, #tpu.memory_space<vmem>>, vector<32x50xf32>
    tpu.vector_store %arg4[%c0_13, %c0_14], %31 {strides = array<i32>} : memref<32x50xf32, #tpu.memory_space<vmem>>, vector<32x50xf32>,
    return
  }
  func.func @transform_0(%arg0: i32) -> (i32, i32) {
    %c0_i32 = arith.constant 0 : i32
    %c0_i32_0 = arith.constant 0 : i32
    %c0_i32_1 = arith.constant 0 : i32
    return %c0_i32, %c0_i32_0 : i32, i32
  }
  func.func @transform_1(%arg0: i32) -> (i32, i32) {
    %c0_i32 = arith.constant 0 : i32
    %c0_i32_0 = arith.constant 0 : i32
    %c0_i32_1 = arith.constant 0 : i32
    return %c0_i32, %c0_i32_0 : i32, i32
  }
  func.func @transform_2(%arg0: i32) -> (i32, i32) {
    %c0_i32 = arith.constant 0 : i32
    %c0_i32_0 = arith.constant 0 : i32
    %c0_i32_1 = arith.constant 0 : i32
    return %c0_i32, %c0_i32_0 : i32, i32
  }
  func.func @transform_3(%arg0: i32) -> (i32, i32) {
    %c0_i32 = arith.constant 0 : i32
    %c0_i32_0 = arith.constant 0 : i32
    %c0_i32_1 = arith.constant 0 : i32
    return %c0_i32, %c0_i32_0 : i32, i32
  }
}

module attributes {stable_mosaic.version = 11 : i64} {
  func.func @_convT_bn_prelu_kernel(%arg0: i32, %arg1: memref<288x98xf32, #tpu.memory_space<vmem>>, %arg2: memref<32x288xf32, #tpu.memory_space<vmem>>, %arg3: memref<32x3xf32, #tpu.memory_space<vmem>>, %arg4: memref<32x98xf32, #tpu.memory_space<vmem>>) attributes {dimension_semantics = [#tpu.dimension_semantics<arbitrary>], iteration_bounds = array<i64: 1>, scalar_prefetch = 0 : i64, scratch_operands = 0 : i64, tpu.core_type = #tpu.core_type<tc>, window_params = [{pipeline_mode = #tpu.pipeline_mode<synchronous>, transform_indices = @transform_0, window_bounds = array<i64: 288, 98>}, {pipeline_mode = #tpu.pipeline_mode<synchronous>, transform_indices = @transform_1, window_bounds = array<i64: 32, 288>}, {pipeline_mode = #tpu.pipeline_mode<synchronous>, transform_indices = @transform_2, window_bounds = array<i64: 32, 3>}, {pipeline_mode = #tpu.pipeline_mode<synchronous>, transform_indices = @transform_3, window_bounds = array<i64: 32, 98>}]} {
    %c0 = arith.constant 0 : index
    %c0_0 = arith.constant 0 : index
    %0 = vector.load %arg2[%c0, %c0_0] : memref<32x288xf32, #tpu.memory_space<vmem>>, vector<32x288xf32>
    %c0_1 = arith.constant 0 : index
    %c0_2 = arith.constant 0 : index
    %1 = vector.load %arg1[%c0_1, %c0_2] : memref<288x98xf32, #tpu.memory_space<vmem>>, vector<288x98xf32>
    %cst = arith.constant dense<0.000000e+00> : vector<32x98xf32>
    %2 = tpu.matmul %0, %1, %cst {dimension_numbers = #tpu.dot_dimension_numbers<[1], [0], [0], [1], [0, 0, 1, 1], [], []>} : vector<32x288xf32>, vector<288x98xf32>, vector<32x98xf32> -> vector<32x98xf32>
    %cst_3 = arith.constant dense<0.000000e+00> : vector<32xf32>
    %3 = vector.multi_reduction <add>, %2, %cst_3 [1] : vector<32x98xf32> to vector<32xf32>
    %4 = vector.shape_cast %3 : vector<32xf32> to vector<32x1xf32>
    %5 = arith.mulf %2, %2 : vector<32x98xf32>
    %cst_4 = arith.constant dense<0.000000e+00> : vector<32xf32>
    %6 = vector.multi_reduction <add>, %5, %cst_4 [1] : vector<32x98xf32> to vector<32xf32>
    %7 = vector.shape_cast %6 : vector<32xf32> to vector<32x1xf32>
    %cst_5 = arith.constant 0.0102040814 : f32
    %8 = vector.broadcast %cst_5 : f32 to vector<32x1xf32>
    %9 = arith.mulf %4, %8 : vector<32x1xf32>
    %cst_6 = arith.constant 0.0102040814 : f32
    %10 = vector.broadcast %cst_6 : f32 to vector<32x1xf32>
    %11 = arith.mulf %7, %10 : vector<32x1xf32>
    %12 = arith.mulf %9, %9 : vector<32x1xf32>
    %13 = arith.subf %11, %12 : vector<32x1xf32>
    %c0_7 = arith.constant 0 : index
    %c0_8 = arith.constant 0 : index
    %14 = vector.load %arg3[%c0_7, %c0_8] : memref<32x3xf32, #tpu.memory_space<vmem>>, vector<32x1xf32>
    %c0_9 = arith.constant 0 : index
    %c1 = arith.constant 1 : index
    %15 = vector.load %arg3[%c0_9, %c1] : memref<32x3xf32, #tpu.memory_space<vmem>>, vector<32x1xf32>
    %c0_10 = arith.constant 0 : index
    %c2 = arith.constant 2 : index
    %16 = vector.load %arg3[%c0_10, %c2] : memref<32x3xf32, #tpu.memory_space<vmem>>, vector<32x1xf32>
    %cst_11 = arith.constant 9.99999974E-6 : f32
    %17 = vector.broadcast %cst_11 : f32 to vector<32x1xf32>
    %18 = arith.addf %13, %17 : vector<32x1xf32>
    %19 = math.rsqrt %18 : vector<32x1xf32>
    %20 = arith.mulf %14, %19 : vector<32x1xf32>
    %21 = arith.mulf %9, %20 : vector<32x1xf32>
    %22 = arith.subf %15, %21 : vector<32x1xf32>
    %23 = vector.broadcast %20 : vector<32x1xf32> to vector<32x98xf32>
    %24 = arith.mulf %2, %23 : vector<32x98xf32>
    %25 = vector.broadcast %22 : vector<32x1xf32> to vector<32x98xf32>
    %26 = arith.addf %24, %25 : vector<32x98xf32>
    %cst_12 = arith.constant 0.000000e+00 : f32
    %27 = vector.broadcast %cst_12 : f32 to vector<32x98xf32>
    %28 = arith.cmpf oge, %26, %27 : vector<32x98xf32>
    %29 = vector.broadcast %16 : vector<32x1xf32> to vector<32x98xf32>
    %30 = arith.mulf %29, %26 : vector<32x98xf32>
    %31 = arith.select %28, %26, %30 : vector<32x98xi1>, vector<32x98xf32>
    %c0_13 = arith.constant 0 : index
    %c0_14 = arith.constant 0 : index
    %32 = vector.load %arg4[%c0_13, %c0_14] : memref<32x98xf32, #tpu.memory_space<vmem>>, vector<32x98xf32>
    tpu.vector_store %arg4[%c0_13, %c0_14], %31 {strides = array<i32>} : memref<32x98xf32, #tpu.memory_space<vmem>>, vector<32x98xf32>,
    return
  }
  func.func @transform_0(%arg0: i32) -> (i32, i32) {
    %c0_i32 = arith.constant 0 : i32
    %c0_i32_0 = arith.constant 0 : i32
    %c0_i32_1 = arith.constant 0 : i32
    return %c0_i32, %c0_i32_0 : i32, i32
  }
  func.func @transform_1(%arg0: i32) -> (i32, i32) {
    %c0_i32 = arith.constant 0 : i32
    %c0_i32_0 = arith.constant 0 : i32
    %c0_i32_1 = arith.constant 0 : i32
    return %c0_i32, %c0_i32_0 : i32, i32
  }
  func.func @transform_2(%arg0: i32) -> (i32, i32) {
    %c0_i32 = arith.constant 0 : i32
    %c0_i32_0 = arith.constant 0 : i32
    %c0_i32_1 = arith.constant 0 : i32
    return %c0_i32, %c0_i32_0 : i32, i32
  }
  func.func @transform_3(%arg0: i32) -> (i32, i32) {
    %c0_i32 = arith.constant 0 : i32
    %c0_i32_0 = arith.constant 0 : i32
    %c0_i32_1 = arith.constant 0 : i32
    return %c0_i32, %c0_i32_0 : i32, i32
  }
}

module attributes {stable_mosaic.version = 11 : i64} {
  func.func @_convT_bn_prelu_kernel(%arg0: i32, %arg1: memref<800x392xf32, #tpu.memory_space<vmem>>, %arg2: memref<16x800xf32, #tpu.memory_space<vmem>>, %arg3: memref<16x3xf32, #tpu.memory_space<vmem>>, %arg4: memref<16x392xf32, #tpu.memory_space<vmem>>) attributes {dimension_semantics = [#tpu.dimension_semantics<arbitrary>], iteration_bounds = array<i64: 1>, scalar_prefetch = 0 : i64, scratch_operands = 0 : i64, tpu.core_type = #tpu.core_type<tc>, window_params = [{pipeline_mode = #tpu.pipeline_mode<synchronous>, transform_indices = @transform_0, window_bounds = array<i64: 800, 392>}, {pipeline_mode = #tpu.pipeline_mode<synchronous>, transform_indices = @transform_1, window_bounds = array<i64: 16, 800>}, {pipeline_mode = #tpu.pipeline_mode<synchronous>, transform_indices = @transform_2, window_bounds = array<i64: 16, 3>}, {pipeline_mode = #tpu.pipeline_mode<synchronous>, transform_indices = @transform_3, window_bounds = array<i64: 16, 392>}]} {
    %c0 = arith.constant 0 : index
    %c0_0 = arith.constant 0 : index
    %0 = vector.load %arg2[%c0, %c0_0] : memref<16x800xf32, #tpu.memory_space<vmem>>, vector<16x800xf32>
    %c0_1 = arith.constant 0 : index
    %c0_2 = arith.constant 0 : index
    %1 = vector.load %arg1[%c0_1, %c0_2] : memref<800x392xf32, #tpu.memory_space<vmem>>, vector<800x392xf32>
    %cst = arith.constant dense<0.000000e+00> : vector<16x392xf32>
    %2 = tpu.matmul %0, %1, %cst {dimension_numbers = #tpu.dot_dimension_numbers<[1], [0], [0], [1], [0, 0, 1, 1], [], []>} : vector<16x800xf32>, vector<800x392xf32>, vector<16x392xf32> -> vector<16x392xf32>
    %cst_3 = arith.constant dense<0.000000e+00> : vector<16xf32>
    %3 = vector.multi_reduction <add>, %2, %cst_3 [1] : vector<16x392xf32> to vector<16xf32>
    %4 = vector.shape_cast %3 : vector<16xf32> to vector<16x1xf32>
    %5 = arith.mulf %2, %2 : vector<16x392xf32>
    %cst_4 = arith.constant dense<0.000000e+00> : vector<16xf32>
    %6 = vector.multi_reduction <add>, %5, %cst_4 [1] : vector<16x392xf32> to vector<16xf32>
    %7 = vector.shape_cast %6 : vector<16xf32> to vector<16x1xf32>
    %cst_5 = arith.constant 0.00255102036 : f32
    %8 = vector.broadcast %cst_5 : f32 to vector<16x1xf32>
    %9 = arith.mulf %4, %8 : vector<16x1xf32>
    %cst_6 = arith.constant 0.00255102036 : f32
    %10 = vector.broadcast %cst_6 : f32 to vector<16x1xf32>
    %11 = arith.mulf %7, %10 : vector<16x1xf32>
    %12 = arith.mulf %9, %9 : vector<16x1xf32>
    %13 = arith.subf %11, %12 : vector<16x1xf32>
    %c0_7 = arith.constant 0 : index
    %c0_8 = arith.constant 0 : index
    %14 = vector.load %arg3[%c0_7, %c0_8] : memref<16x3xf32, #tpu.memory_space<vmem>>, vector<16x1xf32>
    %c0_9 = arith.constant 0 : index
    %c1 = arith.constant 1 : index
    %15 = vector.load %arg3[%c0_9, %c1] : memref<16x3xf32, #tpu.memory_space<vmem>>, vector<16x1xf32>
    %c0_10 = arith.constant 0 : index
    %c2 = arith.constant 2 : index
    %16 = vector.load %arg3[%c0_10, %c2] : memref<16x3xf32, #tpu.memory_space<vmem>>, vector<16x1xf32>
    %cst_11 = arith.constant 9.99999974E-6 : f32
    %17 = vector.broadcast %cst_11 : f32 to vector<16x1xf32>
    %18 = arith.addf %13, %17 : vector<16x1xf32>
    %19 = math.rsqrt %18 : vector<16x1xf32>
    %20 = arith.mulf %14, %19 : vector<16x1xf32>
    %21 = arith.mulf %9, %20 : vector<16x1xf32>
    %22 = arith.subf %15, %21 : vector<16x1xf32>
    %23 = vector.broadcast %20 : vector<16x1xf32> to vector<16x392xf32>
    %24 = arith.mulf %2, %23 : vector<16x392xf32>
    %25 = vector.broadcast %22 : vector<16x1xf32> to vector<16x392xf32>
    %26 = arith.addf %24, %25 : vector<16x392xf32>
    %cst_12 = arith.constant 0.000000e+00 : f32
    %27 = vector.broadcast %cst_12 : f32 to vector<16x392xf32>
    %28 = arith.cmpf oge, %26, %27 : vector<16x392xf32>
    %29 = vector.broadcast %16 : vector<16x1xf32> to vector<16x392xf32>
    %30 = arith.mulf %29, %26 : vector<16x392xf32>
    %31 = arith.select %28, %26, %30 : vector<16x392xi1>, vector<16x392xf32>
    %c0_13 = arith.constant 0 : index
    %c0_14 = arith.constant 0 : index
    %32 = vector.load %arg4[%c0_13, %c0_14] : memref<16x392xf32, #tpu.memory_space<vmem>>, vector<16x392xf32>
    tpu.vector_store %arg4[%c0_13, %c0_14], %31 {strides = array<i32>} : memref<16x392xf32, #tpu.memory_space<vmem>>, vector<16x392xf32>,
    return
  }
  func.func @transform_0(%arg0: i32) -> (i32, i32) {
    %c0_i32 = arith.constant 0 : i32
    %c0_i32_0 = arith.constant 0 : i32
    %c0_i32_1 = arith.constant 0 : i32
    return %c0_i32, %c0_i32_0 : i32, i32
  }
  func.func @transform_1(%arg0: i32) -> (i32, i32) {
    %c0_i32 = arith.constant 0 : i32
    %c0_i32_0 = arith.constant 0 : i32
    %c0_i32_1 = arith.constant 0 : i32
    return %c0_i32, %c0_i32_0 : i32, i32
  }
  func.func @transform_2(%arg0: i32) -> (i32, i32) {
    %c0_i32 = arith.constant 0 : i32
    %c0_i32_0 = arith.constant 0 : i32
    %c0_i32_1 = arith.constant 0 : i32
    return %c0_i32, %c0_i32_0 : i32, i32
  }
  func.func @transform_3(%arg0: i32) -> (i32, i32) {
    %c0_i32 = arith.constant 0 : i32
    %c0_i32_0 = arith.constant 0 : i32
    %c0_i32_1 = arith.constant 0 : i32
    return %c0_i32, %c0_i32_0 : i32, i32
  }
}

module attributes {stable_mosaic.version = 11 : i64} {
  func.func @_convT_bn_prelu_kernel(%arg0: i32, %arg1: memref<400x1568xf32, #tpu.memory_space<vmem>>, %arg2: memref<8x400xf32, #tpu.memory_space<vmem>>, %arg3: memref<8x3xf32, #tpu.memory_space<vmem>>, %arg4: memref<8x1568xf32, #tpu.memory_space<vmem>>) attributes {dimension_semantics = [#tpu.dimension_semantics<arbitrary>], iteration_bounds = array<i64: 1>, scalar_prefetch = 0 : i64, scratch_operands = 0 : i64, tpu.core_type = #tpu.core_type<tc>, window_params = [{pipeline_mode = #tpu.pipeline_mode<synchronous>, transform_indices = @transform_0, window_bounds = array<i64: 400, 1568>}, {pipeline_mode = #tpu.pipeline_mode<synchronous>, transform_indices = @transform_1, window_bounds = array<i64: 8, 400>}, {pipeline_mode = #tpu.pipeline_mode<synchronous>, transform_indices = @transform_2, window_bounds = array<i64: 8, 3>}, {pipeline_mode = #tpu.pipeline_mode<synchronous>, transform_indices = @transform_3, window_bounds = array<i64: 8, 1568>}]} {
    %c0 = arith.constant 0 : index
    %c0_0 = arith.constant 0 : index
    %0 = vector.load %arg2[%c0, %c0_0] : memref<8x400xf32, #tpu.memory_space<vmem>>, vector<8x400xf32>
    %c0_1 = arith.constant 0 : index
    %c0_2 = arith.constant 0 : index
    %1 = vector.load %arg1[%c0_1, %c0_2] : memref<400x1568xf32, #tpu.memory_space<vmem>>, vector<400x1568xf32>
    %cst = arith.constant dense<0.000000e+00> : vector<8x1568xf32>
    %2 = tpu.matmul %0, %1, %cst {dimension_numbers = #tpu.dot_dimension_numbers<[1], [0], [0], [1], [0, 0, 1, 1], [], []>} : vector<8x400xf32>, vector<400x1568xf32>, vector<8x1568xf32> -> vector<8x1568xf32>
    %cst_3 = arith.constant dense<0.000000e+00> : vector<8xf32>
    %3 = vector.multi_reduction <add>, %2, %cst_3 [1] : vector<8x1568xf32> to vector<8xf32>
    %4 = vector.shape_cast %3 : vector<8xf32> to vector<8x1xf32>
    %5 = arith.mulf %2, %2 : vector<8x1568xf32>
    %cst_4 = arith.constant dense<0.000000e+00> : vector<8xf32>
    %6 = vector.multi_reduction <add>, %5, %cst_4 [1] : vector<8x1568xf32> to vector<8xf32>
    %7 = vector.shape_cast %6 : vector<8xf32> to vector<8x1xf32>
    %cst_5 = arith.constant 6.37755089E-4 : f32
    %8 = vector.broadcast %cst_5 : f32 to vector<8x1xf32>
    %9 = arith.mulf %4, %8 : vector<8x1xf32>
    %cst_6 = arith.constant 6.37755089E-4 : f32
    %10 = vector.broadcast %cst_6 : f32 to vector<8x1xf32>
    %11 = arith.mulf %7, %10 : vector<8x1xf32>
    %12 = arith.mulf %9, %9 : vector<8x1xf32>
    %13 = arith.subf %11, %12 : vector<8x1xf32>
    %c0_7 = arith.constant 0 : index
    %c0_8 = arith.constant 0 : index
    %14 = vector.load %arg3[%c0_7, %c0_8] : memref<8x3xf32, #tpu.memory_space<vmem>>, vector<8x1xf32>
    %c0_9 = arith.constant 0 : index
    %c1 = arith.constant 1 : index
    %15 = vector.load %arg3[%c0_9, %c1] : memref<8x3xf32, #tpu.memory_space<vmem>>, vector<8x1xf32>
    %c0_10 = arith.constant 0 : index
    %c2 = arith.constant 2 : index
    %16 = vector.load %arg3[%c0_10, %c2] : memref<8x3xf32, #tpu.memory_space<vmem>>, vector<8x1xf32>
    %cst_11 = arith.constant 9.99999974E-6 : f32
    %17 = vector.broadcast %cst_11 : f32 to vector<8x1xf32>
    %18 = arith.addf %13, %17 : vector<8x1xf32>
    %19 = math.rsqrt %18 : vector<8x1xf32>
    %20 = arith.mulf %14, %19 : vector<8x1xf32>
    %21 = arith.mulf %9, %20 : vector<8x1xf32>
    %22 = arith.subf %15, %21 : vector<8x1xf32>
    %23 = vector.broadcast %20 : vector<8x1xf32> to vector<8x1568xf32>
    %24 = arith.mulf %2, %23 : vector<8x1568xf32>
    %25 = vector.broadcast %22 : vector<8x1xf32> to vector<8x1568xf32>
    %26 = arith.addf %24, %25 : vector<8x1568xf32>
    %cst_12 = arith.constant 0.000000e+00 : f32
    %27 = vector.broadcast %cst_12 : f32 to vector<8x1568xf32>
    %28 = arith.cmpf oge, %26, %27 : vector<8x1568xf32>
    %29 = vector.broadcast %16 : vector<8x1xf32> to vector<8x1568xf32>
    %30 = arith.mulf %29, %26 : vector<8x1568xf32>
    %31 = arith.select %28, %26, %30 : vector<8x1568xi1>, vector<8x1568xf32>
    %c0_13 = arith.constant 0 : index
    %c0_14 = arith.constant 0 : index
    %32 = vector.load %arg4[%c0_13, %c0_14] : memref<8x1568xf32, #tpu.memory_space<vmem>>, vector<8x1568xf32>
    tpu.vector_store %arg4[%c0_13, %c0_14], %31 {strides = array<i32>} : memref<8x1568xf32, #tpu.memory_space<vmem>>, vector<8x1568xf32>,
    return
  }
  func.func @transform_0(%arg0: i32) -> (i32, i32) {
    %c0_i32 = arith.constant 0 : i32
    %c0_i32_0 = arith.constant 0 : i32
    %c0_i32_1 = arith.constant 0 : i32
    return %c0_i32, %c0_i32_0 : i32, i32
  }
  func.func @transform_1(%arg0: i32) -> (i32, i32) {
    %c0_i32 = arith.constant 0 : i32
    %c0_i32_0 = arith.constant 0 : i32
    %c0_i32_1 = arith.constant 0 : i32
    return %c0_i32, %c0_i32_0 : i32, i32
  }
  func.func @transform_2(%arg0: i32) -> (i32, i32) {
    %c0_i32 = arith.constant 0 : i32
    %c0_i32_0 = arith.constant 0 : i32
    %c0_i32_1 = arith.constant 0 : i32
    return %c0_i32, %c0_i32_0 : i32, i32
  }
  func.func @transform_3(%arg0: i32) -> (i32, i32) {
    %c0_i32 = arith.constant 0 : i32
    %c0_i32_0 = arith.constant 0 : i32
    %c0_i32_1 = arith.constant 0 : i32
    return %c0_i32, %c0_i32_0 : i32, i32
  }
}

module attributes {stable_mosaic.version = 11 : i64} {
  func.func @_convT_bn_prelu_kernel(%arg0: i32, %arg1: memref<200x1568xf32, #tpu.memory_space<vmem>>, %arg2: memref<8x200xf32, #tpu.memory_space<vmem>>, %arg3: memref<8x3xf32, #tpu.memory_space<vmem>>, %arg4: memref<8x1568xf32, #tpu.memory_space<vmem>>) attributes {dimension_semantics = [#tpu.dimension_semantics<arbitrary>], iteration_bounds = array<i64: 1>, scalar_prefetch = 0 : i64, scratch_operands = 0 : i64, tpu.core_type = #tpu.core_type<tc>, window_params = [{pipeline_mode = #tpu.pipeline_mode<synchronous>, transform_indices = @transform_0, window_bounds = array<i64: 200, 1568>}, {pipeline_mode = #tpu.pipeline_mode<synchronous>, transform_indices = @transform_1, window_bounds = array<i64: 8, 200>}, {pipeline_mode = #tpu.pipeline_mode<synchronous>, transform_indices = @transform_2, window_bounds = array<i64: 8, 3>}, {pipeline_mode = #tpu.pipeline_mode<synchronous>, transform_indices = @transform_3, window_bounds = array<i64: 8, 1568>}]} {
    %c0 = arith.constant 0 : index
    %c0_0 = arith.constant 0 : index
    %0 = vector.load %arg2[%c0, %c0_0] : memref<8x200xf32, #tpu.memory_space<vmem>>, vector<8x200xf32>
    %c0_1 = arith.constant 0 : index
    %c0_2 = arith.constant 0 : index
    %1 = vector.load %arg1[%c0_1, %c0_2] : memref<200x1568xf32, #tpu.memory_space<vmem>>, vector<200x1568xf32>
    %cst = arith.constant dense<0.000000e+00> : vector<8x1568xf32>
    %2 = tpu.matmul %0, %1, %cst {dimension_numbers = #tpu.dot_dimension_numbers<[1], [0], [0], [1], [0, 0, 1, 1], [], []>} : vector<8x200xf32>, vector<200x1568xf32>, vector<8x1568xf32> -> vector<8x1568xf32>
    %cst_3 = arith.constant dense<0.000000e+00> : vector<8xf32>
    %3 = vector.multi_reduction <add>, %2, %cst_3 [1] : vector<8x1568xf32> to vector<8xf32>
    %4 = vector.shape_cast %3 : vector<8xf32> to vector<8x1xf32>
    %5 = arith.mulf %2, %2 : vector<8x1568xf32>
    %cst_4 = arith.constant dense<0.000000e+00> : vector<8xf32>
    %6 = vector.multi_reduction <add>, %5, %cst_4 [1] : vector<8x1568xf32> to vector<8xf32>
    %7 = vector.shape_cast %6 : vector<8xf32> to vector<8x1xf32>
    %cst_5 = arith.constant 6.37755089E-4 : f32
    %8 = vector.broadcast %cst_5 : f32 to vector<8x1xf32>
    %9 = arith.mulf %4, %8 : vector<8x1xf32>
    %cst_6 = arith.constant 6.37755089E-4 : f32
    %10 = vector.broadcast %cst_6 : f32 to vector<8x1xf32>
    %11 = arith.mulf %7, %10 : vector<8x1xf32>
    %12 = arith.mulf %9, %9 : vector<8x1xf32>
    %13 = arith.subf %11, %12 : vector<8x1xf32>
    %c0_7 = arith.constant 0 : index
    %c0_8 = arith.constant 0 : index
    %14 = vector.load %arg3[%c0_7, %c0_8] : memref<8x3xf32, #tpu.memory_space<vmem>>, vector<8x1xf32>
    %c0_9 = arith.constant 0 : index
    %c1 = arith.constant 1 : index
    %15 = vector.load %arg3[%c0_9, %c1] : memref<8x3xf32, #tpu.memory_space<vmem>>, vector<8x1xf32>
    %c0_10 = arith.constant 0 : index
    %c2 = arith.constant 2 : index
    %16 = vector.load %arg3[%c0_10, %c2] : memref<8x3xf32, #tpu.memory_space<vmem>>, vector<8x1xf32>
    %cst_11 = arith.constant 9.99999974E-6 : f32
    %17 = vector.broadcast %cst_11 : f32 to vector<8x1xf32>
    %18 = arith.addf %13, %17 : vector<8x1xf32>
    %19 = math.rsqrt %18 : vector<8x1xf32>
    %20 = arith.mulf %14, %19 : vector<8x1xf32>
    %21 = arith.mulf %9, %20 : vector<8x1xf32>
    %22 = arith.subf %15, %21 : vector<8x1xf32>
    %23 = vector.broadcast %20 : vector<8x1xf32> to vector<8x1568xf32>
    %24 = arith.mulf %2, %23 : vector<8x1568xf32>
    %25 = vector.broadcast %22 : vector<8x1xf32> to vector<8x1568xf32>
    %26 = arith.addf %24, %25 : vector<8x1568xf32>
    %cst_12 = arith.constant 0.000000e+00 : f32
    %27 = vector.broadcast %cst_12 : f32 to vector<8x1568xf32>
    %28 = arith.cmpf oge, %26, %27 : vector<8x1568xf32>
    %29 = vector.broadcast %16 : vector<8x1xf32> to vector<8x1568xf32>
    %30 = arith.mulf %29, %26 : vector<8x1568xf32>
    %31 = arith.select %28, %26, %30 : vector<8x1568xi1>, vector<8x1568xf32>
    %c0_13 = arith.constant 0 : index
    %c0_14 = arith.constant 0 : index
    %32 = vector.load %arg4[%c0_13, %c0_14] : memref<8x1568xf32, #tpu.memory_space<vmem>>, vector<8x1568xf32>
    tpu.vector_store %arg4[%c0_13, %c0_14], %31 {strides = array<i32>} : memref<8x1568xf32, #tpu.memory_space<vmem>>, vector<8x1568xf32>,
    return
  }
  func.func @transform_0(%arg0: i32) -> (i32, i32) {
    %c0_i32 = arith.constant 0 : i32
    %c0_i32_0 = arith.constant 0 : i32
    %c0_i32_1 = arith.constant 0 : i32
    return %c0_i32, %c0_i32_0 : i32, i32
  }
  func.func @transform_1(%arg0: i32) -> (i32, i32) {
    %c0_i32 = arith.constant 0 : i32
    %c0_i32_0 = arith.constant 0 : i32
    %c0_i32_1 = arith.constant 0 : i32
    return %c0_i32, %c0_i32_0 : i32, i32
  }
  func.func @transform_2(%arg0: i32) -> (i32, i32) {
    %c0_i32 = arith.constant 0 : i32
    %c0_i32_0 = arith.constant 0 : i32
    %c0_i32_1 = arith.constant 0 : i32
    return %c0_i32, %c0_i32_0 : i32, i32
  }
  func.func @transform_3(%arg0: i32) -> (i32, i32) {
    %c0_i32 = arith.constant 0 : i32
    %c0_i32_0 = arith.constant 0 : i32
    %c0_i32_1 = arith.constant 0 : i32
    return %c0_i32, %c0_i32_0 : i32, i32
  }
}

module attributes {stable_mosaic.version = 11 : i64} {
  func.func @_convT_bias_sigmoid_kernel(%arg0: i32, %arg1: memref<72x1568xf32, #tpu.memory_space<vmem>>, %arg2: memref<1x72xf32, #tpu.memory_space<vmem>>, %arg3: memref<1x1xf32, #tpu.memory_space<vmem>>, %arg4: memref<1x1568xf32, #tpu.memory_space<vmem>>) attributes {dimension_semantics = [#tpu.dimension_semantics<arbitrary>], iteration_bounds = array<i64: 1>, scalar_prefetch = 0 : i64, scratch_operands = 0 : i64, tpu.core_type = #tpu.core_type<tc>, window_params = [{pipeline_mode = #tpu.pipeline_mode<synchronous>, transform_indices = @transform_0, window_bounds = array<i64: 72, 1568>}, {pipeline_mode = #tpu.pipeline_mode<synchronous>, transform_indices = @transform_1, window_bounds = array<i64: 1, 72>}, {pipeline_mode = #tpu.pipeline_mode<synchronous>, transform_indices = @transform_2, window_bounds = array<i64: 1, 1>}, {pipeline_mode = #tpu.pipeline_mode<synchronous>, transform_indices = @transform_3, window_bounds = array<i64: 1, 1568>}]} {
    %c0 = arith.constant 0 : index
    %c0_0 = arith.constant 0 : index
    %0 = vector.load %arg2[%c0, %c0_0] : memref<1x72xf32, #tpu.memory_space<vmem>>, vector<1x72xf32>
    %c0_1 = arith.constant 0 : index
    %c0_2 = arith.constant 0 : index
    %1 = vector.load %arg1[%c0_1, %c0_2] : memref<72x1568xf32, #tpu.memory_space<vmem>>, vector<72x1568xf32>
    %cst = arith.constant dense<0.000000e+00> : vector<1x1568xf32>
    %2 = tpu.matmul %0, %1, %cst {dimension_numbers = #tpu.dot_dimension_numbers<[1], [0], [0], [1], [0, 0, 1, 1], [], []>} : vector<1x72xf32>, vector<72x1568xf32>, vector<1x1568xf32> -> vector<1x1568xf32>
    %c0_3 = arith.constant 0 : index
    %c0_4 = arith.constant 0 : index
    %3 = vector.load %arg3[%c0_3, %c0_4] : memref<1x1xf32, #tpu.memory_space<vmem>>, vector<1x1xf32>
    %4 = vector.broadcast %3 : vector<1x1xf32> to vector<1x1568xf32>
    %5 = arith.addf %2, %4 : vector<1x1568xf32>
    %6 = arith.negf %5 : vector<1x1568xf32>
    %7 = math.exp %6 : vector<1x1568xf32>
    %cst_5 = arith.constant 1.000000e+00 : f32
    %8 = vector.broadcast %cst_5 : f32 to vector<1x1568xf32>
    %9 = arith.addf %8, %7 : vector<1x1568xf32>
    %10 = arith.divf %8, %9 : vector<1x1568xf32>
    %c0_6 = arith.constant 0 : index
    %c0_7 = arith.constant 0 : index
    %11 = vector.load %arg4[%c0_6, %c0_7] : memref<1x1568xf32, #tpu.memory_space<vmem>>, vector<1x1568xf32>
    tpu.vector_store %arg4[%c0_6, %c0_7], %10 {strides = array<i32>} : memref<1x1568xf32, #tpu.memory_space<vmem>>, vector<1x1568xf32>,
    return
  }
  func.func @transform_0(%arg0: i32) -> (i32, i32) {
    %c0_i32 = arith.constant 0 : i32
    %c0_i32_0 = arith.constant 0 : i32
    %c0_i32_1 = arith.constant 0 : i32
    return %c0_i32, %c0_i32_0 : i32, i32
  }
  func.func @transform_1(%arg0: i32) -> (i32, i32) {
    %c0_i32 = arith.constant 0 : i32
    %c0_i32_0 = arith.constant 0 : i32
    %c0_i32_1 = arith.constant 0 : i32
    return %c0_i32, %c0_i32_0 : i32, i32
  }
  func.func @transform_2(%arg0: i32) -> (i32, i32) {
    %c0_i32 = arith.constant 0 : i32
    %c0_i32_0 = arith.constant 0 : i32
    %c0_i32_1 = arith.constant 0 : i32
    return %c0_i32, %c0_i32_0 : i32, i32
  }
  func.func @transform_3(%arg0: i32) -> (i32, i32) {
    %c0_i32 = arith.constant 0 : i32
    %c0_i32_0 = arith.constant 0 : i32
    %c0_i32_1 = arith.constant 0 : i32
    return %c0_i32, %c0_i32_0 : i32, i32
  }
}

</mosaic_0001>

<llo_original>
// kernel: vae_conv_forward.12
$region0: #{vae_conv_forward.12}
  #allocation0 [shape = 'u32[]', space=smem, size = 0x4, offset = 0x4, fixed_abs, tag = 'smem constant byte address 0x4 - core index']
  #allocation1 [shape = 'u32[144,128]{1,0:T(1,128)}', space=vmem, size = 0x12000, scoped, tag = 'internal scratch']
  %s0 = inlined_call_operand.vmem [shape: f32[9,1568], index: 0, kind: input, shape index: {}]
  %s1 = inlined_call_operand.hbm [shape: f32[8,9], index: 1, kind: input, shape index: {}]
  %s2 = inlined_call_operand.vmem [shape: f32[8,3], index: 2, kind: input, shape index: {}]
  %s3 = inlined_call_operand.vmem [shape: f32[8,1568], index: 3, kind: output, shape index: {}]
  %s4 = sld [smem:[#allocation0]]
  $region26: #{vae_conv_forward.12} parent=0
    _
  %s6 = ssub.s32 1, %s4
  %s7 = scalar_select 0, %s6, %s4
  $region1: #{vae_conv_forward.12} parent=0
    #allocation2 [shape = 'u8[4096]{0}', space=vmem, size = 0x1000, scoped, tag = 'input window, operand 1, single buffered']
    #allocation3 [shape = 's32[1]{0}', space=sflag, size = 0x4, scoped, tag = 'scoped memory for vae_conv_forward.12']
    %8 = vsyncpa [#allocation3], 0
    // Predicated region
    $region2: #{vae_conv_forward.12} parent=1 // pred_check
      _
    $region3: #{vae_conv_forward.12} parent=1 // pred_check_branch
      %10 = sbr.rel (0) target = $region5
    $region4: #{vae_conv_forward.12} parent=1 // pred_region
      _
    $region5: #{vae_conv_forward.12} parent=1 // pred_fallthru
      _
    // Predicated region
    $region6: #{vae_conv_forward.12} parent=1 // pred_check
      _
    $region7: #{vae_conv_forward.12} parent=1 // pred_check_branch
      %12 = sbr.rel (0) target = $region9
    $region8: #{vae_conv_forward.12} parent=1 // pred_region
      %s14 = ssub.s32 128, 128
      %15 = vsyncadd [#allocation3], %s14
      %s17 = sshll.u32 [#allocation2], 4
      %s18 = int_to_ptr.vmem [resolvable:$true] %s17
      %20 = dma.hbm_to_vmem [thread:$0]  %s1, 128, %s18, [#allocation3]
    $region9: #{vae_conv_forward.12} parent=1 // pred_fallthru
      _
    // Predicated region
    $region10: #{vae_conv_forward.12} parent=1 // pred_check
      _
    $region11: #{vae_conv_forward.12} parent=1 // pred_check_branch
      %22 = sbr.rel (0) target = $region13
    $region12: #{vae_conv_forward.12} parent=1 // pred_region
      _
    $region13: #{vae_conv_forward.12} parent=1 // pred_fallthru
      _
    // Predicated region
    $region14: #{vae_conv_forward.12} parent=1 // pred_check
      _
    $region15: #{vae_conv_forward.12} parent=1 // pred_check_branch
      %24 = sbr.rel (0) target = $region17
    $region16: #{vae_conv_forward.12} parent=1 // pred_region
      %25 = dma.done [#allocation3], 128
    $region17: #{vae_conv_forward.12} parent=1 // pred_fallthru
      _
    %v26 = vld [vmem:[#allocation2] sm:$0xff]
    %v27 = vld [vmem:[%s0] sm:$0xff]
    %v28 = vld [vmem:[%s0 + $0x8] sm:$0xff]
    %v29 = vld [vmem:[%s0 + $0x10] sm:$0xff]
    %v30 = vld [vmem:[%s0 + $0x18] sm:$0xff]
    %v31 = vld [vmem:[%s0 + $0x20] sm:$0xff]
    %v32 = vld [vmem:[%s0 + $0x28] sm:$0xff]
    %v33 = vld [vmem:[%s0 + $0x30] sm:$0xff]
    %v34 = vld [vmem:[%s0 + $0x38] sm:$0xff]
    %v35 = vld [vmem:[%s0 + $0x40] sm:$0xff]
    %v36 = vld [vmem:[%s0 + $0x48] sm:$0xff]
    %v37 = vld [vmem:[%s0 + $0x50] sm:$0xff]
    %v38 = vld [vmem:[%s0 + $0x58] sm:$0xff]
    %v39 = vld [vmem:[%s0 + $0x60] sm:$0xff]
    %v40 = vld [vmem:[%s0 + $0x68] sm:$0x1]
    %v41 = vld [vmem:[%s0 + $0x70] sm:$0x1]
    %v42 = vld [vmem:[%s0 + $0x78] sm:$0x1]
    %v43 = vld [vmem:[%s0 + $0x80] sm:$0x1]
    %v44 = vld [vmem:[%s0 + $0x88] sm:$0x1]
    %v45 = vld [vmem:[%s0 + $0x90] sm:$0x1]
    %v46 = vld [vmem:[%s0 + $0x98] sm:$0x1]
    %v47 = vld [vmem:[%s0 + $0xa0] sm:$0x1]
    %v48 = vld [vmem:[%s0 + $0xa8] sm:$0x1]
    %v49 = vld [vmem:[%s0 + $0xb0] sm:$0x1]
    %v50 = vld [vmem:[%s0 + $0xb8] sm:$0x1]
    %v51 = vld [vmem:[%s0 + $0xc0] sm:$0x1]
    %v52 = vld [vmem:[%s0 + $0xc8] sm:$0x1]
    %vm53 = vcmask 72704
    %v55 = vsel %vm53, %v26, 0
    %vm57 = vcmask 1040384
    %v59 = vsel %vm57, %v40, 0
    %v62 = vsel %vm57, %v41, 0
    %v65 = vsel %vm57, %v42, 0
    %v68 = vsel %vm57, %v43, 0
    %v71 = vsel %vm57, %v44, 0
    %v74 = vsel %vm57, %v45, 0
    %v77 = vsel %vm57, %v46, 0
    %v80 = vsel %vm57, %v47, 0
    %v83 = vsel %vm57, %v48, 0
    %v86 = vsel %vm57, %v49, 0
    %v89 = vsel %vm57, %v50, 0
    %v92 = vsel %vm57, %v51, 0
    %v95 = vsel %vm57, %v52, 0
    %97 = vmatprep.subr.mxu0 %v28
    %98 = vmatpush1.msra.mxu0 %v27
    %99 = vmatprep.subr.mxu0 %v62
    %100 = vmatpush1.msra.mxu0 %v59
    %101 = vmatprep.subr.mxu0 0.0
    %102 = vmatpush1.msra.mxu0 0.0
    %103 = vmatprep.subr.mxu0 0.0
    %104 = vmatpush1.msra.mxu0 0.0
    %105 = vmatprep.subr.mxu0 0.0
    %106 = vmatpush1.msra.mxu0 0.0
    %107 = vmatprep.subr.mxu0 0.0
    %108 = vmatpush1.msra.mxu0 0.0
    %109 = vmatprep.subr.mxu0 0.0
    %110 = vmatpush1.msra.mxu0 0.0
    %111 = vmatprep.subr.mxu0 0.0
    %112 = vmatpush1.msra.mxu0 0.0
    %113 = vmatprep.subr.mxu0 0.0
    %114 = vmatpush1.msra.mxu0 0.0
    %115 = vmatprep.subr.mxu0 0.0
    %116 = vmatpush1.msra.mxu0 0.0
    %117 = vmatprep.subr.mxu0 0.0
    %118 = vmatpush1.msra.mxu0 0.0
    %119 = vmatprep.subr.mxu0 0.0
    %120 = vmatpush1.msra.mxu0 0.0
    %121 = vmatprep.subr.mxu0 0.0
    %122 = vmatpush1.msra.mxu0 0.0
    %123 = vmatprep.subr.mxu0 0.0
    %124 = vmatpush1.msra.mxu0 0.0
    %125 = vmatprep.subr.mxu0 0.0
    %126 = vmatpush1.msra.mxu0 0.0
    %127 = vmatprep.subr.mxu0 0.0
    %128 = vmatpush1.msra.mxu0 0.0
    %129 = vmatprep.subr.mxu0 0.0
    %130 = vmatpush1.msra.mxu0 0.0
    %131 = vmatprep.subr.mxu0 0.0
    %132 = vmatpush1.msra.mxu0 0.0
    %133 = vmatprep.subr.mxu0 0.0
    %134 = vmatpush1.msra.mxu0 0.0
    %135 = vmatprep.subr.mxu0 0.0
    %136 = vmatpush1.msra.mxu0 0.0
    %137 = vmatprep.subr.mxu0 0.0
    %138 = vmatpush1.msra.mxu0 0.0
    %139 = vmatprep.subr.mxu0 0.0
    %140 = vmatpush1.msra.mxu0 0.0
    %141 = vmatprep.subr.mxu0 0.0
    %142 = vmatpush1.msra.mxu0 0.0
    %143 = vmatprep.subr.mxu0 0.0
    %144 = vmatpush1.msra.mxu0 0.0
    %145 = vmatprep.subr.mxu0 0.0
    %146 = vmatpush1.msra.mxu0 0.0
    %147 = vmatprep.subr.mxu0 0.0
    %148 = vmatpush1.msra.mxu0 0.0
    %149 = vmatprep.subr.mxu0 0.0
    %150 = vmatpush1.msra.mxu0 0.0
    %151 = vmatprep.subr.mxu0 0.0
    %152 = vmatpush1.msra.mxu0 0.0
    %153 = vmatprep.subr.mxu0 0.0
    %154 = vmatpush1.msra.mxu0 0.0
    %155 = vmatprep.subr.mxu0 0.0
    %156 = vmatpush1.msra.mxu0 0.0
    %157 = vmatprep.subr.mxu0 0.0
    %158 = vmatpush1.msra.mxu0 0.0
    %159 = vmatprep.subr.mxu0 0.0
    %160 = vmatpush1.msra.mxu0 0.0
    %161 = vmatprep.mubr.f32.mxu0 0.0
    %162 = vmatmul.mubr.f32.gmra.mrb[0].mxu0 %v55
    %v163 = vpop.f32.mrb[0].mxu0
    %v164 = vadd.f32 0.0, %v163
    %v165 = vpop.f32.mrb[0].mxu0
    %v166 = vadd.f32 0.0, %v165
    %167 = vdwg.mxu0
    %168 = vmatprep.subr.mxu0 %v30
    %169 = vmatpush1.msra.mxu0 %v29
    %170 = vmatprep.subr.mxu0 %v68
    %171 = vmatpush1.msra.mxu0 %v65
    %172 = vmatprep.subr.mxu0 0.0
    %173 = vmatpush1.msra.mxu0 0.0
    %174 = vmatprep.subr.mxu0 0.0
    %175 = vmatpush1.msra.mxu0 0.0
    %176 = vmatprep.subr.mxu0 0.0
    %177 = vmatpush1.msra.mxu0 0.0
    %178 = vmatprep.subr.mxu0 0.0
    %179 = vmatpush1.msra.mxu0 0.0
    %180 = vmatprep.subr.mxu0 0.0
    %181 = vmatpush1.msra.mxu0 0.0
    %182 = vmatprep.subr.mxu0 0.0
    %183 = vmatpush1.msra.mxu0 0.0
    %184 = vmatprep.subr.mxu0 0.0
    %185 = vmatpush1.msra.mxu0 0.0
    %186 = vmatprep.subr.mxu0 0.0
    %187 = vmatpush1.msra.mxu0 0.0
    %188 = vmatprep.subr.mxu0 0.0
    %189 = vmatpush1.msra.mxu0 0.0
    %190 = vmatprep.subr.mxu0 0.0
    %191 = vmatpush1.msra.mxu0 0.0
    %192 = vmatprep.subr.mxu0 0.0
    %193 = vmatpush1.msra.mxu0 0.0
    %194 = vmatprep.subr.mxu0 0.0
    %195 = vmatpush1.msra.mxu0 0.0
    %196 = vmatprep.subr.mxu0 0.0
    %197 = vmatpush1.msra.mxu0 0.0
    %198 = vmatprep.subr.mxu0 0.0
    %199 = vmatpush1.msra.mxu0 0.0
    %200 = vmatprep.subr.mxu0 0.0
    %201 = vmatpush1.msra.mxu0 0.0
    %202 = vmatprep.subr.mxu0 0.0
    %203 = vmatpush1.msra.mxu0 0.0
    %204 = vmatprep.subr.mxu0 0.0
    %205 = vmatpush1.msra.mxu0 0.0
    %206 = vmatprep.subr.mxu0 0.0
    %207 = vmatpush1.msra.mxu0 0.0
    %208 = vmatprep.subr.mxu0 0.0
    %209 = vmatpush1.msra.mxu0 0.0
    %210 = vmatprep.subr.mxu0 0.0
    %211 = vmatpush1.msra.mxu0 0.0
    %212 = vmatprep.subr.mxu0 0.0
    %213 = vmatpush1.msra.mxu0 0.0
    %214 = vmatprep.subr.mxu0 0.0
    %215 = vmatpush1.msra.mxu0 0.0
    %216 = vmatprep.subr.mxu0 0.0
    %217 = vmatpush1.msra.mxu0 0.0
    %218 = vmatprep.subr.mxu0 0.0
    %219 = vmatpush1.msra.mxu0 0.0
    %220 = vmatprep.subr.mxu0 0.0
    %221 = vmatpush1.msra.mxu0 0.0
    %222 = vmatprep.subr.mxu0 0.0
    %223 = vmatpush1.msra.mxu0 0.0
    %224 = vmatprep.subr.mxu0 0.0
    %225 = vmatpush1.msra.mxu0 0.0
    %226 = vmatprep.subr.mxu0 0.0
    %227 = vmatpush1.msra.mxu0 0.0
    %228 = vmatprep.subr.mxu0 0.0
    %229 = vmatpush1.msra.mxu0 0.0
    %230 = vmatprep.subr.mxu0 0.0
    %231 = vmatpush1.msra.mxu0 0.0
    %232 = vmatprep.mubr.f32.mxu0 0.0
    %233 = vmatmul.mubr.f32.gmra.mrb[0].mxu0 %v55
    %v234 = vpop.f32.mrb[0].mxu0
    %v235 = vadd.f32 0.0, %v234
    %v236 = vpop.f32.mrb[0].mxu0
    %v237 = vadd.f32 0.0, %v236
    %238 = vdwg.mxu0
    %239 = vmatprep.subr.mxu0 %v32
    %240 = vmatpush1.msra.mxu0 %v31
    %241 = vmatprep.subr.mxu0 %v74
    %242 = vmatpush1.msra.mxu0 %v71
    %243 = vmatprep.subr.mxu0 0.0
    %244 = vmatpush1.msra.mxu0 0.0
    %245 = vmatprep.subr.mxu0 0.0
    %246 = vmatpush1.msra.mxu0 0.0
    %247 = vmatprep.subr.mxu0 0.0
    %248 = vmatpush1.msra.mxu0 0.0
    %249 = vmatprep.subr.mxu0 0.0
    %250 = vmatpush1.msra.mxu0 0.0
    %251 = vmatprep.subr.mxu0 0.0
    %252 = vmatpush1.msra.mxu0 0.0
    %253 = vmatprep.subr.mxu0 0.0
    %254 = vmatpush1.msra.mxu0 0.0
    %255 = vmatprep.subr.mxu0 0.0
    %256 = vmatpush1.msra.mxu0 0.0
    %257 = vmatprep.subr.mxu0 0.0
    %258 = vmatpush1.msra.mxu0 0.0
    %259 = vmatprep.subr.mxu0 0.0
    %260 = vmatpush1.msra.mxu0 0.0
    %261 = vmatprep.subr.mxu0 0.0
    %262 = vmatpush1.msra.mxu0 0.0
    %263 = vmatprep.subr.mxu0 0.0
    %264 = vmatpush1.msra.mxu0 0.0
    %265 = vmatprep.subr.mxu0 0.0
    %266 = vmatpush1.msra.mxu0 0.0
    %267 = vmatprep.subr.mxu0 0.0
    %268 = vmatpush1.msra.mxu0 0.0
    %269 = vmatprep.subr.mxu0 0.0
    %270 = vmatpush1.msra.mxu0 0.0
    %271 = vmatprep.subr.mxu0 0.0
    %272 = vmatpush1.msra.mxu0 0.0
    %273 = vmatprep.subr.mxu0 0.0
    %274 = vmatpush1.msra.mxu0 0.0
    %275 = vmatprep.subr.mxu0 0.0
    %276 = vmatpush1.msra.mxu0 0.0
    %277 = vmatprep.subr.mxu0 0.0
    %278 = vmatpush1.msra.mxu0 0.0
    %279 = vmatprep.subr.mxu0 0.0
    %280 = vmatpush1.msra.mxu0 0.0
    %281 = vmatprep.subr.mxu0 0.0
    %282 = vmatpush1.msra.mxu0 0.0
    %283 = vmatprep.subr.mxu0 0.0
    %284 = vmatpush1.msra.mxu0 0.0
    %285 = vmatprep.subr.mxu0 0.0
    %286 = vmatpush1.msra.mxu0 0.0
    %287 = vmatprep.subr.mxu0 0.0
    %288 = vmatpush1.msra.mxu0 0.0
    %289 = vmatprep.subr.mxu0 0.0
    %290 = vmatpush1.msra.mxu0 0.0
    %291 = vmatprep.subr.mxu0 0.0
    %292 = vmatpush1.msra.mxu0 0.0
    %293 = vmatprep.subr.mxu0 0.0
    %294 = vmatpush1.msra.mxu0 0.0
    %295 = vmatprep.subr.mxu0 0.0
    %296 = vmatpush1.msra.mxu0 0.0
    %297 = vmatprep.subr.mxu0 0.0
    %298 = vmatpush1.msra.mxu0 0.0
    %299 = vmatprep.subr.mxu0 0.0
    %300 = vmatpush1.msra.mxu0 0.0
    %301 = vmatprep.subr.mxu0 0.0
    %302 = vmatpush1.msra.mxu0 0.0
    %303 = vmatprep.mubr.f32.mxu0 0.0
    %304 = vmatmul.mubr.f32.gmra.mrb[0].mxu0 %v55
    %v305 = vpop.f32.mrb[0].mxu0
    %v306 = vadd.f32 0.0, %v305
    %v307 = vpop.f32.mrb[0].mxu0
    %v308 = vadd.f32 0.0, %v307
    %309 = vdwg.mxu0
    %310 = vmatprep.subr.mxu0 %v34
    %311 = vmatpush1.msra.mxu0 %v33
    %312 = vmatprep.subr.mxu0 %v80
    %313 = vmatpush1.msra.mxu0 %v77
    %314 = vmatprep.subr.mxu0 0.0
    %315 = vmatpush1.msra.mxu0 0.0
    %316 = vmatprep.subr.mxu0 0.0
    %317 = vmatpush1.msra.mxu0 0.0
    %318 = vmatprep.subr.mxu0 0.0
    %319 = vmatpush1.msra.mxu0 0.0
    %320 = vmatprep.subr.mxu0 0.0
    %321 = vmatpush1.msra.mxu0 0.0
    %322 = vmatprep.subr.mxu0 0.0
    %323 = vmatpush1.msra.mxu0 0.0
    %324 = vmatprep.subr.mxu0 0.0
    %325 = vmatpush1.msra.mxu0 0.0
    %326 = vmatprep.subr.mxu0 0.0
    %327 = vmatpush1.msra.mxu0 0.0
    %328 = vmatprep.subr.mxu0 0.0
    %329 = vmatpush1.msra.mxu0 0.0
    %330 = vmatprep.subr.mxu0 0.0
    %331 = vmatpush1.msra.mxu0 0.0
    %332 = vmatprep.subr.mxu0 0.0
    %333 = vmatpush1.msra.mxu0 0.0
    %334 = vmatprep.subr.mxu0 0.0
    %335 = vmatpush1.msra.mxu0 0.0
    %336 = vmatprep.subr.mxu0 0.0
    %337 = vmatpush1.msra.mxu0 0.0
    %338 = vmatprep.subr.mxu0 0.0
    %339 = vmatpush1.msra.mxu0 0.0
    %340 = vmatprep.subr.mxu0 0.0
    %341 = vmatpush1.msra.mxu0 0.0
    %342 = vmatprep.subr.mxu0 0.0
    %343 = vmatpush1.msra.mxu0 0.0
    %344 = vmatprep.subr.mxu0 0.0
    %345 = vmatpush1.msra.mxu0 0.0
    %346 = vmatprep.subr.mxu0 0.0
    %347 = vmatpush1.msra.mxu0 0.0
    %348 = vmatprep.subr.mxu0 0.0
    %349 = vmatpush1.msra.mxu0 0.0
    %350 = vmatprep.subr.mxu0 0.0
    %351 = vmatpush1.msra.mxu0 0.0
    %352 = vmatprep.subr.mxu0 0.0
    %353 = vmatpush1.msra.mxu0 0.0
    %354 = vmatprep.subr.mxu0 0.0
    %355 = vmatpush1.msra.mxu0 0.0
    %356 = vmatprep.subr.mxu0 0.0
    %357 = vmatpush1.msra.mxu0 0.0
    %358 = vmatprep.subr.mxu0 0.0
    %359 = vmatpush1.msra.mxu0 0.0
    %360 = vmatprep.subr.mxu0 0.0
    %361 = vmatpush1.msra.mxu0 0.0
    %362 = vmatprep.subr.mxu0 0.0
    %363 = vmatpush1.msra.mxu0 0.0
    %364 = vmatprep.subr.mxu0 0.0
    %365 = vmatpush1.msra.mxu0 0.0
    %366 = vmatprep.subr.mxu0 0.0
    %367 = vmatpush1.msra.mxu0 0.0
    %368 = vmatprep.subr.mxu0 0.0
    %369 = vmatpush1.msra.mxu0 0.0
    %370 = vmatprep.subr.mxu0 0.0
    %371 = vmatpush1.msra.mxu0 0.0
    %372 = vmatprep.subr.mxu0 0.0
    %373 = vmatpush1.msra.mxu0 0.0
    %374 = vmatprep.mubr.f32.mxu0 0.0
    %375 = vmatmul.mubr.f32.gmra.mrb[0].mxu0 %v55
    %v376 = vpop.f32.mrb[0].mxu0
    %v377 = vadd.f32 0.0, %v376
    %v378 = vpop.f32.mrb[0].mxu0
    %v379 = vadd.f32 0.0, %v378
    %380 = vdwg.mxu0
    %381 = vmatprep.subr.mxu0 %v36
    %382 = vmatpush1.msra.mxu0 %v35
    %383 = vmatprep.subr.mxu0 %v86
    %384 = vmatpush1.msra.mxu0 %v83
    %385 = vmatprep.subr.mxu0 0.0
    %386 = vmatpush1.msra.mxu0 0.0
    %387 = vmatprep.subr.mxu0 0.0
    %388 = vmatpush1.msra.mxu0 0.0
    %389 = vmatprep.subr.mxu0 0.0
    %390 = vmatpush1.msra.mxu0 0.0
    %391 = vmatprep.subr.mxu0 0.0
    %392 = vmatpush1.msra.mxu0 0.0
    %393 = vmatprep.subr.mxu0 0.0
    %394 = vmatpush1.msra.mxu0 0.0
    %395 = vmatprep.subr.mxu0 0.0
    %396 = vmatpush1.msra.mxu0 0.0
    %397 = vmatprep.subr.mxu0 0.0
    %398 = vmatpush1.msra.mxu0 0.0
    %399 = vmatprep.subr.mxu0 0.0
    %400 = vmatpush1.msra.mxu0 0.0
    %401 = vmatprep.subr.mxu0 0.0
    %402 = vmatpush1.msra.mxu0 0.0
    %403 = vmatprep.subr.mxu0 0.0
    %404 = vmatpush1.msra.mxu0 0.0
    %405 = vmatprep.subr.mxu0 0.0
    %406 = vmatpush1.msra.mxu0 0.0
    %407 = vmatprep.subr.mxu0 0.0
    %408 = vmatpush1.msra.mxu0 0.0
    %409 = vmatprep.subr.mxu0 0.0
    %410 = vmatpush1.msra.mxu0 0.0
    %411 = vmatprep.subr.mxu0 0.0
    %412 = vmatpush1.msra.mxu0 0.0
    %413 = vmatprep.subr.mxu0 0.0
    %414 = vmatpush1.msra.mxu0 0.0
    %415 = vmatprep.subr.mxu0 0.0
    %416 = vmatpush1.msra.mxu0 0.0
    %417 = vmatprep.subr.mxu0 0.0
    %418 = vmatpush1.msra.mxu0 0.0
    %419 = vmatprep.subr.mxu0 0.0
    %420 = vmatpush1.msra.mxu0 0.0
    %421 = vmatprep.subr.mxu0 0.0
    %422 = vmatpush1.msra.mxu0 0.0
    %423 = vmatprep.subr.mxu0 0.0
    %424 = vmatpush1.msra.mxu0 0.0
    %425 = vmatprep.subr.mxu0 0.0
    %426 = vmatpush1.msra.mxu0 0.0
    %427 = vmatprep.subr.mxu0 0.0
    %428 = vmatpush1.msra.mxu0 0.0
    %429 = vmatprep.subr.mxu0 0.0
    %430 = vmatpush1.msra.mxu0 0.0
    %431 = vmatprep.subr.mxu0 0.0
    %432 = vmatpush1.msra.mxu0 0.0
    %433 = vmatprep.subr.mxu0 0.0
    %434 = vmatpush1.msra.mxu0 0.0
    %435 = vmatprep.subr.mxu0 0.0
    %436 = vmatpush1.msra.mxu0 0.0
    %437 = vmatprep.subr.mxu0 0.0
    %438 = vmatpush1.msra.mxu0 0.0
    %439 = vmatprep.subr.mxu0 0.0
    %440 = vmatpush1.msra.mxu0 0.0
    %441 = vmatprep.subr.mxu0 0.0
    %442 = vmatpush1.msra.mxu0 0.0
    %443 = vmatprep.subr.mxu0 0.0
    %444 = vmatpush1.msra.mxu0 0.0
    %445 = vmatprep.mubr.f32.mxu0 0.0
    %446 = vmatmul.mubr.f32.gmra.mrb[0].mxu0 %v55
    %v447 = vpop.f32.mrb[0].mxu0
    %v448 = vadd.f32 0.0, %v447
    %v449 = vpop.f32.mrb[0].mxu0
    %v450 = vadd.f32 0.0, %v449
    %451 = vdwg.mxu0
    %452 = vmatprep.subr.mxu0 %v38
    %453 = vmatpush1.msra.mxu0 %v37
    %454 = vmatprep.subr.mxu0 %v92
    %455 = vmatpush1.msra.mxu0 %v89
    %456 = vmatprep.subr.mxu0 0.0
    %457 = vmatpush1.msra.mxu0 0.0
    %458 = vmatprep.subr.mxu0 0.0
    %459 = vmatpush1.msra.mxu0 0.0
    %460 = vmatprep.subr.mxu0 0.0
    %461 = vmatpush1.msra.mxu0 0.0
    %462 = vmatprep.subr.mxu0 0.0
    %463 = vmatpush1.msra.mxu0 0.0
    %464 = vmatprep.subr.mxu0 0.0
    %465 = vmatpush1.msra.mxu0 0.0
    %466 = vmatprep.subr.mxu0 0.0
    %467 = vmatpush1.msra.mxu0 0.0
    %468 = vmatprep.subr.mxu0 0.0
    %469 = vmatpush1.msra.mxu0 0.0
    %470 = vmatprep.subr.mxu0 0.0
    %471 = vmatpush1.msra.mxu0 0.0
    %472 = vmatprep.subr.mxu0 0.0
    %473 = vmatpush1.msra.mxu0 0.0
    %474 = vmatprep.subr.mxu0 0.0
    %475 = vmatpush1.msra.mxu0 0.0
    %476 = vmatprep.subr.mxu0 0.0
    %477 = vmatpush1.msra.mxu0 0.0
    %478 = vmatprep.subr.mxu0 0.0
    %479 = vmatpush1.msra.mxu0 0.0
    %480 = vmatprep.subr.mxu0 0.0
    %481 = vmatpush1.msra.mxu0 0.0
    %482 = vmatprep.subr.mxu0 0.0
    %483 = vmatpush1.msra.mxu0 0.0
    %484 = vmatprep.subr.mxu0 0.0
    %485 = vmatpush1.msra.mxu0 0.0
    %486 = vmatprep.subr.mxu0 0.0
    %487 = vmatpush1.msra.mxu0 0.0
    %488 = vmatprep.subr.mxu0 0.0
    %489 = vmatpush1.msra.mxu0 0.0
    %490 = vmatprep.subr.mxu0 0.0
    %491 = vmatpush1.msra.mxu0 0.0
    %492 = vmatprep.subr.mxu0 0.0
    %493 = vmatpush1.msra.mxu0 0.0
    %494 = vmatprep.subr.mxu0 0.0
    %495 = vmatpush1.msra.mxu0 0.0
    %496 = vmatprep.subr.mxu0 0.0
    %497 = vmatpush1.msra.mxu0 0.0
    %498 = vmatprep.subr.mxu0 0.0
    %499 = vmatpush1.msra.mxu0 0.0
    %500 = vmatprep.subr.mxu0 0.0
    %501 = vmatpush1.msra.mxu0 0.0
    %502 = vmatprep.subr.mxu0 0.0
    %503 = vmatpush1.msra.mxu0 0.0
    %504 = vmatprep.subr.mxu0 0.0
    %505 = vmatpush1.msra.mxu0 0.0
    %506 = vmatprep.subr.mxu0 0.0
    %507 = vmatpush1.msra.mxu0 0.0
    %508 = vmatprep.subr.mxu0 0.0
    %509 = vmatpush1.msra.mxu0 0.0
    %510 = vmatprep.subr.mxu0 0.0
    %511 = vmatpush1.msra.mxu0 0.0
    %512 = vmatprep.subr.mxu0 0.0
    %513 = vmatpush1.msra.mxu0 0.0
    %514 = vmatprep.subr.mxu0 0.0
    %515 = vmatpush1.msra.mxu0 0.0
    %516 = vmatprep.mubr.f32.mxu0 0.0
    %517 = vmatmul.mubr.f32.gmra.mrb[0].mxu0 %v55
    %v518 = vpop.f32.mrb[0].mxu0
    %v519 = vadd.f32 0.0, %v518
    %v520 = vpop.f32.mrb[0].mxu0
    %v521 = vadd.f32 0.0, %v520
    %522 = vdwg.mxu0
    %523 = vmatprep.subr.mxu0 0.0
    %524 = vmatpush1.msra.mxu0 %v39
    %525 = vmatprep.subr.mxu0 0.0
    %526 = vmatpush1.msra.mxu0 %v95
    %527 = vmatprep.subr.mxu0 0.0
    %528 = vmatpush1.msra.mxu0 0.0
    %529 = vmatprep.subr.mxu0 0.0
    %530 = vmatpush1.msra.mxu0 0.0
    %531 = vmatprep.subr.mxu0 0.0
    %532 = vmatpush1.msra.mxu0 0.0
    %533 = vmatprep.subr.mxu0 0.0
    %534 = vmatpush1.msra.mxu0 0.0
    %535 = vmatprep.subr.mxu0 0.0
    %536 = vmatpush1.msra.mxu0 0.0
    %537 = vmatprep.subr.mxu0 0.0
    %538 = vmatpush1.msra.mxu0 0.0
    %539 = vmatprep.subr.mxu0 0.0
    %540 = vmatpush1.msra.mxu0 0.0
    %541 = vmatprep.subr.mxu0 0.0
    %542 = vmatpush1.msra.mxu0 0.0
    %543 = vmatprep.subr.mxu0 0.0
    %544 = vmatpush1.msra.mxu0 0.0
    %545 = vmatprep.subr.mxu0 0.0
    %546 = vmatpush1.msra.mxu0 0.0
    %547 = vmatprep.subr.mxu0 0.0
    %548 = vmatpush1.msra.mxu0 0.0
    %549 = vmatprep.subr.mxu0 0.0
    %550 = vmatpush1.msra.mxu0 0.0
    %551 = vmatprep.subr.mxu0 0.0
    %552 = vmatpush1.msra.mxu0 0.0
    %553 = vmatprep.subr.mxu0 0.0
    %554 = vmatpush1.msra.mxu0 0.0
    %555 = vmatprep.subr.mxu0 0.0
    %556 = vmatpush1.msra.mxu0 0.0
    %557 = vmatprep.subr.mxu0 0.0
    %558 = vmatpush1.msra.mxu0 0.0
    %559 = vmatprep.subr.mxu0 0.0
    %560 = vmatpush1.msra.mxu0 0.0
    %561 = vmatprep.subr.mxu0 0.0
    %562 = vmatpush1.msra.mxu0 0.0
    %563 = vmatprep.subr.mxu0 0.0
    %564 = vmatpush1.msra.mxu0 0.0
    %565 = vmatprep.subr.mxu0 0.0
    %566 = vmatpush1.msra.mxu0 0.0
    %567 = vmatprep.subr.mxu0 0.0
    %568 = vmatpush1.msra.mxu0 0.0
    %569 = vmatprep.subr.mxu0 0.0
    %570 = vmatpush1.msra.mxu0 0.0
    %571 = vmatprep.subr.mxu0 0.0
    %572 = vmatpush1.msra.mxu0 0.0
    %573 = vmatprep.subr.mxu0 0.0
    %574 = vmatpush1.msra.mxu0 0.0
    %575 = vmatprep.subr.mxu0 0.0
    %576 = vmatpush1.msra.mxu0 0.0
    %577 = vmatprep.subr.mxu0 0.0
    %578 = vmatpush1.msra.mxu0 0.0
    %579 = vmatprep.subr.mxu0 0.0
    %580 = vmatpush1.msra.mxu0 0.0
    %581 = vmatprep.subr.mxu0 0.0
    %582 = vmatpush1.msra.mxu0 0.0
    %583 = vmatprep.subr.mxu0 0.0
    %584 = vmatpush1.msra.mxu0 0.0
    %585 = vmatprep.subr.mxu0 0.0
    %586 = vmatpush1.msra.mxu0 0.0
    %587 = vmatprep.mubr.f32.mxu0 0.0
    %588 = vmatmul.mubr.f32.gmra.mrb[0].mxu0 %v55
    %v589 = vpop.f32.mrb[0].mxu0
    %v590 = vadd.f32 0.0, %v589
    %v591 = vpop.f32.mrb[0].mxu0
    %592 = vdwg.mxu0
    %v593 = vadd.f32 %v164, %v166
    %v594 = vadd.f32 %v593, %v235
    %v595 = vadd.f32 %v594, %v237
    %v596 = vadd.f32 %v595, %v306
    %v597 = vadd.f32 %v596, %v308
    %v598 = vadd.f32 %v597, %v377
    %v599 = vadd.f32 %v598, %v379
    %v600 = vadd.f32 %v599, %v448
    %v601 = vadd.f32 %v600, %v450
    %v602 = vadd.f32 %v601, %v519
    %v603 = vadd.f32 %v602, %v521
    %vm604 = vcmask 261120
    %v605 = vsel %vm604, %v590, 0.0
    %v606 = vadd.f32 %v603, %v605
    %607 = vadd.xlane.f32.xlu0 %v606
    %v608 = vpop.xlane.xlu0 %607
    %v609 = vmul.f32 %v164, %v164
    %v610 = vmul.f32 %v166, %v166
    %v611 = vmul.f32 %v235, %v235
    %v612 = vmul.f32 %v237, %v237
    %v613 = vmul.f32 %v306, %v306
    %v614 = vmul.f32 %v308, %v308
    %v615 = vmul.f32 %v377, %v377
    %v616 = vmul.f32 %v379, %v379
    %v617 = vmul.f32 %v448, %v448
    %v618 = vmul.f32 %v450, %v450
    %v619 = vmul.f32 %v519, %v519
    %v620 = vmul.f32 %v521, %v521
    %v621 = vmul.f32 %v590, %v590
    %v622 = vadd.f32 %v609, %v610
    %v623 = vadd.f32 %v622, %v611
    %v624 = vadd.f32 %v623, %v612
    %v625 = vadd.f32 %v624, %v613
    %v626 = vadd.f32 %v625, %v614
    %v627 = vadd.f32 %v626, %v615
    %v628 = vadd.f32 %v627, %v616
    %v629 = vadd.f32 %v628, %v617
    %v630 = vadd.f32 %v629, %v618
    %v631 = vadd.f32 %v630, %v619
    %v632 = vadd.f32 %v631, %v620
    %v633 = vsel %vm604, %v621, 0.0
    %v634 = vadd.f32 %v632, %v633
    %635 = vadd.xlane.f32.xlu0 %v634
    %v636 = vpop.xlane.xlu0 %635
    %v637 = vmul.f32 %v608, 0.0006377551
    %v638 = vmul.f32 %v636, 0.0006377551
    %v639 = vmul.f32 %v637, %v637
    %v640 = vsub.f32 %v638, %v639
    %v641 = vld [vmem:[%s2] sm:$0xff]
    %v642 = vadd.f32 %v640, 1e-05
    %v643 = vrsqrt.pop %v642
    %v644 = vmul.f32 %v641, %v643
    %v645 = vmul.f32 %v637, %v644
    %647 = vrot.lane.b32.xlu0 %v645, 1
    %v648 = vpop.permute.xlu0 %647
    %v650 = vsub.f32 %v641, %v648
    %652 = vset.pattern.permute.xlu0 0
    %653 = vperm.xlu0 %652, %v644
    %v654 = vpop.permute.xlu0 %653
    %v656 = vmul.f32 %v164, %v654
    %v657 = vmul.f32 %v166, %v654
    %v658 = vmul.f32 %v235, %v654
    %v659 = vmul.f32 %v237, %v654
    %v660 = vmul.f32 %v306, %v654
    %v661 = vmul.f32 %v308, %v654
    %v662 = vmul.f32 %v377, %v654
    %v663 = vmul.f32 %v379, %v654
    %v664 = vmul.f32 %v448, %v654
    %v665 = vmul.f32 %v450, %v654
    %v666 = vmul.f32 %v519, %v654
    %v667 = vmul.f32 %v521, %v654
    %v668 = vmul.f32 %v590, %v654
    %670 = vset.pattern.permute.xlu0 1
    %671 = vperm.xlu0 %670, %v650
    %v672 = vpop.permute.xlu0 %671
    %v674 = vadd.f32 %v656, %v672
    %v675 = vadd.f32 %v657, %v672
    %v676 = vadd.f32 %v658, %v672
    %v677 = vadd.f32 %v659, %v672
    %v678 = vadd.f32 %v660, %v672
    %v679 = vadd.f32 %v661, %v672
    %v680 = vadd.f32 %v662, %v672
    %v681 = vadd.f32 %v663, %v672
    %v682 = vadd.f32 %v664, %v672
    %v683 = vadd.f32 %v665, %v672
    %v684 = vadd.f32 %v666, %v672
    %v685 = vadd.f32 %v667, %v672
    %v686 = vadd.f32 %v668, %v672
    %vm687 = vcmp.ge.f32.partialorder %v674, 0.0
    %vm688 = vcmp.ge.f32.partialorder %v675, 0.0
    %vm689 = vcmp.ge.f32.partialorder %v676, 0.0
    %vm690 = vcmp.ge.f32.partialorder %v677, 0.0
    %vm691 = vcmp.ge.f32.partialorder %v678, 0.0
    %vm692 = vcmp.ge.f32.partialorder %v679, 0.0
    %vm693 = vcmp.ge.f32.partialorder %v680, 0.0
    %vm694 = vcmp.ge.f32.partialorder %v681, 0.0
    %vm695 = vcmp.ge.f32.partialorder %v682, 0.0
    %vm696 = vcmp.ge.f32.partialorder %v683, 0.0
    %vm697 = vcmp.ge.f32.partialorder %v684, 0.0
    %vm698 = vcmp.ge.f32.partialorder %v685, 0.0
    %vm699 = vcmp.ge.f32.partialorder %v686, 0.0
    %701 = vset.pattern.permute.xlu0 2
    %702 = vperm.xlu0 %701, %v641
    %v703 = vpop.permute.xlu0 %702
    %v705 = vmul.f32 %v703, %v674
    %v706 = vmul.f32 %v703, %v675
    %v707 = vmul.f32 %v703, %v676
    %v708 = vmul.f32 %v703, %v677
    %v709 = vmul.f32 %v703, %v678
    %v710 = vmul.f32 %v703, %v679
    %v711 = vmul.f32 %v703, %v680
    %v712 = vmul.f32 %v703, %v681
    %v713 = vmul.f32 %v703, %v682
    %v714 = vmul.f32 %v703, %v683
    %v715 = vmul.f32 %v703, %v684
    %v716 = vmul.f32 %v703, %v685
    %v717 = vmul.f32 %v703, %v686
    %v718 = vsel %vm687, %v674, %v705
    %v719 = vsel %vm688, %v675, %v706
    %v720 = vsel %vm689, %v676, %v707
    %v721 = vsel %vm690, %v677, %v708
    %v722 = vsel %vm691, %v678, %v709
    %v723 = vsel %vm692, %v679, %v710
    %v724 = vsel %vm693, %v680, %v711
    %v725 = vsel %vm694, %v681, %v712
    %v726 = vsel %vm695, %v682, %v713
    %v727 = vsel %vm696, %v683, %v714
    %v728 = vsel %vm697, %v684, %v715
    %v729 = vsel %vm698, %v685, %v716
    %v730 = vsel %vm699, %v686, %v717
    %731 = vst [vmem:[%s3] sm:$0xff] %v718
    %732 = vst [vmem:[%s3 + $0x8] sm:$0xff] %v719
    %733 = vst [vmem:[%s3 + $0x10] sm:$0xff] %v720
    %734 = vst [vmem:[%s3 + $0x18] sm:$0xff] %v721
    %735 = vst [vmem:[%s3 + $0x20] sm:$0xff] %v722
    %736 = vst [vmem:[%s3 + $0x28] sm:$0xff] %v723
    %737 = vst [vmem:[%s3 + $0x30] sm:$0xff] %v724
    %738 = vst [vmem:[%s3 + $0x38] sm:$0xff] %v725
    %739 = vst [vmem:[%s3 + $0x40] sm:$0xff] %v726
    %740 = vst [vmem:[%s3 + $0x48] sm:$0xff] %v727
    %741 = vst [vmem:[%s3 + $0x50] sm:$0xff] %v728
    %742 = vst [vmem:[%s3 + $0x58] sm:$0xff] %v729
    %743 = vst.msk [vmem:[%s3 + $0x60] sm:$0xff] %vm604, %v730
    // Predicated region
    $region18: #{vae_conv_forward.12} parent=1 // pred_check
      _
    $region19: #{vae_conv_forward.12} parent=1 // pred_check_branch
      %745 = sbr.rel (0) target = $region21
    $region20: #{vae_conv_forward.12} parent=1 // pred_region
      _
    $region21: #{vae_conv_forward.12} parent=1 // pred_fallthru
      _
    // Predicated region
    $region22: #{vae_conv_forward.12} parent=1 // pred_check
      _
    $region23: #{vae_conv_forward.12} parent=1 // pred_check_branch
      %747 = sbr.rel (0) target = $region25
    $region24: #{vae_conv_forward.12} parent=1 // pred_region
      _
    $region25: #{vae_conv_forward.12} parent=1 // pred_fallthru
      _
    %748 = vsyncpa [#allocation3], 1

// kernel: vae_conv_forward.13
$region0: #{vae_conv_forward.13}
  #allocation0 [shape = 'u32[]', space=smem, size = 0x4, offset = 0x4, fixed_abs, tag = 'smem constant byte address 0x4 - core index']
  #allocation1 [shape = 'u32[144,128]{1,0:T(1,128)}', space=vmem, size = 0x12000, scoped, tag = 'internal scratch']
  %s0 = inlined_call_operand.vmem [shape: f32[72,392], index: 0, kind: input, shape index: {}]
  %s1 = inlined_call_operand.vmem [shape: f32[8,72], index: 1, kind: input, shape index: {}]
  %s2 = inlined_call_operand.vmem [shape: f32[8,3], index: 2, kind: input, shape index: {}]
  %s3 = inlined_call_operand.vmem [shape: f32[8,392], index: 3, kind: output, shape index: {}]
  %s4 = sld [smem:[#allocation0]]
  $region22: #{vae_conv_forward.13} parent=0
    _
  %s6 = ssub.s32 1, %s4
  %s7 = scalar_select 0, %s6, %s4
  // Predicated region
  $region2: #{vae_conv_forward.13} parent=0 // pred_check
    _
  $region3: #{vae_conv_forward.13} parent=0 // pred_check_branch
    %9 = sbr.rel (0) target = $region5
  $region4: #{vae_conv_forward.13} parent=0 // pred_region
    _
  $region5: #{vae_conv_forward.13} parent=0 // pred_fallthru
    _
  // Predicated region
  $region6: #{vae_conv_forward.13} parent=0 // pred_check
    _
  $region7: #{vae_conv_forward.13} parent=0 // pred_check_branch
    %11 = sbr.rel (0) target = $region9
  $region8: #{vae_conv_forward.13} parent=0 // pred_region
    _
  $region9: #{vae_conv_forward.13} parent=0 // pred_fallthru
    _
  // Predicated region
  $region10: #{vae_conv_forward.13} parent=0 // pred_check
    _
  $region11: #{vae_conv_forward.13} parent=0 // pred_check_branch
    %13 = sbr.rel (0) target = $region13
  $region12: #{vae_conv_forward.13} parent=0 // pred_region
    _
  $region13: #{vae_conv_forward.13} parent=0 // pred_fallthru
    _
  %v14 = vld [vmem:[%s1] sm:$0xff]
  %v15 = vld [vmem:[%s0] sm:$0xff]
  %v16 = vld [vmem:[%s0 + $0x8] sm:$0xff]
  %v17 = vld [vmem:[%s0 + $0x10] sm:$0xff]
  %v18 = vld [vmem:[%s0 + $0x18] sm:$0xff]
  %v19 = vld [vmem:[%s0 + $0x20] sm:$0xff]
  %v20 = vld [vmem:[%s0 + $0x28] sm:$0xff]
  %v21 = vld [vmem:[%s0 + $0x30] sm:$0xff]
  %v22 = vld [vmem:[%s0 + $0x38] sm:$0xff]
  %v23 = vld [vmem:[%s0 + $0x40] sm:$0xff]
  %v24 = vld [vmem:[%s0 + $0x48] sm:$0xff]
  %v25 = vld [vmem:[%s0 + $0x50] sm:$0xff]
  %v26 = vld [vmem:[%s0 + $0x58] sm:$0xff]
  %v27 = vld [vmem:[%s0 + $0x60] sm:$0xff]
  %v28 = vld [vmem:[%s0 + $0x68] sm:$0xff]
  %v29 = vld [vmem:[%s0 + $0x70] sm:$0xff]
  %v30 = vld [vmem:[%s0 + $0x78] sm:$0xff]
  %v31 = vld [vmem:[%s0 + $0x80] sm:$0xff]
  %v32 = vld [vmem:[%s0 + $0x88] sm:$0xff]
  %v33 = vld [vmem:[%s0 + $0x90] sm:$0xff]
  %v34 = vld [vmem:[%s0 + $0x98] sm:$0xff]
  %v35 = vld [vmem:[%s0 + $0xa0] sm:$0xff]
  %v36 = vld [vmem:[%s0 + $0xa8] sm:$0xff]
  %v37 = vld [vmem:[%s0 + $0xb0] sm:$0xff]
  %v38 = vld [vmem:[%s0 + $0xb8] sm:$0xff]
  %v39 = vld [vmem:[%s0 + $0xc0] sm:$0xff]
  %v40 = vld [vmem:[%s0 + $0xc8] sm:$0xff]
  %v41 = vld [vmem:[%s0 + $0xd0] sm:$0xff]
  %v42 = vld [vmem:[%s0 + $0xd8] sm:$0xff]
  %v43 = vld [vmem:[%s0 + $0xe0] sm:$0xff]
  %v44 = vld [vmem:[%s0 + $0xe8] sm:$0xff]
  %v45 = vld [vmem:[%s0 + $0xf0] sm:$0xff]
  %v46 = vld [vmem:[%s0 + $0xf8] sm:$0xff]
  %v47 = vld [vmem:[%s0 + $0x100] sm:$0xff]
  %v48 = vld [vmem:[%s0 + $0x108] sm:$0xff]
  %v49 = vld [vmem:[%s0 + $0x110] sm:$0xff]
  %v50 = vld [vmem:[%s0 + $0x118] sm:$0xff]
  %vm51 = vcmask 588800
  %v53 = vsel %vm51, %v14, 0
  %55 = vmatprep.subr.mxu0 %v16
  %56 = vmatpush1.msra.mxu0 %v15
  %57 = vmatprep.subr.mxu0 %v20
  %58 = vmatpush1.msra.mxu0 %v19
  %59 = vmatprep.subr.mxu0 %v24
  %60 = vmatpush1.msra.mxu0 %v23
  %61 = vmatprep.subr.mxu0 %v28
  %62 = vmatpush1.msra.mxu0 %v27
  %63 = vmatprep.subr.mxu0 %v32
  %64 = vmatpush1.msra.mxu0 %v31
  %65 = vmatprep.subr.mxu0 %v36
  %66 = vmatpush1.msra.mxu0 %v35
  %67 = vmatprep.subr.mxu0 %v40
  %68 = vmatpush1.msra.mxu0 %v39
  %69 = vmatprep.subr.mxu0 %v44
  %70 = vmatpush1.msra.mxu0 %v43
  %71 = vmatprep.subr.mxu0 %v48
  %72 = vmatpush1.msra.mxu0 %v47
  %73 = vmatprep.subr.mxu0 0.0
  %74 = vmatpush1.msra.mxu0 0.0
  %75 = vmatprep.subr.mxu0 0.0
  %76 = vmatpush1.msra.mxu0 0.0
  %77 = vmatprep.subr.mxu0 0.0
  %78 = vmatpush1.msra.mxu0 0.0
  %79 = vmatprep.subr.mxu0 0.0
  %80 = vmatpush1.msra.mxu0 0.0
  %81 = vmatprep.subr.mxu0 0.0
  %82 = vmatpush1.msra.mxu0 0.0
  %83 = vmatprep.subr.mxu0 0.0
  %84 = vmatpush1.msra.mxu0 0.0
  %85 = vmatprep.subr.mxu0 0.0
  %86 = vmatpush1.msra.mxu0 0.0
  %87 = vmatprep.subr.mxu0 0.0
  %88 = vmatpush1.msra.mxu0 0.0
  %89 = vmatprep.subr.mxu0 0.0
  %90 = vmatpush1.msra.mxu0 0.0
  %91 = vmatprep.subr.mxu0 0.0
  %92 = vmatpush1.msra.mxu0 0.0
  %93 = vmatprep.subr.mxu0 0.0
  %94 = vmatpush1.msra.mxu0 0.0
  %95 = vmatprep.subr.mxu0 0.0
  %96 = vmatpush1.msra.mxu0 0.0
  %97 = vmatprep.subr.mxu0 0.0
  %98 = vmatpush1.msra.mxu0 0.0
  %99 = vmatprep.subr.mxu0 0.0
  %100 = vmatpush1.msra.mxu0 0.0
  %101 = vmatprep.subr.mxu0 0.0
  %102 = vmatpush1.msra.mxu0 0.0
  %103 = vmatprep.subr.mxu0 0.0
  %104 = vmatpush1.msra.mxu0 0.0
  %105 = vmatprep.subr.mxu0 0.0
  %106 = vmatpush1.msra.mxu0 0.0
  %107 = vmatprep.subr.mxu0 0.0
  %108 = vmatpush1.msra.mxu0 0.0
  %109 = vmatprep.subr.mxu0 0.0
  %110 = vmatpush1.msra.mxu0 0.0
  %111 = vmatprep.subr.mxu0 0.0
  %112 = vmatpush1.msra.mxu0 0.0
  %113 = vmatprep.subr.mxu0 0.0
  %114 = vmatpush1.msra.mxu0 0.0
  %115 = vmatprep.subr.mxu0 0.0
  %116 = vmatpush1.msra.mxu0 0.0
  %117 = vmatprep.subr.mxu0 0.0
  %118 = vmatpush1.msra.mxu0 0.0
  %119 = vmatprep.mubr.f32.mxu0 0.0
  %120 = vmatmul.mubr.f32.gmra.mrb[0].mxu0 %v53
  %v121 = vpop.f32.mrb[0].mxu0
  %v122 = vadd.f32 0.0, %v121
  %v123 = vpop.f32.mrb[0].mxu0
  %v124 = vadd.f32 0.0, %v123
  %125 = vdwg.mxu0
  %126 = vmatprep.subr.mxu0 %v18
  %127 = vmatpush1.msra.mxu0 %v17
  %128 = vmatprep.subr.mxu0 %v22
  %129 = vmatpush1.msra.mxu0 %v21
  %130 = vmatprep.subr.mxu0 %v26
  %131 = vmatpush1.msra.mxu0 %v25
  %132 = vmatprep.subr.mxu0 %v30
  %133 = vmatpush1.msra.mxu0 %v29
  %134 = vmatprep.subr.mxu0 %v34
  %135 = vmatpush1.msra.mxu0 %v33
  %136 = vmatprep.subr.mxu0 %v38
  %137 = vmatpush1.msra.mxu0 %v37
  %138 = vmatprep.subr.mxu0 %v42
  %139 = vmatpush1.msra.mxu0 %v41
  %140 = vmatprep.subr.mxu0 %v46
  %141 = vmatpush1.msra.mxu0 %v45
  %142 = vmatprep.subr.mxu0 %v50
  %143 = vmatpush1.msra.mxu0 %v49
  %144 = vmatprep.subr.mxu0 0.0
  %145 = vmatpush1.msra.mxu0 0.0
  %146 = vmatprep.subr.mxu0 0.0
  %147 = vmatpush1.msra.mxu0 0.0
  %148 = vmatprep.subr.mxu0 0.0
  %149 = vmatpush1.msra.mxu0 0.0
  %150 = vmatprep.subr.mxu0 0.0
  %151 = vmatpush1.msra.mxu0 0.0
  %152 = vmatprep.subr.mxu0 0.0
  %153 = vmatpush1.msra.mxu0 0.0
  %154 = vmatprep.subr.mxu0 0.0
  %155 = vmatpush1.msra.mxu0 0.0
  %156 = vmatprep.subr.mxu0 0.0
  %157 = vmatpush1.msra.mxu0 0.0
  %158 = vmatprep.subr.mxu0 0.0
  %159 = vmatpush1.msra.mxu0 0.0
  %160 = vmatprep.subr.mxu0 0.0
  %161 = vmatpush1.msra.mxu0 0.0
  %162 = vmatprep.subr.mxu0 0.0
  %163 = vmatpush1.msra.mxu0 0.0
  %164 = vmatprep.subr.mxu0 0.0
  %165 = vmatpush1.msra.mxu0 0.0
  %166 = vmatprep.subr.mxu0 0.0
  %167 = vmatpush1.msra.mxu0 0.0
  %168 = vmatprep.subr.mxu0 0.0
  %169 = vmatpush1.msra.mxu0 0.0
  %170 = vmatprep.subr.mxu0 0.0
  %171 = vmatpush1.msra.mxu0 0.0
  %172 = vmatprep.subr.mxu0 0.0
  %173 = vmatpush1.msra.mxu0 0.0
  %174 = vmatprep.subr.mxu0 0.0
  %175 = vmatpush1.msra.mxu0 0.0
  %176 = vmatprep.subr.mxu0 0.0
  %177 = vmatpush1.msra.mxu0 0.0
  %178 = vmatprep.subr.mxu0 0.0
  %179 = vmatpush1.msra.mxu0 0.0
  %180 = vmatprep.subr.mxu0 0.0
  %181 = vmatpush1.msra.mxu0 0.0
  %182 = vmatprep.subr.mxu0 0.0
  %183 = vmatpush1.msra.mxu0 0.0
  %184 = vmatprep.subr.mxu0 0.0
  %185 = vmatpush1.msra.mxu0 0.0
  %186 = vmatprep.subr.mxu0 0.0
  %187 = vmatpush1.msra.mxu0 0.0
  %188 = vmatprep.subr.mxu0 0.0
  %189 = vmatpush1.msra.mxu0 0.0
  %190 = vmatprep.mubr.f32.mxu0 0.0
  %191 = vmatmul.mubr.f32.gmra.mrb[0].mxu0 %v53
  %v192 = vpop.f32.mrb[0].mxu0
  %v193 = vadd.f32 0.0, %v192
  %v194 = vpop.f32.mrb[0].mxu0
  %v195 = vadd.f32 0.0, %v194
  %196 = vdwg.mxu0
  %v197 = vadd.f32 %v122, %v124
  %v198 = vadd.f32 %v197, %v193
  %vm199 = vcmask 64512
  %v200 = vsel %vm199, %v195, 0.0
  %v201 = vadd.f32 %v198, %v200
  %202 = vadd.xlane.f32.xlu0 %v201
  %v203 = vpop.xlane.xlu0 %202
  %v204 = vmul.f32 %v122, %v122
  %v205 = vmul.f32 %v124, %v124
  %v206 = vmul.f32 %v193, %v193
  %v207 = vmul.f32 %v195, %v195
  %v208 = vadd.f32 %v204, %v205
  %v209 = vadd.f32 %v208, %v206
  %v210 = vsel %vm199, %v207, 0.0
  %v211 = vadd.f32 %v209, %v210
  %212 = vadd.xlane.f32.xlu0 %v211
  %v213 = vpop.xlane.xlu0 %212
  %v214 = vmul.f32 %v203, 0.0025510204
  %v215 = vmul.f32 %v213, 0.0025510204
  %v216 = vmul.f32 %v214, %v214
  %v217 = vsub.f32 %v215, %v216
  %v218 = vld [vmem:[%s2] sm:$0xff]
  %v219 = vadd.f32 %v217, 1e-05
  %v220 = vrsqrt.pop %v219
  %v221 = vmul.f32 %v218, %v220
  %v222 = vmul.f32 %v214, %v221
  %224 = vrot.lane.b32.xlu0 %v222, 1
  %v225 = vpop.permute.xlu0 %224
  %v227 = vsub.f32 %v218, %v225
  %229 = vset.pattern.permute.xlu0 0
  %230 = vperm.xlu0 %229, %v221
  %v231 = vpop.permute.xlu0 %230
  %v233 = vmul.f32 %v122, %v231
  %v234 = vmul.f32 %v124, %v231
  %v235 = vmul.f32 %v193, %v231
  %v236 = vmul.f32 %v195, %v231
  %238 = vset.pattern.permute.xlu0 1
  %239 = vperm.xlu0 %238, %v227
  %v240 = vpop.permute.xlu0 %239
  %v242 = vadd.f32 %v233, %v240
  %v243 = vadd.f32 %v234, %v240
  %v244 = vadd.f32 %v235, %v240
  %v245 = vadd.f32 %v236, %v240
  %vm246 = vcmp.ge.f32.partialorder %v242, 0.0
  %vm247 = vcmp.ge.f32.partialorder %v243, 0.0
  %vm248 = vcmp.ge.f32.partialorder %v244, 0.0
  %vm249 = vcmp.ge.f32.partialorder %v245, 0.0
  %251 = vset.pattern.permute.xlu0 2
  %252 = vperm.xlu0 %251, %v218
  %v253 = vpop.permute.xlu0 %252
  %v255 = vmul.f32 %v253, %v242
  %v256 = vmul.f32 %v253, %v243
  %v257 = vmul.f32 %v253, %v244
  %v258 = vmul.f32 %v253, %v245
  %v259 = vsel %vm246, %v242, %v255
  %v260 = vsel %vm247, %v243, %v256
  %v261 = vsel %vm248, %v244, %v257
  %v262 = vsel %vm249, %v245, %v258
  %263 = vst [vmem:[%s3] sm:$0xff] %v259
  %264 = vst [vmem:[%s3 + $0x8] sm:$0xff] %v260
  %265 = vst [vmem:[%s3 + $0x10] sm:$0xff] %v261
  %266 = vst.msk [vmem:[%s3 + $0x18] sm:$0xff] %vm199, %v262
  // Predicated region
  $region14: #{vae_conv_forward.13} parent=0 // pred_check
    _
  $region15: #{vae_conv_forward.13} parent=0 // pred_check_branch
    %268 = sbr.rel (0) target = $region17
  $region16: #{vae_conv_forward.13} parent=0 // pred_region
    _
  $region17: #{vae_conv_forward.13} parent=0 // pred_fallthru
    _
  // Predicated region
  $region18: #{vae_conv_forward.13} parent=0 // pred_check
    _
  $region19: #{vae_conv_forward.13} parent=0 // pred_check_branch
    %270 = sbr.rel (0) target = $region21
  $region20: #{vae_conv_forward.13} parent=0 // pred_region
    _
  $region21: #{vae_conv_forward.13} parent=0 // pred_fallthru
    _

// kernel: vae_conv_forward.14
$region0: #{vae_conv_forward.14}
  #allocation0 [shape = 'u32[]', space=smem, size = 0x4, offset = 0x4, fixed_abs, tag = 'smem constant byte address 0x4 - core index']
  #allocation1 [shape = 'u32[144,128]{1,0:T(1,128)}', space=vmem, size = 0x12000, scoped, tag = 'internal scratch']
  %s0 = inlined_call_operand.vmem [shape: f32[200,98], index: 0, kind: input, shape index: {}]
  %s1 = inlined_call_operand.vmem [shape: f32[16,200], index: 1, kind: input, shape index: {}]
  %s2 = inlined_call_operand.vmem [shape: f32[16,3], index: 2, kind: input, shape index: {}]
  %s3 = inlined_call_operand.vmem [shape: f32[16,98], index: 3, kind: output, shape index: {}]
  %s4 = sld [smem:[#allocation0]]
  $region22: #{vae_conv_forward.14} parent=0
    _
  %s6 = ssub.s32 1, %s4
  %s7 = scalar_select 0, %s6, %s4
  // Predicated region
  $region2: #{vae_conv_forward.14} parent=0 // pred_check
    _
  $region3: #{vae_conv_forward.14} parent=0 // pred_check_branch
    %9 = sbr.rel (0) target = $region5
  $region4: #{vae_conv_forward.14} parent=0 // pred_region
    _
  $region5: #{vae_conv_forward.14} parent=0 // pred_fallthru
    _
  // Predicated region
  $region6: #{vae_conv_forward.14} parent=0 // pred_check
    _
  $region7: #{vae_conv_forward.14} parent=0 // pred_check_branch
    %11 = sbr.rel (0) target = $region9
  $region8: #{vae_conv_forward.14} parent=0 // pred_region
    _
  $region9: #{vae_conv_forward.14} parent=0 // pred_fallthru
    _
  // Predicated region
  $region10: #{vae_conv_forward.14} parent=0 // pred_check
    _
  $region11: #{vae_conv_forward.14} parent=0 // pred_check_branch
    %13 = sbr.rel (0) target = $region13
  $region12: #{vae_conv_forward.14} parent=0 // pred_region
    _
  $region13: #{vae_conv_forward.14} parent=0 // pred_fallthru
    _
  %v14 = vld [vmem:[%s1] sm:$0xff]
  %v15 = vld [vmem:[%s1 + $0x8] sm:$0xff]
  %v16 = vld [vmem:[%s1 + $0x10] sm:$0xff]
  %v17 = vld [vmem:[%s1 + $0x18] sm:$0xff]
  %v18 = vld [vmem:[%s0] sm:$0xff]
  %v19 = vld [vmem:[%s0 + $0x8] sm:$0xff]
  %v20 = vld [vmem:[%s0 + $0x10] sm:$0xff]
  %v21 = vld [vmem:[%s0 + $0x18] sm:$0xff]
  %v22 = vld [vmem:[%s0 + $0x20] sm:$0xff]
  %v23 = vld [vmem:[%s0 + $0x28] sm:$0xff]
  %v24 = vld [vmem:[%s0 + $0x30] sm:$0xff]
  %v25 = vld [vmem:[%s0 + $0x38] sm:$0xff]
  %v26 = vld [vmem:[%s0 + $0x40] sm:$0xff]
  %v27 = vld [vmem:[%s0 + $0x48] sm:$0xff]
  %v28 = vld [vmem:[%s0 + $0x50] sm:$0xff]
  %v29 = vld [vmem:[%s0 + $0x58] sm:$0xff]
  %v30 = vld [vmem:[%s0 + $0x60] sm:$0xff]
  %v31 = vld [vmem:[%s0 + $0x68] sm:$0xff]
  %v32 = vld [vmem:[%s0 + $0x70] sm:$0xff]
  %v33 = vld [vmem:[%s0 + $0x78] sm:$0xff]
  %v34 = vld [vmem:[%s0 + $0x80] sm:$0xff]
  %v35 = vld [vmem:[%s0 + $0x88] sm:$0xff]
  %v36 = vld [vmem:[%s0 + $0x90] sm:$0xff]
  %v37 = vld [vmem:[%s0 + $0x98] sm:$0xff]
  %v38 = vld [vmem:[%s0 + $0xa0] sm:$0xff]
  %v39 = vld [vmem:[%s0 + $0xa8] sm:$0xff]
  %v40 = vld [vmem:[%s0 + $0xb0] sm:$0xff]
  %v41 = vld [vmem:[%s0 + $0xb8] sm:$0xff]
  %v42 = vld [vmem:[%s0 + $0xc0] sm:$0xff]
  %vm43 = vcmask 588800
  %v45 = vsel %vm43, %v15, 0
  %v48 = vsel %vm43, %v17, 0
  %50 = vmatprep.subr.mxu0 0.0
  %51 = vmatpush1.msra.mxu0 %v18
  %52 = vmatprep.subr.mxu0 0.0
  %53 = vmatpush1.msra.mxu0 %v19
  %54 = vmatprep.subr.mxu0 0.0
  %55 = vmatpush1.msra.mxu0 %v20
  %56 = vmatprep.subr.mxu0 0.0
  %57 = vmatpush1.msra.mxu0 %v21
  %58 = vmatprep.subr.mxu0 0.0
  %59 = vmatpush1.msra.mxu0 %v22
  %60 = vmatprep.subr.mxu0 0.0
  %61 = vmatpush1.msra.mxu0 %v23
  %62 = vmatprep.subr.mxu0 0.0
  %63 = vmatpush1.msra.mxu0 %v24
  %64 = vmatprep.subr.mxu0 0.0
  %65 = vmatpush1.msra.mxu0 %v25
  %66 = vmatprep.subr.mxu0 0.0
  %67 = vmatpush1.msra.mxu0 %v26
  %68 = vmatprep.subr.mxu0 0.0
  %69 = vmatpush1.msra.mxu0 %v27
  %70 = vmatprep.subr.mxu0 0.0
  %71 = vmatpush1.msra.mxu0 %v28
  %72 = vmatprep.subr.mxu0 0.0
  %73 = vmatpush1.msra.mxu0 %v29
  %74 = vmatprep.subr.mxu0 0.0
  %75 = vmatpush1.msra.mxu0 %v30
  %76 = vmatprep.subr.mxu0 0.0
  %77 = vmatpush1.msra.mxu0 %v31
  %78 = vmatprep.subr.mxu0 0.0
  %79 = vmatpush1.msra.mxu0 %v32
  %80 = vmatprep.subr.mxu0 0.0
  %81 = vmatpush1.msra.mxu0 %v33
  %82 = vmatprep.subr.mxu0 0.0
  %83 = vmatpush1.msra.mxu0 %v34
  %84 = vmatprep.subr.mxu0 0.0
  %85 = vmatpush1.msra.mxu0 %v35
  %86 = vmatprep.subr.mxu0 0.0
  %87 = vmatpush1.msra.mxu0 %v36
  %88 = vmatprep.subr.mxu0 0.0
  %89 = vmatpush1.msra.mxu0 %v37
  %90 = vmatprep.subr.mxu0 0.0
  %91 = vmatpush1.msra.mxu0 %v38
  %92 = vmatprep.subr.mxu0 0.0
  %93 = vmatpush1.msra.mxu0 %v39
  %94 = vmatprep.subr.mxu0 0.0
  %95 = vmatpush1.msra.mxu0 %v40
  %96 = vmatprep.subr.mxu0 0.0
  %97 = vmatpush1.msra.mxu0 %v41
  %98 = vmatprep.subr.mxu0 0.0
  %99 = vmatpush1.msra.mxu0 %v42
  %100 = vmatprep.subr.mxu0 0.0
  %101 = vmatpush1.msra.mxu0 0.0
  %102 = vmatprep.subr.mxu0 0.0
  %103 = vmatpush1.msra.mxu0 0.0
  %104 = vmatprep.subr.mxu0 0.0
  %105 = vmatpush1.msra.mxu0 0.0
  %106 = vmatprep.subr.mxu0 0.0
  %107 = vmatpush1.msra.mxu0 0.0
  %108 = vmatprep.subr.mxu0 0.0
  %109 = vmatpush1.msra.mxu0 0.0
  %110 = vmatprep.subr.mxu0 0.0
  %111 = vmatpush1.msra.mxu0 0.0
  %112 = vmatprep.subr.mxu0 0.0
  %113 = vmatpush1.msra.mxu0 0.0
  %114 = vmatprep.mubr.f32.mxu0 %v45
  %115 = vmatmul.mubr.f32.gmra.mrb[0].mxu0 %v14
  %v116 = vpop.f32.mrb[0].mxu0
  %v117 = vadd.f32 0.0, %v116
  %v118 = vpop.f32.mrb[0].mxu0
  %119 = vmatprep.mubr.f32.mxu0 %v48
  %120 = vmatmul.mubr.f32.gmra.mrb[0].mxu0 %v16
  %v121 = vpop.f32.mrb[0].mxu0
  %v122 = vadd.f32 0.0, %v121
  %v123 = vpop.f32.mrb[0].mxu0
  %124 = vdwg.mxu0
  %vm125 = vcmask 801792
  %v126 = vsel %vm125, %v117, 0.0
  %127 = vadd.xlane.f32.xlu0 %v126
  %v128 = vpop.xlane.xlu0 %127
  %v129 = vsel %vm125, %v122, 0.0
  %130 = vadd.xlane.f32.xlu0 %v129
  %v131 = vpop.xlane.xlu0 %130
  %v132 = vmul.f32 %v117, %v117
  %v133 = vmul.f32 %v122, %v122
  %v134 = vsel %vm125, %v132, 0.0
  %135 = vadd.xlane.f32.xlu0 %v134
  %v136 = vpop.xlane.xlu0 %135
  %v137 = vsel %vm125, %v133, 0.0
  %138 = vadd.xlane.f32.xlu0 %v137
  %v139 = vpop.xlane.xlu0 %138
  %v140 = vmul.f32 %v128, 0.010204081
  %v141 = vmul.f32 %v131, 0.010204081
  %v142 = vmul.f32 %v136, 0.010204081
  %v143 = vmul.f32 %v139, 0.010204081
  %v144 = vmul.f32 %v140, %v140
  %v145 = vmul.f32 %v141, %v141
  %v146 = vsub.f32 %v142, %v144
  %v147 = vsub.f32 %v143, %v145
  %v148 = vld [vmem:[%s2] sm:$0xff]
  %v149 = vld [vmem:[%s2 + $0x8] sm:$0xff]
  %v150 = vadd.f32 %v146, 1e-05
  %v151 = vadd.f32 %v147, 1e-05
  %v152 = vrsqrt.pop %v150
  %v153 = vrsqrt.pop %v151
  %v154 = vmul.f32 %v148, %v152
  %v155 = vmul.f32 %v149, %v153
  %v156 = vmul.f32 %v140, %v154
  %v157 = vmul.f32 %v141, %v155
  %160 = vrot.lane.b32.xlu0 %v156, 1
  %v161 = vpop.permute.xlu0 %160
  %162 = vrot.lane.b32.xlu0 %v157, 1
  %v163 = vpop.permute.xlu0 %162
  %v166 = vsub.f32 %v148, %v161
  %v167 = vsub.f32 %v149, %v163
  %169 = vset.pattern.permute.xlu0 0
  %170 = vperm.xlu0 %169, %v154
  %v171 = vpop.permute.xlu0 %170
  %174 = vset.pattern.permute.xlu0 0
  %175 = vperm.xlu0 %174, %v155
  %v176 = vpop.permute.xlu0 %175
  %v178 = vmul.f32 %v117, %v171
  %v179 = vmul.f32 %v122, %v176
  %181 = vset.pattern.permute.xlu0 1
  %182 = vperm.xlu0 %181, %v166
  %v183 = vpop.permute.xlu0 %182
  %186 = vset.pattern.permute.xlu0 1
  %187 = vperm.xlu0 %186, %v167
  %v188 = vpop.permute.xlu0 %187
  %v190 = vadd.f32 %v178, %v183
  %v191 = vadd.f32 %v179, %v188
  %vm192 = vcmp.ge.f32.partialorder %v190, 0.0
  %vm193 = vcmp.ge.f32.partialorder %v191, 0.0
  %195 = vset.pattern.permute.xlu0 2
  %196 = vperm.xlu0 %195, %v148
  %v197 = vpop.permute.xlu0 %196
  %200 = vset.pattern.permute.xlu0 2
  %201 = vperm.xlu0 %200, %v149
  %v202 = vpop.permute.xlu0 %201
  %v204 = vmul.f32 %v197, %v190
  %v205 = vmul.f32 %v202, %v191
  %v206 = vsel %vm192, %v190, %v204
  %v207 = vsel %vm193, %v191, %v205
  %208 = vst.msk [vmem:[%s3] sm:$0xff] %vm125, %v206
  %209 = vst.msk [vmem:[%s3 + $0x8] sm:$0xff] %vm125, %v207
  // Predicated region
  $region14: #{vae_conv_forward.14} parent=0 // pred_check
    _
  $region15: #{vae_conv_forward.14} parent=0 // pred_check_branch
    %211 = sbr.rel (0) target = $region17
  $region16: #{vae_conv_forward.14} parent=0 // pred_region
    _
  $region17: #{vae_conv_forward.14} parent=0 // pred_fallthru
    _
  // Predicated region
  $region18: #{vae_conv_forward.14} parent=0 // pred_check
    _
  $region19: #{vae_conv_forward.14} parent=0 // pred_check_branch
    %213 = sbr.rel (0) target = $region21
  $region20: #{vae_conv_forward.14} parent=0 // pred_region
    _
  $region21: #{vae_conv_forward.14} parent=0 // pred_fallthru
    _

// kernel: vae_conv_forward.15
$region0: #{vae_conv_forward.15}
  #allocation0 [shape = 'u32[]', space=smem, size = 0x4, offset = 0x4, fixed_abs, tag = 'smem constant byte address 0x4 - core index']
  #allocation1 [shape = 'u32[144,128]{1,0:T(1,128)}', space=vmem, size = 0x12000, scoped, tag = 'internal scratch']
  %s0 = inlined_call_operand.vmem [shape: f32[400,32], index: 0, kind: input, shape index: {}]
  %s1 = inlined_call_operand.vmem [shape: f32[32,400], index: 1, kind: input, shape index: {}]
  %s2 = inlined_call_operand.vmem [shape: f32[32,3], index: 2, kind: input, shape index: {}]
  %s3 = inlined_call_operand.vmem [shape: f32[32,32], index: 3, kind: output, shape index: {}]
  %s4 = sld [smem:[#allocation0]]
  $region22: #{vae_conv_forward.15} parent=0
    _
  %s6 = ssub.s32 1, %s4
  %s7 = scalar_select 0, %s6, %s4
  // Predicated region
  $region2: #{vae_conv_forward.15} parent=0 // pred_check
    _
  $region3: #{vae_conv_forward.15} parent=0 // pred_check_branch
    %9 = sbr.rel (0) target = $region5
  $region4: #{vae_conv_forward.15} parent=0 // pred_region
    _
  $region5: #{vae_conv_forward.15} parent=0 // pred_fallthru
    _
  // Predicated region
  $region6: #{vae_conv_forward.15} parent=0 // pred_check
    _
  $region7: #{vae_conv_forward.15} parent=0 // pred_check_branch
    %11 = sbr.rel (0) target = $region9
  $region8: #{vae_conv_forward.15} parent=0 // pred_region
    _
  $region9: #{vae_conv_forward.15} parent=0 // pred_fallthru
    _
  // Predicated region
  $region10: #{vae_conv_forward.15} parent=0 // pred_check
    _
  $region11: #{vae_conv_forward.15} parent=0 // pred_check_branch
    %13 = sbr.rel (0) target = $region13
  $region12: #{vae_conv_forward.15} parent=0 // pred_region
    _
  $region13: #{vae_conv_forward.15} parent=0 // pred_fallthru
    _
  %v14 = vld [vmem:[%s1] sm:$0xff]
  %v15 = vld [vmem:[%s1 + $0x8] sm:$0xff]
  %v16 = vld [vmem:[%s1 + $0x10] sm:$0xff]
  %v17 = vld [vmem:[%s1 + $0x18] sm:$0xff]
  %v18 = vld [vmem:[%s1 + $0x20] sm:$0xff]
  %v19 = vld [vmem:[%s1 + $0x28] sm:$0xff]
  %v20 = vld [vmem:[%s1 + $0x30] sm:$0xff]
  %v21 = vld [vmem:[%s1 + $0x38] sm:$0xff]
  %v22 = vld [vmem:[%s1 + $0x40] sm:$0xff]
  %v23 = vld [vmem:[%s1 + $0x48] sm:$0xff]
  %v24 = vld [vmem:[%s1 + $0x50] sm:$0xff]
  %v25 = vld [vmem:[%s1 + $0x58] sm:$0xff]
  %v26 = vld [vmem:[%s1 + $0x60] sm:$0xff]
  %v27 = vld [vmem:[%s1 + $0x68] sm:$0xff]
  %v28 = vld [vmem:[%s1 + $0x70] sm:$0xff]
  %v29 = vld [vmem:[%s1 + $0x78] sm:$0xff]
  %v30 = vld [vmem:[%s0] sm:$0xff]
  %v31 = vld [vmem:[%s0 + $0x8] sm:$0xff]
  %v32 = vld [vmem:[%s0 + $0x10] sm:$0xff]
  %v33 = vld [vmem:[%s0 + $0x18] sm:$0xff]
  %v34 = vld [vmem:[%s0 + $0x20] sm:$0xff]
  %v35 = vld [vmem:[%s0 + $0x28] sm:$0xff]
  %v36 = vld [vmem:[%s0 + $0x30] sm:$0xff]
  %v37 = vld [vmem:[%s0 + $0x38] sm:$0xff]
  %v38 = vld [vmem:[%s0 + $0x40] sm:$0xff]
  %v39 = vld [vmem:[%s0 + $0x48] sm:$0xff]
  %v40 = vld [vmem:[%s0 + $0x50] sm:$0xff]
  %v41 = vld [vmem:[%s0 + $0x58] sm:$0xff]
  %v42 = vld [vmem:[%s0 + $0x60] sm:$0xff]
  %v43 = vld [vmem:[%s0 + $0x68] sm:$0xff]
  %v44 = vld [vmem:[%s0 + $0x70] sm:$0xff]
  %v45 = vld [vmem:[%s0 + $0x78] sm:$0xff]
  %v46 = vld [vmem:[%s0 + $0x80] sm:$0xff]
  %v47 = vld [vmem:[%s0 + $0x88] sm:$0xff]
  %v48 = vld [vmem:[%s0 + $0x90] sm:$0xff]
  %v49 = vld [vmem:[%s0 + $0x98] sm:$0xff]
  %v50 = vld [vmem:[%s0 + $0xa0] sm:$0xff]
  %v51 = vld [vmem:[%s0 + $0xa8] sm:$0xff]
  %v52 = vld [vmem:[%s0 + $0xb0] sm:$0xff]
  %v53 = vld [vmem:[%s0 + $0xb8] sm:$0xff]
  %v54 = vld [vmem:[%s0 + $0xc0] sm:$0xff]
  %v55 = vld [vmem:[%s0 + $0xc8] sm:$0xff]
  %v56 = vld [vmem:[%s0 + $0xd0] sm:$0xff]
  %v57 = vld [vmem:[%s0 + $0xd8] sm:$0xff]
  %v58 = vld [vmem:[%s0 + $0xe0] sm:$0xff]
  %v59 = vld [vmem:[%s0 + $0xe8] sm:$0xff]
  %v60 = vld [vmem:[%s0 + $0xf0] sm:$0xff]
  %v61 = vld [vmem:[%s0 + $0xf8] sm:$0xff]
  %v62 = vld [vmem:[%s0 + $0x100] sm:$0xff]
  %v63 = vld [vmem:[%s0 + $0x108] sm:$0xff]
  %v64 = vld [vmem:[%s0 + $0x110] sm:$0xff]
  %v65 = vld [vmem:[%s0 + $0x118] sm:$0xff]
  %v66 = vld [vmem:[%s0 + $0x120] sm:$0xff]
  %v67 = vld [vmem:[%s0 + $0x128] sm:$0xff]
  %v68 = vld [vmem:[%s0 + $0x130] sm:$0xff]
  %v69 = vld [vmem:[%s0 + $0x138] sm:$0xff]
  %v70 = vld [vmem:[%s0 + $0x140] sm:$0xff]
  %v71 = vld [vmem:[%s0 + $0x148] sm:$0xff]
  %v72 = vld [vmem:[%s0 + $0x150] sm:$0xff]
  %v73 = vld [vmem:[%s0 + $0x158] sm:$0xff]
  %v74 = vld [vmem:[%s0 + $0x160] sm:$0xff]
  %v75 = vld [vmem:[%s0 + $0x168] sm:$0xff]
  %v76 = vld [vmem:[%s0 + $0x170] sm:$0xff]
  %v77 = vld [vmem:[%s0 + $0x178] sm:$0xff]
  %v78 = vld [vmem:[%s0 + $0x180] sm:$0xff]
  %v79 = vld [vmem:[%s0 + $0x188] sm:$0xff]
  %vm80 = vcmask 130048
  %v82 = vsel %vm80, %v17, 0
  %v85 = vsel %vm80, %v21, 0
  %v88 = vsel %vm80, %v25, 0
  %v91 = vsel %vm80, %v29, 0
  %93 = vmatprep.subr.mxu0 0.0
  %94 = vmatpush1.msra.mxu0 %v30
  %95 = vmatprep.subr.mxu0 0.0
  %96 = vmatpush1.msra.mxu0 %v31
  %97 = vmatprep.subr.mxu0 0.0
  %98 = vmatpush1.msra.mxu0 %v32
  %99 = vmatprep.subr.mxu0 0.0
  %100 = vmatpush1.msra.mxu0 %v33
  %101 = vmatprep.subr.mxu0 0.0
  %102 = vmatpush1.msra.mxu0 %v34
  %103 = vmatprep.subr.mxu0 0.0
  %104 = vmatpush1.msra.mxu0 %v35
  %105 = vmatprep.subr.mxu0 0.0
  %106 = vmatpush1.msra.mxu0 %v36
  %107 = vmatprep.subr.mxu0 0.0
  %108 = vmatpush1.msra.mxu0 %v37
  %109 = vmatprep.subr.mxu0 0.0
  %110 = vmatpush1.msra.mxu0 %v38
  %111 = vmatprep.subr.mxu0 0.0
  %112 = vmatpush1.msra.mxu0 %v39
  %113 = vmatprep.subr.mxu0 0.0
  %114 = vmatpush1.msra.mxu0 %v40
  %115 = vmatprep.subr.mxu0 0.0
  %116 = vmatpush1.msra.mxu0 %v41
  %117 = vmatprep.subr.mxu0 0.0
  %118 = vmatpush1.msra.mxu0 %v42
  %119 = vmatprep.subr.mxu0 0.0
  %120 = vmatpush1.msra.mxu0 %v43
  %121 = vmatprep.subr.mxu0 0.0
  %122 = vmatpush1.msra.mxu0 %v44
  %123 = vmatprep.subr.mxu0 0.0
  %124 = vmatpush1.msra.mxu0 %v45
  %125 = vmatprep.subr.mxu0 0.0
  %126 = vmatpush1.msra.mxu0 %v46
  %127 = vmatprep.subr.mxu0 0.0
  %128 = vmatpush1.msra.mxu0 %v47
  %129 = vmatprep.subr.mxu0 0.0
  %130 = vmatpush1.msra.mxu0 %v48
  %131 = vmatprep.subr.mxu0 0.0
  %132 = vmatpush1.msra.mxu0 %v49
  %133 = vmatprep.subr.mxu0 0.0
  %134 = vmatpush1.msra.mxu0 %v50
  %135 = vmatprep.subr.mxu0 0.0
  %136 = vmatpush1.msra.mxu0 %v51
  %137 = vmatprep.subr.mxu0 0.0
  %138 = vmatpush1.msra.mxu0 %v52
  %139 = vmatprep.subr.mxu0 0.0
  %140 = vmatpush1.msra.mxu0 %v53
  %141 = vmatprep.subr.mxu0 0.0
  %142 = vmatpush1.msra.mxu0 %v54
  %143 = vmatprep.subr.mxu0 0.0
  %144 = vmatpush1.msra.mxu0 %v55
  %145 = vmatprep.subr.mxu0 0.0
  %146 = vmatpush1.msra.mxu0 %v56
  %147 = vmatprep.subr.mxu0 0.0
  %148 = vmatpush1.msra.mxu0 %v57
  %149 = vmatprep.subr.mxu0 0.0
  %150 = vmatpush1.msra.mxu0 %v58
  %151 = vmatprep.subr.mxu0 0.0
  %152 = vmatpush1.msra.mxu0 %v59
  %153 = vmatprep.subr.mxu0 0.0
  %154 = vmatpush1.msra.mxu0 %v60
  %155 = vmatprep.subr.mxu0 0.0
  %156 = vmatpush1.msra.mxu0 %v61
  %157 = vmatprep.mubr.f32.mxu0 %v15
  %158 = vmatmul.mubr.f32.gmra.mrb[0].mxu0 %v14
  %v159 = vpop.f32.mrb[0].mxu0
  %v160 = vadd.f32 0.0, %v159
  %v161 = vpop.f32.mrb[0].mxu0
  %162 = vmatprep.mubr.f32.mxu0 %v19
  %163 = vmatmul.mubr.f32.gmra.mrb[0].mxu0 %v18
  %v164 = vpop.f32.mrb[0].mxu0
  %v165 = vadd.f32 0.0, %v164
  %v166 = vpop.f32.mrb[0].mxu0
  %167 = vmatprep.mubr.f32.mxu0 %v23
  %168 = vmatmul.mubr.f32.gmra.mrb[0].mxu0 %v22
  %v169 = vpop.f32.mrb[0].mxu0
  %v170 = vadd.f32 0.0, %v169
  %v171 = vpop.f32.mrb[0].mxu0
  %172 = vmatprep.mubr.f32.mxu0 %v27
  %173 = vmatmul.mubr.f32.gmra.mrb[0].mxu0 %v26
  %v174 = vpop.f32.mrb[0].mxu0
  %v175 = vadd.f32 0.0, %v174
  %v176 = vpop.f32.mrb[0].mxu0
  %177 = vdwg.mxu0
  %178 = vmatprep.subr.mxu0 0.0
  %179 = vmatpush1.msra.mxu0 %v62
  %180 = vmatprep.subr.mxu0 0.0
  %181 = vmatpush1.msra.mxu0 %v63
  %182 = vmatprep.subr.mxu0 0.0
  %183 = vmatpush1.msra.mxu0 %v64
  %184 = vmatprep.subr.mxu0 0.0
  %185 = vmatpush1.msra.mxu0 %v65
  %186 = vmatprep.subr.mxu0 0.0
  %187 = vmatpush1.msra.mxu0 %v66
  %188 = vmatprep.subr.mxu0 0.0
  %189 = vmatpush1.msra.mxu0 %v67
  %190 = vmatprep.subr.mxu0 0.0
  %191 = vmatpush1.msra.mxu0 %v68
  %192 = vmatprep.subr.mxu0 0.0
  %193 = vmatpush1.msra.mxu0 %v69
  %194 = vmatprep.subr.mxu0 0.0
  %195 = vmatpush1.msra.mxu0 %v70
  %196 = vmatprep.subr.mxu0 0.0
  %197 = vmatpush1.msra.mxu0 %v71
  %198 = vmatprep.subr.mxu0 0.0
  %199 = vmatpush1.msra.mxu0 %v72
  %200 = vmatprep.subr.mxu0 0.0
  %201 = vmatpush1.msra.mxu0 %v73
  %202 = vmatprep.subr.mxu0 0.0
  %203 = vmatpush1.msra.mxu0 %v74
  %204 = vmatprep.subr.mxu0 0.0
  %205 = vmatpush1.msra.mxu0 %v75
  %206 = vmatprep.subr.mxu0 0.0
  %207 = vmatpush1.msra.mxu0 %v76
  %208 = vmatprep.subr.mxu0 0.0
  %209 = vmatpush1.msra.mxu0 %v77
  %210 = vmatprep.subr.mxu0 0.0
  %211 = vmatpush1.msra.mxu0 %v78
  %212 = vmatprep.subr.mxu0 0.0
  %213 = vmatpush1.msra.mxu0 %v79
  %214 = vmatprep.subr.mxu0 0.0
  %215 = vmatpush1.msra.mxu0 0.0
  %216 = vmatprep.subr.mxu0 0.0
  %217 = vmatpush1.msra.mxu0 0.0
  %218 = vmatprep.subr.mxu0 0.0
  %219 = vmatpush1.msra.mxu0 0.0
  %220 = vmatprep.subr.mxu0 0.0
  %221 = vmatpush1.msra.mxu0 0.0
  %222 = vmatprep.subr.mxu0 0.0
  %223 = vmatpush1.msra.mxu0 0.0
  %224 = vmatprep.subr.mxu0 0.0
  %225 = vmatpush1.msra.mxu0 0.0
  %226 = vmatprep.subr.mxu0 0.0
  %227 = vmatpush1.msra.mxu0 0.0
  %228 = vmatprep.subr.mxu0 0.0
  %229 = vmatpush1.msra.mxu0 0.0
  %230 = vmatprep.subr.mxu0 0.0
  %231 = vmatpush1.msra.mxu0 0.0
  %232 = vmatprep.subr.mxu0 0.0
  %233 = vmatpush1.msra.mxu0 0.0
  %234 = vmatprep.subr.mxu0 0.0
  %235 = vmatpush1.msra.mxu0 0.0
  %236 = vmatprep.subr.mxu0 0.0
  %237 = vmatpush1.msra.mxu0 0.0
  %238 = vmatprep.subr.mxu0 0.0
  %239 = vmatpush1.msra.mxu0 0.0
  %240 = vmatprep.subr.mxu0 0.0
  %241 = vmatpush1.msra.mxu0 0.0
  %242 = vmatprep.mubr.f32.mxu0 %v82
  %243 = vmatmul.mubr.f32.gmra.mrb[0].mxu0 %v16
  %v244 = vpop.f32.mrb[0].mxu0
  %v245 = vadd.f32 %v160, %v244
  %v246 = vpop.f32.mrb[0].mxu0
  %247 = vmatprep.mubr.f32.mxu0 %v85
  %248 = vmatmul.mubr.f32.gmra.mrb[0].mxu0 %v20
  %v249 = vpop.f32.mrb[0].mxu0
  %v250 = vadd.f32 %v165, %v249
  %v251 = vpop.f32.mrb[0].mxu0
  %252 = vmatprep.mubr.f32.mxu0 %v88
  %253 = vmatmul.mubr.f32.gmra.mrb[0].mxu0 %v24
  %v254 = vpop.f32.mrb[0].mxu0
  %v255 = vadd.f32 %v170, %v254
  %v256 = vpop.f32.mrb[0].mxu0
  %257 = vmatprep.mubr.f32.mxu0 %v91
  %258 = vmatmul.mubr.f32.gmra.mrb[0].mxu0 %v28
  %v259 = vpop.f32.mrb[0].mxu0
  %v260 = vadd.f32 %v175, %v259
  %v261 = vpop.f32.mrb[0].mxu0
  %262 = vdwg.mxu0
  %vm263 = vcmask 261120
  %v264 = vsel %vm263, %v245, 0.0
  %265 = vadd.xlane.f32.xlu0 %v264
  %v266 = vpop.xlane.xlu0 %265
  %v267 = vsel %vm263, %v250, 0.0
  %268 = vadd.xlane.f32.xlu0 %v267
  %v269 = vpop.xlane.xlu0 %268
  %v270 = vsel %vm263, %v255, 0.0
  %271 = vadd.xlane.f32.xlu0 %v270
  %v272 = vpop.xlane.xlu0 %271
  %v273 = vsel %vm263, %v260, 0.0
  %274 = vadd.xlane.f32.xlu0 %v273
  %v275 = vpop.xlane.xlu0 %274
  %v276 = vmul.f32 %v245, %v245
  %v277 = vmul.f32 %v250, %v250
  %v278 = vmul.f32 %v255, %v255
  %v279 = vmul.f32 %v260, %v260
  %v280 = vsel %vm263, %v276, 0.0
  %281 = vadd.xlane.f32.xlu0 %v280
  %v282 = vpop.xlane.xlu0 %281
  %v283 = vsel %vm263, %v277, 0.0
  %284 = vadd.xlane.f32.xlu0 %v283
  %v285 = vpop.xlane.xlu0 %284
  %v286 = vsel %vm263, %v278, 0.0
  %287 = vadd.xlane.f32.xlu0 %v286
  %v288 = vpop.xlane.xlu0 %287
  %v289 = vsel %vm263, %v279, 0.0
  %290 = vadd.xlane.f32.xlu0 %v289
  %v291 = vpop.xlane.xlu0 %290
  %v292 = vmul.f32 %v266, 0.03125
  %v293 = vmul.f32 %v269, 0.03125
  %v294 = vmul.f32 %v272, 0.03125
  %v295 = vmul.f32 %v275, 0.03125
  %v296 = vmul.f32 %v282, 0.03125
  %v297 = vmul.f32 %v285, 0.03125
  %v298 = vmul.f32 %v288, 0.03125
  %v299 = vmul.f32 %v291, 0.03125
  %v300 = vmul.f32 %v292, %v292
  %v301 = vmul.f32 %v293, %v293
  %v302 = vmul.f32 %v294, %v294
  %v303 = vmul.f32 %v295, %v295
  %v304 = vsub.f32 %v296, %v300
  %v305 = vsub.f32 %v297, %v301
  %v306 = vsub.f32 %v298, %v302
  %v307 = vsub.f32 %v299, %v303
  %v308 = vld [vmem:[%s2] sm:$0xff]
  %v309 = vld [vmem:[%s2 + $0x8] sm:$0xff]
  %v310 = vld [vmem:[%s2 + $0x10] sm:$0xff]
  %v311 = vld [vmem:[%s2 + $0x18] sm:$0xff]
  %v312 = vadd.f32 %v304, 1e-05
  %v313 = vadd.f32 %v305, 1e-05
  %v314 = vadd.f32 %v306, 1e-05
  %v315 = vadd.f32 %v307, 1e-05
  %v316 = vrsqrt.pop %v312
  %v317 = vrsqrt.pop %v313
  %v318 = vrsqrt.pop %v314
  %v319 = vrsqrt.pop %v315
  %v320 = vmul.f32 %v308, %v316
  %v321 = vmul.f32 %v309, %v317
  %v322 = vmul.f32 %v310, %v318
  %v323 = vmul.f32 %v311, %v319
  %v324 = vmul.f32 %v292, %v320
  %v325 = vmul.f32 %v293, %v321
  %v326 = vmul.f32 %v294, %v322
  %v327 = vmul.f32 %v295, %v323
  %332 = vrot.lane.b32.xlu0 %v324, 1
  %v333 = vpop.permute.xlu0 %332
  %334 = vrot.lane.b32.xlu0 %v325, 1
  %v335 = vpop.permute.xlu0 %334
  %336 = vrot.lane.b32.xlu0 %v326, 1
  %v337 = vpop.permute.xlu0 %336
  %338 = vrot.lane.b32.xlu0 %v327, 1
  %v339 = vpop.permute.xlu0 %338
  %v344 = vsub.f32 %v308, %v333
  %v345 = vsub.f32 %v309, %v335
  %v346 = vsub.f32 %v310, %v337
  %v347 = vsub.f32 %v311, %v339
  %349 = vset.pattern.permute.xlu0 0
  %350 = vperm.xlu0 %349, %v320
  %v351 = vpop.permute.xlu0 %350
  %354 = vset.pattern.permute.xlu0 0
  %355 = vperm.xlu0 %354, %v321
  %v356 = vpop.permute.xlu0 %355
  %359 = vset.pattern.permute.xlu0 0
  %360 = vperm.xlu0 %359, %v322
  %v361 = vpop.permute.xlu0 %360
  %364 = vset.pattern.permute.xlu0 0
  %365 = vperm.xlu0 %364, %v323
  %v366 = vpop.permute.xlu0 %365
  %v368 = vmul.f32 %v245, %v351
  %v369 = vmul.f32 %v250, %v356
  %v370 = vmul.f32 %v255, %v361
  %v371 = vmul.f32 %v260, %v366
  %373 = vset.pattern.permute.xlu0 1
  %374 = vperm.xlu0 %373, %v344
  %v375 = vpop.permute.xlu0 %374
  %378 = vset.pattern.permute.xlu0 1
  %379 = vperm.xlu0 %378, %v345
  %v380 = vpop.permute.xlu0 %379
  %383 = vset.pattern.permute.xlu0 1
  %384 = vperm.xlu0 %383, %v346
  %v385 = vpop.permute.xlu0 %384
  %388 = vset.pattern.permute.xlu0 1
  %389 = vperm.xlu0 %388, %v347
  %v390 = vpop.permute.xlu0 %389
  %v392 = vadd.f32 %v368, %v375
  %v393 = vadd.f32 %v369, %v380
  %v394 = vadd.f32 %v370, %v385
  %v395 = vadd.f32 %v371, %v390
  %vm396 = vcmp.ge.f32.partialorder %v392, 0.0
  %vm397 = vcmp.ge.f32.partialorder %v393, 0.0
  %vm398 = vcmp.ge.f32.partialorder %v394, 0.0
  %vm399 = vcmp.ge.f32.partialorder %v395, 0.0
  %401 = vset.pattern.permute.xlu0 2
  %402 = vperm.xlu0 %401, %v308
  %v403 = vpop.permute.xlu0 %402
  %406 = vset.pattern.permute.xlu0 2
  %407 = vperm.xlu0 %406, %v309
  %v408 = vpop.permute.xlu0 %407
  %411 = vset.pattern.permute.xlu0 2
  %412 = vperm.xlu0 %411, %v310
  %v413 = vpop.permute.xlu0 %412
  %416 = vset.pattern.permute.xlu0 2
  %417 = vperm.xlu0 %416, %v311
  %v418 = vpop.permute.xlu0 %417
  %v420 = vmul.f32 %v403, %v392
  %v421 = vmul.f32 %v408, %v393
  %v422 = vmul.f32 %v413, %v394
  %v423 = vmul.f32 %v418, %v395
  %v424 = vsel %vm396, %v392, %v420
  %v425 = vsel %vm397, %v393, %v421
  %v426 = vsel %vm398, %v394, %v422
  %v427 = vsel %vm399, %v395, %v423
  %428 = vst.msk [vmem:[%s3] sm:$0xff] %vm263, %v424
  %429 = vst.msk [vmem:[%s3 + $0x8] sm:$0xff] %vm263, %v425
  %430 = vst.msk [vmem:[%s3 + $0x10] sm:$0xff] %vm263, %v426
  %431 = vst.msk [vmem:[%s3 + $0x18] sm:$0xff] %vm263, %v427
  // Predicated region
  $region14: #{vae_conv_forward.15} parent=0 // pred_check
    _
  $region15: #{vae_conv_forward.15} parent=0 // pred_check_branch
    %433 = sbr.rel (0) target = $region17
  $region16: #{vae_conv_forward.15} parent=0 // pred_region
    _
  $region17: #{vae_conv_forward.15} parent=0 // pred_fallthru
    _
  // Predicated region
  $region18: #{vae_conv_forward.15} parent=0 // pred_check
    _
  $region19: #{vae_conv_forward.15} parent=0 // pred_check_branch
    %435 = sbr.rel (0) target = $region21
  $region20: #{vae_conv_forward.15} parent=0 // pred_region
    _
  $region21: #{vae_conv_forward.15} parent=0 // pred_fallthru
    _

// kernel: vae_conv_forward.16
$region0: #{vae_conv_forward.16}
  #allocation0 [shape = 'u32[]', space=smem, size = 0x4, offset = 0x4, fixed_abs, tag = 'smem constant byte address 0x4 - core index']
  #allocation1 [shape = 'u32[144,128]{1,0:T(1,128)}', space=vmem, size = 0x12000, scoped, tag = 'internal scratch']
  %s0 = inlined_call_operand.vmem [shape: f32[512,2], index: 0, kind: input, shape index: {}]
  %s1 = inlined_call_operand.vmem [shape: f32[32,512], index: 1, kind: input, shape index: {}]
  %s2 = inlined_call_operand.vmem [shape: f32[32,3], index: 2, kind: input, shape index: {}]
  %s3 = inlined_call_operand.vmem [shape: f32[32,2], index: 3, kind: output, shape index: {}]
  %s4 = sld [smem:[#allocation0]]
  $region22: #{vae_conv_forward.16} parent=0
    _
  %s6 = ssub.s32 1, %s4
  %s7 = scalar_select 0, %s6, %s4
  // Predicated region
  $region2: #{vae_conv_forward.16} parent=0 // pred_check
    _
  $region3: #{vae_conv_forward.16} parent=0 // pred_check_branch
    %9 = sbr.rel (0) target = $region5
  $region4: #{vae_conv_forward.16} parent=0 // pred_region
    _
  $region5: #{vae_conv_forward.16} parent=0 // pred_fallthru
    _
  // Predicated region
  $region6: #{vae_conv_forward.16} parent=0 // pred_check
    _
  $region7: #{vae_conv_forward.16} parent=0 // pred_check_branch
    %11 = sbr.rel (0) target = $region9
  $region8: #{vae_conv_forward.16} parent=0 // pred_region
    _
  $region9: #{vae_conv_forward.16} parent=0 // pred_fallthru
    _
  // Predicated region
  $region10: #{vae_conv_forward.16} parent=0 // pred_check
    _
  $region11: #{vae_conv_forward.16} parent=0 // pred_check_branch
    %13 = sbr.rel (0) target = $region13
  $region12: #{vae_conv_forward.16} parent=0 // pred_region
    _
  $region13: #{vae_conv_forward.16} parent=0 // pred_fallthru
    _
  %v14 = vld [vmem:[%s1] sm:$0xff]
  %v15 = vld [vmem:[%s1 + $0x8] sm:$0xff]
  %v16 = vld [vmem:[%s1 + $0x10] sm:$0xff]
  %v17 = vld [vmem:[%s1 + $0x18] sm:$0xff]
  %v18 = vld [vmem:[%s1 + $0x20] sm:$0xff]
  %v19 = vld [vmem:[%s1 + $0x28] sm:$0xff]
  %v20 = vld [vmem:[%s1 + $0x30] sm:$0xff]
  %v21 = vld [vmem:[%s1 + $0x38] sm:$0xff]
  %v22 = vld [vmem:[%s1 + $0x40] sm:$0xff]
  %v23 = vld [vmem:[%s1 + $0x48] sm:$0xff]
  %v24 = vld [vmem:[%s1 + $0x50] sm:$0xff]
  %v25 = vld [vmem:[%s1 + $0x58] sm:$0xff]
  %v26 = vld [vmem:[%s1 + $0x60] sm:$0xff]
  %v27 = vld [vmem:[%s1 + $0x68] sm:$0xff]
  %v28 = vld [vmem:[%s1 + $0x70] sm:$0xff]
  %v29 = vld [vmem:[%s1 + $0x78] sm:$0xff]
  %v30 = vld [vmem:[%s0] sm:$0xff]
  %v31 = vld [vmem:[%s0 + $0x8] sm:$0xff]
  %v32 = vld [vmem:[%s0 + $0x10] sm:$0xff]
  %v33 = vld [vmem:[%s0 + $0x18] sm:$0xff]
  %v34 = vld [vmem:[%s0 + $0x20] sm:$0xff]
  %v35 = vld [vmem:[%s0 + $0x28] sm:$0xff]
  %v36 = vld [vmem:[%s0 + $0x30] sm:$0xff]
  %v37 = vld [vmem:[%s0 + $0x38] sm:$0xff]
  %v38 = vld [vmem:[%s0 + $0x40] sm:$0xff]
  %v39 = vld [vmem:[%s0 + $0x48] sm:$0xff]
  %v40 = vld [vmem:[%s0 + $0x50] sm:$0xff]
  %v41 = vld [vmem:[%s0 + $0x58] sm:$0xff]
  %v42 = vld [vmem:[%s0 + $0x60] sm:$0xff]
  %v43 = vld [vmem:[%s0 + $0x68] sm:$0xff]
  %v44 = vld [vmem:[%s0 + $0x70] sm:$0xff]
  %v45 = vld [vmem:[%s0 + $0x78] sm:$0xff]
  %v46 = vld [vmem:[%s0 + $0x80] sm:$0xff]
  %v47 = vld [vmem:[%s0 + $0x88] sm:$0xff]
  %v48 = vld [vmem:[%s0 + $0x90] sm:$0xff]
  %v49 = vld [vmem:[%s0 + $0x98] sm:$0xff]
  %v50 = vld [vmem:[%s0 + $0xa0] sm:$0xff]
  %v51 = vld [vmem:[%s0 + $0xa8] sm:$0xff]
  %v52 = vld [vmem:[%s0 + $0xb0] sm:$0xff]
  %v53 = vld [vmem:[%s0 + $0xb8] sm:$0xff]
  %v54 = vld [vmem:[%s0 + $0xc0] sm:$0xff]
  %v55 = vld [vmem:[%s0 + $0xc8] sm:$0xff]
  %v56 = vld [vmem:[%s0 + $0xd0] sm:$0xff]
  %v57 = vld [vmem:[%s0 + $0xd8] sm:$0xff]
  %v58 = vld [vmem:[%s0 + $0xe0] sm:$0xff]
  %v59 = vld [vmem:[%s0 + $0xe8] sm:$0xff]
  %v60 = vld [vmem:[%s0 + $0xf0] sm:$0xff]
  %v61 = vld [vmem:[%s0 + $0xf8] sm:$0xff]
  %v62 = vld [vmem:[%s0 + $0x100] sm:$0xff]
  %v63 = vld [vmem:[%s0 + $0x108] sm:$0xff]
  %v64 = vld [vmem:[%s0 + $0x110] sm:$0xff]
  %v65 = vld [vmem:[%s0 + $0x118] sm:$0xff]
  %v66 = vld [vmem:[%s0 + $0x120] sm:$0xff]
  %v67 = vld [vmem:[%s0 + $0x128] sm:$0xff]
  %v68 = vld [vmem:[%s0 + $0x130] sm:$0xff]
  %v69 = vld [vmem:[%s0 + $0x138] sm:$0xff]
  %v70 = vld [vmem:[%s0 + $0x140] sm:$0xff]
  %v71 = vld [vmem:[%s0 + $0x148] sm:$0xff]
  %v72 = vld [vmem:[%s0 + $0x150] sm:$0xff]
  %v73 = vld [vmem:[%s0 + $0x158] sm:$0xff]
  %v74 = vld [vmem:[%s0 + $0x160] sm:$0xff]
  %v75 = vld [vmem:[%s0 + $0x168] sm:$0xff]
  %v76 = vld [vmem:[%s0 + $0x170] sm:$0xff]
  %v77 = vld [vmem:[%s0 + $0x178] sm:$0xff]
  %v78 = vld [vmem:[%s0 + $0x180] sm:$0xff]
  %v79 = vld [vmem:[%s0 + $0x188] sm:$0xff]
  %v80 = vld [vmem:[%s0 + $0x190] sm:$0xff]
  %v81 = vld [vmem:[%s0 + $0x198] sm:$0xff]
  %v82 = vld [vmem:[%s0 + $0x1a0] sm:$0xff]
  %v83 = vld [vmem:[%s0 + $0x1a8] sm:$0xff]
  %v84 = vld [vmem:[%s0 + $0x1b0] sm:$0xff]
  %v85 = vld [vmem:[%s0 + $0x1b8] sm:$0xff]
  %v86 = vld [vmem:[%s0 + $0x1c0] sm:$0xff]
  %v87 = vld [vmem:[%s0 + $0x1c8] sm:$0xff]
  %v88 = vld [vmem:[%s0 + $0x1d0] sm:$0xff]
  %v89 = vld [vmem:[%s0 + $0x1d8] sm:$0xff]
  %v90 = vld [vmem:[%s0 + $0x1e0] sm:$0xff]
  %v91 = vld [vmem:[%s0 + $0x1e8] sm:$0xff]
  %v92 = vld [vmem:[%s0 + $0x1f0] sm:$0xff]
  %v93 = vld [vmem:[%s0 + $0x1f8] sm:$0xff]
  %94 = vmatprep.subr.mxu0 0.0
  %95 = vmatpush1.msra.mxu0 %v30
  %96 = vmatprep.subr.mxu0 0.0
  %97 = vmatpush1.msra.mxu0 %v31
  %98 = vmatprep.subr.mxu0 0.0
  %99 = vmatpush1.msra.mxu0 %v32
  %100 = vmatprep.subr.mxu0 0.0
  %101 = vmatpush1.msra.mxu0 %v33
  %102 = vmatprep.subr.mxu0 0.0
  %103 = vmatpush1.msra.mxu0 %v34
  %104 = vmatprep.subr.mxu0 0.0
  %105 = vmatpush1.msra.mxu0 %v35
  %106 = vmatprep.subr.mxu0 0.0
  %107 = vmatpush1.msra.mxu0 %v36
  %108 = vmatprep.subr.mxu0 0.0
  %109 = vmatpush1.msra.mxu0 %v37
  %110 = vmatprep.subr.mxu0 0.0
  %111 = vmatpush1.msra.mxu0 %v38
  %112 = vmatprep.subr.mxu0 0.0
  %113 = vmatpush1.msra.mxu0 %v39
  %114 = vmatprep.subr.mxu0 0.0
  %115 = vmatpush1.msra.mxu0 %v40
  %116 = vmatprep.subr.mxu0 0.0
  %117 = vmatpush1.msra.mxu0 %v41
  %118 = vmatprep.subr.mxu0 0.0
  %119 = vmatpush1.msra.mxu0 %v42
  %120 = vmatprep.subr.mxu0 0.0
  %121 = vmatpush1.msra.mxu0 %v43
  %122 = vmatprep.subr.mxu0 0.0
  %123 = vmatpush1.msra.mxu0 %v44
  %124 = vmatprep.subr.mxu0 0.0
  %125 = vmatpush1.msra.mxu0 %v45
  %126 = vmatprep.subr.mxu0 0.0
  %127 = vmatpush1.msra.mxu0 %v46
  %128 = vmatprep.subr.mxu0 0.0
  %129 = vmatpush1.msra.mxu0 %v47
  %130 = vmatprep.subr.mxu0 0.0
  %131 = vmatpush1.msra.mxu0 %v48
  %132 = vmatprep.subr.mxu0 0.0
  %133 = vmatpush1.msra.mxu0 %v49
  %134 = vmatprep.subr.mxu0 0.0
  %135 = vmatpush1.msra.mxu0 %v50
  %136 = vmatprep.subr.mxu0 0.0
  %137 = vmatpush1.msra.mxu0 %v51
  %138 = vmatprep.subr.mxu0 0.0
  %139 = vmatpush1.msra.mxu0 %v52
  %140 = vmatprep.subr.mxu0 0.0
  %141 = vmatpush1.msra.mxu0 %v53
  %142 = vmatprep.subr.mxu0 0.0
  %143 = vmatpush1.msra.mxu0 %v54
  %144 = vmatprep.subr.mxu0 0.0
  %145 = vmatpush1.msra.mxu0 %v55
  %146 = vmatprep.subr.mxu0 0.0
  %147 = vmatpush1.msra.mxu0 %v56
  %148 = vmatprep.subr.mxu0 0.0
  %149 = vmatpush1.msra.mxu0 %v57
  %150 = vmatprep.subr.mxu0 0.0
  %151 = vmatpush1.msra.mxu0 %v58
  %152 = vmatprep.subr.mxu0 0.0
  %153 = vmatpush1.msra.mxu0 %v59
  %154 = vmatprep.subr.mxu0 0.0
  %155 = vmatpush1.msra.mxu0 %v60
  %156 = vmatprep.subr.mxu0 0.0
  %157 = vmatpush1.msra.mxu0 %v61
  %158 = vmatprep.mubr.f32.mxu0 %v15
  %159 = vmatmul.mubr.f32.gmra.mrb[0].mxu0 %v14
  %v160 = vpop.f32.mrb[0].mxu0
  %v161 = vadd.f32 0.0, %v160
  %v162 = vpop.f32.mrb[0].mxu0
  %163 = vmatprep.mubr.f32.mxu0 %v19
  %164 = vmatmul.mubr.f32.gmra.mrb[0].mxu0 %v18
  %v165 = vpop.f32.mrb[0].mxu0
  %v166 = vadd.f32 0.0, %v165
  %v167 = vpop.f32.mrb[0].mxu0
  %168 = vmatprep.mubr.f32.mxu0 %v23
  %169 = vmatmul.mubr.f32.gmra.mrb[0].mxu0 %v22
  %v170 = vpop.f32.mrb[0].mxu0
  %v171 = vadd.f32 0.0, %v170
  %v172 = vpop.f32.mrb[0].mxu0
  %173 = vmatprep.mubr.f32.mxu0 %v27
  %174 = vmatmul.mubr.f32.gmra.mrb[0].mxu0 %v26
  %v175 = vpop.f32.mrb[0].mxu0
  %v176 = vadd.f32 0.0, %v175
  %v177 = vpop.f32.mrb[0].mxu0
  %178 = vdwg.mxu0
  %179 = vmatprep.subr.mxu0 0.0
  %180 = vmatpush1.msra.mxu0 %v62
  %181 = vmatprep.subr.mxu0 0.0
  %182 = vmatpush1.msra.mxu0 %v63
  %183 = vmatprep.subr.mxu0 0.0
  %184 = vmatpush1.msra.mxu0 %v64
  %185 = vmatprep.subr.mxu0 0.0
  %186 = vmatpush1.msra.mxu0 %v65
  %187 = vmatprep.subr.mxu0 0.0
  %188 = vmatpush1.msra.mxu0 %v66
  %189 = vmatprep.subr.mxu0 0.0
  %190 = vmatpush1.msra.mxu0 %v67
  %191 = vmatprep.subr.mxu0 0.0
  %192 = vmatpush1.msra.mxu0 %v68
  %193 = vmatprep.subr.mxu0 0.0
  %194 = vmatpush1.msra.mxu0 %v69
  %195 = vmatprep.subr.mxu0 0.0
  %196 = vmatpush1.msra.mxu0 %v70
  %197 = vmatprep.subr.mxu0 0.0
  %198 = vmatpush1.msra.mxu0 %v71
  %199 = vmatprep.subr.mxu0 0.0
  %200 = vmatpush1.msra.mxu0 %v72
  %201 = vmatprep.subr.mxu0 0.0
  %202 = vmatpush1.msra.mxu0 %v73
  %203 = vmatprep.subr.mxu0 0.0
  %204 = vmatpush1.msra.mxu0 %v74
  %205 = vmatprep.subr.mxu0 0.0
  %206 = vmatpush1.msra.mxu0 %v75
  %207 = vmatprep.subr.mxu0 0.0
  %208 = vmatpush1.msra.mxu0 %v76
  %209 = vmatprep.subr.mxu0 0.0
  %210 = vmatpush1.msra.mxu0 %v77
  %211 = vmatprep.subr.mxu0 0.0
  %212 = vmatpush1.msra.mxu0 %v78
  %213 = vmatprep.subr.mxu0 0.0
  %214 = vmatpush1.msra.mxu0 %v79
  %215 = vmatprep.subr.mxu0 0.0
  %216 = vmatpush1.msra.mxu0 %v80
  %217 = vmatprep.subr.mxu0 0.0
  %218 = vmatpush1.msra.mxu0 %v81
  %219 = vmatprep.subr.mxu0 0.0
  %220 = vmatpush1.msra.mxu0 %v82
  %221 = vmatprep.subr.mxu0 0.0
  %222 = vmatpush1.msra.mxu0 %v83
  %223 = vmatprep.subr.mxu0 0.0
  %224 = vmatpush1.msra.mxu0 %v84
  %225 = vmatprep.subr.mxu0 0.0
  %226 = vmatpush1.msra.mxu0 %v85
  %227 = vmatprep.subr.mxu0 0.0
  %228 = vmatpush1.msra.mxu0 %v86
  %229 = vmatprep.subr.mxu0 0.0
  %230 = vmatpush1.msra.mxu0 %v87
  %231 = vmatprep.subr.mxu0 0.0
  %232 = vmatpush1.msra.mxu0 %v88
  %233 = vmatprep.subr.mxu0 0.0
  %234 = vmatpush1.msra.mxu0 %v89
  %235 = vmatprep.subr.mxu0 0.0
  %236 = vmatpush1.msra.mxu0 %v90
  %237 = vmatprep.subr.mxu0 0.0
  %238 = vmatpush1.msra.mxu0 %v91
  %239 = vmatprep.subr.mxu0 0.0
  %240 = vmatpush1.msra.mxu0 %v92
  %241 = vmatprep.subr.mxu0 0.0
  %242 = vmatpush1.msra.mxu0 %v93
  %243 = vmatprep.mubr.f32.mxu0 %v17
  %244 = vmatmul.mubr.f32.gmra.mrb[0].mxu0 %v16
  %v245 = vpop.f32.mrb[0].mxu0
  %v246 = vadd.f32 %v161, %v245
  %v247 = vpop.f32.mrb[0].mxu0
  %248 = vmatprep.mubr.f32.mxu0 %v21
  %249 = vmatmul.mubr.f32.gmra.mrb[0].mxu0 %v20
  %v250 = vpop.f32.mrb[0].mxu0
  %v251 = vadd.f32 %v166, %v250
  %v252 = vpop.f32.mrb[0].mxu0
  %253 = vmatprep.mubr.f32.mxu0 %v25
  %254 = vmatmul.mubr.f32.gmra.mrb[0].mxu0 %v24
  %v255 = vpop.f32.mrb[0].mxu0
  %v256 = vadd.f32 %v171, %v255
  %v257 = vpop.f32.mrb[0].mxu0
  %258 = vmatprep.mubr.f32.mxu0 %v29
  %259 = vmatmul.mubr.f32.gmra.mrb[0].mxu0 %v28
  %v260 = vpop.f32.mrb[0].mxu0
  %v261 = vadd.f32 %v176, %v260
  %v262 = vpop.f32.mrb[0].mxu0
  %263 = vdwg.mxu0
  %vm264 = vcmask 15360
  %v265 = vsel %vm264, %v246, 0.0
  %266 = vadd.xlane.f32.xlu0 %v265
  %v267 = vpop.xlane.xlu0 %266
  %v268 = vsel %vm264, %v251, 0.0
  %269 = vadd.xlane.f32.xlu0 %v268
  %v270 = vpop.xlane.xlu0 %269
  %v271 = vsel %vm264, %v256, 0.0
  %272 = vadd.xlane.f32.xlu0 %v271
  %v273 = vpop.xlane.xlu0 %272
  %v274 = vsel %vm264, %v261, 0.0
  %275 = vadd.xlane.f32.xlu0 %v274
  %v276 = vpop.xlane.xlu0 %275
  %v277 = vmul.f32 %v246, %v246
  %v278 = vmul.f32 %v251, %v251
  %v279 = vmul.f32 %v256, %v256
  %v280 = vmul.f32 %v261, %v261
  %v281 = vsel %vm264, %v277, 0.0
  %282 = vadd.xlane.f32.xlu0 %v281
  %v283 = vpop.xlane.xlu0 %282
  %v284 = vsel %vm264, %v278, 0.0
  %285 = vadd.xlane.f32.xlu0 %v284
  %v286 = vpop.xlane.xlu0 %285
  %v287 = vsel %vm264, %v279, 0.0
  %288 = vadd.xlane.f32.xlu0 %v287
  %v289 = vpop.xlane.xlu0 %288
  %v290 = vsel %vm264, %v280, 0.0
  %291 = vadd.xlane.f32.xlu0 %v290
  %v292 = vpop.xlane.xlu0 %291
  %v293 = vmul.f32 %v267, 0.5
  %v294 = vmul.f32 %v270, 0.5
  %v295 = vmul.f32 %v273, 0.5
  %v296 = vmul.f32 %v276, 0.5
  %v297 = vmul.f32 %v283, 0.5
  %v298 = vmul.f32 %v286, 0.5
  %v299 = vmul.f32 %v289, 0.5
  %v300 = vmul.f32 %v292, 0.5
  %v301 = vmul.f32 %v293, %v293
  %v302 = vmul.f32 %v294, %v294
  %v303 = vmul.f32 %v295, %v295
  %v304 = vmul.f32 %v296, %v296
  %v305 = vsub.f32 %v297, %v301
  %v306 = vsub.f32 %v298, %v302
  %v307 = vsub.f32 %v299, %v303
  %v308 = vsub.f32 %v300, %v304
  %v309 = vld [vmem:[%s2] sm:$0xff]
  %v310 = vld [vmem:[%s2 + $0x8] sm:$0xff]
  %v311 = vld [vmem:[%s2 + $0x10] sm:$0xff]
  %v312 = vld [vmem:[%s2 + $0x18] sm:$0xff]
  %v313 = vadd.f32 %v305, 1e-05
  %v314 = vadd.f32 %v306, 1e-05
  %v315 = vadd.f32 %v307, 1e-05
  %v316 = vadd.f32 %v308, 1e-05
  %v317 = vrsqrt.pop %v313
  %v318 = vrsqrt.pop %v314
  %v319 = vrsqrt.pop %v315
  %v320 = vrsqrt.pop %v316
  %v321 = vmul.f32 %v309, %v317
  %v322 = vmul.f32 %v310, %v318
  %v323 = vmul.f32 %v311, %v319
  %v324 = vmul.f32 %v312, %v320
  %v325 = vmul.f32 %v293, %v321
  %v326 = vmul.f32 %v294, %v322
  %v327 = vmul.f32 %v295, %v323
  %v328 = vmul.f32 %v296, %v324
  %333 = vrot.lane.b32.xlu0 %v325, 1
  %v334 = vpop.permute.xlu0 %333
  %335 = vrot.lane.b32.xlu0 %v326, 1
  %v336 = vpop.permute.xlu0 %335
  %337 = vrot.lane.b32.xlu0 %v327, 1
  %v338 = vpop.permute.xlu0 %337
  %339 = vrot.lane.b32.xlu0 %v328, 1
  %v340 = vpop.permute.xlu0 %339
  %v345 = vsub.f32 %v309, %v334
  %v346 = vsub.f32 %v310, %v336
  %v347 = vsub.f32 %v311, %v338
  %v348 = vsub.f32 %v312, %v340
  %350 = vset.pattern.permute.xlu0 0
  %351 = vperm.xlu0 %350, %v321
  %v352 = vpop.permute.xlu0 %351
  %355 = vset.pattern.permute.xlu0 0
  %356 = vperm.xlu0 %355, %v322
  %v357 = vpop.permute.xlu0 %356
  %360 = vset.pattern.permute.xlu0 0
  %361 = vperm.xlu0 %360, %v323
  %v362 = vpop.permute.xlu0 %361
  %365 = vset.pattern.permute.xlu0 0
  %366 = vperm.xlu0 %365, %v324
  %v367 = vpop.permute.xlu0 %366
  %v369 = vmul.f32 %v246, %v352
  %v370 = vmul.f32 %v251, %v357
  %v371 = vmul.f32 %v256, %v362
  %v372 = vmul.f32 %v261, %v367
  %374 = vset.pattern.permute.xlu0 1
  %375 = vperm.xlu0 %374, %v345
  %v376 = vpop.permute.xlu0 %375
  %379 = vset.pattern.permute.xlu0 1
  %380 = vperm.xlu0 %379, %v346
  %v381 = vpop.permute.xlu0 %380
  %384 = vset.pattern.permute.xlu0 1
  %385 = vperm.xlu0 %384, %v347
  %v386 = vpop.permute.xlu0 %385
  %389 = vset.pattern.permute.xlu0 1
  %390 = vperm.xlu0 %389, %v348
  %v391 = vpop.permute.xlu0 %390
  %v393 = vadd.f32 %v369, %v376
  %v394 = vadd.f32 %v370, %v381
  %v395 = vadd.f32 %v371, %v386
  %v396 = vadd.f32 %v372, %v391
  %vm397 = vcmp.ge.f32.partialorder %v393, 0.0
  %vm398 = vcmp.ge.f32.partialorder %v394, 0.0
  %vm399 = vcmp.ge.f32.partialorder %v395, 0.0
  %vm400 = vcmp.ge.f32.partialorder %v396, 0.0
  %402 = vset.pattern.permute.xlu0 2
  %403 = vperm.xlu0 %402, %v309
  %v404 = vpop.permute.xlu0 %403
  %407 = vset.pattern.permute.xlu0 2
  %408 = vperm.xlu0 %407, %v310
  %v409 = vpop.permute.xlu0 %408
  %412 = vset.pattern.permute.xlu0 2
  %413 = vperm.xlu0 %412, %v311
  %v414 = vpop.permute.xlu0 %413
  %417 = vset.pattern.permute.xlu0 2
  %418 = vperm.xlu0 %417, %v312
  %v419 = vpop.permute.xlu0 %418
  %v421 = vmul.f32 %v404, %v393
  %v422 = vmul.f32 %v409, %v394
  %v423 = vmul.f32 %v414, %v395
  %v424 = vmul.f32 %v419, %v396
  %v425 = vsel %vm397, %v393, %v421
  %v426 = vsel %vm398, %v394, %v422
  %v427 = vsel %vm399, %v395, %v423
  %v428 = vsel %vm400, %v396, %v424
  %429 = vst.msk [vmem:[%s3] sm:$0xff] %vm264, %v425
  %430 = vst.msk [vmem:[%s3 + $0x8] sm:$0xff] %vm264, %v426
  %431 = vst.msk [vmem:[%s3 + $0x10] sm:$0xff] %vm264, %v427
  %432 = vst.msk [vmem:[%s3 + $0x18] sm:$0xff] %vm264, %v428
  // Predicated region
  $region14: #{vae_conv_forward.16} parent=0 // pred_check
    _
  $region15: #{vae_conv_forward.16} parent=0 // pred_check_branch
    %434 = sbr.rel (0) target = $region17
  $region16: #{vae_conv_forward.16} parent=0 // pred_region
    _
  $region17: #{vae_conv_forward.16} parent=0 // pred_fallthru
    _
  // Predicated region
  $region18: #{vae_conv_forward.16} parent=0 // pred_check
    _
  $region19: #{vae_conv_forward.16} parent=0 // pred_check_branch
    %436 = sbr.rel (0) target = $region21
  $region20: #{vae_conv_forward.16} parent=0 // pred_region
    _
  $region21: #{vae_conv_forward.16} parent=0 // pred_fallthru
    _

// kernel: vae_conv_forward.17
$region0: #{vae_conv_forward.17}
  #allocation0 [shape = 'u32[]', space=smem, size = 0x4, offset = 0x4, fixed_abs, tag = 'smem constant byte address 0x4 - core index']
  #allocation1 [shape = 'u32[144,128]{1,0:T(1,128)}', space=vmem, size = 0x12000, scoped, tag = 'internal scratch']
  %s0 = inlined_call_operand.vmem [shape: f32[32,2], index: 0, kind: input, shape index: {}]
  %s1 = inlined_call_operand.vmem [shape: f32[32,32], index: 1, kind: input, shape index: {}]
  %s2 = inlined_call_operand.vmem [shape: f32[32,1], index: 2, kind: input, shape index: {}]
  %s3 = inlined_call_operand.vmem [shape: f32[16,2], index: 3, kind: input, shape index: {}]
  %s4 = inlined_call_operand.vmem [shape: f32[288,16], index: 4, kind: input, shape index: {}]
  %s5 = inlined_call_operand.vmem [shape: f32[288,1], index: 5, kind: input, shape index: {}]
  %s6 = inlined_call_operand.vmem [shape: f32[16,2], index: 6, kind: output, shape index: {0}]
  %s7 = inlined_call_operand.vmem [shape: f32[16,2], index: 7, kind: output, shape index: {1}]
  %s8 = inlined_call_operand.vmem [shape: f32[288,2], index: 8, kind: output, shape index: {2}]
  %9 = xla_tuple %s6, %s7, %s8
  %s10 = sld [smem:[#allocation0]]
  $region50: #{vae_conv_forward.17} parent=0
    _
  %s12 = ssub.s32 1, %s10
  %s13 = scalar_select 0, %s12, %s10
  // Predicated region
  $region2: #{vae_conv_forward.17} parent=0 // pred_check
    _
  $region3: #{vae_conv_forward.17} parent=0 // pred_check_branch
    %15 = sbr.rel (0) target = $region5
  $region4: #{vae_conv_forward.17} parent=0 // pred_region
    _
  $region5: #{vae_conv_forward.17} parent=0 // pred_fallthru
    _
  // Predicated region
  $region6: #{vae_conv_forward.17} parent=0 // pred_check
    _
  $region7: #{vae_conv_forward.17} parent=0 // pred_check_branch
    %17 = sbr.rel (0) target = $region9
  $region8: #{vae_conv_forward.17} parent=0 // pred_region
    _
  $region9: #{vae_conv_forward.17} parent=0 // pred_fallthru
    _
  // Predicated region
  $region10: #{vae_conv_forward.17} parent=0 // pred_check
    _
  $region11: #{vae_conv_forward.17} parent=0 // pred_check_branch
    %19 = sbr.rel (0) target = $region13
  $region12: #{vae_conv_forward.17} parent=0 // pred_region
    _
  $region13: #{vae_conv_forward.17} parent=0 // pred_fallthru
    _
  // Predicated region
  $region14: #{vae_conv_forward.17} parent=0 // pred_check
    _
  $region15: #{vae_conv_forward.17} parent=0 // pred_check_branch
    %21 = sbr.rel (0) target = $region17
  $region16: #{vae_conv_forward.17} parent=0 // pred_region
    _
  $region17: #{vae_conv_forward.17} parent=0 // pred_fallthru
    _
  // Predicated region
  $region18: #{vae_conv_forward.17} parent=0 // pred_check
    _
  $region19: #{vae_conv_forward.17} parent=0 // pred_check_branch
    %23 = sbr.rel (0) target = $region21
  $region20: #{vae_conv_forward.17} parent=0 // pred_region
    _
  $region21: #{vae_conv_forward.17} parent=0 // pred_fallthru
    _
  // Predicated region
  $region22: #{vae_conv_forward.17} parent=0 // pred_check
    _
  $region23: #{vae_conv_forward.17} parent=0 // pred_check_branch
    %25 = sbr.rel (0) target = $region25
  $region24: #{vae_conv_forward.17} parent=0 // pred_region
    _
  $region25: #{vae_conv_forward.17} parent=0 // pred_fallthru
    _
  %v26 = vld [vmem:[%s1] sm:$0xff]
  %v27 = vld [vmem:[%s1 + $0x8] sm:$0xff]
  %v28 = vld [vmem:[%s1 + $0x10] sm:$0xff]
  %v29 = vld [vmem:[%s1 + $0x18] sm:$0xff]
  %v30 = vld [vmem:[%s0] sm:$0xff]
  %v31 = vld [vmem:[%s0 + $0x8] sm:$0xff]
  %v32 = vld [vmem:[%s0 + $0x10] sm:$0xff]
  %v33 = vld [vmem:[%s0 + $0x18] sm:$0xff]
  %v34 = vld [vmem:[%s2] sm:$0xff]
  %v35 = vld [vmem:[%s2 + $0x8] sm:$0xff]
  %v36 = vld [vmem:[%s2 + $0x10] sm:$0xff]
  %v37 = vld [vmem:[%s2 + $0x18] sm:$0xff]
  %39 = vset.pattern.permute.xlu0 0
  %40 = vperm.xlu0 %39, %v34
  %v41 = vpop.permute.xlu0 %40
  %44 = vset.pattern.permute.xlu0 0
  %45 = vperm.xlu0 %44, %v35
  %v46 = vpop.permute.xlu0 %45
  %49 = vset.pattern.permute.xlu0 0
  %50 = vperm.xlu0 %49, %v36
  %v51 = vpop.permute.xlu0 %50
  %54 = vset.pattern.permute.xlu0 0
  %55 = vperm.xlu0 %54, %v37
  %v56 = vpop.permute.xlu0 %55
  %vm58 = vcmask 261120
  %v60 = vsel %vm58, %v26, 0
  %v63 = vsel %vm58, %v27, 0
  %v66 = vsel %vm58, %v28, 0
  %v69 = vsel %vm58, %v29, 0
  %71 = vmatprep.subr.mxu0 0.0
  %72 = vmatpush1.msra.mxu0 %v30
  %73 = vmatprep.subr.mxu0 0.0
  %74 = vmatpush1.msra.mxu0 %v31
  %75 = vmatprep.subr.mxu0 0.0
  %76 = vmatpush1.msra.mxu0 %v32
  %77 = vmatprep.subr.mxu0 0.0
  %78 = vmatpush1.msra.mxu0 %v33
  %79 = vmatprep.subr.mxu0 0.0
  %80 = vmatpush1.msra.mxu0 0.0
  %81 = vmatprep.subr.mxu0 0.0
  %82 = vmatpush1.msra.mxu0 0.0
  %83 = vmatprep.subr.mxu0 0.0
  %84 = vmatpush1.msra.mxu0 0.0
  %85 = vmatprep.subr.mxu0 0.0
  %86 = vmatpush1.msra.mxu0 0.0
  %87 = vmatprep.subr.mxu0 0.0
  %88 = vmatpush1.msra.mxu0 0.0
  %89 = vmatprep.subr.mxu0 0.0
  %90 = vmatpush1.msra.mxu0 0.0
  %91 = vmatprep.subr.mxu0 0.0
  %92 = vmatpush1.msra.mxu0 0.0
  %93 = vmatprep.subr.mxu0 0.0
  %94 = vmatpush1.msra.mxu0 0.0
  %95 = vmatprep.subr.mxu0 0.0
  %96 = vmatpush1.msra.mxu0 0.0
  %97 = vmatprep.subr.mxu0 0.0
  %98 = vmatpush1.msra.mxu0 0.0
  %99 = vmatprep.subr.mxu0 0.0
  %100 = vmatpush1.msra.mxu0 0.0
  %101 = vmatprep.subr.mxu0 0.0
  %102 = vmatpush1.msra.mxu0 0.0
  %103 = vmatprep.subr.mxu0 0.0
  %104 = vmatpush1.msra.mxu0 0.0
  %105 = vmatprep.subr.mxu0 0.0
  %106 = vmatpush1.msra.mxu0 0.0
  %107 = vmatprep.subr.mxu0 0.0
  %108 = vmatpush1.msra.mxu0 0.0
  %109 = vmatprep.subr.mxu0 0.0
  %110 = vmatpush1.msra.mxu0 0.0
  %111 = vmatprep.subr.mxu0 0.0
  %112 = vmatpush1.msra.mxu0 0.0
  %113 = vmatprep.subr.mxu0 0.0
  %114 = vmatpush1.msra.mxu0 0.0
  %115 = vmatprep.subr.mxu0 0.0
  %116 = vmatpush1.msra.mxu0 0.0
  %117 = vmatprep.subr.mxu0 0.0
  %118 = vmatpush1.msra.mxu0 0.0
  %119 = vmatprep.subr.mxu0 0.0
  %120 = vmatpush1.msra.mxu0 0.0
  %121 = vmatprep.subr.mxu0 0.0
  %122 = vmatpush1.msra.mxu0 0.0
  %123 = vmatprep.subr.mxu0 0.0
  %124 = vmatpush1.msra.mxu0 0.0
  %125 = vmatprep.subr.mxu0 0.0
  %126 = vmatpush1.msra.mxu0 0.0
  %127 = vmatprep.subr.mxu0 0.0
  %128 = vmatpush1.msra.mxu0 0.0
  %129 = vmatprep.subr.mxu0 0.0
  %130 = vmatpush1.msra.mxu0 0.0
  %131 = vmatprep.subr.mxu0 0.0
  %132 = vmatpush1.msra.mxu0 0.0
  %133 = vmatprep.subr.mxu0 0.0
  %134 = vmatpush1.msra.mxu0 0.0
  %135 = vmatprep.mubr.f32.mxu0 0.0
  %136 = vmatmul.mubr.f32.gmra.mrb[0].mxu0 %v60
  %v137 = vpop.f32.mrb[0].mxu0
  %v138 = vadd.f32 %v41, %v137
  %v139 = vpop.f32.mrb[0].mxu0
  %140 = vmatprep.mubr.f32.mxu0 0.0
  %141 = vmatmul.mubr.f32.gmra.mrb[0].mxu0 %v63
  %v142 = vpop.f32.mrb[0].mxu0
  %v143 = vadd.f32 %v46, %v142
  %v144 = vpop.f32.mrb[0].mxu0
  %145 = vmatprep.mubr.f32.mxu0 0.0
  %146 = vmatmul.mubr.f32.gmra.mrb[0].mxu0 %v66
  %v147 = vpop.f32.mrb[0].mxu0
  %v148 = vadd.f32 %v51, %v147
  %v149 = vpop.f32.mrb[0].mxu0
  %150 = vmatprep.mubr.f32.mxu0 0.0
  %151 = vmatmul.mubr.f32.gmra.mrb[0].mxu0 %v69
  %v152 = vpop.f32.mrb[0].mxu0
  %v153 = vadd.f32 %v56, %v152
  %v154 = vpop.f32.mrb[0].mxu0
  %155 = vdwg.mxu0
  %vm156 = vcmask 15360
  %157 = vst.msk [vmem:[%s6] sm:$0xff] %vm156, %v138
  %158 = vst.msk [vmem:[%s6 + $0x8] sm:$0xff] %vm156, %v143
  %159 = vst.msk [vmem:[%s7] sm:$0xff] %vm156, %v148
  %160 = vst.msk [vmem:[%s7 + $0x8] sm:$0xff] %vm156, %v153
  %v161 = vmul.f32 %v148, 0.5
  %v162 = vmul.f32 %v153, 0.5
  %v163 = vmul.f32 %v161, 1.442695
  %v164 = vpow.pop %v163
  %v165 = vmul.f32 %v162, 1.442695
  %v166 = vpow.pop %v165
  %v167 = vld [vmem:[%s3] sm:$0xff]
  %v168 = vld [vmem:[%s3 + $0x8] sm:$0xff]
  %v169 = vmul.f32 %v167, %v164
  %v170 = vmul.f32 %v168, %v166
  %v171 = vadd.f32 %v169, %v138
  %v172 = vadd.f32 %v170, %v143
  %v173 = vld [vmem:[%s4] sm:$0xff]
  %v174 = vld [vmem:[%s4 + $0x8] sm:$0xff]
  %v175 = vld [vmem:[%s4 + $0x10] sm:$0xff]
  %v176 = vld [vmem:[%s4 + $0x18] sm:$0xff]
  %v177 = vld [vmem:[%s4 + $0x20] sm:$0xff]
  %v178 = vld [vmem:[%s4 + $0x28] sm:$0xff]
  %v179 = vld [vmem:[%s4 + $0x30] sm:$0xff]
  %v180 = vld [vmem:[%s4 + $0x38] sm:$0xff]
  %v181 = vld [vmem:[%s4 + $0x40] sm:$0xff]
  %v182 = vld [vmem:[%s4 + $0x48] sm:$0xff]
  %v183 = vld [vmem:[%s4 + $0x50] sm:$0xff]
  %v184 = vld [vmem:[%s4 + $0x58] sm:$0xff]
  %v185 = vld [vmem:[%s4 + $0x60] sm:$0xff]
  %v186 = vld [vmem:[%s4 + $0x68] sm:$0xff]
  %v187 = vld [vmem:[%s4 + $0x70] sm:$0xff]
  %v188 = vld [vmem:[%s4 + $0x78] sm:$0xff]
  %v189 = vld [vmem:[%s4 + $0x80] sm:$0xff]
  %v190 = vld [vmem:[%s4 + $0x88] sm:$0xff]
  %v191 = vld [vmem:[%s4 + $0x90] sm:$0xff]
  %v192 = vld [vmem:[%s4 + $0x98] sm:$0xff]
  %v193 = vld [vmem:[%s4 + $0xa0] sm:$0xff]
  %v194 = vld [vmem:[%s4 + $0xa8] sm:$0xff]
  %v195 = vld [vmem:[%s4 + $0xb0] sm:$0xff]
  %v196 = vld [vmem:[%s4 + $0xb8] sm:$0xff]
  %v197 = vld [vmem:[%s4 + $0xc0] sm:$0xff]
  %v198 = vld [vmem:[%s4 + $0xc8] sm:$0xff]
  %v199 = vld [vmem:[%s4 + $0xd0] sm:$0xff]
  %v200 = vld [vmem:[%s4 + $0xd8] sm:$0xff]
  %v201 = vld [vmem:[%s4 + $0xe0] sm:$0xff]
  %v202 = vld [vmem:[%s4 + $0xe8] sm:$0xff]
  %v203 = vld [vmem:[%s4 + $0xf0] sm:$0xff]
  %v204 = vld [vmem:[%s4 + $0xf8] sm:$0xff]
  %v205 = vld [vmem:[%s4 + $0x100] sm:$0xff]
  %v206 = vld [vmem:[%s4 + $0x108] sm:$0xff]
  %v207 = vld [vmem:[%s4 + $0x110] sm:$0xff]
  %v208 = vld [vmem:[%s4 + $0x118] sm:$0xff]
  %v209 = vld [vmem:[%s5] sm:$0xff]
  %v210 = vld [vmem:[%s5 + $0x8] sm:$0xff]
  %v211 = vld [vmem:[%s5 + $0x10] sm:$0xff]
  %v212 = vld [vmem:[%s5 + $0x18] sm:$0xff]
  %v213 = vld [vmem:[%s5 + $0x20] sm:$0xff]
  %v214 = vld [vmem:[%s5 + $0x28] sm:$0xff]
  %v215 = vld [vmem:[%s5 + $0x30] sm:$0xff]
  %v216 = vld [vmem:[%s5 + $0x38] sm:$0xff]
  %v217 = vld [vmem:[%s5 + $0x40] sm:$0xff]
  %v218 = vld [vmem:[%s5 + $0x48] sm:$0xff]
  %v219 = vld [vmem:[%s5 + $0x50] sm:$0xff]
  %v220 = vld [vmem:[%s5 + $0x58] sm:$0xff]
  %v221 = vld [vmem:[%s5 + $0x60] sm:$0xff]
  %v222 = vld [vmem:[%s5 + $0x68] sm:$0xff]
  %v223 = vld [vmem:[%s5 + $0x70] sm:$0xff]
  %v224 = vld [vmem:[%s5 + $0x78] sm:$0xff]
  %v225 = vld [vmem:[%s5 + $0x80] sm:$0xff]
  %v226 = vld [vmem:[%s5 + $0x88] sm:$0xff]
  %v227 = vld [vmem:[%s5 + $0x90] sm:$0xff]
  %v228 = vld [vmem:[%s5 + $0x98] sm:$0xff]
  %v229 = vld [vmem:[%s5 + $0xa0] sm:$0xff]
  %v230 = vld [vmem:[%s5 + $0xa8] sm:$0xff]
  %v231 = vld [vmem:[%s5 + $0xb0] sm:$0xff]
  %v232 = vld [vmem:[%s5 + $0xb8] sm:$0xff]
  %v233 = vld [vmem:[%s5 + $0xc0] sm:$0xff]
  %v234 = vld [vmem:[%s5 + $0xc8] sm:$0xff]
  %v235 = vld [vmem:[%s5 + $0xd0] sm:$0xff]
  %v236 = vld [vmem:[%s5 + $0xd8] sm:$0xff]
  %v237 = vld [vmem:[%s5 + $0xe0] sm:$0xff]
  %v238 = vld [vmem:[%s5 + $0xe8] sm:$0xff]
  %v239 = vld [vmem:[%s5 + $0xf0] sm:$0xff]
  %v240 = vld [vmem:[%s5 + $0xf8] sm:$0xff]
  %v241 = vld [vmem:[%s5 + $0x100] sm:$0xff]
  %v242 = vld [vmem:[%s5 + $0x108] sm:$0xff]
  %v243 = vld [vmem:[%s5 + $0x110] sm:$0xff]
  %v244 = vld [vmem:[%s5 + $0x118] sm:$0xff]
  %246 = vset.pattern.permute.xlu0 0
  %247 = vperm.xlu0 %246, %v209
  %v248 = vpop.permute.xlu0 %247
  %251 = vset.pattern.permute.xlu0 0
  %252 = vperm.xlu0 %251, %v210
  %v253 = vpop.permute.xlu0 %252
  %256 = vset.pattern.permute.xlu0 0
  %257 = vperm.xlu0 %256, %v211
  %v258 = vpop.permute.xlu0 %257
  %261 = vset.pattern.permute.xlu0 0
  %262 = vperm.xlu0 %261, %v212
  %v263 = vpop.permute.xlu0 %262
  %266 = vset.pattern.permute.xlu0 0
  %267 = vperm.xlu0 %266, %v213
  %v268 = vpop.permute.xlu0 %267
  %271 = vset.pattern.permute.xlu0 0
  %272 = vperm.xlu0 %271, %v214
  %v273 = vpop.permute.xlu0 %272
  %276 = vset.pattern.permute.xlu0 0
  %277 = vperm.xlu0 %276, %v215
  %v278 = vpop.permute.xlu0 %277
  %281 = vset.pattern.permute.xlu0 0
  %282 = vperm.xlu0 %281, %v216
  %v283 = vpop.permute.xlu0 %282
  %286 = vset.pattern.permute.xlu0 0
  %287 = vperm.xlu0 %286, %v217
  %v288 = vpop.permute.xlu0 %287
  %291 = vset.pattern.permute.xlu0 0
  %292 = vperm.xlu0 %291, %v218
  %v293 = vpop.permute.xlu0 %292
  %296 = vset.pattern.permute.xlu0 0
  %297 = vperm.xlu0 %296, %v219
  %v298 = vpop.permute.xlu0 %297
  %301 = vset.pattern.permute.xlu0 0
  %302 = vperm.xlu0 %301, %v220
  %v303 = vpop.permute.xlu0 %302
  %306 = vset.pattern.permute.xlu0 0
  %307 = vperm.xlu0 %306, %v221
  %v308 = vpop.permute.xlu0 %307
  %311 = vset.pattern.permute.xlu0 0
  %312 = vperm.xlu0 %311, %v222
  %v313 = vpop.permute.xlu0 %312
  %316 = vset.pattern.permute.xlu0 0
  %317 = vperm.xlu0 %316, %v223
  %v318 = vpop.permute.xlu0 %317
  %321 = vset.pattern.permute.xlu0 0
  %322 = vperm.xlu0 %321, %v224
  %v323 = vpop.permute.xlu0 %322
  %326 = vset.pattern.permute.xlu0 0
  %327 = vperm.xlu0 %326, %v225
  %v328 = vpop.permute.xlu0 %327
  %331 = vset.pattern.permute.xlu0 0
  %332 = vperm.xlu0 %331, %v226
  %v333 = vpop.permute.xlu0 %332
  %336 = vset.pattern.permute.xlu0 0
  %337 = vperm.xlu0 %336, %v227
  %v338 = vpop.permute.xlu0 %337
  %341 = vset.pattern.permute.xlu0 0
  %342 = vperm.xlu0 %341, %v228
  %v343 = vpop.permute.xlu0 %342
  %346 = vset.pattern.permute.xlu0 0
  %347 = vperm.xlu0 %346, %v229
  %v348 = vpop.permute.xlu0 %347
  %351 = vset.pattern.permute.xlu0 0
  %352 = vperm.xlu0 %351, %v230
  %v353 = vpop.permute.xlu0 %352
  %356 = vset.pattern.permute.xlu0 0
  %357 = vperm.xlu0 %356, %v231
  %v358 = vpop.permute.xlu0 %357
  %361 = vset.pattern.permute.xlu0 0
  %362 = vperm.xlu0 %361, %v232
  %v363 = vpop.permute.xlu0 %362
  %366 = vset.pattern.permute.xlu0 0
  %367 = vperm.xlu0 %366, %v233
  %v368 = vpop.permute.xlu0 %367
  %371 = vset.pattern.permute.xlu0 0
  %372 = vperm.xlu0 %371, %v234
  %v373 = vpop.permute.xlu0 %372
  %376 = vset.pattern.permute.xlu0 0
  %377 = vperm.xlu0 %376, %v235
  %v378 = vpop.permute.xlu0 %377
  %381 = vset.pattern.permute.xlu0 0
  %382 = vperm.xlu0 %381, %v236
  %v383 = vpop.permute.xlu0 %382
  %386 = vset.pattern.permute.xlu0 0
  %387 = vperm.xlu0 %386, %v237
  %v388 = vpop.permute.xlu0 %387
  %391 = vset.pattern.permute.xlu0 0
  %392 = vperm.xlu0 %391, %v238
  %v393 = vpop.permute.xlu0 %392
  %396 = vset.pattern.permute.xlu0 0
  %397 = vperm.xlu0 %396, %v239
  %v398 = vpop.permute.xlu0 %397
  %401 = vset.pattern.permute.xlu0 0
  %402 = vperm.xlu0 %401, %v240
  %v403 = vpop.permute.xlu0 %402
  %406 = vset.pattern.permute.xlu0 0
  %407 = vperm.xlu0 %406, %v241
  %v408 = vpop.permute.xlu0 %407
  %411 = vset.pattern.permute.xlu0 0
  %412 = vperm.xlu0 %411, %v242
  %v413 = vpop.permute.xlu0 %412
  %416 = vset.pattern.permute.xlu0 0
  %417 = vperm.xlu0 %416, %v243
  %v418 = vpop.permute.xlu0 %417
  %421 = vset.pattern.permute.xlu0 0
  %422 = vperm.xlu0 %421, %v244
  %v423 = vpop.permute.xlu0 %422
  %vm425 = vcmask 130048
  %v427 = vsel %vm425, %v173, 0
  %v430 = vsel %vm425, %v174, 0
  %v433 = vsel %vm425, %v175, 0
  %v436 = vsel %vm425, %v176, 0
  %v439 = vsel %vm425, %v177, 0
  %v442 = vsel %vm425, %v178, 0
  %v445 = vsel %vm425, %v179, 0
  %v448 = vsel %vm425, %v180, 0
  %v451 = vsel %vm425, %v181, 0
  %v454 = vsel %vm425, %v182, 0
  %v457 = vsel %vm425, %v183, 0
  %v460 = vsel %vm425, %v184, 0
  %v463 = vsel %vm425, %v185, 0
  %v466 = vsel %vm425, %v186, 0
  %v469 = vsel %vm425, %v187, 0
  %v472 = vsel %vm425, %v188, 0
  %v475 = vsel %vm425, %v189, 0
  %v478 = vsel %vm425, %v190, 0
  %v481 = vsel %vm425, %v191, 0
  %v484 = vsel %vm425, %v192, 0
  %v487 = vsel %vm425, %v193, 0
  %v490 = vsel %vm425, %v194, 0
  %v493 = vsel %vm425, %v195, 0
  %v496 = vsel %vm425, %v196, 0
  %v499 = vsel %vm425, %v197, 0
  %v502 = vsel %vm425, %v198, 0
  %v505 = vsel %vm425, %v199, 0
  %v508 = vsel %vm425, %v200, 0
  %v511 = vsel %vm425, %v201, 0
  %v514 = vsel %vm425, %v202, 0
  %v517 = vsel %vm425, %v203, 0
  %v520 = vsel %vm425, %v204, 0
  %v523 = vsel %vm425, %v205, 0
  %v526 = vsel %vm425, %v206, 0
  %v529 = vsel %vm425, %v207, 0
  %v532 = vsel %vm425, %v208, 0
  %534 = vmatprep.subr.mxu0 0.0
  %535 = vmatpush1.msra.mxu0 %v171
  %536 = vmatprep.subr.mxu0 0.0
  %537 = vmatpush1.msra.mxu0 %v172
  %538 = vmatprep.subr.mxu0 0.0
  %539 = vmatpush1.msra.mxu0 0.0
  %540 = vmatprep.subr.mxu0 0.0
  %541 = vmatpush1.msra.mxu0 0.0
  %542 = vmatprep.subr.mxu0 0.0
  %543 = vmatpush1.msra.mxu0 0.0
  %544 = vmatprep.subr.mxu0 0.0
  %545 = vmatpush1.msra.mxu0 0.0
  %546 = vmatprep.subr.mxu0 0.0
  %547 = vmatpush1.msra.mxu0 0.0
  %548 = vmatprep.subr.mxu0 0.0
  %549 = vmatpush1.msra.mxu0 0.0
  %550 = vmatprep.subr.mxu0 0.0
  %551 = vmatpush1.msra.mxu0 0.0
  %552 = vmatprep.subr.mxu0 0.0
  %553 = vmatpush1.msra.mxu0 0.0
  %554 = vmatprep.subr.mxu0 0.0
  %555 = vmatpush1.msra.mxu0 0.0
  %556 = vmatprep.subr.mxu0 0.0
  %557 = vmatpush1.msra.mxu0 0.0
  %558 = vmatprep.subr.mxu0 0.0
  %559 = vmatpush1.msra.mxu0 0.0
  %560 = vmatprep.subr.mxu0 0.0
  %561 = vmatpush1.msra.mxu0 0.0
  %562 = vmatprep.subr.mxu0 0.0
  %563 = vmatpush1.msra.mxu0 0.0
  %564 = vmatprep.subr.mxu0 0.0
  %565 = vmatpush1.msra.mxu0 0.0
  %566 = vmatprep.subr.mxu0 0.0
  %567 = vmatpush1.msra.mxu0 0.0
  %568 = vmatprep.subr.mxu0 0.0
  %569 = vmatpush1.msra.mxu0 0.0
  %570 = vmatprep.subr.mxu0 0.0
  %571 = vmatpush1.msra.mxu0 0.0
  %572 = vmatprep.subr.mxu0 0.0
  %573 = vmatpush1.msra.mxu0 0.0
  %574 = vmatprep.subr.mxu0 0.0
  %575 = vmatpush1.msra.mxu0 0.0
  %576 = vmatprep.subr.mxu0 0.0
  %577 = vmatpush1.msra.mxu0 0.0
  %578 = vmatprep.subr.mxu0 0.0
  %579 = vmatpush1.msra.mxu0 0.0
  %580 = vmatprep.subr.mxu0 0.0
  %581 = vmatpush1.msra.mxu0 0.0
  %582 = vmatprep.subr.mxu0 0.0
  %583 = vmatpush1.msra.mxu0 0.0
  %584 = vmatprep.subr.mxu0 0.0
  %585 = vmatpush1.msra.mxu0 0.0
  %586 = vmatprep.subr.mxu0 0.0
  %587 = vmatpush1.msra.mxu0 0.0
  %588 = vmatprep.subr.mxu0 0.0
  %589 = vmatpush1.msra.mxu0 0.0
  %590 = vmatprep.subr.mxu0 0.0
  %591 = vmatpush1.msra.mxu0 0.0
  %592 = vmatprep.subr.mxu0 0.0
  %593 = vmatpush1.msra.mxu0 0.0
  %594 = vmatprep.subr.mxu0 0.0
  %595 = vmatpush1.msra.mxu0 0.0
  %596 = vmatprep.subr.mxu0 0.0
  %597 = vmatpush1.msra.mxu0 0.0
  %598 = vmatprep.mubr.f32.mxu0 0.0
  %599 = vmatmul.mubr.f32.gmra.mrb[0].mxu0 %v427
  %v600 = vpop.f32.mrb[0].mxu0
  %v601 = vadd.f32 %v248, %v600
  %v602 = vpop.f32.mrb[0].mxu0
  %603 = vmatprep.mubr.f32.mxu0 0.0
  %604 = vmatmul.mubr.f32.gmra.mrb[0].mxu0 %v430
  %v605 = vpop.f32.mrb[0].mxu0
  %v606 = vadd.f32 %v253, %v605
  %v607 = vpop.f32.mrb[0].mxu0
  %608 = vmatprep.mubr.f32.mxu0 0.0
  %609 = vmatmul.mubr.f32.gmra.mrb[0].mxu0 %v433
  %v610 = vpop.f32.mrb[0].mxu0
  %v611 = vadd.f32 %v258, %v610
  %v612 = vpop.f32.mrb[0].mxu0
  %613 = vmatprep.mubr.f32.mxu0 0.0
  %614 = vmatmul.mubr.f32.gmra.mrb[0].mxu0 %v436
  %v615 = vpop.f32.mrb[0].mxu0
  %v616 = vadd.f32 %v263, %v615
  %v617 = vpop.f32.mrb[0].mxu0
  %618 = vmatprep.mubr.f32.mxu0 0.0
  %619 = vmatmul.mubr.f32.gmra.mrb[0].mxu0 %v439
  %v620 = vpop.f32.mrb[0].mxu0
  %v621 = vadd.f32 %v268, %v620
  %v622 = vpop.f32.mrb[0].mxu0
  %623 = vmatprep.mubr.f32.mxu0 0.0
  %624 = vmatmul.mubr.f32.gmra.mrb[0].mxu0 %v442
  %v625 = vpop.f32.mrb[0].mxu0
  %v626 = vadd.f32 %v273, %v625
  %v627 = vpop.f32.mrb[0].mxu0
  %628 = vmatprep.mubr.f32.mxu0 0.0
  %629 = vmatmul.mubr.f32.gmra.mrb[0].mxu0 %v445
  %v630 = vpop.f32.mrb[0].mxu0
  %v631 = vadd.f32 %v278, %v630
  %v632 = vpop.f32.mrb[0].mxu0
  %633 = vmatprep.mubr.f32.mxu0 0.0
  %634 = vmatmul.mubr.f32.gmra.mrb[0].mxu0 %v448
  %v635 = vpop.f32.mrb[0].mxu0
  %v636 = vadd.f32 %v283, %v635
  %v637 = vpop.f32.mrb[0].mxu0
  %638 = vmatprep.mubr.f32.mxu0 0.0
  %639 = vmatmul.mubr.f32.gmra.mrb[0].mxu0 %v451
  %v640 = vpop.f32.mrb[0].mxu0
  %v641 = vadd.f32 %v288, %v640
  %v642 = vpop.f32.mrb[0].mxu0
  %643 = vmatprep.mubr.f32.mxu0 0.0
  %644 = vmatmul.mubr.f32.gmra.mrb[0].mxu0 %v454
  %v645 = vpop.f32.mrb[0].mxu0
  %v646 = vadd.f32 %v293, %v645
  %v647 = vpop.f32.mrb[0].mxu0
  %648 = vmatprep.mubr.f32.mxu0 0.0
  %649 = vmatmul.mubr.f32.gmra.mrb[0].mxu0 %v457
  %v650 = vpop.f32.mrb[0].mxu0
  %v651 = vadd.f32 %v298, %v650
  %v652 = vpop.f32.mrb[0].mxu0
  %653 = vmatprep.mubr.f32.mxu0 0.0
  %654 = vmatmul.mubr.f32.gmra.mrb[0].mxu0 %v460
  %v655 = vpop.f32.mrb[0].mxu0
  %v656 = vadd.f32 %v303, %v655
  %v657 = vpop.f32.mrb[0].mxu0
  %658 = vmatprep.mubr.f32.mxu0 0.0
  %659 = vmatmul.mubr.f32.gmra.mrb[0].mxu0 %v463
  %v660 = vpop.f32.mrb[0].mxu0
  %v661 = vadd.f32 %v308, %v660
  %v662 = vpop.f32.mrb[0].mxu0
  %663 = vmatprep.mubr.f32.mxu0 0.0
  %664 = vmatmul.mubr.f32.gmra.mrb[0].mxu0 %v466
  %v665 = vpop.f32.mrb[0].mxu0
  %v666 = vadd.f32 %v313, %v665
  %v667 = vpop.f32.mrb[0].mxu0
  %668 = vmatprep.mubr.f32.mxu0 0.0
  %669 = vmatmul.mubr.f32.gmra.mrb[0].mxu0 %v469
  %v670 = vpop.f32.mrb[0].mxu0
  %v671 = vadd.f32 %v318, %v670
  %v672 = vpop.f32.mrb[0].mxu0
  %673 = vmatprep.mubr.f32.mxu0 0.0
  %674 = vmatmul.mubr.f32.gmra.mrb[0].mxu0 %v472
  %v675 = vpop.f32.mrb[0].mxu0
  %v676 = vadd.f32 %v323, %v675
  %v677 = vpop.f32.mrb[0].mxu0
  %678 = vmatprep.mubr.f32.mxu0 0.0
  %679 = vmatmul.mubr.f32.gmra.mrb[0].mxu0 %v475
  %v680 = vpop.f32.mrb[0].mxu0
  %v681 = vadd.f32 %v328, %v680
  %v682 = vpop.f32.mrb[0].mxu0
  %683 = vmatprep.mubr.f32.mxu0 0.0
  %684 = vmatmul.mubr.f32.gmra.mrb[0].mxu0 %v478
  %v685 = vpop.f32.mrb[0].mxu0
  %v686 = vadd.f32 %v333, %v685
  %v687 = vpop.f32.mrb[0].mxu0
  %688 = vmatprep.mubr.f32.mxu0 0.0
  %689 = vmatmul.mubr.f32.gmra.mrb[0].mxu0 %v481
  %v690 = vpop.f32.mrb[0].mxu0
  %v691 = vadd.f32 %v338, %v690
  %v692 = vpop.f32.mrb[0].mxu0
  %693 = vmatprep.mubr.f32.mxu0 0.0
  %694 = vmatmul.mubr.f32.gmra.mrb[0].mxu0 %v484
  %v695 = vpop.f32.mrb[0].mxu0
  %v696 = vadd.f32 %v343, %v695
  %v697 = vpop.f32.mrb[0].mxu0
  %698 = vmatprep.mubr.f32.mxu0 0.0
  %699 = vmatmul.mubr.f32.gmra.mrb[0].mxu0 %v487
  %v700 = vpop.f32.mrb[0].mxu0
  %v701 = vadd.f32 %v348, %v700
  %v702 = vpop.f32.mrb[0].mxu0
  %703 = vmatprep.mubr.f32.mxu0 0.0
  %704 = vmatmul.mubr.f32.gmra.mrb[0].mxu0 %v490
  %v705 = vpop.f32.mrb[0].mxu0
  %v706 = vadd.f32 %v353, %v705
  %v707 = vpop.f32.mrb[0].mxu0
  %708 = vmatprep.mubr.f32.mxu0 0.0
  %709 = vmatmul.mubr.f32.gmra.mrb[0].mxu0 %v493
  %v710 = vpop.f32.mrb[0].mxu0
  %v711 = vadd.f32 %v358, %v710
  %v712 = vpop.f32.mrb[0].mxu0
  %713 = vmatprep.mubr.f32.mxu0 0.0
  %714 = vmatmul.mubr.f32.gmra.mrb[0].mxu0 %v496
  %v715 = vpop.f32.mrb[0].mxu0
  %v716 = vadd.f32 %v363, %v715
  %v717 = vpop.f32.mrb[0].mxu0
  %718 = vmatprep.mubr.f32.mxu0 0.0
  %719 = vmatmul.mubr.f32.gmra.mrb[0].mxu0 %v499
  %v720 = vpop.f32.mrb[0].mxu0
  %v721 = vadd.f32 %v368, %v720
  %v722 = vpop.f32.mrb[0].mxu0
  %723 = vmatprep.mubr.f32.mxu0 0.0
  %724 = vmatmul.mubr.f32.gmra.mrb[0].mxu0 %v502
  %v725 = vpop.f32.mrb[0].mxu0
  %v726 = vadd.f32 %v373, %v725
  %v727 = vpop.f32.mrb[0].mxu0
  %728 = vmatprep.mubr.f32.mxu0 0.0
  %729 = vmatmul.mubr.f32.gmra.mrb[0].mxu0 %v505
  %v730 = vpop.f32.mrb[0].mxu0
  %v731 = vadd.f32 %v378, %v730
  %v732 = vpop.f32.mrb[0].mxu0
  %733 = vmatprep.mubr.f32.mxu0 0.0
  %734 = vmatmul.mubr.f32.gmra.mrb[0].mxu0 %v508
  %v735 = vpop.f32.mrb[0].mxu0
  %v736 = vadd.f32 %v383, %v735
  %v737 = vpop.f32.mrb[0].mxu0
  %738 = vmatprep.mubr.f32.mxu0 0.0
  %739 = vmatmul.mubr.f32.gmra.mrb[0].mxu0 %v511
  %v740 = vpop.f32.mrb[0].mxu0
  %v741 = vadd.f32 %v388, %v740
  %v742 = vpop.f32.mrb[0].mxu0
  %743 = vmatprep.mubr.f32.mxu0 0.0
  %744 = vmatmul.mubr.f32.gmra.mrb[0].mxu0 %v514
  %v745 = vpop.f32.mrb[0].mxu0
  %v746 = vadd.f32 %v393, %v745
  %v747 = vpop.f32.mrb[0].mxu0
  %748 = vmatprep.mubr.f32.mxu0 0.0
  %749 = vmatmul.mubr.f32.gmra.mrb[0].mxu0 %v517
  %v750 = vpop.f32.mrb[0].mxu0
  %v751 = vadd.f32 %v398, %v750
  %v752 = vpop.f32.mrb[0].mxu0
  %753 = vmatprep.mubr.f32.mxu0 0.0
  %754 = vmatmul.mubr.f32.gmra.mrb[0].mxu0 %v520
  %v755 = vpop.f32.mrb[0].mxu0
  %v756 = vadd.f32 %v403, %v755
  %v757 = vpop.f32.mrb[0].mxu0
  %758 = vmatprep.mubr.f32.mxu0 0.0
  %759 = vmatmul.mubr.f32.gmra.mrb[0].mxu0 %v523
  %v760 = vpop.f32.mrb[0].mxu0
  %v761 = vadd.f32 %v408, %v760
  %v762 = vpop.f32.mrb[0].mxu0
  %763 = vmatprep.mubr.f32.mxu0 0.0
  %764 = vmatmul.mubr.f32.gmra.mrb[0].mxu0 %v526
  %v765 = vpop.f32.mrb[0].mxu0
  %v766 = vadd.f32 %v413, %v765
  %v767 = vpop.f32.mrb[0].mxu0
  %768 = vmatprep.mubr.f32.mxu0 0.0
  %769 = vmatmul.mubr.f32.gmra.mrb[0].mxu0 %v529
  %v770 = vpop.f32.mrb[0].mxu0
  %v771 = vadd.f32 %v418, %v770
  %v772 = vpop.f32.mrb[0].mxu0
  %773 = vmatprep.mubr.f32.mxu0 0.0
  %774 = vmatmul.mubr.f32.gmra.mrb[0].mxu0 %v532
  %v775 = vpop.f32.mrb[0].mxu0
  %v776 = vadd.f32 %v423, %v775
  %v777 = vpop.f32.mrb[0].mxu0
  %778 = vdwg.mxu0
  %779 = vst.msk [vmem:[%s8] sm:$0xff] %vm156, %v601
  %780 = vst.msk [vmem:[%s8 + $0x8] sm:$0xff] %vm156, %v606
  %781 = vst.msk [vmem:[%s8 + $0x10] sm:$0xff] %vm156, %v611
  %782 = vst.msk [vmem:[%s8 + $0x18] sm:$0xff] %vm156, %v616
  %783 = vst.msk [vmem:[%s8 + $0x20] sm:$0xff] %vm156, %v621
  %784 = vst.msk [vmem:[%s8 + $0x28] sm:$0xff] %vm156, %v626
  %785 = vst.msk [vmem:[%s8 + $0x30] sm:$0xff] %vm156, %v631
  %786 = vst.msk [vmem:[%s8 + $0x38] sm:$0xff] %vm156, %v636
  %787 = vst.msk [vmem:[%s8 + $0x40] sm:$0xff] %vm156, %v641
  %788 = vst.msk [vmem:[%s8 + $0x48] sm:$0xff] %vm156, %v646
  %789 = vst.msk [vmem:[%s8 + $0x50] sm:$0xff] %vm156, %v651
  %790 = vst.msk [vmem:[%s8 + $0x58] sm:$0xff] %vm156, %v656
  %791 = vst.msk [vmem:[%s8 + $0x60] sm:$0xff] %vm156, %v661
  %792 = vst.msk [vmem:[%s8 + $0x68] sm:$0xff] %vm156, %v666
  %793 = vst.msk [vmem:[%s8 + $0x70] sm:$0xff] %vm156, %v671
  %794 = vst.msk [vmem:[%s8 + $0x78] sm:$0xff] %vm156, %v676
  %795 = vst.msk [vmem:[%s8 + $0x80] sm:$0xff] %vm156, %v681
  %796 = vst.msk [vmem:[%s8 + $0x88] sm:$0xff] %vm156, %v686
  %797 = vst.msk [vmem:[%s8 + $0x90] sm:$0xff] %vm156, %v691
  %798 = vst.msk [vmem:[%s8 + $0x98] sm:$0xff] %vm156, %v696
  %799 = vst.msk [vmem:[%s8 + $0xa0] sm:$0xff] %vm156, %v701
  %800 = vst.msk [vmem:[%s8 + $0xa8] sm:$0xff] %vm156, %v706
  %801 = vst.msk [vmem:[%s8 + $0xb0] sm:$0xff] %vm156, %v711
  %802 = vst.msk [vmem:[%s8 + $0xb8] sm:$0xff] %vm156, %v716
  %803 = vst.msk [vmem:[%s8 + $0xc0] sm:$0xff] %vm156, %v721
  %804 = vst.msk [vmem:[%s8 + $0xc8] sm:$0xff] %vm156, %v726
  %805 = vst.msk [vmem:[%s8 + $0xd0] sm:$0xff] %vm156, %v731
  %806 = vst.msk [vmem:[%s8 + $0xd8] sm:$0xff] %vm156, %v736
  %807 = vst.msk [vmem:[%s8 + $0xe0] sm:$0xff] %vm156, %v741
  %808 = vst.msk [vmem:[%s8 + $0xe8] sm:$0xff] %vm156, %v746
  %809 = vst.msk [vmem:[%s8 + $0xf0] sm:$0xff] %vm156, %v751
  %810 = vst.msk [vmem:[%s8 + $0xf8] sm:$0xff] %vm156, %v756
  %811 = vst.msk [vmem:[%s8 + $0x100] sm:$0xff] %vm156, %v761
  %812 = vst.msk [vmem:[%s8 + $0x108] sm:$0xff] %vm156, %v766
  %813 = vst.msk [vmem:[%s8 + $0x110] sm:$0xff] %vm156, %v771
  %814 = vst.msk [vmem:[%s8 + $0x118] sm:$0xff] %vm156, %v776
  // Predicated region
  $region26: #{vae_conv_forward.17} parent=0 // pred_check
    _
  $region27: #{vae_conv_forward.17} parent=0 // pred_check_branch
    %816 = sbr.rel (0) target = $region29
  $region28: #{vae_conv_forward.17} parent=0 // pred_region
    _
  $region29: #{vae_conv_forward.17} parent=0 // pred_fallthru
    _
  // Predicated region
  $region30: #{vae_conv_forward.17} parent=0 // pred_check
    _
  $region31: #{vae_conv_forward.17} parent=0 // pred_check_branch
    %818 = sbr.rel (0) target = $region33
  $region32: #{vae_conv_forward.17} parent=0 // pred_region
    _
  $region33: #{vae_conv_forward.17} parent=0 // pred_fallthru
    _
  // Predicated region
  $region34: #{vae_conv_forward.17} parent=0 // pred_check
    _
  $region35: #{vae_conv_forward.17} parent=0 // pred_check_branch
    %820 = sbr.rel (0) target = $region37
  $region36: #{vae_conv_forward.17} parent=0 // pred_region
    _
  $region37: #{vae_conv_forward.17} parent=0 // pred_fallthru
    _
  // Predicated region
  $region38: #{vae_conv_forward.17} parent=0 // pred_check
    _
  $region39: #{vae_conv_forward.17} parent=0 // pred_check_branch
    %822 = sbr.rel (0) target = $region41
  $region40: #{vae_conv_forward.17} parent=0 // pred_region
    _
  $region41: #{vae_conv_forward.17} parent=0 // pred_fallthru
    _
  // Predicated region
  $region42: #{vae_conv_forward.17} parent=0 // pred_check
    _
  $region43: #{vae_conv_forward.17} parent=0 // pred_check_branch
    %824 = sbr.rel (0) target = $region45
  $region44: #{vae_conv_forward.17} parent=0 // pred_region
    _
  $region45: #{vae_conv_forward.17} parent=0 // pred_fallthru
    _
  // Predicated region
  $region46: #{vae_conv_forward.17} parent=0 // pred_check
    _
  $region47: #{vae_conv_forward.17} parent=0 // pred_check_branch
    %826 = sbr.rel (0) target = $region49
  $region48: #{vae_conv_forward.17} parent=0 // pred_region
    _
  $region49: #{vae_conv_forward.17} parent=0 // pred_fallthru
    _

// kernel: vae_conv_forward.18
$region0: #{vae_conv_forward.18}
  #allocation0 [shape = 'u32[]', space=smem, size = 0x4, offset = 0x4, fixed_abs, tag = 'smem constant byte address 0x4 - core index']
  #allocation1 [shape = 'u32[144,128]{1,0:T(1,128)}', space=vmem, size = 0x12000, scoped, tag = 'internal scratch']
  %s0 = inlined_call_operand.vmem [shape: f32[288,50], index: 0, kind: input, shape index: {}]
  %s1 = inlined_call_operand.vmem [shape: f32[32,288], index: 1, kind: input, shape index: {}]
  %s2 = inlined_call_operand.vmem [shape: f32[32,3], index: 2, kind: input, shape index: {}]
  %s3 = inlined_call_operand.vmem [shape: f32[32,50], index: 3, kind: output, shape index: {}]
  %s4 = sld [smem:[#allocation0]]
  $region22: #{vae_conv_forward.18} parent=0
    _
  %s6 = ssub.s32 1, %s4
  %s7 = scalar_select 0, %s6, %s4
  // Predicated region
  $region2: #{vae_conv_forward.18} parent=0 // pred_check
    _
  $region3: #{vae_conv_forward.18} parent=0 // pred_check_branch
    %9 = sbr.rel (0) target = $region5
  $region4: #{vae_conv_forward.18} parent=0 // pred_region
    _
  $region5: #{vae_conv_forward.18} parent=0 // pred_fallthru
    _
  // Predicated region
  $region6: #{vae_conv_forward.18} parent=0 // pred_check
    _
  $region7: #{vae_conv_forward.18} parent=0 // pred_check_branch
    %11 = sbr.rel (0) target = $region9
  $region8: #{vae_conv_forward.18} parent=0 // pred_region
    _
  $region9: #{vae_conv_forward.18} parent=0 // pred_fallthru
    _
  // Predicated region
  $region10: #{vae_conv_forward.18} parent=0 // pred_check
    _
  $region11: #{vae_conv_forward.18} parent=0 // pred_check_branch
    %13 = sbr.rel (0) target = $region13
  $region12: #{vae_conv_forward.18} parent=0 // pred_region
    _
  $region13: #{vae_conv_forward.18} parent=0 // pred_fallthru
    _
  %v14 = vld [vmem:[%s1] sm:$0xff]
  %v15 = vld [vmem:[%s1 + $0x8] sm:$0xff]
  %v16 = vld [vmem:[%s1 + $0x10] sm:$0xff]
  %v17 = vld [vmem:[%s1 + $0x18] sm:$0xff]
  %v18 = vld [vmem:[%s1 + $0x20] sm:$0xff]
  %v19 = vld [vmem:[%s1 + $0x28] sm:$0xff]
  %v20 = vld [vmem:[%s1 + $0x30] sm:$0xff]
  %v21 = vld [vmem:[%s1 + $0x38] sm:$0xff]
  %v22 = vld [vmem:[%s1 + $0x40] sm:$0xff]
  %v23 = vld [vmem:[%s1 + $0x48] sm:$0xff]
  %v24 = vld [vmem:[%s1 + $0x50] sm:$0xff]
  %v25 = vld [vmem:[%s1 + $0x58] sm:$0xff]
  %v26 = vld [vmem:[%s0] sm:$0xff]
  %v27 = vld [vmem:[%s0 + $0x8] sm:$0xff]
  %v28 = vld [vmem:[%s0 + $0x10] sm:$0xff]
  %v29 = vld [vmem:[%s0 + $0x18] sm:$0xff]
  %v30 = vld [vmem:[%s0 + $0x20] sm:$0xff]
  %v31 = vld [vmem:[%s0 + $0x28] sm:$0xff]
  %v32 = vld [vmem:[%s0 + $0x30] sm:$0xff]
  %v33 = vld [vmem:[%s0 + $0x38] sm:$0xff]
  %v34 = vld [vmem:[%s0 + $0x40] sm:$0xff]
  %v35 = vld [vmem:[%s0 + $0x48] sm:$0xff]
  %v36 = vld [vmem:[%s0 + $0x50] sm:$0xff]
  %v37 = vld [vmem:[%s0 + $0x58] sm:$0xff]
  %v38 = vld [vmem:[%s0 + $0x60] sm:$0xff]
  %v39 = vld [vmem:[%s0 + $0x68] sm:$0xff]
  %v40 = vld [vmem:[%s0 + $0x70] sm:$0xff]
  %v41 = vld [vmem:[%s0 + $0x78] sm:$0xff]
  %v42 = vld [vmem:[%s0 + $0x80] sm:$0xff]
  %v43 = vld [vmem:[%s0 + $0x88] sm:$0xff]
  %v44 = vld [vmem:[%s0 + $0x90] sm:$0xff]
  %v45 = vld [vmem:[%s0 + $0x98] sm:$0xff]
  %v46 = vld [vmem:[%s0 + $0xa0] sm:$0xff]
  %v47 = vld [vmem:[%s0 + $0xa8] sm:$0xff]
  %v48 = vld [vmem:[%s0 + $0xb0] sm:$0xff]
  %v49 = vld [vmem:[%s0 + $0xb8] sm:$0xff]
  %v50 = vld [vmem:[%s0 + $0xc0] sm:$0xff]
  %v51 = vld [vmem:[%s0 + $0xc8] sm:$0xff]
  %v52 = vld [vmem:[%s0 + $0xd0] sm:$0xff]
  %v53 = vld [vmem:[%s0 + $0xd8] sm:$0xff]
  %v54 = vld [vmem:[%s0 + $0xe0] sm:$0xff]
  %v55 = vld [vmem:[%s0 + $0xe8] sm:$0xff]
  %v56 = vld [vmem:[%s0 + $0xf0] sm:$0xff]
  %v57 = vld [vmem:[%s0 + $0xf8] sm:$0xff]
  %v58 = vld [vmem:[%s0 + $0x100] sm:$0xff]
  %v59 = vld [vmem:[%s0 + $0x108] sm:$0xff]
  %v60 = vld [vmem:[%s0 + $0x110] sm:$0xff]
  %v61 = vld [vmem:[%s0 + $0x118] sm:$0xff]
  %vm62 = vcmask 261120
  %v64 = vsel %vm62, %v16, 0
  %v67 = vsel %vm62, %v19, 0
  %v70 = vsel %vm62, %v22, 0
  %v73 = vsel %vm62, %v25, 0
  %75 = vmatprep.subr.mxu0 0.0
  %76 = vmatpush1.msra.mxu0 %v26
  %77 = vmatprep.subr.mxu0 0.0
  %78 = vmatpush1.msra.mxu0 %v27
  %79 = vmatprep.subr.mxu0 0.0
  %80 = vmatpush1.msra.mxu0 %v28
  %81 = vmatprep.subr.mxu0 0.0
  %82 = vmatpush1.msra.mxu0 %v29
  %83 = vmatprep.subr.mxu0 0.0
  %84 = vmatpush1.msra.mxu0 %v30
  %85 = vmatprep.subr.mxu0 0.0
  %86 = vmatpush1.msra.mxu0 %v31
  %87 = vmatprep.subr.mxu0 0.0
  %88 = vmatpush1.msra.mxu0 %v32
  %89 = vmatprep.subr.mxu0 0.0
  %90 = vmatpush1.msra.mxu0 %v33
  %91 = vmatprep.subr.mxu0 0.0
  %92 = vmatpush1.msra.mxu0 %v34
  %93 = vmatprep.subr.mxu0 0.0
  %94 = vmatpush1.msra.mxu0 %v35
  %95 = vmatprep.subr.mxu0 0.0
  %96 = vmatpush1.msra.mxu0 %v36
  %97 = vmatprep.subr.mxu0 0.0
  %98 = vmatpush1.msra.mxu0 %v37
  %99 = vmatprep.subr.mxu0 0.0
  %100 = vmatpush1.msra.mxu0 %v38
  %101 = vmatprep.subr.mxu0 0.0
  %102 = vmatpush1.msra.mxu0 %v39
  %103 = vmatprep.subr.mxu0 0.0
  %104 = vmatpush1.msra.mxu0 %v40
  %105 = vmatprep.subr.mxu0 0.0
  %106 = vmatpush1.msra.mxu0 %v41
  %107 = vmatprep.subr.mxu0 0.0
  %108 = vmatpush1.msra.mxu0 %v42
  %109 = vmatprep.subr.mxu0 0.0
  %110 = vmatpush1.msra.mxu0 %v43
  %111 = vmatprep.subr.mxu0 0.0
  %112 = vmatpush1.msra.mxu0 %v44
  %113 = vmatprep.subr.mxu0 0.0
  %114 = vmatpush1.msra.mxu0 %v45
  %115 = vmatprep.subr.mxu0 0.0
  %116 = vmatpush1.msra.mxu0 %v46
  %117 = vmatprep.subr.mxu0 0.0
  %118 = vmatpush1.msra.mxu0 %v47
  %119 = vmatprep.subr.mxu0 0.0
  %120 = vmatpush1.msra.mxu0 %v48
  %121 = vmatprep.subr.mxu0 0.0
  %122 = vmatpush1.msra.mxu0 %v49
  %123 = vmatprep.subr.mxu0 0.0
  %124 = vmatpush1.msra.mxu0 %v50
  %125 = vmatprep.subr.mxu0 0.0
  %126 = vmatpush1.msra.mxu0 %v51
  %127 = vmatprep.subr.mxu0 0.0
  %128 = vmatpush1.msra.mxu0 %v52
  %129 = vmatprep.subr.mxu0 0.0
  %130 = vmatpush1.msra.mxu0 %v53
  %131 = vmatprep.subr.mxu0 0.0
  %132 = vmatpush1.msra.mxu0 %v54
  %133 = vmatprep.subr.mxu0 0.0
  %134 = vmatpush1.msra.mxu0 %v55
  %135 = vmatprep.subr.mxu0 0.0
  %136 = vmatpush1.msra.mxu0 %v56
  %137 = vmatprep.subr.mxu0 0.0
  %138 = vmatpush1.msra.mxu0 %v57
  %139 = vmatprep.mubr.f32.mxu0 %v15
  %140 = vmatmul.mubr.f32.gmra.mrb[0].mxu0 %v14
  %v141 = vpop.f32.mrb[0].mxu0
  %v142 = vadd.f32 0.0, %v141
  %v143 = vpop.f32.mrb[0].mxu0
  %144 = vmatprep.mubr.f32.mxu0 %v18
  %145 = vmatmul.mubr.f32.gmra.mrb[0].mxu0 %v17
  %v146 = vpop.f32.mrb[0].mxu0
  %v147 = vadd.f32 0.0, %v146
  %v148 = vpop.f32.mrb[0].mxu0
  %149 = vmatprep.mubr.f32.mxu0 %v21
  %150 = vmatmul.mubr.f32.gmra.mrb[0].mxu0 %v20
  %v151 = vpop.f32.mrb[0].mxu0
  %v152 = vadd.f32 0.0, %v151
  %v153 = vpop.f32.mrb[0].mxu0
  %154 = vmatprep.mubr.f32.mxu0 %v24
  %155 = vmatmul.mubr.f32.gmra.mrb[0].mxu0 %v23
  %v156 = vpop.f32.mrb[0].mxu0
  %v157 = vadd.f32 0.0, %v156
  %v158 = vpop.f32.mrb[0].mxu0
  %159 = vdwg.mxu0
  %160 = vmatprep.subr.mxu0 0.0
  %161 = vmatpush1.msra.mxu0 %v58
  %162 = vmatprep.subr.mxu0 0.0
  %163 = vmatpush1.msra.mxu0 %v59
  %164 = vmatprep.subr.mxu0 0.0
  %165 = vmatpush1.msra.mxu0 %v60
  %166 = vmatprep.subr.mxu0 0.0
  %167 = vmatpush1.msra.mxu0 %v61
  %168 = vmatprep.subr.mxu0 0.0
  %169 = vmatpush1.msra.mxu0 0.0
  %170 = vmatprep.subr.mxu0 0.0
  %171 = vmatpush1.msra.mxu0 0.0
  %172 = vmatprep.subr.mxu0 0.0
  %173 = vmatpush1.msra.mxu0 0.0
  %174 = vmatprep.subr.mxu0 0.0
  %175 = vmatpush1.msra.mxu0 0.0
  %176 = vmatprep.subr.mxu0 0.0
  %177 = vmatpush1.msra.mxu0 0.0
  %178 = vmatprep.subr.mxu0 0.0
  %179 = vmatpush1.msra.mxu0 0.0
  %180 = vmatprep.subr.mxu0 0.0
  %181 = vmatpush1.msra.mxu0 0.0
  %182 = vmatprep.subr.mxu0 0.0
  %183 = vmatpush1.msra.mxu0 0.0
  %184 = vmatprep.subr.mxu0 0.0
  %185 = vmatpush1.msra.mxu0 0.0
  %186 = vmatprep.subr.mxu0 0.0
  %187 = vmatpush1.msra.mxu0 0.0
  %188 = vmatprep.subr.mxu0 0.0
  %189 = vmatpush1.msra.mxu0 0.0
  %190 = vmatprep.subr.mxu0 0.0
  %191 = vmatpush1.msra.mxu0 0.0
  %192 = vmatprep.subr.mxu0 0.0
  %193 = vmatpush1.msra.mxu0 0.0
  %194 = vmatprep.subr.mxu0 0.0
  %195 = vmatpush1.msra.mxu0 0.0
  %196 = vmatprep.subr.mxu0 0.0
  %197 = vmatpush1.msra.mxu0 0.0
  %198 = vmatprep.subr.mxu0 0.0
  %199 = vmatpush1.msra.mxu0 0.0
  %200 = vmatprep.subr.mxu0 0.0
  %201 = vmatpush1.msra.mxu0 0.0
  %202 = vmatprep.subr.mxu0 0.0
  %203 = vmatpush1.msra.mxu0 0.0
  %204 = vmatprep.subr.mxu0 0.0
  %205 = vmatpush1.msra.mxu0 0.0
  %206 = vmatprep.subr.mxu0 0.0
  %207 = vmatpush1.msra.mxu0 0.0
  %208 = vmatprep.subr.mxu0 0.0
  %209 = vmatpush1.msra.mxu0 0.0
  %210 = vmatprep.subr.mxu0 0.0
  %211 = vmatpush1.msra.mxu0 0.0
  %212 = vmatprep.subr.mxu0 0.0
  %213 = vmatpush1.msra.mxu0 0.0
  %214 = vmatprep.subr.mxu0 0.0
  %215 = vmatpush1.msra.mxu0 0.0
  %216 = vmatprep.subr.mxu0 0.0
  %217 = vmatpush1.msra.mxu0 0.0
  %218 = vmatprep.subr.mxu0 0.0
  %219 = vmatpush1.msra.mxu0 0.0
  %220 = vmatprep.subr.mxu0 0.0
  %221 = vmatpush1.msra.mxu0 0.0
  %222 = vmatprep.subr.mxu0 0.0
  %223 = vmatpush1.msra.mxu0 0.0
  %224 = vmatprep.mubr.f32.mxu0 0.0
  %225 = vmatmul.mubr.f32.gmra.mrb[0].mxu0 %v64
  %v226 = vpop.f32.mrb[0].mxu0
  %v227 = vadd.f32 %v142, %v226
  %v228 = vpop.f32.mrb[0].mxu0
  %229 = vmatprep.mubr.f32.mxu0 0.0
  %230 = vmatmul.mubr.f32.gmra.mrb[0].mxu0 %v67
  %v231 = vpop.f32.mrb[0].mxu0
  %v232 = vadd.f32 %v147, %v231
  %v233 = vpop.f32.mrb[0].mxu0
  %234 = vmatprep.mubr.f32.mxu0 0.0
  %235 = vmatmul.mubr.f32.gmra.mrb[0].mxu0 %v70
  %v236 = vpop.f32.mrb[0].mxu0
  %v237 = vadd.f32 %v152, %v236
  %v238 = vpop.f32.mrb[0].mxu0
  %239 = vmatprep.mubr.f32.mxu0 0.0
  %240 = vmatmul.mubr.f32.gmra.mrb[0].mxu0 %v73
  %v241 = vpop.f32.mrb[0].mxu0
  %v242 = vadd.f32 %v157, %v241
  %v243 = vpop.f32.mrb[0].mxu0
  %244 = vdwg.mxu0
  %vm245 = vcmask 408576
  %v246 = vsel %vm245, %v227, 0.0
  %247 = vadd.xlane.f32.xlu0 %v246
  %v248 = vpop.xlane.xlu0 %247
  %v249 = vsel %vm245, %v232, 0.0
  %250 = vadd.xlane.f32.xlu0 %v249
  %v251 = vpop.xlane.xlu0 %250
  %v252 = vsel %vm245, %v237, 0.0
  %253 = vadd.xlane.f32.xlu0 %v252
  %v254 = vpop.xlane.xlu0 %253
  %v255 = vsel %vm245, %v242, 0.0
  %256 = vadd.xlane.f32.xlu0 %v255
  %v257 = vpop.xlane.xlu0 %256
  %v258 = vmul.f32 %v227, %v227
  %v259 = vmul.f32 %v232, %v232
  %v260 = vmul.f32 %v237, %v237
  %v261 = vmul.f32 %v242, %v242
  %v262 = vsel %vm245, %v258, 0.0
  %263 = vadd.xlane.f32.xlu0 %v262
  %v264 = vpop.xlane.xlu0 %263
  %v265 = vsel %vm245, %v259, 0.0
  %266 = vadd.xlane.f32.xlu0 %v265
  %v267 = vpop.xlane.xlu0 %266
  %v268 = vsel %vm245, %v260, 0.0
  %269 = vadd.xlane.f32.xlu0 %v268
  %v270 = vpop.xlane.xlu0 %269
  %v271 = vsel %vm245, %v261, 0.0
  %272 = vadd.xlane.f32.xlu0 %v271
  %v273 = vpop.xlane.xlu0 %272
  %v274 = vmul.f32 %v248, 0.02
  %v275 = vmul.f32 %v251, 0.02
  %v276 = vmul.f32 %v254, 0.02
  %v277 = vmul.f32 %v257, 0.02
  %v278 = vmul.f32 %v264, 0.02
  %v279 = vmul.f32 %v267, 0.02
  %v280 = vmul.f32 %v270, 0.02
  %v281 = vmul.f32 %v273, 0.02
  %v282 = vmul.f32 %v274, %v274
  %v283 = vmul.f32 %v275, %v275
  %v284 = vmul.f32 %v276, %v276
  %v285 = vmul.f32 %v277, %v277
  %v286 = vsub.f32 %v278, %v282
  %v287 = vsub.f32 %v279, %v283
  %v288 = vsub.f32 %v280, %v284
  %v289 = vsub.f32 %v281, %v285
  %v290 = vld [vmem:[%s2] sm:$0xff]
  %v291 = vld [vmem:[%s2 + $0x8] sm:$0xff]
  %v292 = vld [vmem:[%s2 + $0x10] sm:$0xff]
  %v293 = vld [vmem:[%s2 + $0x18] sm:$0xff]
  %v294 = vadd.f32 %v286, 1e-05
  %v295 = vadd.f32 %v287, 1e-05
  %v296 = vadd.f32 %v288, 1e-05
  %v297 = vadd.f32 %v289, 1e-05
  %v298 = vrsqrt.pop %v294
  %v299 = vrsqrt.pop %v295
  %v300 = vrsqrt.pop %v296
  %v301 = vrsqrt.pop %v297
  %v302 = vmul.f32 %v290, %v298
  %v303 = vmul.f32 %v291, %v299
  %v304 = vmul.f32 %v292, %v300
  %v305 = vmul.f32 %v293, %v301
  %v306 = vmul.f32 %v274, %v302
  %v307 = vmul.f32 %v275, %v303
  %v308 = vmul.f32 %v276, %v304
  %v309 = vmul.f32 %v277, %v305
  %314 = vrot.lane.b32.xlu0 %v306, 1
  %v315 = vpop.permute.xlu0 %314
  %316 = vrot.lane.b32.xlu0 %v307, 1
  %v317 = vpop.permute.xlu0 %316
  %318 = vrot.lane.b32.xlu0 %v308, 1
  %v319 = vpop.permute.xlu0 %318
  %320 = vrot.lane.b32.xlu0 %v309, 1
  %v321 = vpop.permute.xlu0 %320
  %v326 = vsub.f32 %v290, %v315
  %v327 = vsub.f32 %v291, %v317
  %v328 = vsub.f32 %v292, %v319
  %v329 = vsub.f32 %v293, %v321
  %331 = vset.pattern.permute.xlu0 0
  %332 = vperm.xlu0 %331, %v302
  %v333 = vpop.permute.xlu0 %332
  %336 = vset.pattern.permute.xlu0 0
  %337 = vperm.xlu0 %336, %v303
  %v338 = vpop.permute.xlu0 %337
  %341 = vset.pattern.permute.xlu0 0
  %342 = vperm.xlu0 %341, %v304
  %v343 = vpop.permute.xlu0 %342
  %346 = vset.pattern.permute.xlu0 0
  %347 = vperm.xlu0 %346, %v305
  %v348 = vpop.permute.xlu0 %347
  %v350 = vmul.f32 %v227, %v333
  %v351 = vmul.f32 %v232, %v338
  %v352 = vmul.f32 %v237, %v343
  %v353 = vmul.f32 %v242, %v348
  %355 = vset.pattern.permute.xlu0 1
  %356 = vperm.xlu0 %355, %v326
  %v357 = vpop.permute.xlu0 %356
  %360 = vset.pattern.permute.xlu0 1
  %361 = vperm.xlu0 %360, %v327
  %v362 = vpop.permute.xlu0 %361
  %365 = vset.pattern.permute.xlu0 1
  %366 = vperm.xlu0 %365, %v328
  %v367 = vpop.permute.xlu0 %366
  %370 = vset.pattern.permute.xlu0 1
  %371 = vperm.xlu0 %370, %v329
  %v372 = vpop.permute.xlu0 %371
  %v374 = vadd.f32 %v350, %v357
  %v375 = vadd.f32 %v351, %v362
  %v376 = vadd.f32 %v352, %v367
  %v377 = vadd.f32 %v353, %v372
  %vm378 = vcmp.ge.f32.partialorder %v374, 0.0
  %vm379 = vcmp.ge.f32.partialorder %v375, 0.0
  %vm380 = vcmp.ge.f32.partialorder %v376, 0.0
  %vm381 = vcmp.ge.f32.partialorder %v377, 0.0
  %383 = vset.pattern.permute.xlu0 2
  %384 = vperm.xlu0 %383, %v290
  %v385 = vpop.permute.xlu0 %384
  %388 = vset.pattern.permute.xlu0 2
  %389 = vperm.xlu0 %388, %v291
  %v390 = vpop.permute.xlu0 %389
  %393 = vset.pattern.permute.xlu0 2
  %394 = vperm.xlu0 %393, %v292
  %v395 = vpop.permute.xlu0 %394
  %398 = vset.pattern.permute.xlu0 2
  %399 = vperm.xlu0 %398, %v293
  %v400 = vpop.permute.xlu0 %399
  %v402 = vmul.f32 %v385, %v374
  %v403 = vmul.f32 %v390, %v375
  %v404 = vmul.f32 %v395, %v376
  %v405 = vmul.f32 %v400, %v377
  %v406 = vsel %vm378, %v374, %v402
  %v407 = vsel %vm379, %v375, %v403
  %v408 = vsel %vm380, %v376, %v404
  %v409 = vsel %vm381, %v377, %v405
  %410 = vst.msk [vmem:[%s3] sm:$0xff] %vm245, %v406
  %411 = vst.msk [vmem:[%s3 + $0x8] sm:$0xff] %vm245, %v407
  %412 = vst.msk [vmem:[%s3 + $0x10] sm:$0xff] %vm245, %v408
  %413 = vst.msk [vmem:[%s3 + $0x18] sm:$0xff] %vm245, %v409
  // Predicated region
  $region14: #{vae_conv_forward.18} parent=0 // pred_check
    _
  $region15: #{vae_conv_forward.18} parent=0 // pred_check_branch
    %415 = sbr.rel (0) target = $region17
  $region16: #{vae_conv_forward.18} parent=0 // pred_region
    _
  $region17: #{vae_conv_forward.18} parent=0 // pred_fallthru
    _
  // Predicated region
  $region18: #{vae_conv_forward.18} parent=0 // pred_check
    _
  $region19: #{vae_conv_forward.18} parent=0 // pred_check_branch
    %417 = sbr.rel (0) target = $region21
  $region20: #{vae_conv_forward.18} parent=0 // pred_region
    _
  $region21: #{vae_conv_forward.18} parent=0 // pred_fallthru
    _

// kernel: vae_conv_forward.19
$region0: #{vae_conv_forward.19}
  #allocation0 [shape = 'u32[]', space=smem, size = 0x4, offset = 0x4, fixed_abs, tag = 'smem constant byte address 0x4 - core index']
  #allocation1 [shape = 'u32[144,128]{1,0:T(1,128)}', space=vmem, size = 0x12000, scoped, tag = 'internal scratch']
  %s0 = inlined_call_operand.vmem [shape: f32[288,98], index: 0, kind: input, shape index: {}]
  %s1 = inlined_call_operand.vmem [shape: f32[32,288], index: 1, kind: input, shape index: {}]
  %s2 = inlined_call_operand.vmem [shape: f32[32,3], index: 2, kind: input, shape index: {}]
  %s3 = inlined_call_operand.vmem [shape: f32[32,98], index: 3, kind: output, shape index: {}]
  %s4 = sld [smem:[#allocation0]]
  $region22: #{vae_conv_forward.19} parent=0
    _
  %s6 = ssub.s32 1, %s4
  %s7 = scalar_select 0, %s6, %s4
  // Predicated region
  $region2: #{vae_conv_forward.19} parent=0 // pred_check
    _
  $region3: #{vae_conv_forward.19} parent=0 // pred_check_branch
    %9 = sbr.rel (0) target = $region5
  $region4: #{vae_conv_forward.19} parent=0 // pred_region
    _
  $region5: #{vae_conv_forward.19} parent=0 // pred_fallthru
    _
  // Predicated region
  $region6: #{vae_conv_forward.19} parent=0 // pred_check
    _
  $region7: #{vae_conv_forward.19} parent=0 // pred_check_branch
    %11 = sbr.rel (0) target = $region9
  $region8: #{vae_conv_forward.19} parent=0 // pred_region
    _
  $region9: #{vae_conv_forward.19} parent=0 // pred_fallthru
    _
  // Predicated region
  $region10: #{vae_conv_forward.19} parent=0 // pred_check
    _
  $region11: #{vae_conv_forward.19} parent=0 // pred_check_branch
    %13 = sbr.rel (0) target = $region13
  $region12: #{vae_conv_forward.19} parent=0 // pred_region
    _
  $region13: #{vae_conv_forward.19} parent=0 // pred_fallthru
    _
  %v14 = vld [vmem:[%s1] sm:$0xff]
  %v15 = vld [vmem:[%s1 + $0x8] sm:$0xff]
  %v16 = vld [vmem:[%s1 + $0x10] sm:$0xff]
  %v17 = vld [vmem:[%s1 + $0x18] sm:$0xff]
  %v18 = vld [vmem:[%s1 + $0x20] sm:$0xff]
  %v19 = vld [vmem:[%s1 + $0x28] sm:$0xff]
  %v20 = vld [vmem:[%s1 + $0x30] sm:$0xff]
  %v21 = vld [vmem:[%s1 + $0x38] sm:$0xff]
  %v22 = vld [vmem:[%s1 + $0x40] sm:$0xff]
  %v23 = vld [vmem:[%s1 + $0x48] sm:$0xff]
  %v24 = vld [vmem:[%s1 + $0x50] sm:$0xff]
  %v25 = vld [vmem:[%s1 + $0x58] sm:$0xff]
  %v26 = vld [vmem:[%s0] sm:$0xff]
  %v27 = vld [vmem:[%s0 + $0x8] sm:$0xff]
  %v28 = vld [vmem:[%s0 + $0x10] sm:$0xff]
  %v29 = vld [vmem:[%s0 + $0x18] sm:$0xff]
  %v30 = vld [vmem:[%s0 + $0x20] sm:$0xff]
  %v31 = vld [vmem:[%s0 + $0x28] sm:$0xff]
  %v32 = vld [vmem:[%s0 + $0x30] sm:$0xff]
  %v33 = vld [vmem:[%s0 + $0x38] sm:$0xff]
  %v34 = vld [vmem:[%s0 + $0x40] sm:$0xff]
  %v35 = vld [vmem:[%s0 + $0x48] sm:$0xff]
  %v36 = vld [vmem:[%s0 + $0x50] sm:$0xff]
  %v37 = vld [vmem:[%s0 + $0x58] sm:$0xff]
  %v38 = vld [vmem:[%s0 + $0x60] sm:$0xff]
  %v39 = vld [vmem:[%s0 + $0x68] sm:$0xff]
  %v40 = vld [vmem:[%s0 + $0x70] sm:$0xff]
  %v41 = vld [vmem:[%s0 + $0x78] sm:$0xff]
  %v42 = vld [vmem:[%s0 + $0x80] sm:$0xff]
  %v43 = vld [vmem:[%s0 + $0x88] sm:$0xff]
  %v44 = vld [vmem:[%s0 + $0x90] sm:$0xff]
  %v45 = vld [vmem:[%s0 + $0x98] sm:$0xff]
  %v46 = vld [vmem:[%s0 + $0xa0] sm:$0xff]
  %v47 = vld [vmem:[%s0 + $0xa8] sm:$0xff]
  %v48 = vld [vmem:[%s0 + $0xb0] sm:$0xff]
  %v49 = vld [vmem:[%s0 + $0xb8] sm:$0xff]
  %v50 = vld [vmem:[%s0 + $0xc0] sm:$0xff]
  %v51 = vld [vmem:[%s0 + $0xc8] sm:$0xff]
  %v52 = vld [vmem:[%s0 + $0xd0] sm:$0xff]
  %v53 = vld [vmem:[%s0 + $0xd8] sm:$0xff]
  %v54 = vld [vmem:[%s0 + $0xe0] sm:$0xff]
  %v55 = vld [vmem:[%s0 + $0xe8] sm:$0xff]
  %v56 = vld [vmem:[%s0 + $0xf0] sm:$0xff]
  %v57 = vld [vmem:[%s0 + $0xf8] sm:$0xff]
  %v58 = vld [vmem:[%s0 + $0x100] sm:$0xff]
  %v59 = vld [vmem:[%s0 + $0x108] sm:$0xff]
  %v60 = vld [vmem:[%s0 + $0x110] sm:$0xff]
  %v61 = vld [vmem:[%s0 + $0x118] sm:$0xff]
  %vm62 = vcmask 261120
  %v64 = vsel %vm62, %v16, 0
  %v67 = vsel %vm62, %v19, 0
  %v70 = vsel %vm62, %v22, 0
  %v73 = vsel %vm62, %v25, 0
  %75 = vmatprep.subr.mxu0 0.0
  %76 = vmatpush1.msra.mxu0 %v26
  %77 = vmatprep.subr.mxu0 0.0
  %78 = vmatpush1.msra.mxu0 %v27
  %79 = vmatprep.subr.mxu0 0.0
  %80 = vmatpush1.msra.mxu0 %v28
  %81 = vmatprep.subr.mxu0 0.0
  %82 = vmatpush1.msra.mxu0 %v29
  %83 = vmatprep.subr.mxu0 0.0
  %84 = vmatpush1.msra.mxu0 %v30
  %85 = vmatprep.subr.mxu0 0.0
  %86 = vmatpush1.msra.mxu0 %v31
  %87 = vmatprep.subr.mxu0 0.0
  %88 = vmatpush1.msra.mxu0 %v32
  %89 = vmatprep.subr.mxu0 0.0
  %90 = vmatpush1.msra.mxu0 %v33
  %91 = vmatprep.subr.mxu0 0.0
  %92 = vmatpush1.msra.mxu0 %v34
  %93 = vmatprep.subr.mxu0 0.0
  %94 = vmatpush1.msra.mxu0 %v35
  %95 = vmatprep.subr.mxu0 0.0
  %96 = vmatpush1.msra.mxu0 %v36
  %97 = vmatprep.subr.mxu0 0.0
  %98 = vmatpush1.msra.mxu0 %v37
  %99 = vmatprep.subr.mxu0 0.0
  %100 = vmatpush1.msra.mxu0 %v38
  %101 = vmatprep.subr.mxu0 0.0
  %102 = vmatpush1.msra.mxu0 %v39
  %103 = vmatprep.subr.mxu0 0.0
  %104 = vmatpush1.msra.mxu0 %v40
  %105 = vmatprep.subr.mxu0 0.0
  %106 = vmatpush1.msra.mxu0 %v41
  %107 = vmatprep.subr.mxu0 0.0
  %108 = vmatpush1.msra.mxu0 %v42
  %109 = vmatprep.subr.mxu0 0.0
  %110 = vmatpush1.msra.mxu0 %v43
  %111 = vmatprep.subr.mxu0 0.0
  %112 = vmatpush1.msra.mxu0 %v44
  %113 = vmatprep.subr.mxu0 0.0
  %114 = vmatpush1.msra.mxu0 %v45
  %115 = vmatprep.subr.mxu0 0.0
  %116 = vmatpush1.msra.mxu0 %v46
  %117 = vmatprep.subr.mxu0 0.0
  %118 = vmatpush1.msra.mxu0 %v47
  %119 = vmatprep.subr.mxu0 0.0
  %120 = vmatpush1.msra.mxu0 %v48
  %121 = vmatprep.subr.mxu0 0.0
  %122 = vmatpush1.msra.mxu0 %v49
  %123 = vmatprep.subr.mxu0 0.0
  %124 = vmatpush1.msra.mxu0 %v50
  %125 = vmatprep.subr.mxu0 0.0
  %126 = vmatpush1.msra.mxu0 %v51
  %127 = vmatprep.subr.mxu0 0.0
  %128 = vmatpush1.msra.mxu0 %v52
  %129 = vmatprep.subr.mxu0 0.0
  %130 = vmatpush1.msra.mxu0 %v53
  %131 = vmatprep.subr.mxu0 0.0
  %132 = vmatpush1.msra.mxu0 %v54
  %133 = vmatprep.subr.mxu0 0.0
  %134 = vmatpush1.msra.mxu0 %v55
  %135 = vmatprep.subr.mxu0 0.0
  %136 = vmatpush1.msra.mxu0 %v56
  %137 = vmatprep.subr.mxu0 0.0
  %138 = vmatpush1.msra.mxu0 %v57
  %139 = vmatprep.mubr.f32.mxu0 %v15
  %140 = vmatmul.mubr.f32.gmra.mrb[0].mxu0 %v14
  %v141 = vpop.f32.mrb[0].mxu0
  %v142 = vadd.f32 0.0, %v141
  %v143 = vpop.f32.mrb[0].mxu0
  %144 = vmatprep.mubr.f32.mxu0 %v18
  %145 = vmatmul.mubr.f32.gmra.mrb[0].mxu0 %v17
  %v146 = vpop.f32.mrb[0].mxu0
  %v147 = vadd.f32 0.0, %v146
  %v148 = vpop.f32.mrb[0].mxu0
  %149 = vmatprep.mubr.f32.mxu0 %v21
  %150 = vmatmul.mubr.f32.gmra.mrb[0].mxu0 %v20
  %v151 = vpop.f32.mrb[0].mxu0
  %v152 = vadd.f32 0.0, %v151
  %v153 = vpop.f32.mrb[0].mxu0
  %154 = vmatprep.mubr.f32.mxu0 %v24
  %155 = vmatmul.mubr.f32.gmra.mrb[0].mxu0 %v23
  %v156 = vpop.f32.mrb[0].mxu0
  %v157 = vadd.f32 0.0, %v156
  %v158 = vpop.f32.mrb[0].mxu0
  %159 = vdwg.mxu0
  %160 = vmatprep.subr.mxu0 0.0
  %161 = vmatpush1.msra.mxu0 %v58
  %162 = vmatprep.subr.mxu0 0.0
  %163 = vmatpush1.msra.mxu0 %v59
  %164 = vmatprep.subr.mxu0 0.0
  %165 = vmatpush1.msra.mxu0 %v60
  %166 = vmatprep.subr.mxu0 0.0
  %167 = vmatpush1.msra.mxu0 %v61
  %168 = vmatprep.subr.mxu0 0.0
  %169 = vmatpush1.msra.mxu0 0.0
  %170 = vmatprep.subr.mxu0 0.0
  %171 = vmatpush1.msra.mxu0 0.0
  %172 = vmatprep.subr.mxu0 0.0
  %173 = vmatpush1.msra.mxu0 0.0
  %174 = vmatprep.subr.mxu0 0.0
  %175 = vmatpush1.msra.mxu0 0.0
  %176 = vmatprep.subr.mxu0 0.0
  %177 = vmatpush1.msra.mxu0 0.0
  %178 = vmatprep.subr.mxu0 0.0
  %179 = vmatpush1.msra.mxu0 0.0
  %180 = vmatprep.subr.mxu0 0.0
  %181 = vmatpush1.msra.mxu0 0.0
  %182 = vmatprep.subr.mxu0 0.0
  %183 = vmatpush1.msra.mxu0 0.0
  %184 = vmatprep.subr.mxu0 0.0
  %185 = vmatpush1.msra.mxu0 0.0
  %186 = vmatprep.subr.mxu0 0.0
  %187 = vmatpush1.msra.mxu0 0.0
  %188 = vmatprep.subr.mxu0 0.0
  %189 = vmatpush1.msra.mxu0 0.0
  %190 = vmatprep.subr.mxu0 0.0
  %191 = vmatpush1.msra.mxu0 0.0
  %192 = vmatprep.subr.mxu0 0.0
  %193 = vmatpush1.msra.mxu0 0.0
  %194 = vmatprep.subr.mxu0 0.0
  %195 = vmatpush1.msra.mxu0 0.0
  %196 = vmatprep.subr.mxu0 0.0
  %197 = vmatpush1.msra.mxu0 0.0
  %198 = vmatprep.subr.mxu0 0.0
  %199 = vmatpush1.msra.mxu0 0.0
  %200 = vmatprep.subr.mxu0 0.0
  %201 = vmatpush1.msra.mxu0 0.0
  %202 = vmatprep.subr.mxu0 0.0
  %203 = vmatpush1.msra.mxu0 0.0
  %204 = vmatprep.subr.mxu0 0.0
  %205 = vmatpush1.msra.mxu0 0.0
  %206 = vmatprep.subr.mxu0 0.0
  %207 = vmatpush1.msra.mxu0 0.0
  %208 = vmatprep.subr.mxu0 0.0
  %209 = vmatpush1.msra.mxu0 0.0
  %210 = vmatprep.subr.mxu0 0.0
  %211 = vmatpush1.msra.mxu0 0.0
  %212 = vmatprep.subr.mxu0 0.0
  %213 = vmatpush1.msra.mxu0 0.0
  %214 = vmatprep.subr.mxu0 0.0
  %215 = vmatpush1.msra.mxu0 0.0
  %216 = vmatprep.subr.mxu0 0.0
  %217 = vmatpush1.msra.mxu0 0.0
  %218 = vmatprep.subr.mxu0 0.0
  %219 = vmatpush1.msra.mxu0 0.0
  %220 = vmatprep.subr.mxu0 0.0
  %221 = vmatpush1.msra.mxu0 0.0
  %222 = vmatprep.subr.mxu0 0.0
  %223 = vmatpush1.msra.mxu0 0.0
  %224 = vmatprep.mubr.f32.mxu0 0.0
  %225 = vmatmul.mubr.f32.gmra.mrb[0].mxu0 %v64
  %v226 = vpop.f32.mrb[0].mxu0
  %v227 = vadd.f32 %v142, %v226
  %v228 = vpop.f32.mrb[0].mxu0
  %229 = vmatprep.mubr.f32.mxu0 0.0
  %230 = vmatmul.mubr.f32.gmra.mrb[0].mxu0 %v67
  %v231 = vpop.f32.mrb[0].mxu0
  %v232 = vadd.f32 %v147, %v231
  %v233 = vpop.f32.mrb[0].mxu0
  %234 = vmatprep.mubr.f32.mxu0 0.0
  %235 = vmatmul.mubr.f32.gmra.mrb[0].mxu0 %v70
  %v236 = vpop.f32.mrb[0].mxu0
  %v237 = vadd.f32 %v152, %v236
  %v238 = vpop.f32.mrb[0].mxu0
  %239 = vmatprep.mubr.f32.mxu0 0.0
  %240 = vmatmul.mubr.f32.gmra.mrb[0].mxu0 %v73
  %v241 = vpop.f32.mrb[0].mxu0
  %v242 = vadd.f32 %v157, %v241
  %v243 = vpop.f32.mrb[0].mxu0
  %244 = vdwg.mxu0
  %vm245 = vcmask 801792
  %v246 = vsel %vm245, %v227, 0.0
  %247 = vadd.xlane.f32.xlu0 %v246
  %v248 = vpop.xlane.xlu0 %247
  %v249 = vsel %vm245, %v232, 0.0
  %250 = vadd.xlane.f32.xlu0 %v249
  %v251 = vpop.xlane.xlu0 %250
  %v252 = vsel %vm245, %v237, 0.0
  %253 = vadd.xlane.f32.xlu0 %v252
  %v254 = vpop.xlane.xlu0 %253
  %v255 = vsel %vm245, %v242, 0.0
  %256 = vadd.xlane.f32.xlu0 %v255
  %v257 = vpop.xlane.xlu0 %256
  %v258 = vmul.f32 %v227, %v227
  %v259 = vmul.f32 %v232, %v232
  %v260 = vmul.f32 %v237, %v237
  %v261 = vmul.f32 %v242, %v242
  %v262 = vsel %vm245, %v258, 0.0
  %263 = vadd.xlane.f32.xlu0 %v262
  %v264 = vpop.xlane.xlu0 %263
  %v265 = vsel %vm245, %v259, 0.0
  %266 = vadd.xlane.f32.xlu0 %v265
  %v267 = vpop.xlane.xlu0 %266
  %v268 = vsel %vm245, %v260, 0.0
  %269 = vadd.xlane.f32.xlu0 %v268
  %v270 = vpop.xlane.xlu0 %269
  %v271 = vsel %vm245, %v261, 0.0
  %272 = vadd.xlane.f32.xlu0 %v271
  %v273 = vpop.xlane.xlu0 %272
  %v274 = vmul.f32 %v248, 0.010204081
  %v275 = vmul.f32 %v251, 0.010204081
  %v276 = vmul.f32 %v254, 0.010204081
  %v277 = vmul.f32 %v257, 0.010204081
  %v278 = vmul.f32 %v264, 0.010204081
  %v279 = vmul.f32 %v267, 0.010204081
  %v280 = vmul.f32 %v270, 0.010204081
  %v281 = vmul.f32 %v273, 0.010204081
  %v282 = vmul.f32 %v274, %v274
  %v283 = vmul.f32 %v275, %v275
  %v284 = vmul.f32 %v276, %v276
  %v285 = vmul.f32 %v277, %v277
  %v286 = vsub.f32 %v278, %v282
  %v287 = vsub.f32 %v279, %v283
  %v288 = vsub.f32 %v280, %v284
  %v289 = vsub.f32 %v281, %v285
  %v290 = vld [vmem:[%s2] sm:$0xff]
  %v291 = vld [vmem:[%s2 + $0x8] sm:$0xff]
  %v292 = vld [vmem:[%s2 + $0x10] sm:$0xff]
  %v293 = vld [vmem:[%s2 + $0x18] sm:$0xff]
  %v294 = vadd.f32 %v286, 1e-05
  %v295 = vadd.f32 %v287, 1e-05
  %v296 = vadd.f32 %v288, 1e-05
  %v297 = vadd.f32 %v289, 1e-05
  %v298 = vrsqrt.pop %v294
  %v299 = vrsqrt.pop %v295
  %v300 = vrsqrt.pop %v296
  %v301 = vrsqrt.pop %v297
  %v302 = vmul.f32 %v290, %v298
  %v303 = vmul.f32 %v291, %v299
  %v304 = vmul.f32 %v292, %v300
  %v305 = vmul.f32 %v293, %v301
  %v306 = vmul.f32 %v274, %v302
  %v307 = vmul.f32 %v275, %v303
  %v308 = vmul.f32 %v276, %v304
  %v309 = vmul.f32 %v277, %v305
  %314 = vrot.lane.b32.xlu0 %v306, 1
  %v315 = vpop.permute.xlu0 %314
  %316 = vrot.lane.b32.xlu0 %v307, 1
  %v317 = vpop.permute.xlu0 %316
  %318 = vrot.lane.b32.xlu0 %v308, 1
  %v319 = vpop.permute.xlu0 %318
  %320 = vrot.lane.b32.xlu0 %v309, 1
  %v321 = vpop.permute.xlu0 %320
  %v326 = vsub.f32 %v290, %v315
  %v327 = vsub.f32 %v291, %v317
  %v328 = vsub.f32 %v292, %v319
  %v329 = vsub.f32 %v293, %v321
  %331 = vset.pattern.permute.xlu0 0
  %332 = vperm.xlu0 %331, %v302
  %v333 = vpop.permute.xlu0 %332
  %336 = vset.pattern.permute.xlu0 0
  %337 = vperm.xlu0 %336, %v303
  %v338 = vpop.permute.xlu0 %337
  %341 = vset.pattern.permute.xlu0 0
  %342 = vperm.xlu0 %341, %v304
  %v343 = vpop.permute.xlu0 %342
  %346 = vset.pattern.permute.xlu0 0
  %347 = vperm.xlu0 %346, %v305
  %v348 = vpop.permute.xlu0 %347
  %v350 = vmul.f32 %v227, %v333
  %v351 = vmul.f32 %v232, %v338
  %v352 = vmul.f32 %v237, %v343
  %v353 = vmul.f32 %v242, %v348
  %355 = vset.pattern.permute.xlu0 1
  %356 = vperm.xlu0 %355, %v326
  %v357 = vpop.permute.xlu0 %356
  %360 = vset.pattern.permute.xlu0 1
  %361 = vperm.xlu0 %360, %v327
  %v362 = vpop.permute.xlu0 %361
  %365 = vset.pattern.permute.xlu0 1
  %366 = vperm.xlu0 %365, %v328
  %v367 = vpop.permute.xlu0 %366
  %370 = vset.pattern.permute.xlu0 1
  %371 = vperm.xlu0 %370, %v329
  %v372 = vpop.permute.xlu0 %371
  %v374 = vadd.f32 %v350, %v357
  %v375 = vadd.f32 %v351, %v362
  %v376 = vadd.f32 %v352, %v367
  %v377 = vadd.f32 %v353, %v372
  %vm378 = vcmp.ge.f32.partialorder %v374, 0.0
  %vm379 = vcmp.ge.f32.partialorder %v375, 0.0
  %vm380 = vcmp.ge.f32.partialorder %v376, 0.0
  %vm381 = vcmp.ge.f32.partialorder %v377, 0.0
  %383 = vset.pattern.permute.xlu0 2
  %384 = vperm.xlu0 %383, %v290
  %v385 = vpop.permute.xlu0 %384
  %388 = vset.pattern.permute.xlu0 2
  %389 = vperm.xlu0 %388, %v291
  %v390 = vpop.permute.xlu0 %389
  %393 = vset.pattern.permute.xlu0 2
  %394 = vperm.xlu0 %393, %v292
  %v395 = vpop.permute.xlu0 %394
  %398 = vset.pattern.permute.xlu0 2
  %399 = vperm.xlu0 %398, %v293
  %v400 = vpop.permute.xlu0 %399
  %v402 = vmul.f32 %v385, %v374
  %v403 = vmul.f32 %v390, %v375
  %v404 = vmul.f32 %v395, %v376
  %v405 = vmul.f32 %v400, %v377
  %v406 = vsel %vm378, %v374, %v402
  %v407 = vsel %vm379, %v375, %v403
  %v408 = vsel %vm380, %v376, %v404
  %v409 = vsel %vm381, %v377, %v405
  %410 = vst.msk [vmem:[%s3] sm:$0xff] %vm245, %v406
  %411 = vst.msk [vmem:[%s3 + $0x8] sm:$0xff] %vm245, %v407
  %412 = vst.msk [vmem:[%s3 + $0x10] sm:$0xff] %vm245, %v408
  %413 = vst.msk [vmem:[%s3 + $0x18] sm:$0xff] %vm245, %v409
  // Predicated region
  $region14: #{vae_conv_forward.19} parent=0 // pred_check
    _
  $region15: #{vae_conv_forward.19} parent=0 // pred_check_branch
    %415 = sbr.rel (0) target = $region17
  $region16: #{vae_conv_forward.19} parent=0 // pred_region
    _
  $region17: #{vae_conv_forward.19} parent=0 // pred_fallthru
    _
  // Predicated region
  $region18: #{vae_conv_forward.19} parent=0 // pred_check
    _
  $region19: #{vae_conv_forward.19} parent=0 // pred_check_branch
    %417 = sbr.rel (0) target = $region21
  $region20: #{vae_conv_forward.19} parent=0 // pred_region
    _
  $region21: #{vae_conv_forward.19} parent=0 // pred_fallthru
    _

// kernel: vae_conv_forward.20
$region0: #{vae_conv_forward.20}
  #allocation0 [shape = 'u32[]', space=smem, size = 0x4, offset = 0x4, fixed_abs, tag = 'smem constant byte address 0x4 - core index']
  #allocation1 [shape = 'u32[144,128]{1,0:T(1,128)}', space=vmem, size = 0x12000, scoped, tag = 'internal scratch']
  %s0 = inlined_call_operand.vmem [shape: f32[800,392], index: 0, kind: input, shape index: {}]
  %s1 = inlined_call_operand.vmem [shape: f32[16,800], index: 1, kind: input, shape index: {}]
  %s2 = inlined_call_operand.vmem [shape: f32[16,3], index: 2, kind: input, shape index: {}]
  %s3 = inlined_call_operand.vmem [shape: f32[16,392], index: 3, kind: output, shape index: {}]
  %s4 = sld [smem:[#allocation0]]
  $region22: #{vae_conv_forward.20} parent=0
    _
  %s6 = ssub.s32 1, %s4
  %s7 = scalar_select 0, %s6, %s4
  // Predicated region
  $region2: #{vae_conv_forward.20} parent=0 // pred_check
    _
  $region3: #{vae_conv_forward.20} parent=0 // pred_check_branch
    %9 = sbr.rel (0) target = $region5
  $region4: #{vae_conv_forward.20} parent=0 // pred_region
    _
  $region5: #{vae_conv_forward.20} parent=0 // pred_fallthru
    _
  // Predicated region
  $region6: #{vae_conv_forward.20} parent=0 // pred_check
    _
  $region7: #{vae_conv_forward.20} parent=0 // pred_check_branch
    %11 = sbr.rel (0) target = $region9
  $region8: #{vae_conv_forward.20} parent=0 // pred_region
    _
  $region9: #{vae_conv_forward.20} parent=0 // pred_fallthru
    _
  // Predicated region
  $region10: #{vae_conv_forward.20} parent=0 // pred_check
    _
  $region11: #{vae_conv_forward.20} parent=0 // pred_check_branch
    %13 = sbr.rel (0) target = $region13
  $region12: #{vae_conv_forward.20} parent=0 // pred_region
    _
  $region13: #{vae_conv_forward.20} parent=0 // pred_fallthru
    _
  %v14 = vld [vmem:[%s1] sm:$0xff]
  %v15 = vld [vmem:[%s1 + $0x8] sm:$0xff]
  %v16 = vld [vmem:[%s1 + $0x10] sm:$0xff]
  %v17 = vld [vmem:[%s1 + $0x18] sm:$0xff]
  %v18 = vld [vmem:[%s1 + $0x20] sm:$0xff]
  %v19 = vld [vmem:[%s1 + $0x28] sm:$0xff]
  %v20 = vld [vmem:[%s1 + $0x30] sm:$0xff]
  %v21 = vld [vmem:[%s1 + $0x38] sm:$0xff]
  %v22 = vld [vmem:[%s1 + $0x40] sm:$0xff]
  %v23 = vld [vmem:[%s1 + $0x48] sm:$0xff]
  %v24 = vld [vmem:[%s1 + $0x50] sm:$0xff]
  %v25 = vld [vmem:[%s1 + $0x58] sm:$0xff]
  %v26 = vld [vmem:[%s1 + $0x60] sm:$0xff]
  %v27 = vld [vmem:[%s1 + $0x68] sm:$0xff]
  %v28 = vld [vmem:[%s0] sm:$0xff]
  %v29 = vld [vmem:[%s0 + $0x8] sm:$0xff]
  %v30 = vld [vmem:[%s0 + $0x10] sm:$0xff]
  %v31 = vld [vmem:[%s0 + $0x18] sm:$0xff]
  %v32 = vld [vmem:[%s0 + $0x20] sm:$0xff]
  %v33 = vld [vmem:[%s0 + $0x28] sm:$0xff]
  %v34 = vld [vmem:[%s0 + $0x30] sm:$0xff]
  %v35 = vld [vmem:[%s0 + $0x38] sm:$0xff]
  %v36 = vld [vmem:[%s0 + $0x40] sm:$0xff]
  %v37 = vld [vmem:[%s0 + $0x48] sm:$0xff]
  %v38 = vld [vmem:[%s0 + $0x50] sm:$0xff]
  %v39 = vld [vmem:[%s0 + $0x58] sm:$0xff]
  %v40 = vld [vmem:[%s0 + $0x60] sm:$0xff]
  %v41 = vld [vmem:[%s0 + $0x68] sm:$0xff]
  %v42 = vld [vmem:[%s0 + $0x70] sm:$0xff]
  %v43 = vld [vmem:[%s0 + $0x78] sm:$0xff]
  %v44 = vld [vmem:[%s0 + $0x80] sm:$0xff]
  %v45 = vld [vmem:[%s0 + $0x88] sm:$0xff]
  %v46 = vld [vmem:[%s0 + $0x90] sm:$0xff]
  %v47 = vld [vmem:[%s0 + $0x98] sm:$0xff]
  %v48 = vld [vmem:[%s0 + $0xa0] sm:$0xff]
  %v49 = vld [vmem:[%s0 + $0xa8] sm:$0xff]
  %v50 = vld [vmem:[%s0 + $0xb0] sm:$0xff]
  %v51 = vld [vmem:[%s0 + $0xb8] sm:$0xff]
  %v52 = vld [vmem:[%s0 + $0xc0] sm:$0xff]
  %v53 = vld [vmem:[%s0 + $0xc8] sm:$0xff]
  %v54 = vld [vmem:[%s0 + $0xd0] sm:$0xff]
  %v55 = vld [vmem:[%s0 + $0xd8] sm:$0xff]
  %v56 = vld [vmem:[%s0 + $0xe0] sm:$0xff]
  %v57 = vld [vmem:[%s0 + $0xe8] sm:$0xff]
  %v58 = vld [vmem:[%s0 + $0xf0] sm:$0xff]
  %v59 = vld [vmem:[%s0 + $0xf8] sm:$0xff]
  %v60 = vld [vmem:[%s0 + $0x100] sm:$0xff]
  %v61 = vld [vmem:[%s0 + $0x108] sm:$0xff]
  %v62 = vld [vmem:[%s0 + $0x110] sm:$0xff]
  %v63 = vld [vmem:[%s0 + $0x118] sm:$0xff]
  %v64 = vld [vmem:[%s0 + $0x120] sm:$0xff]
  %v65 = vld [vmem:[%s0 + $0x128] sm:$0xff]
  %v66 = vld [vmem:[%s0 + $0x130] sm:$0xff]
  %v67 = vld [vmem:[%s0 + $0x138] sm:$0xff]
  %v68 = vld [vmem:[%s0 + $0x140] sm:$0xff]
  %v69 = vld [vmem:[%s0 + $0x148] sm:$0xff]
  %v70 = vld [vmem:[%s0 + $0x150] sm:$0xff]
  %v71 = vld [vmem:[%s0 + $0x158] sm:$0xff]
  %v72 = vld [vmem:[%s0 + $0x160] sm:$0xff]
  %v73 = vld [vmem:[%s0 + $0x168] sm:$0xff]
  %v74 = vld [vmem:[%s0 + $0x170] sm:$0xff]
  %v75 = vld [vmem:[%s0 + $0x178] sm:$0xff]
  %v76 = vld [vmem:[%s0 + $0x180] sm:$0xff]
  %v77 = vld [vmem:[%s0 + $0x188] sm:$0xff]
  %v78 = vld [vmem:[%s0 + $0x190] sm:$0xff]
  %v79 = vld [vmem:[%s0 + $0x198] sm:$0xff]
  %v80 = vld [vmem:[%s0 + $0x1a0] sm:$0xff]
  %v81 = vld [vmem:[%s0 + $0x1a8] sm:$0xff]
  %v82 = vld [vmem:[%s0 + $0x1b0] sm:$0xff]
  %v83 = vld [vmem:[%s0 + $0x1b8] sm:$0xff]
  %v84 = vld [vmem:[%s0 + $0x1c0] sm:$0xff]
  %v85 = vld [vmem:[%s0 + $0x1c8] sm:$0xff]
  %v86 = vld [vmem:[%s0 + $0x1d0] sm:$0xff]
  %v87 = vld [vmem:[%s0 + $0x1d8] sm:$0xff]
  %v88 = vld [vmem:[%s0 + $0x1e0] sm:$0xff]
  %v89 = vld [vmem:[%s0 + $0x1e8] sm:$0xff]
  %v90 = vld [vmem:[%s0 + $0x1f0] sm:$0xff]
  %v91 = vld [vmem:[%s0 + $0x1f8] sm:$0xff]
  %v92 = vld [vmem:[%s0 + $0x200] sm:$0xff]
  %v93 = vld [vmem:[%s0 + $0x208] sm:$0xff]
  %v94 = vld [vmem:[%s0 + $0x210] sm:$0xff]
  %v95 = vld [vmem:[%s0 + $0x218] sm:$0xff]
  %v96 = vld [vmem:[%s0 + $0x220] sm:$0xff]
  %v97 = vld [vmem:[%s0 + $0x228] sm:$0xff]
  %v98 = vld [vmem:[%s0 + $0x230] sm:$0xff]
  %v99 = vld [vmem:[%s0 + $0x238] sm:$0xff]
  %v100 = vld [vmem:[%s0 + $0x240] sm:$0xff]
  %v101 = vld [vmem:[%s0 + $0x248] sm:$0xff]
  %v102 = vld [vmem:[%s0 + $0x250] sm:$0xff]
  %v103 = vld [vmem:[%s0 + $0x258] sm:$0xff]
  %v104 = vld [vmem:[%s0 + $0x260] sm:$0xff]
  %v105 = vld [vmem:[%s0 + $0x268] sm:$0xff]
  %v106 = vld [vmem:[%s0 + $0x270] sm:$0xff]
  %v107 = vld [vmem:[%s0 + $0x278] sm:$0xff]
  %v108 = vld [vmem:[%s0 + $0x280] sm:$0xff]
  %v109 = vld [vmem:[%s0 + $0x288] sm:$0xff]
  %v110 = vld [vmem:[%s0 + $0x290] sm:$0xff]
  %v111 = vld [vmem:[%s0 + $0x298] sm:$0xff]
  %v112 = vld [vmem:[%s0 + $0x2a0] sm:$0xff]
  %v113 = vld [vmem:[%s0 + $0x2a8] sm:$0xff]
  %v114 = vld [vmem:[%s0 + $0x2b0] sm:$0xff]
  %v115 = vld [vmem:[%s0 + $0x2b8] sm:$0xff]
  %v116 = vld [vmem:[%s0 + $0x2c0] sm:$0xff]
  %v117 = vld [vmem:[%s0 + $0x2c8] sm:$0xff]
  %v118 = vld [vmem:[%s0 + $0x2d0] sm:$0xff]
  %v119 = vld [vmem:[%s0 + $0x2d8] sm:$0xff]
  %v120 = vld [vmem:[%s0 + $0x2e0] sm:$0xff]
  %v121 = vld [vmem:[%s0 + $0x2e8] sm:$0xff]
  %v122 = vld [vmem:[%s0 + $0x2f0] sm:$0xff]
  %v123 = vld [vmem:[%s0 + $0x2f8] sm:$0xff]
  %v124 = vld [vmem:[%s0 + $0x300] sm:$0xff]
  %v125 = vld [vmem:[%s0 + $0x308] sm:$0xff]
  %v126 = vld [vmem:[%s0 + $0x310] sm:$0xff]
  %v127 = vld [vmem:[%s0 + $0x318] sm:$0xff]
  %v128 = vld [vmem:[%s0 + $0x320] sm:$0xff]
  %v129 = vld [vmem:[%s0 + $0x328] sm:$0xff]
  %v130 = vld [vmem:[%s0 + $0x330] sm:$0xff]
  %v131 = vld [vmem:[%s0 + $0x338] sm:$0xff]
  %v132 = vld [vmem:[%s0 + $0x340] sm:$0xff]
  %v133 = vld [vmem:[%s0 + $0x348] sm:$0xff]
  %v134 = vld [vmem:[%s0 + $0x350] sm:$0xff]
  %v135 = vld [vmem:[%s0 + $0x358] sm:$0xff]
  %v136 = vld [vmem:[%s0 + $0x360] sm:$0xff]
  %v137 = vld [vmem:[%s0 + $0x368] sm:$0xff]
  %v138 = vld [vmem:[%s0 + $0x370] sm:$0xff]
  %v139 = vld [vmem:[%s0 + $0x378] sm:$0xff]
  %v140 = vld [vmem:[%s0 + $0x380] sm:$0xff]
  %v141 = vld [vmem:[%s0 + $0x388] sm:$0xff]
  %v142 = vld [vmem:[%s0 + $0x390] sm:$0xff]
  %v143 = vld [vmem:[%s0 + $0x398] sm:$0xff]
  %v144 = vld [vmem:[%s0 + $0x3a0] sm:$0xff]
  %v145 = vld [vmem:[%s0 + $0x3a8] sm:$0xff]
  %v146 = vld [vmem:[%s0 + $0x3b0] sm:$0xff]
  %v147 = vld [vmem:[%s0 + $0x3b8] sm:$0xff]
  %v148 = vld [vmem:[%s0 + $0x3c0] sm:$0xff]
  %v149 = vld [vmem:[%s0 + $0x3c8] sm:$0xff]
  %v150 = vld [vmem:[%s0 + $0x3d0] sm:$0xff]
  %v151 = vld [vmem:[%s0 + $0x3d8] sm:$0xff]
  %v152 = vld [vmem:[%s0 + $0x3e0] sm:$0xff]
  %v153 = vld [vmem:[%s0 + $0x3e8] sm:$0xff]
  %v154 = vld [vmem:[%s0 + $0x3f0] sm:$0xff]
  %v155 = vld [vmem:[%s0 + $0x3f8] sm:$0xff]
  %v156 = vld [vmem:[%s0 + $0x400] sm:$0xff]
  %v157 = vld [vmem:[%s0 + $0x408] sm:$0xff]
  %v158 = vld [vmem:[%s0 + $0x410] sm:$0xff]
  %v159 = vld [vmem:[%s0 + $0x418] sm:$0xff]
  %v160 = vld [vmem:[%s0 + $0x420] sm:$0xff]
  %v161 = vld [vmem:[%s0 + $0x428] sm:$0xff]
  %v162 = vld [vmem:[%s0 + $0x430] sm:$0xff]
  %v163 = vld [vmem:[%s0 + $0x438] sm:$0xff]
  %v164 = vld [vmem:[%s0 + $0x440] sm:$0xff]
  %v165 = vld [vmem:[%s0 + $0x448] sm:$0xff]
  %v166 = vld [vmem:[%s0 + $0x450] sm:$0xff]
  %v167 = vld [vmem:[%s0 + $0x458] sm:$0xff]
  %v168 = vld [vmem:[%s0 + $0x460] sm:$0xff]
  %v169 = vld [vmem:[%s0 + $0x468] sm:$0xff]
  %v170 = vld [vmem:[%s0 + $0x470] sm:$0xff]
  %v171 = vld [vmem:[%s0 + $0x478] sm:$0xff]
  %v172 = vld [vmem:[%s0 + $0x480] sm:$0xff]
  %v173 = vld [vmem:[%s0 + $0x488] sm:$0xff]
  %v174 = vld [vmem:[%s0 + $0x490] sm:$0xff]
  %v175 = vld [vmem:[%s0 + $0x498] sm:$0xff]
  %v176 = vld [vmem:[%s0 + $0x4a0] sm:$0xff]
  %v177 = vld [vmem:[%s0 + $0x4a8] sm:$0xff]
  %v178 = vld [vmem:[%s0 + $0x4b0] sm:$0xff]
  %v179 = vld [vmem:[%s0 + $0x4b8] sm:$0xff]
  %v180 = vld [vmem:[%s0 + $0x4c0] sm:$0xff]
  %v181 = vld [vmem:[%s0 + $0x4c8] sm:$0xff]
  %v182 = vld [vmem:[%s0 + $0x4d0] sm:$0xff]
  %v183 = vld [vmem:[%s0 + $0x4d8] sm:$0xff]
  %v184 = vld [vmem:[%s0 + $0x4e0] sm:$0xff]
  %v185 = vld [vmem:[%s0 + $0x4e8] sm:$0xff]
  %v186 = vld [vmem:[%s0 + $0x4f0] sm:$0xff]
  %v187 = vld [vmem:[%s0 + $0x4f8] sm:$0xff]
  %v188 = vld [vmem:[%s0 + $0x500] sm:$0xff]
  %v189 = vld [vmem:[%s0 + $0x508] sm:$0xff]
  %v190 = vld [vmem:[%s0 + $0x510] sm:$0xff]
  %v191 = vld [vmem:[%s0 + $0x518] sm:$0xff]
  %v192 = vld [vmem:[%s0 + $0x520] sm:$0xff]
  %v193 = vld [vmem:[%s0 + $0x528] sm:$0xff]
  %v194 = vld [vmem:[%s0 + $0x530] sm:$0xff]
  %v195 = vld [vmem:[%s0 + $0x538] sm:$0xff]
  %v196 = vld [vmem:[%s0 + $0x540] sm:$0xff]
  %v197 = vld [vmem:[%s0 + $0x548] sm:$0xff]
  %v198 = vld [vmem:[%s0 + $0x550] sm:$0xff]
  %v199 = vld [vmem:[%s0 + $0x558] sm:$0xff]
  %v200 = vld [vmem:[%s0 + $0x560] sm:$0xff]
  %v201 = vld [vmem:[%s0 + $0x568] sm:$0xff]
  %v202 = vld [vmem:[%s0 + $0x570] sm:$0xff]
  %v203 = vld [vmem:[%s0 + $0x578] sm:$0xff]
  %v204 = vld [vmem:[%s0 + $0x580] sm:$0xff]
  %v205 = vld [vmem:[%s0 + $0x588] sm:$0xff]
  %v206 = vld [vmem:[%s0 + $0x590] sm:$0xff]
  %v207 = vld [vmem:[%s0 + $0x598] sm:$0xff]
  %v208 = vld [vmem:[%s0 + $0x5a0] sm:$0xff]
  %v209 = vld [vmem:[%s0 + $0x5a8] sm:$0xff]
  %v210 = vld [vmem:[%s0 + $0x5b0] sm:$0xff]
  %v211 = vld [vmem:[%s0 + $0x5b8] sm:$0xff]
  %v212 = vld [vmem:[%s0 + $0x5c0] sm:$0xff]
  %v213 = vld [vmem:[%s0 + $0x5c8] sm:$0xff]
  %v214 = vld [vmem:[%s0 + $0x5d0] sm:$0xff]
  %v215 = vld [vmem:[%s0 + $0x5d8] sm:$0xff]
  %v216 = vld [vmem:[%s0 + $0x5e0] sm:$0xff]
  %v217 = vld [vmem:[%s0 + $0x5e8] sm:$0xff]
  %v218 = vld [vmem:[%s0 + $0x5f0] sm:$0xff]
  %v219 = vld [vmem:[%s0 + $0x5f8] sm:$0xff]
  %v220 = vld [vmem:[%s0 + $0x600] sm:$0xff]
  %v221 = vld [vmem:[%s0 + $0x608] sm:$0xff]
  %v222 = vld [vmem:[%s0 + $0x610] sm:$0xff]
  %v223 = vld [vmem:[%s0 + $0x618] sm:$0xff]
  %v224 = vld [vmem:[%s0 + $0x620] sm:$0xff]
  %v225 = vld [vmem:[%s0 + $0x628] sm:$0xff]
  %v226 = vld [vmem:[%s0 + $0x630] sm:$0xff]
  %v227 = vld [vmem:[%s0 + $0x638] sm:$0xff]
  %v228 = vld [vmem:[%s0 + $0x640] sm:$0xff]
  %v229 = vld [vmem:[%s0 + $0x648] sm:$0xff]
  %v230 = vld [vmem:[%s0 + $0x650] sm:$0xff]
  %v231 = vld [vmem:[%s0 + $0x658] sm:$0xff]
  %v232 = vld [vmem:[%s0 + $0x660] sm:$0xff]
  %v233 = vld [vmem:[%s0 + $0x668] sm:$0xff]
  %v234 = vld [vmem:[%s0 + $0x670] sm:$0xff]
  %v235 = vld [vmem:[%s0 + $0x678] sm:$0xff]
  %v236 = vld [vmem:[%s0 + $0x680] sm:$0xff]
  %v237 = vld [vmem:[%s0 + $0x688] sm:$0xff]
  %v238 = vld [vmem:[%s0 + $0x690] sm:$0xff]
  %v239 = vld [vmem:[%s0 + $0x698] sm:$0xff]
  %v240 = vld [vmem:[%s0 + $0x6a0] sm:$0xff]
  %v241 = vld [vmem:[%s0 + $0x6a8] sm:$0xff]
  %v242 = vld [vmem:[%s0 + $0x6b0] sm:$0xff]
  %v243 = vld [vmem:[%s0 + $0x6b8] sm:$0xff]
  %v244 = vld [vmem:[%s0 + $0x6c0] sm:$0xff]
  %v245 = vld [vmem:[%s0 + $0x6c8] sm:$0xff]
  %v246 = vld [vmem:[%s0 + $0x6d0] sm:$0xff]
  %v247 = vld [vmem:[%s0 + $0x6d8] sm:$0xff]
  %v248 = vld [vmem:[%s0 + $0x6e0] sm:$0xff]
  %v249 = vld [vmem:[%s0 + $0x6e8] sm:$0xff]
  %v250 = vld [vmem:[%s0 + $0x6f0] sm:$0xff]
  %v251 = vld [vmem:[%s0 + $0x6f8] sm:$0xff]
  %v252 = vld [vmem:[%s0 + $0x700] sm:$0xff]
  %v253 = vld [vmem:[%s0 + $0x708] sm:$0xff]
  %v254 = vld [vmem:[%s0 + $0x710] sm:$0xff]
  %v255 = vld [vmem:[%s0 + $0x718] sm:$0xff]
  %v256 = vld [vmem:[%s0 + $0x720] sm:$0xff]
  %v257 = vld [vmem:[%s0 + $0x728] sm:$0xff]
  %v258 = vld [vmem:[%s0 + $0x730] sm:$0xff]
  %v259 = vld [vmem:[%s0 + $0x738] sm:$0xff]
  %v260 = vld [vmem:[%s0 + $0x740] sm:$0xff]
  %v261 = vld [vmem:[%s0 + $0x748] sm:$0xff]
  %v262 = vld [vmem:[%s0 + $0x750] sm:$0xff]
  %v263 = vld [vmem:[%s0 + $0x758] sm:$0xff]
  %v264 = vld [vmem:[%s0 + $0x760] sm:$0xff]
  %v265 = vld [vmem:[%s0 + $0x768] sm:$0xff]
  %v266 = vld [vmem:[%s0 + $0x770] sm:$0xff]
  %v267 = vld [vmem:[%s0 + $0x778] sm:$0xff]
  %v268 = vld [vmem:[%s0 + $0x780] sm:$0xff]
  %v269 = vld [vmem:[%s0 + $0x788] sm:$0xff]
  %v270 = vld [vmem:[%s0 + $0x790] sm:$0xff]
  %v271 = vld [vmem:[%s0 + $0x798] sm:$0xff]
  %v272 = vld [vmem:[%s0 + $0x7a0] sm:$0xff]
  %v273 = vld [vmem:[%s0 + $0x7a8] sm:$0xff]
  %v274 = vld [vmem:[%s0 + $0x7b0] sm:$0xff]
  %v275 = vld [vmem:[%s0 + $0x7b8] sm:$0xff]
  %v276 = vld [vmem:[%s0 + $0x7c0] sm:$0xff]
  %v277 = vld [vmem:[%s0 + $0x7c8] sm:$0xff]
  %v278 = vld [vmem:[%s0 + $0x7d0] sm:$0xff]
  %v279 = vld [vmem:[%s0 + $0x7d8] sm:$0xff]
  %v280 = vld [vmem:[%s0 + $0x7e0] sm:$0xff]
  %v281 = vld [vmem:[%s0 + $0x7e8] sm:$0xff]
  %v282 = vld [vmem:[%s0 + $0x7f0] sm:$0xff]
  %v283 = vld [vmem:[%s0 + $0x7f8] sm:$0xff]
  %v284 = vld [vmem:[%s0 + $0x800] sm:$0xff]
  %v285 = vld [vmem:[%s0 + $0x808] sm:$0xff]
  %v286 = vld [vmem:[%s0 + $0x810] sm:$0xff]
  %v287 = vld [vmem:[%s0 + $0x818] sm:$0xff]
  %v288 = vld [vmem:[%s0 + $0x820] sm:$0xff]
  %v289 = vld [vmem:[%s0 + $0x828] sm:$0xff]
  %v290 = vld [vmem:[%s0 + $0x830] sm:$0xff]
  %v291 = vld [vmem:[%s0 + $0x838] sm:$0xff]
  %v292 = vld [vmem:[%s0 + $0x840] sm:$0xff]
  %v293 = vld [vmem:[%s0 + $0x848] sm:$0xff]
  %v294 = vld [vmem:[%s0 + $0x850] sm:$0xff]
  %v295 = vld [vmem:[%s0 + $0x858] sm:$0xff]
  %v296 = vld [vmem:[%s0 + $0x860] sm:$0xff]
  %v297 = vld [vmem:[%s0 + $0x868] sm:$0xff]
  %v298 = vld [vmem:[%s0 + $0x870] sm:$0xff]
  %v299 = vld [vmem:[%s0 + $0x878] sm:$0xff]
  %v300 = vld [vmem:[%s0 + $0x880] sm:$0xff]
  %v301 = vld [vmem:[%s0 + $0x888] sm:$0xff]
  %v302 = vld [vmem:[%s0 + $0x890] sm:$0xff]
  %v303 = vld [vmem:[%s0 + $0x898] sm:$0xff]
  %v304 = vld [vmem:[%s0 + $0x8a0] sm:$0xff]
  %v305 = vld [vmem:[%s0 + $0x8a8] sm:$0xff]
  %v306 = vld [vmem:[%s0 + $0x8b0] sm:$0xff]
  %v307 = vld [vmem:[%s0 + $0x8b8] sm:$0xff]
  %v308 = vld [vmem:[%s0 + $0x8c0] sm:$0xff]
  %v309 = vld [vmem:[%s0 + $0x8c8] sm:$0xff]
  %v310 = vld [vmem:[%s0 + $0x8d0] sm:$0xff]
  %v311 = vld [vmem:[%s0 + $0x8d8] sm:$0xff]
  %v312 = vld [vmem:[%s0 + $0x8e0] sm:$0xff]
  %v313 = vld [vmem:[%s0 + $0x8e8] sm:$0xff]
  %v314 = vld [vmem:[%s0 + $0x8f0] sm:$0xff]
  %v315 = vld [vmem:[%s0 + $0x8f8] sm:$0xff]
  %v316 = vld [vmem:[%s0 + $0x900] sm:$0xff]
  %v317 = vld [vmem:[%s0 + $0x908] sm:$0xff]
  %v318 = vld [vmem:[%s0 + $0x910] sm:$0xff]
  %v319 = vld [vmem:[%s0 + $0x918] sm:$0xff]
  %v320 = vld [vmem:[%s0 + $0x920] sm:$0xff]
  %v321 = vld [vmem:[%s0 + $0x928] sm:$0xff]
  %v322 = vld [vmem:[%s0 + $0x930] sm:$0xff]
  %v323 = vld [vmem:[%s0 + $0x938] sm:$0xff]
  %v324 = vld [vmem:[%s0 + $0x940] sm:$0xff]
  %v325 = vld [vmem:[%s0 + $0x948] sm:$0xff]
  %v326 = vld [vmem:[%s0 + $0x950] sm:$0xff]
  %v327 = vld [vmem:[%s0 + $0x958] sm:$0xff]
  %v328 = vld [vmem:[%s0 + $0x960] sm:$0xff]
  %v329 = vld [vmem:[%s0 + $0x968] sm:$0xff]
  %v330 = vld [vmem:[%s0 + $0x970] sm:$0xff]
  %v331 = vld [vmem:[%s0 + $0x978] sm:$0xff]
  %v332 = vld [vmem:[%s0 + $0x980] sm:$0xff]
  %v333 = vld [vmem:[%s0 + $0x988] sm:$0xff]
  %v334 = vld [vmem:[%s0 + $0x990] sm:$0xff]
  %v335 = vld [vmem:[%s0 + $0x998] sm:$0xff]
  %v336 = vld [vmem:[%s0 + $0x9a0] sm:$0xff]
  %v337 = vld [vmem:[%s0 + $0x9a8] sm:$0xff]
  %v338 = vld [vmem:[%s0 + $0x9b0] sm:$0xff]
  %v339 = vld [vmem:[%s0 + $0x9b8] sm:$0xff]
  %v340 = vld [vmem:[%s0 + $0x9c0] sm:$0xff]
  %v341 = vld [vmem:[%s0 + $0x9c8] sm:$0xff]
  %v342 = vld [vmem:[%s0 + $0x9d0] sm:$0xff]
  %v343 = vld [vmem:[%s0 + $0x9d8] sm:$0xff]
  %v344 = vld [vmem:[%s0 + $0x9e0] sm:$0xff]
  %v345 = vld [vmem:[%s0 + $0x9e8] sm:$0xff]
  %v346 = vld [vmem:[%s0 + $0x9f0] sm:$0xff]
  %v347 = vld [vmem:[%s0 + $0x9f8] sm:$0xff]
  %v348 = vld [vmem:[%s0 + $0xa00] sm:$0xff]
  %v349 = vld [vmem:[%s0 + $0xa08] sm:$0xff]
  %v350 = vld [vmem:[%s0 + $0xa10] sm:$0xff]
  %v351 = vld [vmem:[%s0 + $0xa18] sm:$0xff]
  %v352 = vld [vmem:[%s0 + $0xa20] sm:$0xff]
  %v353 = vld [vmem:[%s0 + $0xa28] sm:$0xff]
  %v354 = vld [vmem:[%s0 + $0xa30] sm:$0xff]
  %v355 = vld [vmem:[%s0 + $0xa38] sm:$0xff]
  %v356 = vld [vmem:[%s0 + $0xa40] sm:$0xff]
  %v357 = vld [vmem:[%s0 + $0xa48] sm:$0xff]
  %v358 = vld [vmem:[%s0 + $0xa50] sm:$0xff]
  %v359 = vld [vmem:[%s0 + $0xa58] sm:$0xff]
  %v360 = vld [vmem:[%s0 + $0xa60] sm:$0xff]
  %v361 = vld [vmem:[%s0 + $0xa68] sm:$0xff]
  %v362 = vld [vmem:[%s0 + $0xa70] sm:$0xff]
  %v363 = vld [vmem:[%s0 + $0xa78] sm:$0xff]
  %v364 = vld [vmem:[%s0 + $0xa80] sm:$0xff]
  %v365 = vld [vmem:[%s0 + $0xa88] sm:$0xff]
  %v366 = vld [vmem:[%s0 + $0xa90] sm:$0xff]
  %v367 = vld [vmem:[%s0 + $0xa98] sm:$0xff]
  %v368 = vld [vmem:[%s0 + $0xaa0] sm:$0xff]
  %v369 = vld [vmem:[%s0 + $0xaa8] sm:$0xff]
  %v370 = vld [vmem:[%s0 + $0xab0] sm:$0xff]
  %v371 = vld [vmem:[%s0 + $0xab8] sm:$0xff]
  %v372 = vld [vmem:[%s0 + $0xac0] sm:$0xff]
  %v373 = vld [vmem:[%s0 + $0xac8] sm:$0xff]
  %v374 = vld [vmem:[%s0 + $0xad0] sm:$0xff]
  %v375 = vld [vmem:[%s0 + $0xad8] sm:$0xff]
  %v376 = vld [vmem:[%s0 + $0xae0] sm:$0xff]
  %v377 = vld [vmem:[%s0 + $0xae8] sm:$0xff]
  %v378 = vld [vmem:[%s0 + $0xaf0] sm:$0xff]
  %v379 = vld [vmem:[%s0 + $0xaf8] sm:$0xff]
  %v380 = vld [vmem:[%s0 + $0xb00] sm:$0xff]
  %v381 = vld [vmem:[%s0 + $0xb08] sm:$0xff]
  %v382 = vld [vmem:[%s0 + $0xb10] sm:$0xff]
  %v383 = vld [vmem:[%s0 + $0xb18] sm:$0xff]
  %v384 = vld [vmem:[%s0 + $0xb20] sm:$0xff]
  %v385 = vld [vmem:[%s0 + $0xb28] sm:$0xff]
  %v386 = vld [vmem:[%s0 + $0xb30] sm:$0xff]
  %v387 = vld [vmem:[%s0 + $0xb38] sm:$0xff]
  %v388 = vld [vmem:[%s0 + $0xb40] sm:$0xff]
  %v389 = vld [vmem:[%s0 + $0xb48] sm:$0xff]
  %v390 = vld [vmem:[%s0 + $0xb50] sm:$0xff]
  %v391 = vld [vmem:[%s0 + $0xb58] sm:$0xff]
  %v392 = vld [vmem:[%s0 + $0xb60] sm:$0xff]
  %v393 = vld [vmem:[%s0 + $0xb68] sm:$0xff]
  %v394 = vld [vmem:[%s0 + $0xb70] sm:$0xff]
  %v395 = vld [vmem:[%s0 + $0xb78] sm:$0xff]
  %v396 = vld [vmem:[%s0 + $0xb80] sm:$0xff]
  %v397 = vld [vmem:[%s0 + $0xb88] sm:$0xff]
  %v398 = vld [vmem:[%s0 + $0xb90] sm:$0xff]
  %v399 = vld [vmem:[%s0 + $0xb98] sm:$0xff]
  %v400 = vld [vmem:[%s0 + $0xba0] sm:$0xff]
  %v401 = vld [vmem:[%s0 + $0xba8] sm:$0xff]
  %v402 = vld [vmem:[%s0 + $0xbb0] sm:$0xff]
  %v403 = vld [vmem:[%s0 + $0xbb8] sm:$0xff]
  %v404 = vld [vmem:[%s0 + $0xbc0] sm:$0xff]
  %v405 = vld [vmem:[%s0 + $0xbc8] sm:$0xff]
  %v406 = vld [vmem:[%s0 + $0xbd0] sm:$0xff]
  %v407 = vld [vmem:[%s0 + $0xbd8] sm:$0xff]
  %v408 = vld [vmem:[%s0 + $0xbe0] sm:$0xff]
  %v409 = vld [vmem:[%s0 + $0xbe8] sm:$0xff]
  %v410 = vld [vmem:[%s0 + $0xbf0] sm:$0xff]
  %v411 = vld [vmem:[%s0 + $0xbf8] sm:$0xff]
  %v412 = vld [vmem:[%s0 + $0xc00] sm:$0xff]
  %v413 = vld [vmem:[%s0 + $0xc08] sm:$0xff]
  %v414 = vld [vmem:[%s0 + $0xc10] sm:$0xff]
  %v415 = vld [vmem:[%s0 + $0xc18] sm:$0xff]
  %v416 = vld [vmem:[%s0 + $0xc20] sm:$0xff]
  %v417 = vld [vmem:[%s0 + $0xc28] sm:$0xff]
  %v418 = vld [vmem:[%s0 + $0xc30] sm:$0xff]
  %v419 = vld [vmem:[%s0 + $0xc38] sm:$0xff]
  %v420 = vld [vmem:[%s0 + $0xc40] sm:$0xff]
  %v421 = vld [vmem:[%s0 + $0xc48] sm:$0xff]
  %v422 = vld [vmem:[%s0 + $0xc50] sm:$0xff]
  %v423 = vld [vmem:[%s0 + $0xc58] sm:$0xff]
  %v424 = vld [vmem:[%s0 + $0xc60] sm:$0xff]
  %v425 = vld [vmem:[%s0 + $0xc68] sm:$0xff]
  %v426 = vld [vmem:[%s0 + $0xc70] sm:$0xff]
  %v427 = vld [vmem:[%s0 + $0xc78] sm:$0xff]
  %vm428 = vcmask 261120
  %v430 = vsel %vm428, %v20, 0
  %v433 = vsel %vm428, %v27, 0
  %435 = vmatprep.subr.mxu0 %v29
  %436 = vmatpush1.msra.mxu0 %v28
  %437 = vmatprep.subr.mxu0 %v33
  %438 = vmatpush1.msra.mxu0 %v32
  %439 = vmatprep.subr.mxu0 %v37
  %440 = vmatpush1.msra.mxu0 %v36
  %441 = vmatprep.subr.mxu0 %v41
  %442 = vmatpush1.msra.mxu0 %v40
  %443 = vmatprep.subr.mxu0 %v45
  %444 = vmatpush1.msra.mxu0 %v44
  %445 = vmatprep.subr.mxu0 %v49
  %446 = vmatpush1.msra.mxu0 %v48
  %447 = vmatprep.subr.mxu0 %v53
  %448 = vmatpush1.msra.mxu0 %v52
  %449 = vmatprep.subr.mxu0 %v57
  %450 = vmatpush1.msra.mxu0 %v56
  %451 = vmatprep.subr.mxu0 %v61
  %452 = vmatpush1.msra.mxu0 %v60
  %453 = vmatprep.subr.mxu0 %v65
  %454 = vmatpush1.msra.mxu0 %v64
  %455 = vmatprep.subr.mxu0 %v69
  %456 = vmatpush1.msra.mxu0 %v68
  %457 = vmatprep.subr.mxu0 %v73
  %458 = vmatpush1.msra.mxu0 %v72
  %459 = vmatprep.subr.mxu0 %v77
  %460 = vmatpush1.msra.mxu0 %v76
  %461 = vmatprep.subr.mxu0 %v81
  %462 = vmatpush1.msra.mxu0 %v80
  %463 = vmatprep.subr.mxu0 %v85
  %464 = vmatpush1.msra.mxu0 %v84
  %465 = vmatprep.subr.mxu0 %v89
  %466 = vmatpush1.msra.mxu0 %v88
  %467 = vmatprep.subr.mxu0 %v93
  %468 = vmatpush1.msra.mxu0 %v92
  %469 = vmatprep.subr.mxu0 %v97
  %470 = vmatpush1.msra.mxu0 %v96
  %471 = vmatprep.subr.mxu0 %v101
  %472 = vmatpush1.msra.mxu0 %v100
  %473 = vmatprep.subr.mxu0 %v105
  %474 = vmatpush1.msra.mxu0 %v104
  %475 = vmatprep.subr.mxu0 %v109
  %476 = vmatpush1.msra.mxu0 %v108
  %477 = vmatprep.subr.mxu0 %v113
  %478 = vmatpush1.msra.mxu0 %v112
  %479 = vmatprep.subr.mxu0 %v117
  %480 = vmatpush1.msra.mxu0 %v116
  %481 = vmatprep.subr.mxu0 %v121
  %482 = vmatpush1.msra.mxu0 %v120
  %483 = vmatprep.subr.mxu0 %v125
  %484 = vmatpush1.msra.mxu0 %v124
  %485 = vmatprep.subr.mxu0 %v129
  %486 = vmatpush1.msra.mxu0 %v128
  %487 = vmatprep.subr.mxu0 %v133
  %488 = vmatpush1.msra.mxu0 %v132
  %489 = vmatprep.subr.mxu0 %v137
  %490 = vmatpush1.msra.mxu0 %v136
  %491 = vmatprep.subr.mxu0 %v141
  %492 = vmatpush1.msra.mxu0 %v140
  %493 = vmatprep.subr.mxu0 %v145
  %494 = vmatpush1.msra.mxu0 %v144
  %495 = vmatprep.subr.mxu0 %v149
  %496 = vmatpush1.msra.mxu0 %v148
  %497 = vmatprep.subr.mxu0 %v153
  %498 = vmatpush1.msra.mxu0 %v152
  %499 = vmatprep.mubr.f32.mxu0 %v15
  %500 = vmatmul.mubr.f32.gmra.mrb[0].mxu0 %v14
  %v501 = vpop.f32.mrb[0].mxu0
  %v502 = vadd.f32 0.0, %v501
  %v503 = vpop.f32.mrb[0].mxu0
  %v504 = vadd.f32 0.0, %v503
  %505 = vmatprep.mubr.f32.mxu0 %v22
  %506 = vmatmul.mubr.f32.gmra.mrb[0].mxu0 %v21
  %v507 = vpop.f32.mrb[0].mxu0
  %v508 = vadd.f32 0.0, %v507
  %v509 = vpop.f32.mrb[0].mxu0
  %v510 = vadd.f32 0.0, %v509
  %511 = vdwg.mxu0
  %512 = vmatprep.subr.mxu0 %v157
  %513 = vmatpush1.msra.mxu0 %v156
  %514 = vmatprep.subr.mxu0 %v161
  %515 = vmatpush1.msra.mxu0 %v160
  %516 = vmatprep.subr.mxu0 %v165
  %517 = vmatpush1.msra.mxu0 %v164
  %518 = vmatprep.subr.mxu0 %v169
  %519 = vmatpush1.msra.mxu0 %v168
  %520 = vmatprep.subr.mxu0 %v173
  %521 = vmatpush1.msra.mxu0 %v172
  %522 = vmatprep.subr.mxu0 %v177
  %523 = vmatpush1.msra.mxu0 %v176
  %524 = vmatprep.subr.mxu0 %v181
  %525 = vmatpush1.msra.mxu0 %v180
  %526 = vmatprep.subr.mxu0 %v185
  %527 = vmatpush1.msra.mxu0 %v184
  %528 = vmatprep.subr.mxu0 %v189
  %529 = vmatpush1.msra.mxu0 %v188
  %530 = vmatprep.subr.mxu0 %v193
  %531 = vmatpush1.msra.mxu0 %v192
  %532 = vmatprep.subr.mxu0 %v197
  %533 = vmatpush1.msra.mxu0 %v196
  %534 = vmatprep.subr.mxu0 %v201
  %535 = vmatpush1.msra.mxu0 %v200
  %536 = vmatprep.subr.mxu0 %v205
  %537 = vmatpush1.msra.mxu0 %v204
  %538 = vmatprep.subr.mxu0 %v209
  %539 = vmatpush1.msra.mxu0 %v208
  %540 = vmatprep.subr.mxu0 %v213
  %541 = vmatpush1.msra.mxu0 %v212
  %542 = vmatprep.subr.mxu0 %v217
  %543 = vmatpush1.msra.mxu0 %v216
  %544 = vmatprep.subr.mxu0 %v221
  %545 = vmatpush1.msra.mxu0 %v220
  %546 = vmatprep.subr.mxu0 %v225
  %547 = vmatpush1.msra.mxu0 %v224
  %548 = vmatprep.subr.mxu0 %v229
  %549 = vmatpush1.msra.mxu0 %v228
  %550 = vmatprep.subr.mxu0 %v233
  %551 = vmatpush1.msra.mxu0 %v232
  %552 = vmatprep.subr.mxu0 %v237
  %553 = vmatpush1.msra.mxu0 %v236
  %554 = vmatprep.subr.mxu0 %v241
  %555 = vmatpush1.msra.mxu0 %v240
  %556 = vmatprep.subr.mxu0 %v245
  %557 = vmatpush1.msra.mxu0 %v244
  %558 = vmatprep.subr.mxu0 %v249
  %559 = vmatpush1.msra.mxu0 %v248
  %560 = vmatprep.subr.mxu0 %v253
  %561 = vmatpush1.msra.mxu0 %v252
  %562 = vmatprep.subr.mxu0 %v257
  %563 = vmatpush1.msra.mxu0 %v256
  %564 = vmatprep.subr.mxu0 %v261
  %565 = vmatpush1.msra.mxu0 %v260
  %566 = vmatprep.subr.mxu0 %v265
  %567 = vmatpush1.msra.mxu0 %v264
  %568 = vmatprep.subr.mxu0 %v269
  %569 = vmatpush1.msra.mxu0 %v268
  %570 = vmatprep.subr.mxu0 %v273
  %571 = vmatpush1.msra.mxu0 %v272
  %572 = vmatprep.subr.mxu0 %v277
  %573 = vmatpush1.msra.mxu0 %v276
  %574 = vmatprep.subr.mxu0 %v281
  %575 = vmatpush1.msra.mxu0 %v280
  %576 = vmatprep.mubr.f32.mxu0 %v17
  %577 = vmatmul.mubr.f32.gmra.mrb[0].mxu0 %v16
  %v578 = vpop.f32.mrb[0].mxu0
  %v579 = vadd.f32 %v502, %v578
  %v580 = vpop.f32.mrb[0].mxu0
  %v581 = vadd.f32 %v504, %v580
  %582 = vmatprep.mubr.f32.mxu0 %v24
  %583 = vmatmul.mubr.f32.gmra.mrb[0].mxu0 %v23
  %v584 = vpop.f32.mrb[0].mxu0
  %v585 = vadd.f32 %v508, %v584
  %v586 = vpop.f32.mrb[0].mxu0
  %v587 = vadd.f32 %v510, %v586
  %588 = vdwg.mxu0
  %589 = vmatprep.subr.mxu0 %v285
  %590 = vmatpush1.msra.mxu0 %v284
  %591 = vmatprep.subr.mxu0 %v289
  %592 = vmatpush1.msra.mxu0 %v288
  %593 = vmatprep.subr.mxu0 %v293
  %594 = vmatpush1.msra.mxu0 %v292
  %595 = vmatprep.subr.mxu0 %v297
  %596 = vmatpush1.msra.mxu0 %v296
  %597 = vmatprep.subr.mxu0 %v301
  %598 = vmatpush1.msra.mxu0 %v300
  %599 = vmatprep.subr.mxu0 %v305
  %600 = vmatpush1.msra.mxu0 %v304
  %601 = vmatprep.subr.mxu0 %v309
  %602 = vmatpush1.msra.mxu0 %v308
  %603 = vmatprep.subr.mxu0 %v313
  %604 = vmatpush1.msra.mxu0 %v312
  %605 = vmatprep.subr.mxu0 %v317
  %606 = vmatpush1.msra.mxu0 %v316
  %607 = vmatprep.subr.mxu0 %v321
  %608 = vmatpush1.msra.mxu0 %v320
  %609 = vmatprep.subr.mxu0 %v325
  %610 = vmatpush1.msra.mxu0 %v324
  %611 = vmatprep.subr.mxu0 %v329
  %612 = vmatpush1.msra.mxu0 %v328
  %613 = vmatprep.subr.mxu0 %v333
  %614 = vmatpush1.msra.mxu0 %v332
  %615 = vmatprep.subr.mxu0 %v337
  %616 = vmatpush1.msra.mxu0 %v336
  %617 = vmatprep.subr.mxu0 %v341
  %618 = vmatpush1.msra.mxu0 %v340
  %619 = vmatprep.subr.mxu0 %v345
  %620 = vmatpush1.msra.mxu0 %v344
  %621 = vmatprep.subr.mxu0 %v349
  %622 = vmatpush1.msra.mxu0 %v348
  %623 = vmatprep.subr.mxu0 %v353
  %624 = vmatpush1.msra.mxu0 %v352
  %625 = vmatprep.subr.mxu0 %v357
  %626 = vmatpush1.msra.mxu0 %v356
  %627 = vmatprep.subr.mxu0 %v361
  %628 = vmatpush1.msra.mxu0 %v360
  %629 = vmatprep.subr.mxu0 %v365
  %630 = vmatpush1.msra.mxu0 %v364
  %631 = vmatprep.subr.mxu0 %v369
  %632 = vmatpush1.msra.mxu0 %v368
  %633 = vmatprep.subr.mxu0 %v373
  %634 = vmatpush1.msra.mxu0 %v372
  %635 = vmatprep.subr.mxu0 %v377
  %636 = vmatpush1.msra.mxu0 %v376
  %637 = vmatprep.subr.mxu0 %v381
  %638 = vmatpush1.msra.mxu0 %v380
  %639 = vmatprep.subr.mxu0 %v385
  %640 = vmatpush1.msra.mxu0 %v384
  %641 = vmatprep.subr.mxu0 %v389
  %642 = vmatpush1.msra.mxu0 %v388
  %643 = vmatprep.subr.mxu0 %v393
  %644 = vmatpush1.msra.mxu0 %v392
  %645 = vmatprep.subr.mxu0 %v397
  %646 = vmatpush1.msra.mxu0 %v396
  %647 = vmatprep.subr.mxu0 %v401
  %648 = vmatpush1.msra.mxu0 %v400
  %649 = vmatprep.subr.mxu0 %v405
  %650 = vmatpush1.msra.mxu0 %v404
  %651 = vmatprep.subr.mxu0 %v409
  %652 = vmatpush1.msra.mxu0 %v408
  %653 = vmatprep.mubr.f32.mxu0 %v19
  %654 = vmatmul.mubr.f32.gmra.mrb[0].mxu0 %v18
  %v655 = vpop.f32.mrb[0].mxu0
  %v656 = vadd.f32 %v579, %v655
  %v657 = vpop.f32.mrb[0].mxu0
  %v658 = vadd.f32 %v581, %v657
  %659 = vmatprep.mubr.f32.mxu0 %v26
  %660 = vmatmul.mubr.f32.gmra.mrb[0].mxu0 %v25
  %v661 = vpop.f32.mrb[0].mxu0
  %v662 = vadd.f32 %v585, %v661
  %v663 = vpop.f32.mrb[0].mxu0
  %v664 = vadd.f32 %v587, %v663
  %665 = vdwg.mxu0
  %666 = vmatprep.subr.mxu0 %v413
  %667 = vmatpush1.msra.mxu0 %v412
  %668 = vmatprep.subr.mxu0 %v417
  %669 = vmatpush1.msra.mxu0 %v416
  %670 = vmatprep.subr.mxu0 %v421
  %671 = vmatpush1.msra.mxu0 %v420
  %672 = vmatprep.subr.mxu0 %v425
  %673 = vmatpush1.msra.mxu0 %v424
  %674 = vmatprep.subr.mxu0 0.0
  %675 = vmatpush1.msra.mxu0 0.0
  %676 = vmatprep.subr.mxu0 0.0
  %677 = vmatpush1.msra.mxu0 0.0
  %678 = vmatprep.subr.mxu0 0.0
  %679 = vmatpush1.msra.mxu0 0.0
  %680 = vmatprep.subr.mxu0 0.0
  %681 = vmatpush1.msra.mxu0 0.0
  %682 = vmatprep.subr.mxu0 0.0
  %683 = vmatpush1.msra.mxu0 0.0
  %684 = vmatprep.subr.mxu0 0.0
  %685 = vmatpush1.msra.mxu0 0.0
  %686 = vmatprep.subr.mxu0 0.0
  %687 = vmatpush1.msra.mxu0 0.0
  %688 = vmatprep.subr.mxu0 0.0
  %689 = vmatpush1.msra.mxu0 0.0
  %690 = vmatprep.subr.mxu0 0.0
  %691 = vmatpush1.msra.mxu0 0.0
  %692 = vmatprep.subr.mxu0 0.0
  %693 = vmatpush1.msra.mxu0 0.0
  %694 = vmatprep.subr.mxu0 0.0
  %695 = vmatpush1.msra.mxu0 0.0
  %696 = vmatprep.subr.mxu0 0.0
  %697 = vmatpush1.msra.mxu0 0.0
  %698 = vmatprep.subr.mxu0 0.0
  %699 = vmatpush1.msra.mxu0 0.0
  %700 = vmatprep.subr.mxu0 0.0
  %701 = vmatpush1.msra.mxu0 0.0
  %702 = vmatprep.subr.mxu0 0.0
  %703 = vmatpush1.msra.mxu0 0.0
  %704 = vmatprep.subr.mxu0 0.0
  %705 = vmatpush1.msra.mxu0 0.0
  %706 = vmatprep.subr.mxu0 0.0
  %707 = vmatpush1.msra.mxu0 0.0
  %708 = vmatprep.subr.mxu0 0.0
  %709 = vmatpush1.msra.mxu0 0.0
  %710 = vmatprep.subr.mxu0 0.0
  %711 = vmatpush1.msra.mxu0 0.0
  %712 = vmatprep.subr.mxu0 0.0
  %713 = vmatpush1.msra.mxu0 0.0
  %714 = vmatprep.subr.mxu0 0.0
  %715 = vmatpush1.msra.mxu0 0.0
  %716 = vmatprep.subr.mxu0 0.0
  %717 = vmatpush1.msra.mxu0 0.0
  %718 = vmatprep.subr.mxu0 0.0
  %719 = vmatpush1.msra.mxu0 0.0
  %720 = vmatprep.subr.mxu0 0.0
  %721 = vmatpush1.msra.mxu0 0.0
  %722 = vmatprep.subr.mxu0 0.0
  %723 = vmatpush1.msra.mxu0 0.0
  %724 = vmatprep.subr.mxu0 0.0
  %725 = vmatpush1.msra.mxu0 0.0
  %726 = vmatprep.subr.mxu0 0.0
  %727 = vmatpush1.msra.mxu0 0.0
  %728 = vmatprep.subr.mxu0 0.0
  %729 = vmatpush1.msra.mxu0 0.0
  %730 = vmatprep.mubr.f32.mxu0 0.0
  %731 = vmatmul.mubr.f32.gmra.mrb[0].mxu0 %v430
  %v732 = vpop.f32.mrb[0].mxu0
  %v733 = vadd.f32 %v656, %v732
  %v734 = vpop.f32.mrb[0].mxu0
  %v735 = vadd.f32 %v658, %v734
  %736 = vmatprep.mubr.f32.mxu0 0.0
  %737 = vmatmul.mubr.f32.gmra.mrb[0].mxu0 %v433
  %v738 = vpop.f32.mrb[0].mxu0
  %v739 = vadd.f32 %v662, %v738
  %v740 = vpop.f32.mrb[0].mxu0
  %v741 = vadd.f32 %v664, %v740
  %742 = vdwg.mxu0
  %743 = vmatprep.subr.mxu0 %v31
  %744 = vmatpush1.msra.mxu0 %v30
  %745 = vmatprep.subr.mxu0 %v35
  %746 = vmatpush1.msra.mxu0 %v34
  %747 = vmatprep.subr.mxu0 %v39
  %748 = vmatpush1.msra.mxu0 %v38
  %749 = vmatprep.subr.mxu0 %v43
  %750 = vmatpush1.msra.mxu0 %v42
  %751 = vmatprep.subr.mxu0 %v47
  %752 = vmatpush1.msra.mxu0 %v46
  %753 = vmatprep.subr.mxu0 %v51
  %754 = vmatpush1.msra.mxu0 %v50
  %755 = vmatprep.subr.mxu0 %v55
  %756 = vmatpush1.msra.mxu0 %v54
  %757 = vmatprep.subr.mxu0 %v59
  %758 = vmatpush1.msra.mxu0 %v58
  %759 = vmatprep.subr.mxu0 %v63
  %760 = vmatpush1.msra.mxu0 %v62
  %761 = vmatprep.subr.mxu0 %v67
  %762 = vmatpush1.msra.mxu0 %v66
  %763 = vmatprep.subr.mxu0 %v71
  %764 = vmatpush1.msra.mxu0 %v70
  %765 = vmatprep.subr.mxu0 %v75
  %766 = vmatpush1.msra.mxu0 %v74
  %767 = vmatprep.subr.mxu0 %v79
  %768 = vmatpush1.msra.mxu0 %v78
  %769 = vmatprep.subr.mxu0 %v83
  %770 = vmatpush1.msra.mxu0 %v82
  %771 = vmatprep.subr.mxu0 %v87
  %772 = vmatpush1.msra.mxu0 %v86
  %773 = vmatprep.subr.mxu0 %v91
  %774 = vmatpush1.msra.mxu0 %v90
  %775 = vmatprep.subr.mxu0 %v95
  %776 = vmatpush1.msra.mxu0 %v94
  %777 = vmatprep.subr.mxu0 %v99
  %778 = vmatpush1.msra.mxu0 %v98
  %779 = vmatprep.subr.mxu0 %v103
  %780 = vmatpush1.msra.mxu0 %v102
  %781 = vmatprep.subr.mxu0 %v107
  %782 = vmatpush1.msra.mxu0 %v106
  %783 = vmatprep.subr.mxu0 %v111
  %784 = vmatpush1.msra.mxu0 %v110
  %785 = vmatprep.subr.mxu0 %v115
  %786 = vmatpush1.msra.mxu0 %v114
  %787 = vmatprep.subr.mxu0 %v119
  %788 = vmatpush1.msra.mxu0 %v118
  %789 = vmatprep.subr.mxu0 %v123
  %790 = vmatpush1.msra.mxu0 %v122
  %791 = vmatprep.subr.mxu0 %v127
  %792 = vmatpush1.msra.mxu0 %v126
  %793 = vmatprep.subr.mxu0 %v131
  %794 = vmatpush1.msra.mxu0 %v130
  %795 = vmatprep.subr.mxu0 %v135
  %796 = vmatpush1.msra.mxu0 %v134
  %797 = vmatprep.subr.mxu0 %v139
  %798 = vmatpush1.msra.mxu0 %v138
  %799 = vmatprep.subr.mxu0 %v143
  %800 = vmatpush1.msra.mxu0 %v142
  %801 = vmatprep.subr.mxu0 %v147
  %802 = vmatpush1.msra.mxu0 %v146
  %803 = vmatprep.subr.mxu0 %v151
  %804 = vmatpush1.msra.mxu0 %v150
  %805 = vmatprep.subr.mxu0 %v155
  %806 = vmatpush1.msra.mxu0 %v154
  %807 = vmatprep.mubr.f32.mxu0 %v15
  %808 = vmatmul.mubr.f32.gmra.mrb[0].mxu0 %v14
  %v809 = vpop.f32.mrb[0].mxu0
  %v810 = vadd.f32 0.0, %v809
  %v811 = vpop.f32.mrb[0].mxu0
  %v812 = vadd.f32 0.0, %v811
  %813 = vmatprep.mubr.f32.mxu0 %v22
  %814 = vmatmul.mubr.f32.gmra.mrb[0].mxu0 %v21
  %v815 = vpop.f32.mrb[0].mxu0
  %v816 = vadd.f32 0.0, %v815
  %v817 = vpop.f32.mrb[0].mxu0
  %v818 = vadd.f32 0.0, %v817
  %819 = vdwg.mxu0
  %820 = vmatprep.subr.mxu0 %v159
  %821 = vmatpush1.msra.mxu0 %v158
  %822 = vmatprep.subr.mxu0 %v163
  %823 = vmatpush1.msra.mxu0 %v162
  %824 = vmatprep.subr.mxu0 %v167
  %825 = vmatpush1.msra.mxu0 %v166
  %826 = vmatprep.subr.mxu0 %v171
  %827 = vmatpush1.msra.mxu0 %v170
  %828 = vmatprep.subr.mxu0 %v175
  %829 = vmatpush1.msra.mxu0 %v174
  %830 = vmatprep.subr.mxu0 %v179
  %831 = vmatpush1.msra.mxu0 %v178
  %832 = vmatprep.subr.mxu0 %v183
  %833 = vmatpush1.msra.mxu0 %v182
  %834 = vmatprep.subr.mxu0 %v187
  %835 = vmatpush1.msra.mxu0 %v186
  %836 = vmatprep.subr.mxu0 %v191
  %837 = vmatpush1.msra.mxu0 %v190
  %838 = vmatprep.subr.mxu0 %v195
  %839 = vmatpush1.msra.mxu0 %v194
  %840 = vmatprep.subr.mxu0 %v199
  %841 = vmatpush1.msra.mxu0 %v198
  %842 = vmatprep.subr.mxu0 %v203
  %843 = vmatpush1.msra.mxu0 %v202
  %844 = vmatprep.subr.mxu0 %v207
  %845 = vmatpush1.msra.mxu0 %v206
  %846 = vmatprep.subr.mxu0 %v211
  %847 = vmatpush1.msra.mxu0 %v210
  %848 = vmatprep.subr.mxu0 %v215
  %849 = vmatpush1.msra.mxu0 %v214
  %850 = vmatprep.subr.mxu0 %v219
  %851 = vmatpush1.msra.mxu0 %v218
  %852 = vmatprep.subr.mxu0 %v223
  %853 = vmatpush1.msra.mxu0 %v222
  %854 = vmatprep.subr.mxu0 %v227
  %855 = vmatpush1.msra.mxu0 %v226
  %856 = vmatprep.subr.mxu0 %v231
  %857 = vmatpush1.msra.mxu0 %v230
  %858 = vmatprep.subr.mxu0 %v235
  %859 = vmatpush1.msra.mxu0 %v234
  %860 = vmatprep.subr.mxu0 %v239
  %861 = vmatpush1.msra.mxu0 %v238
  %862 = vmatprep.subr.mxu0 %v243
  %863 = vmatpush1.msra.mxu0 %v242
  %864 = vmatprep.subr.mxu0 %v247
  %865 = vmatpush1.msra.mxu0 %v246
  %866 = vmatprep.subr.mxu0 %v251
  %867 = vmatpush1.msra.mxu0 %v250
  %868 = vmatprep.subr.mxu0 %v255
  %869 = vmatpush1.msra.mxu0 %v254
  %870 = vmatprep.subr.mxu0 %v259
  %871 = vmatpush1.msra.mxu0 %v258
  %872 = vmatprep.subr.mxu0 %v263
  %873 = vmatpush1.msra.mxu0 %v262
  %874 = vmatprep.subr.mxu0 %v267
  %875 = vmatpush1.msra.mxu0 %v266
  %876 = vmatprep.subr.mxu0 %v271
  %877 = vmatpush1.msra.mxu0 %v270
  %878 = vmatprep.subr.mxu0 %v275
  %879 = vmatpush1.msra.mxu0 %v274
  %880 = vmatprep.subr.mxu0 %v279
  %881 = vmatpush1.msra.mxu0 %v278
  %882 = vmatprep.subr.mxu0 %v283
  %883 = vmatpush1.msra.mxu0 %v282
  %884 = vmatprep.mubr.f32.mxu0 %v17
  %885 = vmatmul.mubr.f32.gmra.mrb[0].mxu0 %v16
  %v886 = vpop.f32.mrb[0].mxu0
  %v887 = vadd.f32 %v810, %v886
  %v888 = vpop.f32.mrb[0].mxu0
  %v889 = vadd.f32 %v812, %v888
  %890 = vmatprep.mubr.f32.mxu0 %v24
  %891 = vmatmul.mubr.f32.gmra.mrb[0].mxu0 %v23
  %v892 = vpop.f32.mrb[0].mxu0
  %v893 = vadd.f32 %v816, %v892
  %v894 = vpop.f32.mrb[0].mxu0
  %v895 = vadd.f32 %v818, %v894
  %896 = vdwg.mxu0
  %897 = vmatprep.subr.mxu0 %v287
  %898 = vmatpush1.msra.mxu0 %v286
  %899 = vmatprep.subr.mxu0 %v291
  %900 = vmatpush1.msra.mxu0 %v290
  %901 = vmatprep.subr.mxu0 %v295
  %902 = vmatpush1.msra.mxu0 %v294
  %903 = vmatprep.subr.mxu0 %v299
  %904 = vmatpush1.msra.mxu0 %v298
  %905 = vmatprep.subr.mxu0 %v303
  %906 = vmatpush1.msra.mxu0 %v302
  %907 = vmatprep.subr.mxu0 %v307
  %908 = vmatpush1.msra.mxu0 %v306
  %909 = vmatprep.subr.mxu0 %v311
  %910 = vmatpush1.msra.mxu0 %v310
  %911 = vmatprep.subr.mxu0 %v315
  %912 = vmatpush1.msra.mxu0 %v314
  %913 = vmatprep.subr.mxu0 %v319
  %914 = vmatpush1.msra.mxu0 %v318
  %915 = vmatprep.subr.mxu0 %v323
  %916 = vmatpush1.msra.mxu0 %v322
  %917 = vmatprep.subr.mxu0 %v327
  %918 = vmatpush1.msra.mxu0 %v326
  %919 = vmatprep.subr.mxu0 %v331
  %920 = vmatpush1.msra.mxu0 %v330
  %921 = vmatprep.subr.mxu0 %v335
  %922 = vmatpush1.msra.mxu0 %v334
  %923 = vmatprep.subr.mxu0 %v339
  %924 = vmatpush1.msra.mxu0 %v338
  %925 = vmatprep.subr.mxu0 %v343
  %926 = vmatpush1.msra.mxu0 %v342
  %927 = vmatprep.subr.mxu0 %v347
  %928 = vmatpush1.msra.mxu0 %v346
  %929 = vmatprep.subr.mxu0 %v351
  %930 = vmatpush1.msra.mxu0 %v350
  %931 = vmatprep.subr.mxu0 %v355
  %932 = vmatpush1.msra.mxu0 %v354
  %933 = vmatprep.subr.mxu0 %v359
  %934 = vmatpush1.msra.mxu0 %v358
  %935 = vmatprep.subr.mxu0 %v363
  %936 = vmatpush1.msra.mxu0 %v362
  %937 = vmatprep.subr.mxu0 %v367
  %938 = vmatpush1.msra.mxu0 %v366
  %939 = vmatprep.subr.mxu0 %v371
  %940 = vmatpush1.msra.mxu0 %v370
  %941 = vmatprep.subr.mxu0 %v375
  %942 = vmatpush1.msra.mxu0 %v374
  %943 = vmatprep.subr.mxu0 %v379
  %944 = vmatpush1.msra.mxu0 %v378
  %945 = vmatprep.subr.mxu0 %v383
  %946 = vmatpush1.msra.mxu0 %v382
  %947 = vmatprep.subr.mxu0 %v387
  %948 = vmatpush1.msra.mxu0 %v386
  %949 = vmatprep.subr.mxu0 %v391
  %950 = vmatpush1.msra.mxu0 %v390
  %951 = vmatprep.subr.mxu0 %v395
  %952 = vmatpush1.msra.mxu0 %v394
  %953 = vmatprep.subr.mxu0 %v399
  %954 = vmatpush1.msra.mxu0 %v398
  %955 = vmatprep.subr.mxu0 %v403
  %956 = vmatpush1.msra.mxu0 %v402
  %957 = vmatprep.subr.mxu0 %v407
  %958 = vmatpush1.msra.mxu0 %v406
  %959 = vmatprep.subr.mxu0 %v411
  %960 = vmatpush1.msra.mxu0 %v410
  %961 = vmatprep.mubr.f32.mxu0 %v19
  %962 = vmatmul.mubr.f32.gmra.mrb[0].mxu0 %v18
  %v963 = vpop.f32.mrb[0].mxu0
  %v964 = vadd.f32 %v887, %v963
  %v965 = vpop.f32.mrb[0].mxu0
  %v966 = vadd.f32 %v889, %v965
  %967 = vmatprep.mubr.f32.mxu0 %v26
  %968 = vmatmul.mubr.f32.gmra.mrb[0].mxu0 %v25
  %v969 = vpop.f32.mrb[0].mxu0
  %v970 = vadd.f32 %v893, %v969
  %v971 = vpop.f32.mrb[0].mxu0
  %v972 = vadd.f32 %v895, %v971
  %973 = vdwg.mxu0
  %974 = vmatprep.subr.mxu0 %v415
  %975 = vmatpush1.msra.mxu0 %v414
  %976 = vmatprep.subr.mxu0 %v419
  %977 = vmatpush1.msra.mxu0 %v418
  %978 = vmatprep.subr.mxu0 %v423
  %979 = vmatpush1.msra.mxu0 %v422
  %980 = vmatprep.subr.mxu0 %v427
  %981 = vmatpush1.msra.mxu0 %v426
  %982 = vmatprep.subr.mxu0 0.0
  %983 = vmatpush1.msra.mxu0 0.0
  %984 = vmatprep.subr.mxu0 0.0
  %985 = vmatpush1.msra.mxu0 0.0
  %986 = vmatprep.subr.mxu0 0.0
  %987 = vmatpush1.msra.mxu0 0.0
  %988 = vmatprep.subr.mxu0 0.0
  %989 = vmatpush1.msra.mxu0 0.0
  %990 = vmatprep.subr.mxu0 0.0
  %991 = vmatpush1.msra.mxu0 0.0
  %992 = vmatprep.subr.mxu0 0.0
  %993 = vmatpush1.msra.mxu0 0.0
  %994 = vmatprep.subr.mxu0 0.0
  %995 = vmatpush1.msra.mxu0 0.0
  %996 = vmatprep.subr.mxu0 0.0
  %997 = vmatpush1.msra.mxu0 0.0
  %998 = vmatprep.subr.mxu0 0.0
  %999 = vmatpush1.msra.mxu0 0.0
  %1000 = vmatprep.subr.mxu0 0.0
  %1001 = vmatpush1.msra.mxu0 0.0
  %1002 = vmatprep.subr.mxu0 0.0
  %1003 = vmatpush1.msra.mxu0 0.0
  %1004 = vmatprep.subr.mxu0 0.0
  %1005 = vmatpush1.msra.mxu0 0.0
  %1006 = vmatprep.subr.mxu0 0.0
  %1007 = vmatpush1.msra.mxu0 0.0
  %1008 = vmatprep.subr.mxu0 0.0
  %1009 = vmatpush1.msra.mxu0 0.0
  %1010 = vmatprep.subr.mxu0 0.0
  %1011 = vmatpush1.msra.mxu0 0.0
  %1012 = vmatprep.subr.mxu0 0.0
  %1013 = vmatpush1.msra.mxu0 0.0
  %1014 = vmatprep.subr.mxu0 0.0
  %1015 = vmatpush1.msra.mxu0 0.0
  %1016 = vmatprep.subr.mxu0 0.0
  %1017 = vmatpush1.msra.mxu0 0.0
  %1018 = vmatprep.subr.mxu0 0.0
  %1019 = vmatpush1.msra.mxu0 0.0
  %1020 = vmatprep.subr.mxu0 0.0
  %1021 = vmatpush1.msra.mxu0 0.0
  %1022 = vmatprep.subr.mxu0 0.0
  %1023 = vmatpush1.msra.mxu0 0.0
  %1024 = vmatprep.subr.mxu0 0.0
  %1025 = vmatpush1.msra.mxu0 0.0
  %1026 = vmatprep.subr.mxu0 0.0
  %1027 = vmatpush1.msra.mxu0 0.0
  %1028 = vmatprep.subr.mxu0 0.0
  %1029 = vmatpush1.msra.mxu0 0.0
  %1030 = vmatprep.subr.mxu0 0.0
  %1031 = vmatpush1.msra.mxu0 0.0
  %1032 = vmatprep.subr.mxu0 0.0
  %1033 = vmatpush1.msra.mxu0 0.0
  %1034 = vmatprep.subr.mxu0 0.0
  %1035 = vmatpush1.msra.mxu0 0.0
  %1036 = vmatprep.subr.mxu0 0.0
  %1037 = vmatpush1.msra.mxu0 0.0
  %1038 = vmatprep.mubr.f32.mxu0 0.0
  %1039 = vmatmul.mubr.f32.gmra.mrb[0].mxu0 %v430
  %v1040 = vpop.f32.mrb[0].mxu0
  %v1041 = vadd.f32 %v964, %v1040
  %v1042 = vpop.f32.mrb[0].mxu0
  %v1043 = vadd.f32 %v966, %v1042
  %1044 = vmatprep.mubr.f32.mxu0 0.0
  %1045 = vmatmul.mubr.f32.gmra.mrb[0].mxu0 %v433
  %v1046 = vpop.f32.mrb[0].mxu0
  %v1047 = vadd.f32 %v970, %v1046
  %v1048 = vpop.f32.mrb[0].mxu0
  %v1049 = vadd.f32 %v972, %v1048
  %1050 = vdwg.mxu0
  %v1051 = vadd.f32 %v733, %v735
  %v1052 = vadd.f32 %v1051, %v1041
  %vm1053 = vcmask 64512
  %v1054 = vsel %vm1053, %v1043, 0.0
  %v1055 = vadd.f32 %v1052, %v1054
  %1056 = vadd.xlane.f32.xlu0 %v1055
  %v1057 = vpop.xlane.xlu0 %1056
  %v1058 = vadd.f32 %v739, %v741
  %v1059 = vadd.f32 %v1058, %v1047
  %v1060 = vsel %vm1053, %v1049, 0.0
  %v1061 = vadd.f32 %v1059, %v1060
  %1062 = vadd.xlane.f32.xlu0 %v1061
  %v1063 = vpop.xlane.xlu0 %1062
  %v1064 = vmul.f32 %v733, %v733
  %v1065 = vmul.f32 %v735, %v735
  %v1066 = vmul.f32 %v1041, %v1041
  %v1067 = vmul.f32 %v1043, %v1043
  %v1068 = vmul.f32 %v739, %v739
  %v1069 = vmul.f32 %v741, %v741
  %v1070 = vmul.f32 %v1047, %v1047
  %v1071 = vmul.f32 %v1049, %v1049
  %v1072 = vadd.f32 %v1064, %v1065
  %v1073 = vadd.f32 %v1072, %v1066
  %v1074 = vsel %vm1053, %v1067, 0.0
  %v1075 = vadd.f32 %v1073, %v1074
  %1076 = vadd.xlane.f32.xlu0 %v1075
  %v1077 = vpop.xlane.xlu0 %1076
  %v1078 = vadd.f32 %v1068, %v1069
  %v1079 = vadd.f32 %v1078, %v1070
  %v1080 = vsel %vm1053, %v1071, 0.0
  %v1081 = vadd.f32 %v1079, %v1080
  %1082 = vadd.xlane.f32.xlu0 %v1081
  %v1083 = vpop.xlane.xlu0 %1082
  %v1084 = vmul.f32 %v1057, 0.0025510204
  %v1085 = vmul.f32 %v1063, 0.0025510204
  %v1086 = vmul.f32 %v1077, 0.0025510204
  %v1087 = vmul.f32 %v1083, 0.0025510204
  %v1088 = vmul.f32 %v1084, %v1084
  %v1089 = vmul.f32 %v1085, %v1085
  %v1090 = vsub.f32 %v1086, %v1088
  %v1091 = vsub.f32 %v1087, %v1089
  %v1092 = vld [vmem:[%s2] sm:$0xff]
  %v1093 = vld [vmem:[%s2 + $0x8] sm:$0xff]
  %v1094 = vadd.f32 %v1090, 1e-05
  %v1095 = vadd.f32 %v1091, 1e-05
  %v1096 = vrsqrt.pop %v1094
  %v1097 = vrsqrt.pop %v1095
  %v1098 = vmul.f32 %v1092, %v1096
  %v1099 = vmul.f32 %v1093, %v1097
  %v1100 = vmul.f32 %v1084, %v1098
  %v1101 = vmul.f32 %v1085, %v1099
  %1104 = vrot.lane.b32.xlu0 %v1100, 1
  %v1105 = vpop.permute.xlu0 %1104
  %1106 = vrot.lane.b32.xlu0 %v1101, 1
  %v1107 = vpop.permute.xlu0 %1106
  %v1110 = vsub.f32 %v1092, %v1105
  %v1111 = vsub.f32 %v1093, %v1107
  %1113 = vset.pattern.permute.xlu0 0
  %1114 = vperm.xlu0 %1113, %v1098
  %v1115 = vpop.permute.xlu0 %1114
  %1118 = vset.pattern.permute.xlu0 0
  %1119 = vperm.xlu0 %1118, %v1099
  %v1120 = vpop.permute.xlu0 %1119
  %v1122 = vmul.f32 %v733, %v1115
  %v1123 = vmul.f32 %v735, %v1115
  %v1124 = vmul.f32 %v1041, %v1115
  %v1125 = vmul.f32 %v1043, %v1115
  %v1126 = vmul.f32 %v739, %v1120
  %v1127 = vmul.f32 %v741, %v1120
  %v1128 = vmul.f32 %v1047, %v1120
  %v1129 = vmul.f32 %v1049, %v1120
  %1131 = vset.pattern.permute.xlu0 1
  %1132 = vperm.xlu0 %1131, %v1110
  %v1133 = vpop.permute.xlu0 %1132
  %1136 = vset.pattern.permute.xlu0 1
  %1137 = vperm.xlu0 %1136, %v1111
  %v1138 = vpop.permute.xlu0 %1137
  %v1140 = vadd.f32 %v1122, %v1133
  %v1141 = vadd.f32 %v1123, %v1133
  %v1142 = vadd.f32 %v1124, %v1133
  %v1143 = vadd.f32 %v1125, %v1133
  %v1144 = vadd.f32 %v1126, %v1138
  %v1145 = vadd.f32 %v1127, %v1138
  %v1146 = vadd.f32 %v1128, %v1138
  %v1147 = vadd.f32 %v1129, %v1138
  %vm1148 = vcmp.ge.f32.partialorder %v1140, 0.0
  %vm1149 = vcmp.ge.f32.partialorder %v1141, 0.0
  %vm1150 = vcmp.ge.f32.partialorder %v1142, 0.0
  %vm1151 = vcmp.ge.f32.partialorder %v1143, 0.0
  %vm1152 = vcmp.ge.f32.partialorder %v1144, 0.0
  %vm1153 = vcmp.ge.f32.partialorder %v1145, 0.0
  %vm1154 = vcmp.ge.f32.partialorder %v1146, 0.0
  %vm1155 = vcmp.ge.f32.partialorder %v1147, 0.0
  %1157 = vset.pattern.permute.xlu0 2
  %1158 = vperm.xlu0 %1157, %v1092
  %v1159 = vpop.permute.xlu0 %1158
  %1162 = vset.pattern.permute.xlu0 2
  %1163 = vperm.xlu0 %1162, %v1093
  %v1164 = vpop.permute.xlu0 %1163
  %v1166 = vmul.f32 %v1159, %v1140
  %v1167 = vmul.f32 %v1159, %v1141
  %v1168 = vmul.f32 %v1159, %v1142
  %v1169 = vmul.f32 %v1159, %v1143
  %v1170 = vmul.f32 %v1164, %v1144
  %v1171 = vmul.f32 %v1164, %v1145
  %v1172 = vmul.f32 %v1164, %v1146
  %v1173 = vmul.f32 %v1164, %v1147
  %v1174 = vsel %vm1148, %v1140, %v1166
  %v1175 = vsel %vm1149, %v1141, %v1167
  %v1176 = vsel %vm1150, %v1142, %v1168
  %v1177 = vsel %vm1151, %v1143, %v1169
  %v1178 = vsel %vm1152, %v1144, %v1170
  %v1179 = vsel %vm1153, %v1145, %v1171
  %v1180 = vsel %vm1154, %v1146, %v1172
  %v1181 = vsel %vm1155, %v1147, %v1173
  %1182 = vst [vmem:[%s3] sm:$0xff] %v1174
  %1183 = vst [vmem:[%s3 + $0x8] sm:$0xff] %v1175
  %1184 = vst [vmem:[%s3 + $0x10] sm:$0xff] %v1176
  %1185 = vst.msk [vmem:[%s3 + $0x18] sm:$0xff] %vm1053, %v1177
  %1186 = vst [vmem:[%s3 + $0x20] sm:$0xff] %v1178
  %1187 = vst [vmem:[%s3 + $0x28] sm:$0xff] %v1179
  %1188 = vst [vmem:[%s3 + $0x30] sm:$0xff] %v1180
  %1189 = vst.msk [vmem:[%s3 + $0x38] sm:$0xff] %vm1053, %v1181
  // Predicated region
  $region14: #{vae_conv_forward.20} parent=0 // pred_check
    _
  $region15: #{vae_conv_forward.20} parent=0 // pred_check_branch
    %1191 = sbr.rel (0) target = $region17
  $region16: #{vae_conv_forward.20} parent=0 // pred_region
    _
  $region17: #{vae_conv_forward.20} parent=0 // pred_fallthru
    _
  // Predicated region
  $region18: #{vae_conv_forward.20} parent=0 // pred_check
    _
  $region19: #{vae_conv_forward.20} parent=0 // pred_check_branch
    %1193 = sbr.rel (0) target = $region21
  $region20: #{vae_conv_forward.20} parent=0 // pred_region
    _
  $region21: #{vae_conv_forward.20} parent=0 // pred_fallthru
    _

// kernel: vae_conv_forward.21
$region0: #{vae_conv_forward.21}
  #allocation0 [shape = 'u32[]', space=smem, size = 0x4, offset = 0x4, fixed_abs, tag = 'smem constant byte address 0x4 - core index']
  #allocation1 [shape = 'u32[144,128]{1,0:T(1,128)}', space=vmem, size = 0x12000, scoped, tag = 'internal scratch']
  %s0 = inlined_call_operand.vmem [shape: f32[400,1568], index: 0, kind: input, shape index: {}]
  %s1 = inlined_call_operand.vmem [shape: f32[8,400], index: 1, kind: input, shape index: {}]
  %s2 = inlined_call_operand.vmem [shape: f32[8,3], index: 2, kind: input, shape index: {}]
  %s3 = inlined_call_operand.vmem [shape: f32[8,1568], index: 3, kind: output, shape index: {}]
  %s4 = sld [smem:[#allocation0]]
  $region22: #{vae_conv_forward.21} parent=0
    _
  %s6 = ssub.s32 1, %s4
  %s7 = scalar_select 0, %s6, %s4
  // Predicated region
  $region2: #{vae_conv_forward.21} parent=0 // pred_check
    _
  $region3: #{vae_conv_forward.21} parent=0 // pred_check_branch
    %9 = sbr.rel (0) target = $region5
  $region4: #{vae_conv_forward.21} parent=0 // pred_region
    _
  $region5: #{vae_conv_forward.21} parent=0 // pred_fallthru
    _
  // Predicated region
  $region6: #{vae_conv_forward.21} parent=0 // pred_check
    _
  $region7: #{vae_conv_forward.21} parent=0 // pred_check_branch
    %11 = sbr.rel (0) target = $region9
  $region8: #{vae_conv_forward.21} parent=0 // pred_region
    _
  $region9: #{vae_conv_forward.21} parent=0 // pred_fallthru
    _
  // Predicated region
  $region10: #{vae_conv_forward.21} parent=0 // pred_check
    _
  $region11: #{vae_conv_forward.21} parent=0 // pred_check_branch
    %13 = sbr.rel (0) target = $region13
  $region12: #{vae_conv_forward.21} parent=0 // pred_region
    _
  $region13: #{vae_conv_forward.21} parent=0 // pred_fallthru
    _
  %v14 = vld [vmem:[%s1] sm:$0xff]
  %v15 = vld [vmem:[%s1 + $0x8] sm:$0xff]
  %v16 = vld [vmem:[%s1 + $0x10] sm:$0xff]
  %v17 = vld [vmem:[%s1 + $0x18] sm:$0xff]
  %v18 = vld [vmem:[%s0] sm:$0xff]
  %v19 = vld [vmem:[%s0 + $0x8] sm:$0xff]
  %v20 = vld [vmem:[%s0 + $0x10] sm:$0xff]
  %v21 = vld [vmem:[%s0 + $0x18] sm:$0xff]
  %v22 = vld [vmem:[%s0 + $0x20] sm:$0xff]
  %v23 = vld [vmem:[%s0 + $0x28] sm:$0xff]
  %v24 = vld [vmem:[%s0 + $0x30] sm:$0xff]
  %v25 = vld [vmem:[%s0 + $0x38] sm:$0xff]
  %v26 = vld [vmem:[%s0 + $0x40] sm:$0xff]
  %v27 = vld [vmem:[%s0 + $0x48] sm:$0xff]
  %v28 = vld [vmem:[%s0 + $0x50] sm:$0xff]
  %v29 = vld [vmem:[%s0 + $0x58] sm:$0xff]
  %v30 = vld [vmem:[%s0 + $0x60] sm:$0xff]
  %v31 = vld [vmem:[%s0 + $0x68] sm:$0xff]
  %v32 = vld [vmem:[%s0 + $0x70] sm:$0xff]
  %v33 = vld [vmem:[%s0 + $0x78] sm:$0xff]
  %v34 = vld [vmem:[%s0 + $0x80] sm:$0xff]
  %v35 = vld [vmem:[%s0 + $0x88] sm:$0xff]
  %v36 = vld [vmem:[%s0 + $0x90] sm:$0xff]
  %v37 = vld [vmem:[%s0 + $0x98] sm:$0xff]
  %v38 = vld [vmem:[%s0 + $0xa0] sm:$0xff]
  %v39 = vld [vmem:[%s0 + $0xa8] sm:$0xff]
  %v40 = vld [vmem:[%s0 + $0xb0] sm:$0xff]
  %v41 = vld [vmem:[%s0 + $0xb8] sm:$0xff]
  %v42 = vld [vmem:[%s0 + $0xc0] sm:$0xff]
  %v43 = vld [vmem:[%s0 + $0xc8] sm:$0xff]
  %v44 = vld [vmem:[%s0 + $0xd0] sm:$0xff]
  %v45 = vld [vmem:[%s0 + $0xd8] sm:$0xff]
  %v46 = vld [vmem:[%s0 + $0xe0] sm:$0xff]
  %v47 = vld [vmem:[%s0 + $0xe8] sm:$0xff]
  %v48 = vld [vmem:[%s0 + $0xf0] sm:$0xff]
  %v49 = vld [vmem:[%s0 + $0xf8] sm:$0xff]
  %v50 = vld [vmem:[%s0 + $0x100] sm:$0xff]
  %v51 = vld [vmem:[%s0 + $0x108] sm:$0xff]
  %v52 = vld [vmem:[%s0 + $0x110] sm:$0xff]
  %v53 = vld [vmem:[%s0 + $0x118] sm:$0xff]
  %v54 = vld [vmem:[%s0 + $0x120] sm:$0xff]
  %v55 = vld [vmem:[%s0 + $0x128] sm:$0xff]
  %v56 = vld [vmem:[%s0 + $0x130] sm:$0xff]
  %v57 = vld [vmem:[%s0 + $0x138] sm:$0xff]
  %v58 = vld [vmem:[%s0 + $0x140] sm:$0xff]
  %v59 = vld [vmem:[%s0 + $0x148] sm:$0xff]
  %v60 = vld [vmem:[%s0 + $0x150] sm:$0xff]
  %v61 = vld [vmem:[%s0 + $0x158] sm:$0xff]
  %v62 = vld [vmem:[%s0 + $0x160] sm:$0xff]
  %v63 = vld [vmem:[%s0 + $0x168] sm:$0xff]
  %v64 = vld [vmem:[%s0 + $0x170] sm:$0xff]
  %v65 = vld [vmem:[%s0 + $0x178] sm:$0xff]
  %v66 = vld [vmem:[%s0 + $0x180] sm:$0xff]
  %v67 = vld [vmem:[%s0 + $0x188] sm:$0xff]
  %v68 = vld [vmem:[%s0 + $0x190] sm:$0xff]
  %v69 = vld [vmem:[%s0 + $0x198] sm:$0xff]
  %v70 = vld [vmem:[%s0 + $0x1a0] sm:$0xff]
  %v71 = vld [vmem:[%s0 + $0x1a8] sm:$0xff]
  %v72 = vld [vmem:[%s0 + $0x1b0] sm:$0xff]
  %v73 = vld [vmem:[%s0 + $0x1b8] sm:$0xff]
  %v74 = vld [vmem:[%s0 + $0x1c0] sm:$0xff]
  %v75 = vld [vmem:[%s0 + $0x1c8] sm:$0xff]
  %v76 = vld [vmem:[%s0 + $0x1d0] sm:$0xff]
  %v77 = vld [vmem:[%s0 + $0x1d8] sm:$0xff]
  %v78 = vld [vmem:[%s0 + $0x1e0] sm:$0xff]
  %v79 = vld [vmem:[%s0 + $0x1e8] sm:$0xff]
  %v80 = vld [vmem:[%s0 + $0x1f0] sm:$0xff]
  %v81 = vld [vmem:[%s0 + $0x1f8] sm:$0xff]
  %v82 = vld [vmem:[%s0 + $0x200] sm:$0xff]
  %v83 = vld [vmem:[%s0 + $0x208] sm:$0xff]
  %v84 = vld [vmem:[%s0 + $0x210] sm:$0xff]
  %v85 = vld [vmem:[%s0 + $0x218] sm:$0xff]
  %v86 = vld [vmem:[%s0 + $0x220] sm:$0xff]
  %v87 = vld [vmem:[%s0 + $0x228] sm:$0xff]
  %v88 = vld [vmem:[%s0 + $0x230] sm:$0xff]
  %v89 = vld [vmem:[%s0 + $0x238] sm:$0xff]
  %v90 = vld [vmem:[%s0 + $0x240] sm:$0xff]
  %v91 = vld [vmem:[%s0 + $0x248] sm:$0xff]
  %v92 = vld [vmem:[%s0 + $0x250] sm:$0xff]
  %v93 = vld [vmem:[%s0 + $0x258] sm:$0xff]
  %v94 = vld [vmem:[%s0 + $0x260] sm:$0xff]
  %v95 = vld [vmem:[%s0 + $0x268] sm:$0xff]
  %v96 = vld [vmem:[%s0 + $0x270] sm:$0xff]
  %v97 = vld [vmem:[%s0 + $0x278] sm:$0xff]
  %v98 = vld [vmem:[%s0 + $0x280] sm:$0xff]
  %v99 = vld [vmem:[%s0 + $0x288] sm:$0xff]
  %v100 = vld [vmem:[%s0 + $0x290] sm:$0xff]
  %v101 = vld [vmem:[%s0 + $0x298] sm:$0xff]
  %v102 = vld [vmem:[%s0 + $0x2a0] sm:$0xff]
  %v103 = vld [vmem:[%s0 + $0x2a8] sm:$0xff]
  %v104 = vld [vmem:[%s0 + $0x2b0] sm:$0xff]
  %v105 = vld [vmem:[%s0 + $0x2b8] sm:$0xff]
  %v106 = vld [vmem:[%s0 + $0x2c0] sm:$0xff]
  %v107 = vld [vmem:[%s0 + $0x2c8] sm:$0xff]
  %v108 = vld [vmem:[%s0 + $0x2d0] sm:$0xff]
  %v109 = vld [vmem:[%s0 + $0x2d8] sm:$0xff]
  %v110 = vld [vmem:[%s0 + $0x2e0] sm:$0xff]
  %v111 = vld [vmem:[%s0 + $0x2e8] sm:$0xff]
  %v112 = vld [vmem:[%s0 + $0x2f0] sm:$0xff]
  %v113 = vld [vmem:[%s0 + $0x2f8] sm:$0xff]
  %v114 = vld [vmem:[%s0 + $0x300] sm:$0xff]
  %v115 = vld [vmem:[%s0 + $0x308] sm:$0xff]
  %v116 = vld [vmem:[%s0 + $0x310] sm:$0xff]
  %v117 = vld [vmem:[%s0 + $0x318] sm:$0xff]
  %v118 = vld [vmem:[%s0 + $0x320] sm:$0xff]
  %v119 = vld [vmem:[%s0 + $0x328] sm:$0xff]
  %v120 = vld [vmem:[%s0 + $0x330] sm:$0xff]
  %v121 = vld [vmem:[%s0 + $0x338] sm:$0xff]
  %v122 = vld [vmem:[%s0 + $0x340] sm:$0xff]
  %v123 = vld [vmem:[%s0 + $0x348] sm:$0xff]
  %v124 = vld [vmem:[%s0 + $0x350] sm:$0xff]
  %v125 = vld [vmem:[%s0 + $0x358] sm:$0xff]
  %v126 = vld [vmem:[%s0 + $0x360] sm:$0xff]
  %v127 = vld [vmem:[%s0 + $0x368] sm:$0xff]
  %v128 = vld [vmem:[%s0 + $0x370] sm:$0xff]
  %v129 = vld [vmem:[%s0 + $0x378] sm:$0xff]
  %v130 = vld [vmem:[%s0 + $0x380] sm:$0xff]
  %v131 = vld [vmem:[%s0 + $0x388] sm:$0xff]
  %v132 = vld [vmem:[%s0 + $0x390] sm:$0xff]
  %v133 = vld [vmem:[%s0 + $0x398] sm:$0xff]
  %v134 = vld [vmem:[%s0 + $0x3a0] sm:$0xff]
  %v135 = vld [vmem:[%s0 + $0x3a8] sm:$0xff]
  %v136 = vld [vmem:[%s0 + $0x3b0] sm:$0xff]
  %v137 = vld [vmem:[%s0 + $0x3b8] sm:$0xff]
  %v138 = vld [vmem:[%s0 + $0x3c0] sm:$0xff]
  %v139 = vld [vmem:[%s0 + $0x3c8] sm:$0xff]
  %v140 = vld [vmem:[%s0 + $0x3d0] sm:$0xff]
  %v141 = vld [vmem:[%s0 + $0x3d8] sm:$0xff]
  %v142 = vld [vmem:[%s0 + $0x3e0] sm:$0xff]
  %v143 = vld [vmem:[%s0 + $0x3e8] sm:$0xff]
  %v144 = vld [vmem:[%s0 + $0x3f0] sm:$0xff]
  %v145 = vld [vmem:[%s0 + $0x3f8] sm:$0xff]
  %v146 = vld [vmem:[%s0 + $0x400] sm:$0xff]
  %v147 = vld [vmem:[%s0 + $0x408] sm:$0xff]
  %v148 = vld [vmem:[%s0 + $0x410] sm:$0xff]
  %v149 = vld [vmem:[%s0 + $0x418] sm:$0xff]
  %v150 = vld [vmem:[%s0 + $0x420] sm:$0xff]
  %v151 = vld [vmem:[%s0 + $0x428] sm:$0xff]
  %v152 = vld [vmem:[%s0 + $0x430] sm:$0xff]
  %v153 = vld [vmem:[%s0 + $0x438] sm:$0xff]
  %v154 = vld [vmem:[%s0 + $0x440] sm:$0xff]
  %v155 = vld [vmem:[%s0 + $0x448] sm:$0xff]
  %v156 = vld [vmem:[%s0 + $0x450] sm:$0xff]
  %v157 = vld [vmem:[%s0 + $0x458] sm:$0xff]
  %v158 = vld [vmem:[%s0 + $0x460] sm:$0xff]
  %v159 = vld [vmem:[%s0 + $0x468] sm:$0xff]
  %v160 = vld [vmem:[%s0 + $0x470] sm:$0xff]
  %v161 = vld [vmem:[%s0 + $0x478] sm:$0xff]
  %v162 = vld [vmem:[%s0 + $0x480] sm:$0xff]
  %v163 = vld [vmem:[%s0 + $0x488] sm:$0xff]
  %v164 = vld [vmem:[%s0 + $0x490] sm:$0xff]
  %v165 = vld [vmem:[%s0 + $0x498] sm:$0xff]
  %v166 = vld [vmem:[%s0 + $0x4a0] sm:$0xff]
  %v167 = vld [vmem:[%s0 + $0x4a8] sm:$0xff]
  %v168 = vld [vmem:[%s0 + $0x4b0] sm:$0xff]
  %v169 = vld [vmem:[%s0 + $0x4b8] sm:$0xff]
  %v170 = vld [vmem:[%s0 + $0x4c0] sm:$0xff]
  %v171 = vld [vmem:[%s0 + $0x4c8] sm:$0xff]
  %v172 = vld [vmem:[%s0 + $0x4d0] sm:$0xff]
  %v173 = vld [vmem:[%s0 + $0x4d8] sm:$0xff]
  %v174 = vld [vmem:[%s0 + $0x4e0] sm:$0xff]
  %v175 = vld [vmem:[%s0 + $0x4e8] sm:$0xff]
  %v176 = vld [vmem:[%s0 + $0x4f0] sm:$0xff]
  %v177 = vld [vmem:[%s0 + $0x4f8] sm:$0xff]
  %v178 = vld [vmem:[%s0 + $0x500] sm:$0xff]
  %v179 = vld [vmem:[%s0 + $0x508] sm:$0xff]
  %v180 = vld [vmem:[%s0 + $0x510] sm:$0xff]
  %v181 = vld [vmem:[%s0 + $0x518] sm:$0xff]
  %v182 = vld [vmem:[%s0 + $0x520] sm:$0xff]
  %v183 = vld [vmem:[%s0 + $0x528] sm:$0xff]
  %v184 = vld [vmem:[%s0 + $0x530] sm:$0xff]
  %v185 = vld [vmem:[%s0 + $0x538] sm:$0xff]
  %v186 = vld [vmem:[%s0 + $0x540] sm:$0xff]
  %v187 = vld [vmem:[%s0 + $0x548] sm:$0xff]
  %v188 = vld [vmem:[%s0 + $0x550] sm:$0xff]
  %v189 = vld [vmem:[%s0 + $0x558] sm:$0xff]
  %v190 = vld [vmem:[%s0 + $0x560] sm:$0xff]
  %v191 = vld [vmem:[%s0 + $0x568] sm:$0xff]
  %v192 = vld [vmem:[%s0 + $0x570] sm:$0xff]
  %v193 = vld [vmem:[%s0 + $0x578] sm:$0xff]
  %v194 = vld [vmem:[%s0 + $0x580] sm:$0xff]
  %v195 = vld [vmem:[%s0 + $0x588] sm:$0xff]
  %v196 = vld [vmem:[%s0 + $0x590] sm:$0xff]
  %v197 = vld [vmem:[%s0 + $0x598] sm:$0xff]
  %v198 = vld [vmem:[%s0 + $0x5a0] sm:$0xff]
  %v199 = vld [vmem:[%s0 + $0x5a8] sm:$0xff]
  %v200 = vld [vmem:[%s0 + $0x5b0] sm:$0xff]
  %v201 = vld [vmem:[%s0 + $0x5b8] sm:$0xff]
  %v202 = vld [vmem:[%s0 + $0x5c0] sm:$0xff]
  %v203 = vld [vmem:[%s0 + $0x5c8] sm:$0xff]
  %v204 = vld [vmem:[%s0 + $0x5d0] sm:$0xff]
  %v205 = vld [vmem:[%s0 + $0x5d8] sm:$0xff]
  %v206 = vld [vmem:[%s0 + $0x5e0] sm:$0xff]
  %v207 = vld [vmem:[%s0 + $0x5e8] sm:$0xff]
  %v208 = vld [vmem:[%s0 + $0x5f0] sm:$0xff]
  %v209 = vld [vmem:[%s0 + $0x5f8] sm:$0xff]
  %v210 = vld [vmem:[%s0 + $0x600] sm:$0xff]
  %v211 = vld [vmem:[%s0 + $0x608] sm:$0xff]
  %v212 = vld [vmem:[%s0 + $0x610] sm:$0xff]
  %v213 = vld [vmem:[%s0 + $0x618] sm:$0xff]
  %v214 = vld [vmem:[%s0 + $0x620] sm:$0xff]
  %v215 = vld [vmem:[%s0 + $0x628] sm:$0xff]
  %v216 = vld [vmem:[%s0 + $0x630] sm:$0xff]
  %v217 = vld [vmem:[%s0 + $0x638] sm:$0xff]
  %v218 = vld [vmem:[%s0 + $0x640] sm:$0xff]
  %v219 = vld [vmem:[%s0 + $0x648] sm:$0xff]
  %v220 = vld [vmem:[%s0 + $0x650] sm:$0xff]
  %v221 = vld [vmem:[%s0 + $0x658] sm:$0xff]
  %v222 = vld [vmem:[%s0 + $0x660] sm:$0xff]
  %v223 = vld [vmem:[%s0 + $0x668] sm:$0xff]
  %v224 = vld [vmem:[%s0 + $0x670] sm:$0xff]
  %v225 = vld [vmem:[%s0 + $0x678] sm:$0xff]
  %v226 = vld [vmem:[%s0 + $0x680] sm:$0xff]
  %v227 = vld [vmem:[%s0 + $0x688] sm:$0xff]
  %v228 = vld [vmem:[%s0 + $0x690] sm:$0xff]
  %v229 = vld [vmem:[%s0 + $0x698] sm:$0xff]
  %v230 = vld [vmem:[%s0 + $0x6a0] sm:$0xff]
  %v231 = vld [vmem:[%s0 + $0x6a8] sm:$0xff]
  %v232 = vld [vmem:[%s0 + $0x6b0] sm:$0xff]
  %v233 = vld [vmem:[%s0 + $0x6b8] sm:$0xff]
  %v234 = vld [vmem:[%s0 + $0x6c0] sm:$0xff]
  %v235 = vld [vmem:[%s0 + $0x6c8] sm:$0xff]
  %v236 = vld [vmem:[%s0 + $0x6d0] sm:$0xff]
  %v237 = vld [vmem:[%s0 + $0x6d8] sm:$0xff]
  %v238 = vld [vmem:[%s0 + $0x6e0] sm:$0xff]
  %v239 = vld [vmem:[%s0 + $0x6e8] sm:$0xff]
  %v240 = vld [vmem:[%s0 + $0x6f0] sm:$0xff]
  %v241 = vld [vmem:[%s0 + $0x6f8] sm:$0xff]
  %v242 = vld [vmem:[%s0 + $0x700] sm:$0xff]
  %v243 = vld [vmem:[%s0 + $0x708] sm:$0xff]
  %v244 = vld [vmem:[%s0 + $0x710] sm:$0xff]
  %v245 = vld [vmem:[%s0 + $0x718] sm:$0xff]
  %v246 = vld [vmem:[%s0 + $0x720] sm:$0xff]
  %v247 = vld [vmem:[%s0 + $0x728] sm:$0xff]
  %v248 = vld [vmem:[%s0 + $0x730] sm:$0xff]
  %v249 = vld [vmem:[%s0 + $0x738] sm:$0xff]
  %v250 = vld [vmem:[%s0 + $0x740] sm:$0xff]
  %v251 = vld [vmem:[%s0 + $0x748] sm:$0xff]
  %v252 = vld [vmem:[%s0 + $0x750] sm:$0xff]
  %v253 = vld [vmem:[%s0 + $0x758] sm:$0xff]
  %v254 = vld [vmem:[%s0 + $0x760] sm:$0xff]
  %v255 = vld [vmem:[%s0 + $0x768] sm:$0xff]
  %v256 = vld [vmem:[%s0 + $0x770] sm:$0xff]
  %v257 = vld [vmem:[%s0 + $0x778] sm:$0xff]
  %v258 = vld [vmem:[%s0 + $0x780] sm:$0xff]
  %v259 = vld [vmem:[%s0 + $0x788] sm:$0xff]
  %v260 = vld [vmem:[%s0 + $0x790] sm:$0xff]
  %v261 = vld [vmem:[%s0 + $0x798] sm:$0xff]
  %v262 = vld [vmem:[%s0 + $0x7a0] sm:$0xff]
  %v263 = vld [vmem:[%s0 + $0x7a8] sm:$0xff]
  %v264 = vld [vmem:[%s0 + $0x7b0] sm:$0xff]
  %v265 = vld [vmem:[%s0 + $0x7b8] sm:$0xff]
  %v266 = vld [vmem:[%s0 + $0x7c0] sm:$0xff]
  %v267 = vld [vmem:[%s0 + $0x7c8] sm:$0xff]
  %v268 = vld [vmem:[%s0 + $0x7d0] sm:$0xff]
  %v269 = vld [vmem:[%s0 + $0x7d8] sm:$0xff]
  %v270 = vld [vmem:[%s0 + $0x7e0] sm:$0xff]
  %v271 = vld [vmem:[%s0 + $0x7e8] sm:$0xff]
  %v272 = vld [vmem:[%s0 + $0x7f0] sm:$0xff]
  %v273 = vld [vmem:[%s0 + $0x7f8] sm:$0xff]
  %v274 = vld [vmem:[%s0 + $0x800] sm:$0xff]
  %v275 = vld [vmem:[%s0 + $0x808] sm:$0xff]
  %v276 = vld [vmem:[%s0 + $0x810] sm:$0xff]
  %v277 = vld [vmem:[%s0 + $0x818] sm:$0xff]
  %v278 = vld [vmem:[%s0 + $0x820] sm:$0xff]
  %v279 = vld [vmem:[%s0 + $0x828] sm:$0xff]
  %v280 = vld [vmem:[%s0 + $0x830] sm:$0xff]
  %v281 = vld [vmem:[%s0 + $0x838] sm:$0xff]
  %v282 = vld [vmem:[%s0 + $0x840] sm:$0xff]
  %v283 = vld [vmem:[%s0 + $0x848] sm:$0xff]
  %v284 = vld [vmem:[%s0 + $0x850] sm:$0xff]
  %v285 = vld [vmem:[%s0 + $0x858] sm:$0xff]
  %v286 = vld [vmem:[%s0 + $0x860] sm:$0xff]
  %v287 = vld [vmem:[%s0 + $0x868] sm:$0xff]
  %v288 = vld [vmem:[%s0 + $0x870] sm:$0xff]
  %v289 = vld [vmem:[%s0 + $0x878] sm:$0xff]
  %v290 = vld [vmem:[%s0 + $0x880] sm:$0xff]
  %v291 = vld [vmem:[%s0 + $0x888] sm:$0xff]
  %v292 = vld [vmem:[%s0 + $0x890] sm:$0xff]
  %v293 = vld [vmem:[%s0 + $0x898] sm:$0xff]
  %v294 = vld [vmem:[%s0 + $0x8a0] sm:$0xff]
  %v295 = vld [vmem:[%s0 + $0x8a8] sm:$0xff]
  %v296 = vld [vmem:[%s0 + $0x8b0] sm:$0xff]
  %v297 = vld [vmem:[%s0 + $0x8b8] sm:$0xff]
  %v298 = vld [vmem:[%s0 + $0x8c0] sm:$0xff]
  %v299 = vld [vmem:[%s0 + $0x8c8] sm:$0xff]
  %v300 = vld [vmem:[%s0 + $0x8d0] sm:$0xff]
  %v301 = vld [vmem:[%s0 + $0x8d8] sm:$0xff]
  %v302 = vld [vmem:[%s0 + $0x8e0] sm:$0xff]
  %v303 = vld [vmem:[%s0 + $0x8e8] sm:$0xff]
  %v304 = vld [vmem:[%s0 + $0x8f0] sm:$0xff]
  %v305 = vld [vmem:[%s0 + $0x8f8] sm:$0xff]
  %v306 = vld [vmem:[%s0 + $0x900] sm:$0xff]
  %v307 = vld [vmem:[%s0 + $0x908] sm:$0xff]
  %v308 = vld [vmem:[%s0 + $0x910] sm:$0xff]
  %v309 = vld [vmem:[%s0 + $0x918] sm:$0xff]
  %v310 = vld [vmem:[%s0 + $0x920] sm:$0xff]
  %v311 = vld [vmem:[%s0 + $0x928] sm:$0xff]
  %v312 = vld [vmem:[%s0 + $0x930] sm:$0xff]
  %v313 = vld [vmem:[%s0 + $0x938] sm:$0xff]
  %v314 = vld [vmem:[%s0 + $0x940] sm:$0xff]
  %v315 = vld [vmem:[%s0 + $0x948] sm:$0xff]
  %v316 = vld [vmem:[%s0 + $0x950] sm:$0xff]
  %v317 = vld [vmem:[%s0 + $0x958] sm:$0xff]
  %v318 = vld [vmem:[%s0 + $0x960] sm:$0xff]
  %v319 = vld [vmem:[%s0 + $0x968] sm:$0xff]
  %v320 = vld [vmem:[%s0 + $0x970] sm:$0xff]
  %v321 = vld [vmem:[%s0 + $0x978] sm:$0xff]
  %v322 = vld [vmem:[%s0 + $0x980] sm:$0xff]
  %v323 = vld [vmem:[%s0 + $0x988] sm:$0xff]
  %v324 = vld [vmem:[%s0 + $0x990] sm:$0xff]
  %v325 = vld [vmem:[%s0 + $0x998] sm:$0xff]
  %v326 = vld [vmem:[%s0 + $0x9a0] sm:$0xff]
  %v327 = vld [vmem:[%s0 + $0x9a8] sm:$0xff]
  %v328 = vld [vmem:[%s0 + $0x9b0] sm:$0xff]
  %v329 = vld [vmem:[%s0 + $0x9b8] sm:$0xff]
  %v330 = vld [vmem:[%s0 + $0x9c0] sm:$0xff]
  %v331 = vld [vmem:[%s0 + $0x9c8] sm:$0xff]
  %v332 = vld [vmem:[%s0 + $0x9d0] sm:$0xff]
  %v333 = vld [vmem:[%s0 + $0x9d8] sm:$0xff]
  %v334 = vld [vmem:[%s0 + $0x9e0] sm:$0xff]
  %v335 = vld [vmem:[%s0 + $0x9e8] sm:$0xff]
  %v336 = vld [vmem:[%s0 + $0x9f0] sm:$0xff]
  %v337 = vld [vmem:[%s0 + $0x9f8] sm:$0xff]
  %v338 = vld [vmem:[%s0 + $0xa00] sm:$0xff]
  %v339 = vld [vmem:[%s0 + $0xa08] sm:$0xff]
  %v340 = vld [vmem:[%s0 + $0xa10] sm:$0xff]
  %v341 = vld [vmem:[%s0 + $0xa18] sm:$0xff]
  %v342 = vld [vmem:[%s0 + $0xa20] sm:$0xff]
  %v343 = vld [vmem:[%s0 + $0xa28] sm:$0xff]
  %v344 = vld [vmem:[%s0 + $0xa30] sm:$0xff]
  %v345 = vld [vmem:[%s0 + $0xa38] sm:$0xff]
  %v346 = vld [vmem:[%s0 + $0xa40] sm:$0xff]
  %v347 = vld [vmem:[%s0 + $0xa48] sm:$0xff]
  %v348 = vld [vmem:[%s0 + $0xa50] sm:$0xff]
  %v349 = vld [vmem:[%s0 + $0xa58] sm:$0xff]
  %v350 = vld [vmem:[%s0 + $0xa60] sm:$0xff]
  %v351 = vld [vmem:[%s0 + $0xa68] sm:$0xff]
  %v352 = vld [vmem:[%s0 + $0xa70] sm:$0xff]
  %v353 = vld [vmem:[%s0 + $0xa78] sm:$0xff]
  %v354 = vld [vmem:[%s0 + $0xa80] sm:$0xff]
  %v355 = vld [vmem:[%s0 + $0xa88] sm:$0xff]
  %v356 = vld [vmem:[%s0 + $0xa90] sm:$0xff]
  %v357 = vld [vmem:[%s0 + $0xa98] sm:$0xff]
  %v358 = vld [vmem:[%s0 + $0xaa0] sm:$0xff]
  %v359 = vld [vmem:[%s0 + $0xaa8] sm:$0xff]
  %v360 = vld [vmem:[%s0 + $0xab0] sm:$0xff]
  %v361 = vld [vmem:[%s0 + $0xab8] sm:$0xff]
  %v362 = vld [vmem:[%s0 + $0xac0] sm:$0xff]
  %v363 = vld [vmem:[%s0 + $0xac8] sm:$0xff]
  %v364 = vld [vmem:[%s0 + $0xad0] sm:$0xff]
  %v365 = vld [vmem:[%s0 + $0xad8] sm:$0xff]
  %v366 = vld [vmem:[%s0 + $0xae0] sm:$0xff]
  %v367 = vld [vmem:[%s0 + $0xae8] sm:$0xff]
  %v368 = vld [vmem:[%s0 + $0xaf0] sm:$0xff]
  %v369 = vld [vmem:[%s0 + $0xaf8] sm:$0xff]
  %v370 = vld [vmem:[%s0 + $0xb00] sm:$0xff]
  %v371 = vld [vmem:[%s0 + $0xb08] sm:$0xff]
  %v372 = vld [vmem:[%s0 + $0xb10] sm:$0xff]
  %v373 = vld [vmem:[%s0 + $0xb18] sm:$0xff]
  %v374 = vld [vmem:[%s0 + $0xb20] sm:$0xff]
  %v375 = vld [vmem:[%s0 + $0xb28] sm:$0xff]
  %v376 = vld [vmem:[%s0 + $0xb30] sm:$0xff]
  %v377 = vld [vmem:[%s0 + $0xb38] sm:$0xff]
  %v378 = vld [vmem:[%s0 + $0xb40] sm:$0xff]
  %v379 = vld [vmem:[%s0 + $0xb48] sm:$0xff]
  %v380 = vld [vmem:[%s0 + $0xb50] sm:$0xff]
  %v381 = vld [vmem:[%s0 + $0xb58] sm:$0xff]
  %v382 = vld [vmem:[%s0 + $0xb60] sm:$0xff]
  %v383 = vld [vmem:[%s0 + $0xb68] sm:$0xff]
  %v384 = vld [vmem:[%s0 + $0xb70] sm:$0xff]
  %v385 = vld [vmem:[%s0 + $0xb78] sm:$0xff]
  %v386 = vld [vmem:[%s0 + $0xb80] sm:$0xff]
  %v387 = vld [vmem:[%s0 + $0xb88] sm:$0xff]
  %v388 = vld [vmem:[%s0 + $0xb90] sm:$0xff]
  %v389 = vld [vmem:[%s0 + $0xb98] sm:$0xff]
  %v390 = vld [vmem:[%s0 + $0xba0] sm:$0xff]
  %v391 = vld [vmem:[%s0 + $0xba8] sm:$0xff]
  %v392 = vld [vmem:[%s0 + $0xbb0] sm:$0xff]
  %v393 = vld [vmem:[%s0 + $0xbb8] sm:$0xff]
  %v394 = vld [vmem:[%s0 + $0xbc0] sm:$0xff]
  %v395 = vld [vmem:[%s0 + $0xbc8] sm:$0xff]
  %v396 = vld [vmem:[%s0 + $0xbd0] sm:$0xff]
  %v397 = vld [vmem:[%s0 + $0xbd8] sm:$0xff]
  %v398 = vld [vmem:[%s0 + $0xbe0] sm:$0xff]
  %v399 = vld [vmem:[%s0 + $0xbe8] sm:$0xff]
  %v400 = vld [vmem:[%s0 + $0xbf0] sm:$0xff]
  %v401 = vld [vmem:[%s0 + $0xbf8] sm:$0xff]
  %v402 = vld [vmem:[%s0 + $0xc00] sm:$0xff]
  %v403 = vld [vmem:[%s0 + $0xc08] sm:$0xff]
  %v404 = vld [vmem:[%s0 + $0xc10] sm:$0xff]
  %v405 = vld [vmem:[%s0 + $0xc18] sm:$0xff]
  %v406 = vld [vmem:[%s0 + $0xc20] sm:$0xff]
  %v407 = vld [vmem:[%s0 + $0xc28] sm:$0xff]
  %v408 = vld [vmem:[%s0 + $0xc30] sm:$0xff]
  %v409 = vld [vmem:[%s0 + $0xc38] sm:$0xff]
  %v410 = vld [vmem:[%s0 + $0xc40] sm:$0xff]
  %v411 = vld [vmem:[%s0 + $0xc48] sm:$0xff]
  %v412 = vld [vmem:[%s0 + $0xc50] sm:$0xff]
  %v413 = vld [vmem:[%s0 + $0xc58] sm:$0xff]
  %v414 = vld [vmem:[%s0 + $0xc60] sm:$0xff]
  %v415 = vld [vmem:[%s0 + $0xc68] sm:$0xff]
  %v416 = vld [vmem:[%s0 + $0xc70] sm:$0xff]
  %v417 = vld [vmem:[%s0 + $0xc78] sm:$0xff]
  %v418 = vld [vmem:[%s0 + $0xc80] sm:$0xff]
  %v419 = vld [vmem:[%s0 + $0xc88] sm:$0xff]
  %v420 = vld [vmem:[%s0 + $0xc90] sm:$0xff]
  %v421 = vld [vmem:[%s0 + $0xc98] sm:$0xff]
  %v422 = vld [vmem:[%s0 + $0xca0] sm:$0xff]
  %v423 = vld [vmem:[%s0 + $0xca8] sm:$0xff]
  %v424 = vld [vmem:[%s0 + $0xcb0] sm:$0xff]
  %v425 = vld [vmem:[%s0 + $0xcb8] sm:$0xff]
  %v426 = vld [vmem:[%s0 + $0xcc0] sm:$0xff]
  %v427 = vld [vmem:[%s0 + $0xcc8] sm:$0xff]
  %v428 = vld [vmem:[%s0 + $0xcd0] sm:$0xff]
  %v429 = vld [vmem:[%s0 + $0xcd8] sm:$0xff]
  %v430 = vld [vmem:[%s0 + $0xce0] sm:$0xff]
  %v431 = vld [vmem:[%s0 + $0xce8] sm:$0xff]
  %v432 = vld [vmem:[%s0 + $0xcf0] sm:$0xff]
  %v433 = vld [vmem:[%s0 + $0xcf8] sm:$0xff]
  %v434 = vld [vmem:[%s0 + $0xd00] sm:$0xff]
  %v435 = vld [vmem:[%s0 + $0xd08] sm:$0xff]
  %v436 = vld [vmem:[%s0 + $0xd10] sm:$0xff]
  %v437 = vld [vmem:[%s0 + $0xd18] sm:$0xff]
  %v438 = vld [vmem:[%s0 + $0xd20] sm:$0xff]
  %v439 = vld [vmem:[%s0 + $0xd28] sm:$0xff]
  %v440 = vld [vmem:[%s0 + $0xd30] sm:$0xff]
  %v441 = vld [vmem:[%s0 + $0xd38] sm:$0xff]
  %v442 = vld [vmem:[%s0 + $0xd40] sm:$0xff]
  %v443 = vld [vmem:[%s0 + $0xd48] sm:$0xff]
  %v444 = vld [vmem:[%s0 + $0xd50] sm:$0xff]
  %v445 = vld [vmem:[%s0 + $0xd58] sm:$0xff]
  %v446 = vld [vmem:[%s0 + $0xd60] sm:$0xff]
  %v447 = vld [vmem:[%s0 + $0xd68] sm:$0xff]
  %v448 = vld [vmem:[%s0 + $0xd70] sm:$0xff]
  %v449 = vld [vmem:[%s0 + $0xd78] sm:$0xff]
  %v450 = vld [vmem:[%s0 + $0xd80] sm:$0xff]
  %v451 = vld [vmem:[%s0 + $0xd88] sm:$0xff]
  %v452 = vld [vmem:[%s0 + $0xd90] sm:$0xff]
  %v453 = vld [vmem:[%s0 + $0xd98] sm:$0xff]
  %v454 = vld [vmem:[%s0 + $0xda0] sm:$0xff]
  %v455 = vld [vmem:[%s0 + $0xda8] sm:$0xff]
  %v456 = vld [vmem:[%s0 + $0xdb0] sm:$0xff]
  %v457 = vld [vmem:[%s0 + $0xdb8] sm:$0xff]
  %v458 = vld [vmem:[%s0 + $0xdc0] sm:$0xff]
  %v459 = vld [vmem:[%s0 + $0xdc8] sm:$0xff]
  %v460 = vld [vmem:[%s0 + $0xdd0] sm:$0xff]
  %v461 = vld [vmem:[%s0 + $0xdd8] sm:$0xff]
  %v462 = vld [vmem:[%s0 + $0xde0] sm:$0xff]
  %v463 = vld [vmem:[%s0 + $0xde8] sm:$0xff]
  %v464 = vld [vmem:[%s0 + $0xdf0] sm:$0xff]
  %v465 = vld [vmem:[%s0 + $0xdf8] sm:$0xff]
  %v466 = vld [vmem:[%s0 + $0xe00] sm:$0xff]
  %v467 = vld [vmem:[%s0 + $0xe08] sm:$0xff]
  %v468 = vld [vmem:[%s0 + $0xe10] sm:$0xff]
  %v469 = vld [vmem:[%s0 + $0xe18] sm:$0xff]
  %v470 = vld [vmem:[%s0 + $0xe20] sm:$0xff]
  %v471 = vld [vmem:[%s0 + $0xe28] sm:$0xff]
  %v472 = vld [vmem:[%s0 + $0xe30] sm:$0xff]
  %v473 = vld [vmem:[%s0 + $0xe38] sm:$0xff]
  %v474 = vld [vmem:[%s0 + $0xe40] sm:$0xff]
  %v475 = vld [vmem:[%s0 + $0xe48] sm:$0xff]
  %v476 = vld [vmem:[%s0 + $0xe50] sm:$0xff]
  %v477 = vld [vmem:[%s0 + $0xe58] sm:$0xff]
  %v478 = vld [vmem:[%s0 + $0xe60] sm:$0xff]
  %v479 = vld [vmem:[%s0 + $0xe68] sm:$0xff]
  %v480 = vld [vmem:[%s0 + $0xe70] sm:$0xff]
  %v481 = vld [vmem:[%s0 + $0xe78] sm:$0xff]
  %v482 = vld [vmem:[%s0 + $0xe80] sm:$0xff]
  %v483 = vld [vmem:[%s0 + $0xe88] sm:$0xff]
  %v484 = vld [vmem:[%s0 + $0xe90] sm:$0xff]
  %v485 = vld [vmem:[%s0 + $0xe98] sm:$0xff]
  %v486 = vld [vmem:[%s0 + $0xea0] sm:$0xff]
  %v487 = vld [vmem:[%s0 + $0xea8] sm:$0xff]
  %v488 = vld [vmem:[%s0 + $0xeb0] sm:$0xff]
  %v489 = vld [vmem:[%s0 + $0xeb8] sm:$0xff]
  %v490 = vld [vmem:[%s0 + $0xec0] sm:$0xff]
  %v491 = vld [vmem:[%s0 + $0xec8] sm:$0xff]
  %v492 = vld [vmem:[%s0 + $0xed0] sm:$0xff]
  %v493 = vld [vmem:[%s0 + $0xed8] sm:$0xff]
  %v494 = vld [vmem:[%s0 + $0xee0] sm:$0xff]
  %v495 = vld [vmem:[%s0 + $0xee8] sm:$0xff]
  %v496 = vld [vmem:[%s0 + $0xef0] sm:$0xff]
  %v497 = vld [vmem:[%s0 + $0xef8] sm:$0xff]
  %v498 = vld [vmem:[%s0 + $0xf00] sm:$0xff]
  %v499 = vld [vmem:[%s0 + $0xf08] sm:$0xff]
  %v500 = vld [vmem:[%s0 + $0xf10] sm:$0xff]
  %v501 = vld [vmem:[%s0 + $0xf18] sm:$0xff]
  %v502 = vld [vmem:[%s0 + $0xf20] sm:$0xff]
  %v503 = vld [vmem:[%s0 + $0xf28] sm:$0xff]
  %v504 = vld [vmem:[%s0 + $0xf30] sm:$0xff]
  %v505 = vld [vmem:[%s0 + $0xf38] sm:$0xff]
  %v506 = vld [vmem:[%s0 + $0xf40] sm:$0xff]
  %v507 = vld [vmem:[%s0 + $0xf48] sm:$0xff]
  %v508 = vld [vmem:[%s0 + $0xf50] sm:$0xff]
  %v509 = vld [vmem:[%s0 + $0xf58] sm:$0xff]
  %v510 = vld [vmem:[%s0 + $0xf60] sm:$0xff]
  %v511 = vld [vmem:[%s0 + $0xf68] sm:$0xff]
  %v512 = vld [vmem:[%s0 + $0xf70] sm:$0xff]
  %v513 = vld [vmem:[%s0 + $0xf78] sm:$0xff]
  %v514 = vld [vmem:[%s0 + $0xf80] sm:$0xff]
  %v515 = vld [vmem:[%s0 + $0xf88] sm:$0xff]
  %v516 = vld [vmem:[%s0 + $0xf90] sm:$0xff]
  %v517 = vld [vmem:[%s0 + $0xf98] sm:$0xff]
  %v518 = vld [vmem:[%s0 + $0xfa0] sm:$0xff]
  %v519 = vld [vmem:[%s0 + $0xfa8] sm:$0xff]
  %v520 = vld [vmem:[%s0 + $0xfb0] sm:$0xff]
  %v521 = vld [vmem:[%s0 + $0xfb8] sm:$0xff]
  %v522 = vld [vmem:[%s0 + $0xfc0] sm:$0xff]
  %v523 = vld [vmem:[%s0 + $0xfc8] sm:$0xff]
  %v524 = vld [vmem:[%s0 + $0xfd0] sm:$0xff]
  %v525 = vld [vmem:[%s0 + $0xfd8] sm:$0xff]
  %v526 = vld [vmem:[%s0 + $0xfe0] sm:$0xff]
  %v527 = vld [vmem:[%s0 + $0xfe8] sm:$0xff]
  %v528 = vld [vmem:[%s0 + $0xff0] sm:$0xff]
  %v529 = vld [vmem:[%s0 + $0xff8] sm:$0xff]
  %v530 = vld [vmem:[%s0 + $0x1000] sm:$0xff]
  %v531 = vld [vmem:[%s0 + $0x1008] sm:$0xff]
  %v532 = vld [vmem:[%s0 + $0x1010] sm:$0xff]
  %v533 = vld [vmem:[%s0 + $0x1018] sm:$0xff]
  %v534 = vld [vmem:[%s0 + $0x1020] sm:$0xff]
  %v535 = vld [vmem:[%s0 + $0x1028] sm:$0xff]
  %v536 = vld [vmem:[%s0 + $0x1030] sm:$0xff]
  %v537 = vld [vmem:[%s0 + $0x1038] sm:$0xff]
  %v538 = vld [vmem:[%s0 + $0x1040] sm:$0xff]
  %v539 = vld [vmem:[%s0 + $0x1048] sm:$0xff]
  %v540 = vld [vmem:[%s0 + $0x1050] sm:$0xff]
  %v541 = vld [vmem:[%s0 + $0x1058] sm:$0xff]
  %v542 = vld [vmem:[%s0 + $0x1060] sm:$0xff]
  %v543 = vld [vmem:[%s0 + $0x1068] sm:$0xff]
  %v544 = vld [vmem:[%s0 + $0x1070] sm:$0xff]
  %v545 = vld [vmem:[%s0 + $0x1078] sm:$0xff]
  %v546 = vld [vmem:[%s0 + $0x1080] sm:$0xff]
  %v547 = vld [vmem:[%s0 + $0x1088] sm:$0xff]
  %v548 = vld [vmem:[%s0 + $0x1090] sm:$0xff]
  %v549 = vld [vmem:[%s0 + $0x1098] sm:$0xff]
  %v550 = vld [vmem:[%s0 + $0x10a0] sm:$0xff]
  %v551 = vld [vmem:[%s0 + $0x10a8] sm:$0xff]
  %v552 = vld [vmem:[%s0 + $0x10b0] sm:$0xff]
  %v553 = vld [vmem:[%s0 + $0x10b8] sm:$0xff]
  %v554 = vld [vmem:[%s0 + $0x10c0] sm:$0xff]
  %v555 = vld [vmem:[%s0 + $0x10c8] sm:$0xff]
  %v556 = vld [vmem:[%s0 + $0x10d0] sm:$0xff]
  %v557 = vld [vmem:[%s0 + $0x10d8] sm:$0xff]
  %v558 = vld [vmem:[%s0 + $0x10e0] sm:$0xff]
  %v559 = vld [vmem:[%s0 + $0x10e8] sm:$0xff]
  %v560 = vld [vmem:[%s0 + $0x10f0] sm:$0xff]
  %v561 = vld [vmem:[%s0 + $0x10f8] sm:$0xff]
  %v562 = vld [vmem:[%s0 + $0x1100] sm:$0xff]
  %v563 = vld [vmem:[%s0 + $0x1108] sm:$0xff]
  %v564 = vld [vmem:[%s0 + $0x1110] sm:$0xff]
  %v565 = vld [vmem:[%s0 + $0x1118] sm:$0xff]
  %v566 = vld [vmem:[%s0 + $0x1120] sm:$0xff]
  %v567 = vld [vmem:[%s0 + $0x1128] sm:$0xff]
  %v568 = vld [vmem:[%s0 + $0x1130] sm:$0xff]
  %v569 = vld [vmem:[%s0 + $0x1138] sm:$0xff]
  %v570 = vld [vmem:[%s0 + $0x1140] sm:$0xff]
  %v571 = vld [vmem:[%s0 + $0x1148] sm:$0xff]
  %v572 = vld [vmem:[%s0 + $0x1150] sm:$0xff]
  %v573 = vld [vmem:[%s0 + $0x1158] sm:$0xff]
  %v574 = vld [vmem:[%s0 + $0x1160] sm:$0xff]
  %v575 = vld [vmem:[%s0 + $0x1168] sm:$0xff]
  %v576 = vld [vmem:[%s0 + $0x1170] sm:$0xff]
  %v577 = vld [vmem:[%s0 + $0x1178] sm:$0xff]
  %v578 = vld [vmem:[%s0 + $0x1180] sm:$0xff]
  %v579 = vld [vmem:[%s0 + $0x1188] sm:$0xff]
  %v580 = vld [vmem:[%s0 + $0x1190] sm:$0xff]
  %v581 = vld [vmem:[%s0 + $0x1198] sm:$0xff]
  %v582 = vld [vmem:[%s0 + $0x11a0] sm:$0xff]
  %v583 = vld [vmem:[%s0 + $0x11a8] sm:$0xff]
  %v584 = vld [vmem:[%s0 + $0x11b0] sm:$0xff]
  %v585 = vld [vmem:[%s0 + $0x11b8] sm:$0xff]
  %v586 = vld [vmem:[%s0 + $0x11c0] sm:$0xff]
  %v587 = vld [vmem:[%s0 + $0x11c8] sm:$0xff]
  %v588 = vld [vmem:[%s0 + $0x11d0] sm:$0xff]
  %v589 = vld [vmem:[%s0 + $0x11d8] sm:$0xff]
  %v590 = vld [vmem:[%s0 + $0x11e0] sm:$0xff]
  %v591 = vld [vmem:[%s0 + $0x11e8] sm:$0xff]
  %v592 = vld [vmem:[%s0 + $0x11f0] sm:$0xff]
  %v593 = vld [vmem:[%s0 + $0x11f8] sm:$0xff]
  %v594 = vld [vmem:[%s0 + $0x1200] sm:$0xff]
  %v595 = vld [vmem:[%s0 + $0x1208] sm:$0xff]
  %v596 = vld [vmem:[%s0 + $0x1210] sm:$0xff]
  %v597 = vld [vmem:[%s0 + $0x1218] sm:$0xff]
  %v598 = vld [vmem:[%s0 + $0x1220] sm:$0xff]
  %v599 = vld [vmem:[%s0 + $0x1228] sm:$0xff]
  %v600 = vld [vmem:[%s0 + $0x1230] sm:$0xff]
  %v601 = vld [vmem:[%s0 + $0x1238] sm:$0xff]
  %v602 = vld [vmem:[%s0 + $0x1240] sm:$0xff]
  %v603 = vld [vmem:[%s0 + $0x1248] sm:$0xff]
  %v604 = vld [vmem:[%s0 + $0x1250] sm:$0xff]
  %v605 = vld [vmem:[%s0 + $0x1258] sm:$0xff]
  %v606 = vld [vmem:[%s0 + $0x1260] sm:$0xff]
  %v607 = vld [vmem:[%s0 + $0x1268] sm:$0xff]
  %v608 = vld [vmem:[%s0 + $0x1270] sm:$0xff]
  %v609 = vld [vmem:[%s0 + $0x1278] sm:$0xff]
  %v610 = vld [vmem:[%s0 + $0x1280] sm:$0xff]
  %v611 = vld [vmem:[%s0 + $0x1288] sm:$0xff]
  %v612 = vld [vmem:[%s0 + $0x1290] sm:$0xff]
  %v613 = vld [vmem:[%s0 + $0x1298] sm:$0xff]
  %v614 = vld [vmem:[%s0 + $0x12a0] sm:$0xff]
  %v615 = vld [vmem:[%s0 + $0x12a8] sm:$0xff]
  %v616 = vld [vmem:[%s0 + $0x12b0] sm:$0xff]
  %v617 = vld [vmem:[%s0 + $0x12b8] sm:$0xff]
  %v618 = vld [vmem:[%s0 + $0x12c0] sm:$0xff]
  %v619 = vld [vmem:[%s0 + $0x12c8] sm:$0xff]
  %v620 = vld [vmem:[%s0 + $0x12d0] sm:$0xff]
  %v621 = vld [vmem:[%s0 + $0x12d8] sm:$0xff]
  %v622 = vld [vmem:[%s0 + $0x12e0] sm:$0xff]
  %v623 = vld [vmem:[%s0 + $0x12e8] sm:$0xff]
  %v624 = vld [vmem:[%s0 + $0x12f0] sm:$0xff]
  %v625 = vld [vmem:[%s0 + $0x12f8] sm:$0xff]
  %v626 = vld [vmem:[%s0 + $0x1300] sm:$0xff]
  %v627 = vld [vmem:[%s0 + $0x1308] sm:$0xff]
  %v628 = vld [vmem:[%s0 + $0x1310] sm:$0xff]
  %v629 = vld [vmem:[%s0 + $0x1318] sm:$0xff]
  %v630 = vld [vmem:[%s0 + $0x1320] sm:$0xff]
  %v631 = vld [vmem:[%s0 + $0x1328] sm:$0xff]
  %v632 = vld [vmem:[%s0 + $0x1330] sm:$0xff]
  %v633 = vld [vmem:[%s0 + $0x1338] sm:$0xff]
  %v634 = vld [vmem:[%s0 + $0x1340] sm:$0xff]
  %v635 = vld [vmem:[%s0 + $0x1348] sm:$0xff]
  %v636 = vld [vmem:[%s0 + $0x1350] sm:$0xff]
  %v637 = vld [vmem:[%s0 + $0x1358] sm:$0xff]
  %v638 = vld [vmem:[%s0 + $0x1360] sm:$0xff]
  %v639 = vld [vmem:[%s0 + $0x1368] sm:$0xff]
  %v640 = vld [vmem:[%s0 + $0x1370] sm:$0xff]
  %v641 = vld [vmem:[%s0 + $0x1378] sm:$0xff]
  %v642 = vld [vmem:[%s0 + $0x1380] sm:$0xff]
  %v643 = vld [vmem:[%s0 + $0x1388] sm:$0xff]
  %v644 = vld [vmem:[%s0 + $0x1390] sm:$0xff]
  %v645 = vld [vmem:[%s0 + $0x1398] sm:$0xff]
  %v646 = vld [vmem:[%s0 + $0x13a0] sm:$0xff]
  %v647 = vld [vmem:[%s0 + $0x13a8] sm:$0xff]
  %v648 = vld [vmem:[%s0 + $0x13b0] sm:$0xff]
  %v649 = vld [vmem:[%s0 + $0x13b8] sm:$0xff]
  %v650 = vld [vmem:[%s0 + $0x13c0] sm:$0xff]
  %v651 = vld [vmem:[%s0 + $0x13c8] sm:$0xff]
  %v652 = vld [vmem:[%s0 + $0x13d0] sm:$0xff]
  %v653 = vld [vmem:[%s0 + $0x13d8] sm:$0xff]
  %v654 = vld [vmem:[%s0 + $0x13e0] sm:$0xff]
  %v655 = vld [vmem:[%s0 + $0x13e8] sm:$0xff]
  %v656 = vld [vmem:[%s0 + $0x13f0] sm:$0xff]
  %v657 = vld [vmem:[%s0 + $0x13f8] sm:$0xff]
  %v658 = vld [vmem:[%s0 + $0x1400] sm:$0xff]
  %v659 = vld [vmem:[%s0 + $0x1408] sm:$0xff]
  %v660 = vld [vmem:[%s0 + $0x1410] sm:$0xff]
  %v661 = vld [vmem:[%s0 + $0x1418] sm:$0xff]
  %v662 = vld [vmem:[%s0 + $0x1420] sm:$0xff]
  %v663 = vld [vmem:[%s0 + $0x1428] sm:$0xff]
  %v664 = vld [vmem:[%s0 + $0x1430] sm:$0xff]
  %v665 = vld [vmem:[%s0 + $0x1438] sm:$0xff]
  %v666 = vld [vmem:[%s0 + $0x1440] sm:$0xff]
  %v667 = vld [vmem:[%s0 + $0x1448] sm:$0xff]
  %vm668 = vcmask 130048
  %v670 = vsel %vm668, %v17, 0
  %672 = vmatprep.subr.mxu0 %v19
  %673 = vmatpush1.msra.mxu0 %v18
  %674 = vmatprep.subr.mxu0 %v32
  %675 = vmatpush1.msra.mxu0 %v31
  %676 = vmatprep.subr.mxu0 %v45
  %677 = vmatpush1.msra.mxu0 %v44
  %678 = vmatprep.subr.mxu0 %v58
  %679 = vmatpush1.msra.mxu0 %v57
  %680 = vmatprep.subr.mxu0 %v71
  %681 = vmatpush1.msra.mxu0 %v70
  %682 = vmatprep.subr.mxu0 %v84
  %683 = vmatpush1.msra.mxu0 %v83
  %684 = vmatprep.subr.mxu0 %v97
  %685 = vmatpush1.msra.mxu0 %v96
  %686 = vmatprep.subr.mxu0 %v110
  %687 = vmatpush1.msra.mxu0 %v109
  %688 = vmatprep.subr.mxu0 %v123
  %689 = vmatpush1.msra.mxu0 %v122
  %690 = vmatprep.subr.mxu0 %v136
  %691 = vmatpush1.msra.mxu0 %v135
  %692 = vmatprep.subr.mxu0 %v149
  %693 = vmatpush1.msra.mxu0 %v148
  %694 = vmatprep.subr.mxu0 %v162
  %695 = vmatpush1.msra.mxu0 %v161
  %696 = vmatprep.subr.mxu0 %v175
  %697 = vmatpush1.msra.mxu0 %v174
  %698 = vmatprep.subr.mxu0 %v188
  %699 = vmatpush1.msra.mxu0 %v187
  %700 = vmatprep.subr.mxu0 %v201
  %701 = vmatpush1.msra.mxu0 %v200
  %702 = vmatprep.subr.mxu0 %v214
  %703 = vmatpush1.msra.mxu0 %v213
  %704 = vmatprep.subr.mxu0 %v227
  %705 = vmatpush1.msra.mxu0 %v226
  %706 = vmatprep.subr.mxu0 %v240
  %707 = vmatpush1.msra.mxu0 %v239
  %708 = vmatprep.subr.mxu0 %v253
  %709 = vmatpush1.msra.mxu0 %v252
  %710 = vmatprep.subr.mxu0 %v266
  %711 = vmatpush1.msra.mxu0 %v265
  %712 = vmatprep.subr.mxu0 %v279
  %713 = vmatpush1.msra.mxu0 %v278
  %714 = vmatprep.subr.mxu0 %v292
  %715 = vmatpush1.msra.mxu0 %v291
  %716 = vmatprep.subr.mxu0 %v305
  %717 = vmatpush1.msra.mxu0 %v304
  %718 = vmatprep.subr.mxu0 %v318
  %719 = vmatpush1.msra.mxu0 %v317
  %720 = vmatprep.subr.mxu0 %v331
  %721 = vmatpush1.msra.mxu0 %v330
  %722 = vmatprep.subr.mxu0 %v344
  %723 = vmatpush1.msra.mxu0 %v343
  %724 = vmatprep.subr.mxu0 %v357
  %725 = vmatpush1.msra.mxu0 %v356
  %726 = vmatprep.subr.mxu0 %v370
  %727 = vmatpush1.msra.mxu0 %v369
  %728 = vmatprep.subr.mxu0 %v383
  %729 = vmatpush1.msra.mxu0 %v382
  %730 = vmatprep.subr.mxu0 %v396
  %731 = vmatpush1.msra.mxu0 %v395
  %732 = vmatprep.subr.mxu0 %v409
  %733 = vmatpush1.msra.mxu0 %v408
  %734 = vmatprep.subr.mxu0 %v422
  %735 = vmatpush1.msra.mxu0 %v421
  %736 = vmatprep.mubr.f32.mxu0 %v15
  %737 = vmatmul.mubr.f32.gmra.mrb[0].mxu0 %v14
  %v738 = vpop.f32.mrb[0].mxu0
  %v739 = vadd.f32 0.0, %v738
  %v740 = vpop.f32.mrb[0].mxu0
  %v741 = vadd.f32 0.0, %v740
  %742 = vdwg.mxu0
  %743 = vmatprep.subr.mxu0 %v435
  %744 = vmatpush1.msra.mxu0 %v434
  %745 = vmatprep.subr.mxu0 %v448
  %746 = vmatpush1.msra.mxu0 %v447
  %747 = vmatprep.subr.mxu0 %v461
  %748 = vmatpush1.msra.mxu0 %v460
  %749 = vmatprep.subr.mxu0 %v474
  %750 = vmatpush1.msra.mxu0 %v473
  %751 = vmatprep.subr.mxu0 %v487
  %752 = vmatpush1.msra.mxu0 %v486
  %753 = vmatprep.subr.mxu0 %v500
  %754 = vmatpush1.msra.mxu0 %v499
  %755 = vmatprep.subr.mxu0 %v513
  %756 = vmatpush1.msra.mxu0 %v512
  %757 = vmatprep.subr.mxu0 %v526
  %758 = vmatpush1.msra.mxu0 %v525
  %759 = vmatprep.subr.mxu0 %v539
  %760 = vmatpush1.msra.mxu0 %v538
  %761 = vmatprep.subr.mxu0 %v552
  %762 = vmatpush1.msra.mxu0 %v551
  %763 = vmatprep.subr.mxu0 %v565
  %764 = vmatpush1.msra.mxu0 %v564
  %765 = vmatprep.subr.mxu0 %v578
  %766 = vmatpush1.msra.mxu0 %v577
  %767 = vmatprep.subr.mxu0 %v591
  %768 = vmatpush1.msra.mxu0 %v590
  %769 = vmatprep.subr.mxu0 %v604
  %770 = vmatpush1.msra.mxu0 %v603
  %771 = vmatprep.subr.mxu0 %v617
  %772 = vmatpush1.msra.mxu0 %v616
  %773 = vmatprep.subr.mxu0 %v630
  %774 = vmatpush1.msra.mxu0 %v629
  %775 = vmatprep.subr.mxu0 %v643
  %776 = vmatpush1.msra.mxu0 %v642
  %777 = vmatprep.subr.mxu0 %v656
  %778 = vmatpush1.msra.mxu0 %v655
  %779 = vmatprep.subr.mxu0 0.0
  %780 = vmatpush1.msra.mxu0 0.0
  %781 = vmatprep.subr.mxu0 0.0
  %782 = vmatpush1.msra.mxu0 0.0
  %783 = vmatprep.subr.mxu0 0.0
  %784 = vmatpush1.msra.mxu0 0.0
  %785 = vmatprep.subr.mxu0 0.0
  %786 = vmatpush1.msra.mxu0 0.0
  %787 = vmatprep.subr.mxu0 0.0
  %788 = vmatpush1.msra.mxu0 0.0
  %789 = vmatprep.subr.mxu0 0.0
  %790 = vmatpush1.msra.mxu0 0.0
  %791 = vmatprep.subr.mxu0 0.0
  %792 = vmatpush1.msra.mxu0 0.0
  %793 = vmatprep.subr.mxu0 0.0
  %794 = vmatpush1.msra.mxu0 0.0
  %795 = vmatprep.subr.mxu0 0.0
  %796 = vmatpush1.msra.mxu0 0.0
  %797 = vmatprep.subr.mxu0 0.0
  %798 = vmatpush1.msra.mxu0 0.0
  %799 = vmatprep.subr.mxu0 0.0
  %800 = vmatpush1.msra.mxu0 0.0
  %801 = vmatprep.subr.mxu0 0.0
  %802 = vmatpush1.msra.mxu0 0.0
  %803 = vmatprep.subr.mxu0 0.0
  %804 = vmatpush1.msra.mxu0 0.0
  %805 = vmatprep.subr.mxu0 0.0
  %806 = vmatpush1.msra.mxu0 0.0
  %807 = vmatprep.mubr.f32.mxu0 %v670
  %808 = vmatmul.mubr.f32.gmra.mrb[0].mxu0 %v16
  %v809 = vpop.f32.mrb[0].mxu0
  %v810 = vadd.f32 %v739, %v809
  %v811 = vpop.f32.mrb[0].mxu0
  %v812 = vadd.f32 %v741, %v811
  %813 = vdwg.mxu0
  %814 = vmatprep.subr.mxu0 %v21
  %815 = vmatpush1.msra.mxu0 %v20
  %816 = vmatprep.subr.mxu0 %v34
  %817 = vmatpush1.msra.mxu0 %v33
  %818 = vmatprep.subr.mxu0 %v47
  %819 = vmatpush1.msra.mxu0 %v46
  %820 = vmatprep.subr.mxu0 %v60
  %821 = vmatpush1.msra.mxu0 %v59
  %822 = vmatprep.subr.mxu0 %v73
  %823 = vmatpush1.msra.mxu0 %v72
  %824 = vmatprep.subr.mxu0 %v86
  %825 = vmatpush1.msra.mxu0 %v85
  %826 = vmatprep.subr.mxu0 %v99
  %827 = vmatpush1.msra.mxu0 %v98
  %828 = vmatprep.subr.mxu0 %v112
  %829 = vmatpush1.msra.mxu0 %v111
  %830 = vmatprep.subr.mxu0 %v125
  %831 = vmatpush1.msra.mxu0 %v124
  %832 = vmatprep.subr.mxu0 %v138
  %833 = vmatpush1.msra.mxu0 %v137
  %834 = vmatprep.subr.mxu0 %v151
  %835 = vmatpush1.msra.mxu0 %v150
  %836 = vmatprep.subr.mxu0 %v164
  %837 = vmatpush1.msra.mxu0 %v163
  %838 = vmatprep.subr.mxu0 %v177
  %839 = vmatpush1.msra.mxu0 %v176
  %840 = vmatprep.subr.mxu0 %v190
  %841 = vmatpush1.msra.mxu0 %v189
  %842 = vmatprep.subr.mxu0 %v203
  %843 = vmatpush1.msra.mxu0 %v202
  %844 = vmatprep.subr.mxu0 %v216
  %845 = vmatpush1.msra.mxu0 %v215
  %846 = vmatprep.subr.mxu0 %v229
  %847 = vmatpush1.msra.mxu0 %v228
  %848 = vmatprep.subr.mxu0 %v242
  %849 = vmatpush1.msra.mxu0 %v241
  %850 = vmatprep.subr.mxu0 %v255
  %851 = vmatpush1.msra.mxu0 %v254
  %852 = vmatprep.subr.mxu0 %v268
  %853 = vmatpush1.msra.mxu0 %v267
  %854 = vmatprep.subr.mxu0 %v281
  %855 = vmatpush1.msra.mxu0 %v280
  %856 = vmatprep.subr.mxu0 %v294
  %857 = vmatpush1.msra.mxu0 %v293
  %858 = vmatprep.subr.mxu0 %v307
  %859 = vmatpush1.msra.mxu0 %v306
  %860 = vmatprep.subr.mxu0 %v320
  %861 = vmatpush1.msra.mxu0 %v319
  %862 = vmatprep.subr.mxu0 %v333
  %863 = vmatpush1.msra.mxu0 %v332
  %864 = vmatprep.subr.mxu0 %v346
  %865 = vmatpush1.msra.mxu0 %v345
  %866 = vmatprep.subr.mxu0 %v359
  %867 = vmatpush1.msra.mxu0 %v358
  %868 = vmatprep.subr.mxu0 %v372
  %869 = vmatpush1.msra.mxu0 %v371
  %870 = vmatprep.subr.mxu0 %v385
  %871 = vmatpush1.msra.mxu0 %v384
  %872 = vmatprep.subr.mxu0 %v398
  %873 = vmatpush1.msra.mxu0 %v397
  %874 = vmatprep.subr.mxu0 %v411
  %875 = vmatpush1.msra.mxu0 %v410
  %876 = vmatprep.subr.mxu0 %v424
  %877 = vmatpush1.msra.mxu0 %v423
  %878 = vmatprep.mubr.f32.mxu0 %v15
  %879 = vmatmul.mubr.f32.gmra.mrb[0].mxu0 %v14
  %v880 = vpop.f32.mrb[0].mxu0
  %v881 = vadd.f32 0.0, %v880
  %v882 = vpop.f32.mrb[0].mxu0
  %v883 = vadd.f32 0.0, %v882
  %884 = vdwg.mxu0
  %885 = vmatprep.subr.mxu0 %v437
  %886 = vmatpush1.msra.mxu0 %v436
  %887 = vmatprep.subr.mxu0 %v450
  %888 = vmatpush1.msra.mxu0 %v449
  %889 = vmatprep.subr.mxu0 %v463
  %890 = vmatpush1.msra.mxu0 %v462
  %891 = vmatprep.subr.mxu0 %v476
  %892 = vmatpush1.msra.mxu0 %v475
  %893 = vmatprep.subr.mxu0 %v489
  %894 = vmatpush1.msra.mxu0 %v488
  %895 = vmatprep.subr.mxu0 %v502
  %896 = vmatpush1.msra.mxu0 %v501
  %897 = vmatprep.subr.mxu0 %v515
  %898 = vmatpush1.msra.mxu0 %v514
  %899 = vmatprep.subr.mxu0 %v528
  %900 = vmatpush1.msra.mxu0 %v527
  %901 = vmatprep.subr.mxu0 %v541
  %902 = vmatpush1.msra.mxu0 %v540
  %903 = vmatprep.subr.mxu0 %v554
  %904 = vmatpush1.msra.mxu0 %v553
  %905 = vmatprep.subr.mxu0 %v567
  %906 = vmatpush1.msra.mxu0 %v566
  %907 = vmatprep.subr.mxu0 %v580
  %908 = vmatpush1.msra.mxu0 %v579
  %909 = vmatprep.subr.mxu0 %v593
  %910 = vmatpush1.msra.mxu0 %v592
  %911 = vmatprep.subr.mxu0 %v606
  %912 = vmatpush1.msra.mxu0 %v605
  %913 = vmatprep.subr.mxu0 %v619
  %914 = vmatpush1.msra.mxu0 %v618
  %915 = vmatprep.subr.mxu0 %v632
  %916 = vmatpush1.msra.mxu0 %v631
  %917 = vmatprep.subr.mxu0 %v645
  %918 = vmatpush1.msra.mxu0 %v644
  %919 = vmatprep.subr.mxu0 %v658
  %920 = vmatpush1.msra.mxu0 %v657
  %921 = vmatprep.subr.mxu0 0.0
  %922 = vmatpush1.msra.mxu0 0.0
  %923 = vmatprep.subr.mxu0 0.0
  %924 = vmatpush1.msra.mxu0 0.0
  %925 = vmatprep.subr.mxu0 0.0
  %926 = vmatpush1.msra.mxu0 0.0
  %927 = vmatprep.subr.mxu0 0.0
  %928 = vmatpush1.msra.mxu0 0.0
  %929 = vmatprep.subr.mxu0 0.0
  %930 = vmatpush1.msra.mxu0 0.0
  %931 = vmatprep.subr.mxu0 0.0
  %932 = vmatpush1.msra.mxu0 0.0
  %933 = vmatprep.subr.mxu0 0.0
  %934 = vmatpush1.msra.mxu0 0.0
  %935 = vmatprep.subr.mxu0 0.0
  %936 = vmatpush1.msra.mxu0 0.0
  %937 = vmatprep.subr.mxu0 0.0
  %938 = vmatpush1.msra.mxu0 0.0
  %939 = vmatprep.subr.mxu0 0.0
  %940 = vmatpush1.msra.mxu0 0.0
  %941 = vmatprep.subr.mxu0 0.0
  %942 = vmatpush1.msra.mxu0 0.0
  %943 = vmatprep.subr.mxu0 0.0
  %944 = vmatpush1.msra.mxu0 0.0
  %945 = vmatprep.subr.mxu0 0.0
  %946 = vmatpush1.msra.mxu0 0.0
  %947 = vmatprep.subr.mxu0 0.0
  %948 = vmatpush1.msra.mxu0 0.0
  %949 = vmatprep.mubr.f32.mxu0 %v670
  %950 = vmatmul.mubr.f32.gmra.mrb[0].mxu0 %v16
  %v951 = vpop.f32.mrb[0].mxu0
  %v952 = vadd.f32 %v881, %v951
  %v953 = vpop.f32.mrb[0].mxu0
  %v954 = vadd.f32 %v883, %v953
  %955 = vdwg.mxu0
  %956 = vmatprep.subr.mxu0 %v23
  %957 = vmatpush1.msra.mxu0 %v22
  %958 = vmatprep.subr.mxu0 %v36
  %959 = vmatpush1.msra.mxu0 %v35
  %960 = vmatprep.subr.mxu0 %v49
  %961 = vmatpush1.msra.mxu0 %v48
  %962 = vmatprep.subr.mxu0 %v62
  %963 = vmatpush1.msra.mxu0 %v61
  %964 = vmatprep.subr.mxu0 %v75
  %965 = vmatpush1.msra.mxu0 %v74
  %966 = vmatprep.subr.mxu0 %v88
  %967 = vmatpush1.msra.mxu0 %v87
  %968 = vmatprep.subr.mxu0 %v101
  %969 = vmatpush1.msra.mxu0 %v100
  %970 = vmatprep.subr.mxu0 %v114
  %971 = vmatpush1.msra.mxu0 %v113
  %972 = vmatprep.subr.mxu0 %v127
  %973 = vmatpush1.msra.mxu0 %v126
  %974 = vmatprep.subr.mxu0 %v140
  %975 = vmatpush1.msra.mxu0 %v139
  %976 = vmatprep.subr.mxu0 %v153
  %977 = vmatpush1.msra.mxu0 %v152
  %978 = vmatprep.subr.mxu0 %v166
  %979 = vmatpush1.msra.mxu0 %v165
  %980 = vmatprep.subr.mxu0 %v179
  %981 = vmatpush1.msra.mxu0 %v178
  %982 = vmatprep.subr.mxu0 %v192
  %983 = vmatpush1.msra.mxu0 %v191
  %984 = vmatprep.subr.mxu0 %v205
  %985 = vmatpush1.msra.mxu0 %v204
  %986 = vmatprep.subr.mxu0 %v218
  %987 = vmatpush1.msra.mxu0 %v217
  %988 = vmatprep.subr.mxu0 %v231
  %989 = vmatpush1.msra.mxu0 %v230
  %990 = vmatprep.subr.mxu0 %v244
  %991 = vmatpush1.msra.mxu0 %v243
  %992 = vmatprep.subr.mxu0 %v257
  %993 = vmatpush1.msra.mxu0 %v256
  %994 = vmatprep.subr.mxu0 %v270
  %995 = vmatpush1.msra.mxu0 %v269
  %996 = vmatprep.subr.mxu0 %v283
  %997 = vmatpush1.msra.mxu0 %v282
  %998 = vmatprep.subr.mxu0 %v296
  %999 = vmatpush1.msra.mxu0 %v295
  %1000 = vmatprep.subr.mxu0 %v309
  %1001 = vmatpush1.msra.mxu0 %v308
  %1002 = vmatprep.subr.mxu0 %v322
  %1003 = vmatpush1.msra.mxu0 %v321
  %1004 = vmatprep.subr.mxu0 %v335
  %1005 = vmatpush1.msra.mxu0 %v334
  %1006 = vmatprep.subr.mxu0 %v348
  %1007 = vmatpush1.msra.mxu0 %v347
  %1008 = vmatprep.subr.mxu0 %v361
  %1009 = vmatpush1.msra.mxu0 %v360
  %1010 = vmatprep.subr.mxu0 %v374
  %1011 = vmatpush1.msra.mxu0 %v373
  %1012 = vmatprep.subr.mxu0 %v387
  %1013 = vmatpush1.msra.mxu0 %v386
  %1014 = vmatprep.subr.mxu0 %v400
  %1015 = vmatpush1.msra.mxu0 %v399
  %1016 = vmatprep.subr.mxu0 %v413
  %1017 = vmatpush1.msra.mxu0 %v412
  %1018 = vmatprep.subr.mxu0 %v426
  %1019 = vmatpush1.msra.mxu0 %v425
  %1020 = vmatprep.mubr.f32.mxu0 %v15
  %1021 = vmatmul.mubr.f32.gmra.mrb[0].mxu0 %v14
  %v1022 = vpop.f32.mrb[0].mxu0
  %v1023 = vadd.f32 0.0, %v1022
  %v1024 = vpop.f32.mrb[0].mxu0
  %v1025 = vadd.f32 0.0, %v1024
  %1026 = vdwg.mxu0
  %1027 = vmatprep.subr.mxu0 %v439
  %1028 = vmatpush1.msra.mxu0 %v438
  %1029 = vmatprep.subr.mxu0 %v452
  %1030 = vmatpush1.msra.mxu0 %v451
  %1031 = vmatprep.subr.mxu0 %v465
  %1032 = vmatpush1.msra.mxu0 %v464
  %1033 = vmatprep.subr.mxu0 %v478
  %1034 = vmatpush1.msra.mxu0 %v477
  %1035 = vmatprep.subr.mxu0 %v491
  %1036 = vmatpush1.msra.mxu0 %v490
  %1037 = vmatprep.subr.mxu0 %v504
  %1038 = vmatpush1.msra.mxu0 %v503
  %1039 = vmatprep.subr.mxu0 %v517
  %1040 = vmatpush1.msra.mxu0 %v516
  %1041 = vmatprep.subr.mxu0 %v530
  %1042 = vmatpush1.msra.mxu0 %v529
  %1043 = vmatprep.subr.mxu0 %v543
  %1044 = vmatpush1.msra.mxu0 %v542
  %1045 = vmatprep.subr.mxu0 %v556
  %1046 = vmatpush1.msra.mxu0 %v555
  %1047 = vmatprep.subr.mxu0 %v569
  %1048 = vmatpush1.msra.mxu0 %v568
  %1049 = vmatprep.subr.mxu0 %v582
  %1050 = vmatpush1.msra.mxu0 %v581
  %1051 = vmatprep.subr.mxu0 %v595
  %1052 = vmatpush1.msra.mxu0 %v594
  %1053 = vmatprep.subr.mxu0 %v608
  %1054 = vmatpush1.msra.mxu0 %v607
  %1055 = vmatprep.subr.mxu0 %v621
  %1056 = vmatpush1.msra.mxu0 %v620
  %1057 = vmatprep.subr.mxu0 %v634
  %1058 = vmatpush1.msra.mxu0 %v633
  %1059 = vmatprep.subr.mxu0 %v647
  %1060 = vmatpush1.msra.mxu0 %v646
  %1061 = vmatprep.subr.mxu0 %v660
  %1062 = vmatpush1.msra.mxu0 %v659
  %1063 = vmatprep.subr.mxu0 0.0
  %1064 = vmatpush1.msra.mxu0 0.0
  %1065 = vmatprep.subr.mxu0 0.0
  %1066 = vmatpush1.msra.mxu0 0.0
  %1067 = vmatprep.subr.mxu0 0.0
  %1068 = vmatpush1.msra.mxu0 0.0
  %1069 = vmatprep.subr.mxu0 0.0
  %1070 = vmatpush1.msra.mxu0 0.0
  %1071 = vmatprep.subr.mxu0 0.0
  %1072 = vmatpush1.msra.mxu0 0.0
  %1073 = vmatprep.subr.mxu0 0.0
  %1074 = vmatpush1.msra.mxu0 0.0
  %1075 = vmatprep.subr.mxu0 0.0
  %1076 = vmatpush1.msra.mxu0 0.0
  %1077 = vmatprep.subr.mxu0 0.0
  %1078 = vmatpush1.msra.mxu0 0.0
  %1079 = vmatprep.subr.mxu0 0.0
  %1080 = vmatpush1.msra.mxu0 0.0
  %1081 = vmatprep.subr.mxu0 0.0
  %1082 = vmatpush1.msra.mxu0 0.0
  %1083 = vmatprep.subr.mxu0 0.0
  %1084 = vmatpush1.msra.mxu0 0.0
  %1085 = vmatprep.subr.mxu0 0.0
  %1086 = vmatpush1.msra.mxu0 0.0
  %1087 = vmatprep.subr.mxu0 0.0
  %1088 = vmatpush1.msra.mxu0 0.0
  %1089 = vmatprep.subr.mxu0 0.0
  %1090 = vmatpush1.msra.mxu0 0.0
  %1091 = vmatprep.mubr.f32.mxu0 %v670
  %1092 = vmatmul.mubr.f32.gmra.mrb[0].mxu0 %v16
  %v1093 = vpop.f32.mrb[0].mxu0
  %v1094 = vadd.f32 %v1023, %v1093
  %v1095 = vpop.f32.mrb[0].mxu0
  %v1096 = vadd.f32 %v1025, %v1095
  %1097 = vdwg.mxu0
  %1098 = vmatprep.subr.mxu0 %v25
  %1099 = vmatpush1.msra.mxu0 %v24
  %1100 = vmatprep.subr.mxu0 %v38
  %1101 = vmatpush1.msra.mxu0 %v37
  %1102 = vmatprep.subr.mxu0 %v51
  %1103 = vmatpush1.msra.mxu0 %v50
  %1104 = vmatprep.subr.mxu0 %v64
  %1105 = vmatpush1.msra.mxu0 %v63
  %1106 = vmatprep.subr.mxu0 %v77
  %1107 = vmatpush1.msra.mxu0 %v76
  %1108 = vmatprep.subr.mxu0 %v90
  %1109 = vmatpush1.msra.mxu0 %v89
  %1110 = vmatprep.subr.mxu0 %v103
  %1111 = vmatpush1.msra.mxu0 %v102
  %1112 = vmatprep.subr.mxu0 %v116
  %1113 = vmatpush1.msra.mxu0 %v115
  %1114 = vmatprep.subr.mxu0 %v129
  %1115 = vmatpush1.msra.mxu0 %v128
  %1116 = vmatprep.subr.mxu0 %v142
  %1117 = vmatpush1.msra.mxu0 %v141
  %1118 = vmatprep.subr.mxu0 %v155
  %1119 = vmatpush1.msra.mxu0 %v154
  %1120 = vmatprep.subr.mxu0 %v168
  %1121 = vmatpush1.msra.mxu0 %v167
  %1122 = vmatprep.subr.mxu0 %v181
  %1123 = vmatpush1.msra.mxu0 %v180
  %1124 = vmatprep.subr.mxu0 %v194
  %1125 = vmatpush1.msra.mxu0 %v193
  %1126 = vmatprep.subr.mxu0 %v207
  %1127 = vmatpush1.msra.mxu0 %v206
  %1128 = vmatprep.subr.mxu0 %v220
  %1129 = vmatpush1.msra.mxu0 %v219
  %1130 = vmatprep.subr.mxu0 %v233
  %1131 = vmatpush1.msra.mxu0 %v232
  %1132 = vmatprep.subr.mxu0 %v246
  %1133 = vmatpush1.msra.mxu0 %v245
  %1134 = vmatprep.subr.mxu0 %v259
  %1135 = vmatpush1.msra.mxu0 %v258
  %1136 = vmatprep.subr.mxu0 %v272
  %1137 = vmatpush1.msra.mxu0 %v271
  %1138 = vmatprep.subr.mxu0 %v285
  %1139 = vmatpush1.msra.mxu0 %v284
  %1140 = vmatprep.subr.mxu0 %v298
  %1141 = vmatpush1.msra.mxu0 %v297
  %1142 = vmatprep.subr.mxu0 %v311
  %1143 = vmatpush1.msra.mxu0 %v310
  %1144 = vmatprep.subr.mxu0 %v324
  %1145 = vmatpush1.msra.mxu0 %v323
  %1146 = vmatprep.subr.mxu0 %v337
  %1147 = vmatpush1.msra.mxu0 %v336
  %1148 = vmatprep.subr.mxu0 %v350
  %1149 = vmatpush1.msra.mxu0 %v349
  %1150 = vmatprep.subr.mxu0 %v363
  %1151 = vmatpush1.msra.mxu0 %v362
  %1152 = vmatprep.subr.mxu0 %v376
  %1153 = vmatpush1.msra.mxu0 %v375
  %1154 = vmatprep.subr.mxu0 %v389
  %1155 = vmatpush1.msra.mxu0 %v388
  %1156 = vmatprep.subr.mxu0 %v402
  %1157 = vmatpush1.msra.mxu0 %v401
  %1158 = vmatprep.subr.mxu0 %v415
  %1159 = vmatpush1.msra.mxu0 %v414
  %1160 = vmatprep.subr.mxu0 %v428
  %1161 = vmatpush1.msra.mxu0 %v427
  %1162 = vmatprep.mubr.f32.mxu0 %v15
  %1163 = vmatmul.mubr.f32.gmra.mrb[0].mxu0 %v14
  %v1164 = vpop.f32.mrb[0].mxu0
  %v1165 = vadd.f32 0.0, %v1164
  %v1166 = vpop.f32.mrb[0].mxu0
  %v1167 = vadd.f32 0.0, %v1166
  %1168 = vdwg.mxu0
  %1169 = vmatprep.subr.mxu0 %v441
  %1170 = vmatpush1.msra.mxu0 %v440
  %1171 = vmatprep.subr.mxu0 %v454
  %1172 = vmatpush1.msra.mxu0 %v453
  %1173 = vmatprep.subr.mxu0 %v467
  %1174 = vmatpush1.msra.mxu0 %v466
  %1175 = vmatprep.subr.mxu0 %v480
  %1176 = vmatpush1.msra.mxu0 %v479
  %1177 = vmatprep.subr.mxu0 %v493
  %1178 = vmatpush1.msra.mxu0 %v492
  %1179 = vmatprep.subr.mxu0 %v506
  %1180 = vmatpush1.msra.mxu0 %v505
  %1181 = vmatprep.subr.mxu0 %v519
  %1182 = vmatpush1.msra.mxu0 %v518
  %1183 = vmatprep.subr.mxu0 %v532
  %1184 = vmatpush1.msra.mxu0 %v531
  %1185 = vmatprep.subr.mxu0 %v545
  %1186 = vmatpush1.msra.mxu0 %v544
  %1187 = vmatprep.subr.mxu0 %v558
  %1188 = vmatpush1.msra.mxu0 %v557
  %1189 = vmatprep.subr.mxu0 %v571
  %1190 = vmatpush1.msra.mxu0 %v570
  %1191 = vmatprep.subr.mxu0 %v584
  %1192 = vmatpush1.msra.mxu0 %v583
  %1193 = vmatprep.subr.mxu0 %v597
  %1194 = vmatpush1.msra.mxu0 %v596
  %1195 = vmatprep.subr.mxu0 %v610
  %1196 = vmatpush1.msra.mxu0 %v609
  %1197 = vmatprep.subr.mxu0 %v623
  %1198 = vmatpush1.msra.mxu0 %v622
  %1199 = vmatprep.subr.mxu0 %v636
  %1200 = vmatpush1.msra.mxu0 %v635
  %1201 = vmatprep.subr.mxu0 %v649
  %1202 = vmatpush1.msra.mxu0 %v648
  %1203 = vmatprep.subr.mxu0 %v662
  %1204 = vmatpush1.msra.mxu0 %v661
  %1205 = vmatprep.subr.mxu0 0.0
  %1206 = vmatpush1.msra.mxu0 0.0
  %1207 = vmatprep.subr.mxu0 0.0
  %1208 = vmatpush1.msra.mxu0 0.0
  %1209 = vmatprep.subr.mxu0 0.0
  %1210 = vmatpush1.msra.mxu0 0.0
  %1211 = vmatprep.subr.mxu0 0.0
  %1212 = vmatpush1.msra.mxu0 0.0
  %1213 = vmatprep.subr.mxu0 0.0
  %1214 = vmatpush1.msra.mxu0 0.0
  %1215 = vmatprep.subr.mxu0 0.0
  %1216 = vmatpush1.msra.mxu0 0.0
  %1217 = vmatprep.subr.mxu0 0.0
  %1218 = vmatpush1.msra.mxu0 0.0
  %1219 = vmatprep.subr.mxu0 0.0
  %1220 = vmatpush1.msra.mxu0 0.0
  %1221 = vmatprep.subr.mxu0 0.0
  %1222 = vmatpush1.msra.mxu0 0.0
  %1223 = vmatprep.subr.mxu0 0.0
  %1224 = vmatpush1.msra.mxu0 0.0
  %1225 = vmatprep.subr.mxu0 0.0
  %1226 = vmatpush1.msra.mxu0 0.0
  %1227 = vmatprep.subr.mxu0 0.0
  %1228 = vmatpush1.msra.mxu0 0.0
  %1229 = vmatprep.subr.mxu0 0.0
  %1230 = vmatpush1.msra.mxu0 0.0
  %1231 = vmatprep.subr.mxu0 0.0
  %1232 = vmatpush1.msra.mxu0 0.0
  %1233 = vmatprep.mubr.f32.mxu0 %v670
  %1234 = vmatmul.mubr.f32.gmra.mrb[0].mxu0 %v16
  %v1235 = vpop.f32.mrb[0].mxu0
  %v1236 = vadd.f32 %v1165, %v1235
  %v1237 = vpop.f32.mrb[0].mxu0
  %v1238 = vadd.f32 %v1167, %v1237
  %1239 = vdwg.mxu0
  %1240 = vmatprep.subr.mxu0 %v27
  %1241 = vmatpush1.msra.mxu0 %v26
  %1242 = vmatprep.subr.mxu0 %v40
  %1243 = vmatpush1.msra.mxu0 %v39
  %1244 = vmatprep.subr.mxu0 %v53
  %1245 = vmatpush1.msra.mxu0 %v52
  %1246 = vmatprep.subr.mxu0 %v66
  %1247 = vmatpush1.msra.mxu0 %v65
  %1248 = vmatprep.subr.mxu0 %v79
  %1249 = vmatpush1.msra.mxu0 %v78
  %1250 = vmatprep.subr.mxu0 %v92
  %1251 = vmatpush1.msra.mxu0 %v91
  %1252 = vmatprep.subr.mxu0 %v105
  %1253 = vmatpush1.msra.mxu0 %v104
  %1254 = vmatprep.subr.mxu0 %v118
  %1255 = vmatpush1.msra.mxu0 %v117
  %1256 = vmatprep.subr.mxu0 %v131
  %1257 = vmatpush1.msra.mxu0 %v130
  %1258 = vmatprep.subr.mxu0 %v144
  %1259 = vmatpush1.msra.mxu0 %v143
  %1260 = vmatprep.subr.mxu0 %v157
  %1261 = vmatpush1.msra.mxu0 %v156
  %1262 = vmatprep.subr.mxu0 %v170
  %1263 = vmatpush1.msra.mxu0 %v169
  %1264 = vmatprep.subr.mxu0 %v183
  %1265 = vmatpush1.msra.mxu0 %v182
  %1266 = vmatprep.subr.mxu0 %v196
  %1267 = vmatpush1.msra.mxu0 %v195
  %1268 = vmatprep.subr.mxu0 %v209
  %1269 = vmatpush1.msra.mxu0 %v208
  %1270 = vmatprep.subr.mxu0 %v222
  %1271 = vmatpush1.msra.mxu0 %v221
  %1272 = vmatprep.subr.mxu0 %v235
  %1273 = vmatpush1.msra.mxu0 %v234
  %1274 = vmatprep.subr.mxu0 %v248
  %1275 = vmatpush1.msra.mxu0 %v247
  %1276 = vmatprep.subr.mxu0 %v261
  %1277 = vmatpush1.msra.mxu0 %v260
  %1278 = vmatprep.subr.mxu0 %v274
  %1279 = vmatpush1.msra.mxu0 %v273
  %1280 = vmatprep.subr.mxu0 %v287
  %1281 = vmatpush1.msra.mxu0 %v286
  %1282 = vmatprep.subr.mxu0 %v300
  %1283 = vmatpush1.msra.mxu0 %v299
  %1284 = vmatprep.subr.mxu0 %v313
  %1285 = vmatpush1.msra.mxu0 %v312
  %1286 = vmatprep.subr.mxu0 %v326
  %1287 = vmatpush1.msra.mxu0 %v325
  %1288 = vmatprep.subr.mxu0 %v339
  %1289 = vmatpush1.msra.mxu0 %v338
  %1290 = vmatprep.subr.mxu0 %v352
  %1291 = vmatpush1.msra.mxu0 %v351
  %1292 = vmatprep.subr.mxu0 %v365
  %1293 = vmatpush1.msra.mxu0 %v364
  %1294 = vmatprep.subr.mxu0 %v378
  %1295 = vmatpush1.msra.mxu0 %v377
  %1296 = vmatprep.subr.mxu0 %v391
  %1297 = vmatpush1.msra.mxu0 %v390
  %1298 = vmatprep.subr.mxu0 %v404
  %1299 = vmatpush1.msra.mxu0 %v403
  %1300 = vmatprep.subr.mxu0 %v417
  %1301 = vmatpush1.msra.mxu0 %v416
  %1302 = vmatprep.subr.mxu0 %v430
  %1303 = vmatpush1.msra.mxu0 %v429
  %1304 = vmatprep.mubr.f32.mxu0 %v15
  %1305 = vmatmul.mubr.f32.gmra.mrb[0].mxu0 %v14
  %v1306 = vpop.f32.mrb[0].mxu0
  %v1307 = vadd.f32 0.0, %v1306
  %v1308 = vpop.f32.mrb[0].mxu0
  %v1309 = vadd.f32 0.0, %v1308
  %1310 = vdwg.mxu0
  %1311 = vmatprep.subr.mxu0 %v443
  %1312 = vmatpush1.msra.mxu0 %v442
  %1313 = vmatprep.subr.mxu0 %v456
  %1314 = vmatpush1.msra.mxu0 %v455
  %1315 = vmatprep.subr.mxu0 %v469
  %1316 = vmatpush1.msra.mxu0 %v468
  %1317 = vmatprep.subr.mxu0 %v482
  %1318 = vmatpush1.msra.mxu0 %v481
  %1319 = vmatprep.subr.mxu0 %v495
  %1320 = vmatpush1.msra.mxu0 %v494
  %1321 = vmatprep.subr.mxu0 %v508
  %1322 = vmatpush1.msra.mxu0 %v507
  %1323 = vmatprep.subr.mxu0 %v521
  %1324 = vmatpush1.msra.mxu0 %v520
  %1325 = vmatprep.subr.mxu0 %v534
  %1326 = vmatpush1.msra.mxu0 %v533
  %1327 = vmatprep.subr.mxu0 %v547
  %1328 = vmatpush1.msra.mxu0 %v546
  %1329 = vmatprep.subr.mxu0 %v560
  %1330 = vmatpush1.msra.mxu0 %v559
  %1331 = vmatprep.subr.mxu0 %v573
  %1332 = vmatpush1.msra.mxu0 %v572
  %1333 = vmatprep.subr.mxu0 %v586
  %1334 = vmatpush1.msra.mxu0 %v585
  %1335 = vmatprep.subr.mxu0 %v599
  %1336 = vmatpush1.msra.mxu0 %v598
  %1337 = vmatprep.subr.mxu0 %v612
  %1338 = vmatpush1.msra.mxu0 %v611
  %1339 = vmatprep.subr.mxu0 %v625
  %1340 = vmatpush1.msra.mxu0 %v624
  %1341 = vmatprep.subr.mxu0 %v638
  %1342 = vmatpush1.msra.mxu0 %v637
  %1343 = vmatprep.subr.mxu0 %v651
  %1344 = vmatpush1.msra.mxu0 %v650
  %1345 = vmatprep.subr.mxu0 %v664
  %1346 = vmatpush1.msra.mxu0 %v663
  %1347 = vmatprep.subr.mxu0 0.0
  %1348 = vmatpush1.msra.mxu0 0.0
  %1349 = vmatprep.subr.mxu0 0.0
  %1350 = vmatpush1.msra.mxu0 0.0
  %1351 = vmatprep.subr.mxu0 0.0
  %1352 = vmatpush1.msra.mxu0 0.0
  %1353 = vmatprep.subr.mxu0 0.0
  %1354 = vmatpush1.msra.mxu0 0.0
  %1355 = vmatprep.subr.mxu0 0.0
  %1356 = vmatpush1.msra.mxu0 0.0
  %1357 = vmatprep.subr.mxu0 0.0
  %1358 = vmatpush1.msra.mxu0 0.0
  %1359 = vmatprep.subr.mxu0 0.0
  %1360 = vmatpush1.msra.mxu0 0.0
  %1361 = vmatprep.subr.mxu0 0.0
  %1362 = vmatpush1.msra.mxu0 0.0
  %1363 = vmatprep.subr.mxu0 0.0
  %1364 = vmatpush1.msra.mxu0 0.0
  %1365 = vmatprep.subr.mxu0 0.0
  %1366 = vmatpush1.msra.mxu0 0.0
  %1367 = vmatprep.subr.mxu0 0.0
  %1368 = vmatpush1.msra.mxu0 0.0
  %1369 = vmatprep.subr.mxu0 0.0
  %1370 = vmatpush1.msra.mxu0 0.0
  %1371 = vmatprep.subr.mxu0 0.0
  %1372 = vmatpush1.msra.mxu0 0.0
  %1373 = vmatprep.subr.mxu0 0.0
  %1374 = vmatpush1.msra.mxu0 0.0
  %1375 = vmatprep.mubr.f32.mxu0 %v670
  %1376 = vmatmul.mubr.f32.gmra.mrb[0].mxu0 %v16
  %v1377 = vpop.f32.mrb[0].mxu0
  %v1378 = vadd.f32 %v1307, %v1377
  %v1379 = vpop.f32.mrb[0].mxu0
  %v1380 = vadd.f32 %v1309, %v1379
  %1381 = vdwg.mxu0
  %1382 = vmatprep.subr.mxu0 %v29
  %1383 = vmatpush1.msra.mxu0 %v28
  %1384 = vmatprep.subr.mxu0 %v42
  %1385 = vmatpush1.msra.mxu0 %v41
  %1386 = vmatprep.subr.mxu0 %v55
  %1387 = vmatpush1.msra.mxu0 %v54
  %1388 = vmatprep.subr.mxu0 %v68
  %1389 = vmatpush1.msra.mxu0 %v67
  %1390 = vmatprep.subr.mxu0 %v81
  %1391 = vmatpush1.msra.mxu0 %v80
  %1392 = vmatprep.subr.mxu0 %v94
  %1393 = vmatpush1.msra.mxu0 %v93
  %1394 = vmatprep.subr.mxu0 %v107
  %1395 = vmatpush1.msra.mxu0 %v106
  %1396 = vmatprep.subr.mxu0 %v120
  %1397 = vmatpush1.msra.mxu0 %v119
  %1398 = vmatprep.subr.mxu0 %v133
  %1399 = vmatpush1.msra.mxu0 %v132
  %1400 = vmatprep.subr.mxu0 %v146
  %1401 = vmatpush1.msra.mxu0 %v145
  %1402 = vmatprep.subr.mxu0 %v159
  %1403 = vmatpush1.msra.mxu0 %v158
  %1404 = vmatprep.subr.mxu0 %v172
  %1405 = vmatpush1.msra.mxu0 %v171
  %1406 = vmatprep.subr.mxu0 %v185
  %1407 = vmatpush1.msra.mxu0 %v184
  %1408 = vmatprep.subr.mxu0 %v198
  %1409 = vmatpush1.msra.mxu0 %v197
  %1410 = vmatprep.subr.mxu0 %v211
  %1411 = vmatpush1.msra.mxu0 %v210
  %1412 = vmatprep.subr.mxu0 %v224
  %1413 = vmatpush1.msra.mxu0 %v223
  %1414 = vmatprep.subr.mxu0 %v237
  %1415 = vmatpush1.msra.mxu0 %v236
  %1416 = vmatprep.subr.mxu0 %v250
  %1417 = vmatpush1.msra.mxu0 %v249
  %1418 = vmatprep.subr.mxu0 %v263
  %1419 = vmatpush1.msra.mxu0 %v262
  %1420 = vmatprep.subr.mxu0 %v276
  %1421 = vmatpush1.msra.mxu0 %v275
  %1422 = vmatprep.subr.mxu0 %v289
  %1423 = vmatpush1.msra.mxu0 %v288
  %1424 = vmatprep.subr.mxu0 %v302
  %1425 = vmatpush1.msra.mxu0 %v301
  %1426 = vmatprep.subr.mxu0 %v315
  %1427 = vmatpush1.msra.mxu0 %v314
  %1428 = vmatprep.subr.mxu0 %v328
  %1429 = vmatpush1.msra.mxu0 %v327
  %1430 = vmatprep.subr.mxu0 %v341
  %1431 = vmatpush1.msra.mxu0 %v340
  %1432 = vmatprep.subr.mxu0 %v354
  %1433 = vmatpush1.msra.mxu0 %v353
  %1434 = vmatprep.subr.mxu0 %v367
  %1435 = vmatpush1.msra.mxu0 %v366
  %1436 = vmatprep.subr.mxu0 %v380
  %1437 = vmatpush1.msra.mxu0 %v379
  %1438 = vmatprep.subr.mxu0 %v393
  %1439 = vmatpush1.msra.mxu0 %v392
  %1440 = vmatprep.subr.mxu0 %v406
  %1441 = vmatpush1.msra.mxu0 %v405
  %1442 = vmatprep.subr.mxu0 %v419
  %1443 = vmatpush1.msra.mxu0 %v418
  %1444 = vmatprep.subr.mxu0 %v432
  %1445 = vmatpush1.msra.mxu0 %v431
  %1446 = vmatprep.mubr.f32.mxu0 %v15
  %1447 = vmatmul.mubr.f32.gmra.mrb[0].mxu0 %v14
  %v1448 = vpop.f32.mrb[0].mxu0
  %v1449 = vadd.f32 0.0, %v1448
  %v1450 = vpop.f32.mrb[0].mxu0
  %v1451 = vadd.f32 0.0, %v1450
  %1452 = vdwg.mxu0
  %1453 = vmatprep.subr.mxu0 %v445
  %1454 = vmatpush1.msra.mxu0 %v444
  %1455 = vmatprep.subr.mxu0 %v458
  %1456 = vmatpush1.msra.mxu0 %v457
  %1457 = vmatprep.subr.mxu0 %v471
  %1458 = vmatpush1.msra.mxu0 %v470
  %1459 = vmatprep.subr.mxu0 %v484
  %1460 = vmatpush1.msra.mxu0 %v483
  %1461 = vmatprep.subr.mxu0 %v497
  %1462 = vmatpush1.msra.mxu0 %v496
  %1463 = vmatprep.subr.mxu0 %v510
  %1464 = vmatpush1.msra.mxu0 %v509
  %1465 = vmatprep.subr.mxu0 %v523
  %1466 = vmatpush1.msra.mxu0 %v522
  %1467 = vmatprep.subr.mxu0 %v536
  %1468 = vmatpush1.msra.mxu0 %v535
  %1469 = vmatprep.subr.mxu0 %v549
  %1470 = vmatpush1.msra.mxu0 %v548
  %1471 = vmatprep.subr.mxu0 %v562
  %1472 = vmatpush1.msra.mxu0 %v561
  %1473 = vmatprep.subr.mxu0 %v575
  %1474 = vmatpush1.msra.mxu0 %v574
  %1475 = vmatprep.subr.mxu0 %v588
  %1476 = vmatpush1.msra.mxu0 %v587
  %1477 = vmatprep.subr.mxu0 %v601
  %1478 = vmatpush1.msra.mxu0 %v600
  %1479 = vmatprep.subr.mxu0 %v614
  %1480 = vmatpush1.msra.mxu0 %v613
  %1481 = vmatprep.subr.mxu0 %v627
  %1482 = vmatpush1.msra.mxu0 %v626
  %1483 = vmatprep.subr.mxu0 %v640
  %1484 = vmatpush1.msra.mxu0 %v639
  %1485 = vmatprep.subr.mxu0 %v653
  %1486 = vmatpush1.msra.mxu0 %v652
  %1487 = vmatprep.subr.mxu0 %v666
  %1488 = vmatpush1.msra.mxu0 %v665
  %1489 = vmatprep.subr.mxu0 0.0
  %1490 = vmatpush1.msra.mxu0 0.0
  %1491 = vmatprep.subr.mxu0 0.0
  %1492 = vmatpush1.msra.mxu0 0.0
  %1493 = vmatprep.subr.mxu0 0.0
  %1494 = vmatpush1.msra.mxu0 0.0
  %1495 = vmatprep.subr.mxu0 0.0
  %1496 = vmatpush1.msra.mxu0 0.0
  %1497 = vmatprep.subr.mxu0 0.0
  %1498 = vmatpush1.msra.mxu0 0.0
  %1499 = vmatprep.subr.mxu0 0.0
  %1500 = vmatpush1.msra.mxu0 0.0
  %1501 = vmatprep.subr.mxu0 0.0
  %1502 = vmatpush1.msra.mxu0 0.0
  %1503 = vmatprep.subr.mxu0 0.0
  %1504 = vmatpush1.msra.mxu0 0.0
  %1505 = vmatprep.subr.mxu0 0.0
  %1506 = vmatpush1.msra.mxu0 0.0
  %1507 = vmatprep.subr.mxu0 0.0
  %1508 = vmatpush1.msra.mxu0 0.0
  %1509 = vmatprep.subr.mxu0 0.0
  %1510 = vmatpush1.msra.mxu0 0.0
  %1511 = vmatprep.subr.mxu0 0.0
  %1512 = vmatpush1.msra.mxu0 0.0
  %1513 = vmatprep.subr.mxu0 0.0
  %1514 = vmatpush1.msra.mxu0 0.0
  %1515 = vmatprep.subr.mxu0 0.0
  %1516 = vmatpush1.msra.mxu0 0.0
  %1517 = vmatprep.mubr.f32.mxu0 %v670
  %1518 = vmatmul.mubr.f32.gmra.mrb[0].mxu0 %v16
  %v1519 = vpop.f32.mrb[0].mxu0
  %v1520 = vadd.f32 %v1449, %v1519
  %v1521 = vpop.f32.mrb[0].mxu0
  %v1522 = vadd.f32 %v1451, %v1521
  %1523 = vdwg.mxu0
  %1524 = vmatprep.subr.mxu0 0.0
  %1525 = vmatpush1.msra.mxu0 %v30
  %1526 = vmatprep.subr.mxu0 0.0
  %1527 = vmatpush1.msra.mxu0 %v43
  %1528 = vmatprep.subr.mxu0 0.0
  %1529 = vmatpush1.msra.mxu0 %v56
  %1530 = vmatprep.subr.mxu0 0.0
  %1531 = vmatpush1.msra.mxu0 %v69
  %1532 = vmatprep.subr.mxu0 0.0
  %1533 = vmatpush1.msra.mxu0 %v82
  %1534 = vmatprep.subr.mxu0 0.0
  %1535 = vmatpush1.msra.mxu0 %v95
  %1536 = vmatprep.subr.mxu0 0.0
  %1537 = vmatpush1.msra.mxu0 %v108
  %1538 = vmatprep.subr.mxu0 0.0
  %1539 = vmatpush1.msra.mxu0 %v121
  %1540 = vmatprep.subr.mxu0 0.0
  %1541 = vmatpush1.msra.mxu0 %v134
  %1542 = vmatprep.subr.mxu0 0.0
  %1543 = vmatpush1.msra.mxu0 %v147
  %1544 = vmatprep.subr.mxu0 0.0
  %1545 = vmatpush1.msra.mxu0 %v160
  %1546 = vmatprep.subr.mxu0 0.0
  %1547 = vmatpush1.msra.mxu0 %v173
  %1548 = vmatprep.subr.mxu0 0.0
  %1549 = vmatpush1.msra.mxu0 %v186
  %1550 = vmatprep.subr.mxu0 0.0
  %1551 = vmatpush1.msra.mxu0 %v199
  %1552 = vmatprep.subr.mxu0 0.0
  %1553 = vmatpush1.msra.mxu0 %v212
  %1554 = vmatprep.subr.mxu0 0.0
  %1555 = vmatpush1.msra.mxu0 %v225
  %1556 = vmatprep.subr.mxu0 0.0
  %1557 = vmatpush1.msra.mxu0 %v238
  %1558 = vmatprep.subr.mxu0 0.0
  %1559 = vmatpush1.msra.mxu0 %v251
  %1560 = vmatprep.subr.mxu0 0.0
  %1561 = vmatpush1.msra.mxu0 %v264
  %1562 = vmatprep.subr.mxu0 0.0
  %1563 = vmatpush1.msra.mxu0 %v277
  %1564 = vmatprep.subr.mxu0 0.0
  %1565 = vmatpush1.msra.mxu0 %v290
  %1566 = vmatprep.subr.mxu0 0.0
  %1567 = vmatpush1.msra.mxu0 %v303
  %1568 = vmatprep.subr.mxu0 0.0
  %1569 = vmatpush1.msra.mxu0 %v316
  %1570 = vmatprep.subr.mxu0 0.0
  %1571 = vmatpush1.msra.mxu0 %v329
  %1572 = vmatprep.subr.mxu0 0.0
  %1573 = vmatpush1.msra.mxu0 %v342
  %1574 = vmatprep.subr.mxu0 0.0
  %1575 = vmatpush1.msra.mxu0 %v355
  %1576 = vmatprep.subr.mxu0 0.0
  %1577 = vmatpush1.msra.mxu0 %v368
  %1578 = vmatprep.subr.mxu0 0.0
  %1579 = vmatpush1.msra.mxu0 %v381
  %1580 = vmatprep.subr.mxu0 0.0
  %1581 = vmatpush1.msra.mxu0 %v394
  %1582 = vmatprep.subr.mxu0 0.0
  %1583 = vmatpush1.msra.mxu0 %v407
  %1584 = vmatprep.subr.mxu0 0.0
  %1585 = vmatpush1.msra.mxu0 %v420
  %1586 = vmatprep.subr.mxu0 0.0
  %1587 = vmatpush1.msra.mxu0 %v433
  %1588 = vmatprep.mubr.f32.mxu0 %v15
  %1589 = vmatmul.mubr.f32.gmra.mrb[0].mxu0 %v14
  %v1590 = vpop.f32.mrb[0].mxu0
  %v1591 = vadd.f32 0.0, %v1590
  %v1592 = vpop.f32.mrb[0].mxu0
  %1593 = vdwg.mxu0
  %1594 = vmatprep.subr.mxu0 0.0
  %1595 = vmatpush1.msra.mxu0 %v446
  %1596 = vmatprep.subr.mxu0 0.0
  %1597 = vmatpush1.msra.mxu0 %v459
  %1598 = vmatprep.subr.mxu0 0.0
  %1599 = vmatpush1.msra.mxu0 %v472
  %1600 = vmatprep.subr.mxu0 0.0
  %1601 = vmatpush1.msra.mxu0 %v485
  %1602 = vmatprep.subr.mxu0 0.0
  %1603 = vmatpush1.msra.mxu0 %v498
  %1604 = vmatprep.subr.mxu0 0.0
  %1605 = vmatpush1.msra.mxu0 %v511
  %1606 = vmatprep.subr.mxu0 0.0
  %1607 = vmatpush1.msra.mxu0 %v524
  %1608 = vmatprep.subr.mxu0 0.0
  %1609 = vmatpush1.msra.mxu0 %v537
  %1610 = vmatprep.subr.mxu0 0.0
  %1611 = vmatpush1.msra.mxu0 %v550
  %1612 = vmatprep.subr.mxu0 0.0
  %1613 = vmatpush1.msra.mxu0 %v563
  %1614 = vmatprep.subr.mxu0 0.0
  %1615 = vmatpush1.msra.mxu0 %v576
  %1616 = vmatprep.subr.mxu0 0.0
  %1617 = vmatpush1.msra.mxu0 %v589
  %1618 = vmatprep.subr.mxu0 0.0
  %1619 = vmatpush1.msra.mxu0 %v602
  %1620 = vmatprep.subr.mxu0 0.0
  %1621 = vmatpush1.msra.mxu0 %v615
  %1622 = vmatprep.subr.mxu0 0.0
  %1623 = vmatpush1.msra.mxu0 %v628
  %1624 = vmatprep.subr.mxu0 0.0
  %1625 = vmatpush1.msra.mxu0 %v641
  %1626 = vmatprep.subr.mxu0 0.0
  %1627 = vmatpush1.msra.mxu0 %v654
  %1628 = vmatprep.subr.mxu0 0.0
  %1629 = vmatpush1.msra.mxu0 %v667
  %1630 = vmatprep.subr.mxu0 0.0
  %1631 = vmatpush1.msra.mxu0 0.0
  %1632 = vmatprep.subr.mxu0 0.0
  %1633 = vmatpush1.msra.mxu0 0.0
  %1634 = vmatprep.subr.mxu0 0.0
  %1635 = vmatpush1.msra.mxu0 0.0
  %1636 = vmatprep.subr.mxu0 0.0
  %1637 = vmatpush1.msra.mxu0 0.0
  %1638 = vmatprep.subr.mxu0 0.0
  %1639 = vmatpush1.msra.mxu0 0.0
  %1640 = vmatprep.subr.mxu0 0.0
  %1641 = vmatpush1.msra.mxu0 0.0
  %1642 = vmatprep.subr.mxu0 0.0
  %1643 = vmatpush1.msra.mxu0 0.0
  %1644 = vmatprep.subr.mxu0 0.0
  %1645 = vmatpush1.msra.mxu0 0.0
  %1646 = vmatprep.subr.mxu0 0.0
  %1647 = vmatpush1.msra.mxu0 0.0
  %1648 = vmatprep.subr.mxu0 0.0
  %1649 = vmatpush1.msra.mxu0 0.0
  %1650 = vmatprep.subr.mxu0 0.0
  %1651 = vmatpush1.msra.mxu0 0.0
  %1652 = vmatprep.subr.mxu0 0.0
  %1653 = vmatpush1.msra.mxu0 0.0
  %1654 = vmatprep.subr.mxu0 0.0
  %1655 = vmatpush1.msra.mxu0 0.0
  %1656 = vmatprep.subr.mxu0 0.0
  %1657 = vmatpush1.msra.mxu0 0.0
  %1658 = vmatprep.mubr.f32.mxu0 %v670
  %1659 = vmatmul.mubr.f32.gmra.mrb[0].mxu0 %v16
  %v1660 = vpop.f32.mrb[0].mxu0
  %v1661 = vadd.f32 %v1591, %v1660
  %v1662 = vpop.f32.mrb[0].mxu0
  %1663 = vdwg.mxu0
  %v1664 = vadd.f32 %v810, %v812
  %v1665 = vadd.f32 %v1664, %v952
  %v1666 = vadd.f32 %v1665, %v954
  %v1667 = vadd.f32 %v1666, %v1094
  %v1668 = vadd.f32 %v1667, %v1096
  %v1669 = vadd.f32 %v1668, %v1236
  %v1670 = vadd.f32 %v1669, %v1238
  %v1671 = vadd.f32 %v1670, %v1378
  %v1672 = vadd.f32 %v1671, %v1380
  %v1673 = vadd.f32 %v1672, %v1520
  %v1674 = vadd.f32 %v1673, %v1522
  %vm1675 = vcmask 261120
  %v1676 = vsel %vm1675, %v1661, 0.0
  %v1677 = vadd.f32 %v1674, %v1676
  %1678 = vadd.xlane.f32.xlu0 %v1677
  %v1679 = vpop.xlane.xlu0 %1678
  %v1680 = vmul.f32 %v810, %v810
  %v1681 = vmul.f32 %v812, %v812
  %v1682 = vmul.f32 %v952, %v952
  %v1683 = vmul.f32 %v954, %v954
  %v1684 = vmul.f32 %v1094, %v1094
  %v1685 = vmul.f32 %v1096, %v1096
  %v1686 = vmul.f32 %v1236, %v1236
  %v1687 = vmul.f32 %v1238, %v1238
  %v1688 = vmul.f32 %v1378, %v1378
  %v1689 = vmul.f32 %v1380, %v1380
  %v1690 = vmul.f32 %v1520, %v1520
  %v1691 = vmul.f32 %v1522, %v1522
  %v1692 = vmul.f32 %v1661, %v1661
  %v1693 = vadd.f32 %v1680, %v1681
  %v1694 = vadd.f32 %v1693, %v1682
  %v1695 = vadd.f32 %v1694, %v1683
  %v1696 = vadd.f32 %v1695, %v1684
  %v1697 = vadd.f32 %v1696, %v1685
  %v1698 = vadd.f32 %v1697, %v1686
  %v1699 = vadd.f32 %v1698, %v1687
  %v1700 = vadd.f32 %v1699, %v1688
  %v1701 = vadd.f32 %v1700, %v1689
  %v1702 = vadd.f32 %v1701, %v1690
  %v1703 = vadd.f32 %v1702, %v1691
  %v1704 = vsel %vm1675, %v1692, 0.0
  %v1705 = vadd.f32 %v1703, %v1704
  %1706 = vadd.xlane.f32.xlu0 %v1705
  %v1707 = vpop.xlane.xlu0 %1706
  %v1708 = vmul.f32 %v1679, 0.0006377551
  %v1709 = vmul.f32 %v1707, 0.0006377551
  %v1710 = vmul.f32 %v1708, %v1708
  %v1711 = vsub.f32 %v1709, %v1710
  %v1712 = vld [vmem:[%s2] sm:$0xff]
  %v1713 = vadd.f32 %v1711, 1e-05
  %v1714 = vrsqrt.pop %v1713
  %v1715 = vmul.f32 %v1712, %v1714
  %v1716 = vmul.f32 %v1708, %v1715
  %1718 = vrot.lane.b32.xlu0 %v1716, 1
  %v1719 = vpop.permute.xlu0 %1718
  %v1721 = vsub.f32 %v1712, %v1719
  %1723 = vset.pattern.permute.xlu0 0
  %1724 = vperm.xlu0 %1723, %v1715
  %v1725 = vpop.permute.xlu0 %1724
  %v1727 = vmul.f32 %v810, %v1725
  %v1728 = vmul.f32 %v812, %v1725
  %v1729 = vmul.f32 %v952, %v1725
  %v1730 = vmul.f32 %v954, %v1725
  %v1731 = vmul.f32 %v1094, %v1725
  %v1732 = vmul.f32 %v1096, %v1725
  %v1733 = vmul.f32 %v1236, %v1725
  %v1734 = vmul.f32 %v1238, %v1725
  %v1735 = vmul.f32 %v1378, %v1725
  %v1736 = vmul.f32 %v1380, %v1725
  %v1737 = vmul.f32 %v1520, %v1725
  %v1738 = vmul.f32 %v1522, %v1725
  %v1739 = vmul.f32 %v1661, %v1725
  %1741 = vset.pattern.permute.xlu0 1
  %1742 = vperm.xlu0 %1741, %v1721
  %v1743 = vpop.permute.xlu0 %1742
  %v1745 = vadd.f32 %v1727, %v1743
  %v1746 = vadd.f32 %v1728, %v1743
  %v1747 = vadd.f32 %v1729, %v1743
  %v1748 = vadd.f32 %v1730, %v1743
  %v1749 = vadd.f32 %v1731, %v1743
  %v1750 = vadd.f32 %v1732, %v1743
  %v1751 = vadd.f32 %v1733, %v1743
  %v1752 = vadd.f32 %v1734, %v1743
  %v1753 = vadd.f32 %v1735, %v1743
  %v1754 = vadd.f32 %v1736, %v1743
  %v1755 = vadd.f32 %v1737, %v1743
  %v1756 = vadd.f32 %v1738, %v1743
  %v1757 = vadd.f32 %v1739, %v1743
  %vm1758 = vcmp.ge.f32.partialorder %v1745, 0.0
  %vm1759 = vcmp.ge.f32.partialorder %v1746, 0.0
  %vm1760 = vcmp.ge.f32.partialorder %v1747, 0.0
  %vm1761 = vcmp.ge.f32.partialorder %v1748, 0.0
  %vm1762 = vcmp.ge.f32.partialorder %v1749, 0.0
  %vm1763 = vcmp.ge.f32.partialorder %v1750, 0.0
  %vm1764 = vcmp.ge.f32.partialorder %v1751, 0.0
  %vm1765 = vcmp.ge.f32.partialorder %v1752, 0.0
  %vm1766 = vcmp.ge.f32.partialorder %v1753, 0.0
  %vm1767 = vcmp.ge.f32.partialorder %v1754, 0.0
  %vm1768 = vcmp.ge.f32.partialorder %v1755, 0.0
  %vm1769 = vcmp.ge.f32.partialorder %v1756, 0.0
  %vm1770 = vcmp.ge.f32.partialorder %v1757, 0.0
  %1772 = vset.pattern.permute.xlu0 2
  %1773 = vperm.xlu0 %1772, %v1712
  %v1774 = vpop.permute.xlu0 %1773
  %v1776 = vmul.f32 %v1774, %v1745
  %v1777 = vmul.f32 %v1774, %v1746
  %v1778 = vmul.f32 %v1774, %v1747
  %v1779 = vmul.f32 %v1774, %v1748
  %v1780 = vmul.f32 %v1774, %v1749
  %v1781 = vmul.f32 %v1774, %v1750
  %v1782 = vmul.f32 %v1774, %v1751
  %v1783 = vmul.f32 %v1774, %v1752
  %v1784 = vmul.f32 %v1774, %v1753
  %v1785 = vmul.f32 %v1774, %v1754
  %v1786 = vmul.f32 %v1774, %v1755
  %v1787 = vmul.f32 %v1774, %v1756
  %v1788 = vmul.f32 %v1774, %v1757
  %v1789 = vsel %vm1758, %v1745, %v1776
  %v1790 = vsel %vm1759, %v1746, %v1777
  %v1791 = vsel %vm1760, %v1747, %v1778
  %v1792 = vsel %vm1761, %v1748, %v1779
  %v1793 = vsel %vm1762, %v1749, %v1780
  %v1794 = vsel %vm1763, %v1750, %v1781
  %v1795 = vsel %vm1764, %v1751, %v1782
  %v1796 = vsel %vm1765, %v1752, %v1783
  %v1797 = vsel %vm1766, %v1753, %v1784
  %v1798 = vsel %vm1767, %v1754, %v1785
  %v1799 = vsel %vm1768, %v1755, %v1786
  %v1800 = vsel %vm1769, %v1756, %v1787
  %v1801 = vsel %vm1770, %v1757, %v1788
  %1802 = vst [vmem:[%s3] sm:$0xff] %v1789
  %1803 = vst [vmem:[%s3 + $0x8] sm:$0xff] %v1790
  %1804 = vst [vmem:[%s3 + $0x10] sm:$0xff] %v1791
  %1805 = vst [vmem:[%s3 + $0x18] sm:$0xff] %v1792
  %1806 = vst [vmem:[%s3 + $0x20] sm:$0xff] %v1793
  %1807 = vst [vmem:[%s3 + $0x28] sm:$0xff] %v1794
  %1808 = vst [vmem:[%s3 + $0x30] sm:$0xff] %v1795
  %1809 = vst [vmem:[%s3 + $0x38] sm:$0xff] %v1796
  %1810 = vst [vmem:[%s3 + $0x40] sm:$0xff] %v1797
  %1811 = vst [vmem:[%s3 + $0x48] sm:$0xff] %v1798
  %1812 = vst [vmem:[%s3 + $0x50] sm:$0xff] %v1799
  %1813 = vst [vmem:[%s3 + $0x58] sm:$0xff] %v1800
  %1814 = vst.msk [vmem:[%s3 + $0x60] sm:$0xff] %vm1675, %v1801
  // Predicated region
  $region14: #{vae_conv_forward.21} parent=0 // pred_check
    _
  $region15: #{vae_conv_forward.21} parent=0 // pred_check_branch
    %1816 = sbr.rel (0) target = $region17
  $region16: #{vae_conv_forward.21} parent=0 // pred_region
    _
  $region17: #{vae_conv_forward.21} parent=0 // pred_fallthru
    _
  // Predicated region
  $region18: #{vae_conv_forward.21} parent=0 // pred_check
    _
  $region19: #{vae_conv_forward.21} parent=0 // pred_check_branch
    %1818 = sbr.rel (0) target = $region21
  $region20: #{vae_conv_forward.21} parent=0 // pred_region
    _
  $region21: #{vae_conv_forward.21} parent=0 // pred_fallthru
    _

// kernel: vae_conv_forward.22
$region0: #{vae_conv_forward.22}
  #allocation0 [shape = 'u32[]', space=smem, size = 0x4, offset = 0x4, fixed_abs, tag = 'smem constant byte address 0x4 - core index']
  #allocation1 [shape = 'u32[144,128]{1,0:T(1,128)}', space=vmem, size = 0x12000, scoped, tag = 'internal scratch']
  %s0 = inlined_call_operand.vmem [shape: f32[200,1568], index: 0, kind: input, shape index: {}]
  %s1 = inlined_call_operand.vmem [shape: f32[8,200], index: 1, kind: input, shape index: {}]
  %s2 = inlined_call_operand.vmem [shape: f32[8,3], index: 2, kind: input, shape index: {}]
  %s3 = inlined_call_operand.vmem [shape: f32[8,1568], index: 3, kind: output, shape index: {}]
  %s4 = sld [smem:[#allocation0]]
  $region22: #{vae_conv_forward.22} parent=0
    _
  %s6 = ssub.s32 1, %s4
  %s7 = scalar_select 0, %s6, %s4
  // Predicated region
  $region2: #{vae_conv_forward.22} parent=0 // pred_check
    _
  $region3: #{vae_conv_forward.22} parent=0 // pred_check_branch
    %9 = sbr.rel (0) target = $region5
  $region4: #{vae_conv_forward.22} parent=0 // pred_region
    _
  $region5: #{vae_conv_forward.22} parent=0 // pred_fallthru
    _
  // Predicated region
  $region6: #{vae_conv_forward.22} parent=0 // pred_check
    _
  $region7: #{vae_conv_forward.22} parent=0 // pred_check_branch
    %11 = sbr.rel (0) target = $region9
  $region8: #{vae_conv_forward.22} parent=0 // pred_region
    _
  $region9: #{vae_conv_forward.22} parent=0 // pred_fallthru
    _
  // Predicated region
  $region10: #{vae_conv_forward.22} parent=0 // pred_check
    _
  $region11: #{vae_conv_forward.22} parent=0 // pred_check_branch
    %13 = sbr.rel (0) target = $region13
  $region12: #{vae_conv_forward.22} parent=0 // pred_region
    _
  $region13: #{vae_conv_forward.22} parent=0 // pred_fallthru
    _
  %v14 = vld [vmem:[%s1] sm:$0xff]
  %v15 = vld [vmem:[%s1 + $0x8] sm:$0xff]
  %v16 = vld [vmem:[%s0] sm:$0xff]
  %v17 = vld [vmem:[%s0 + $0x8] sm:$0xff]
  %v18 = vld [vmem:[%s0 + $0x10] sm:$0xff]
  %v19 = vld [vmem:[%s0 + $0x18] sm:$0xff]
  %v20 = vld [vmem:[%s0 + $0x20] sm:$0xff]
  %v21 = vld [vmem:[%s0 + $0x28] sm:$0xff]
  %v22 = vld [vmem:[%s0 + $0x30] sm:$0xff]
  %v23 = vld [vmem:[%s0 + $0x38] sm:$0xff]
  %v24 = vld [vmem:[%s0 + $0x40] sm:$0xff]
  %v25 = vld [vmem:[%s0 + $0x48] sm:$0xff]
  %v26 = vld [vmem:[%s0 + $0x50] sm:$0xff]
  %v27 = vld [vmem:[%s0 + $0x58] sm:$0xff]
  %v28 = vld [vmem:[%s0 + $0x60] sm:$0xff]
  %v29 = vld [vmem:[%s0 + $0x68] sm:$0xff]
  %v30 = vld [vmem:[%s0 + $0x70] sm:$0xff]
  %v31 = vld [vmem:[%s0 + $0x78] sm:$0xff]
  %v32 = vld [vmem:[%s0 + $0x80] sm:$0xff]
  %v33 = vld [vmem:[%s0 + $0x88] sm:$0xff]
  %v34 = vld [vmem:[%s0 + $0x90] sm:$0xff]
  %v35 = vld [vmem:[%s0 + $0x98] sm:$0xff]
  %v36 = vld [vmem:[%s0 + $0xa0] sm:$0xff]
  %v37 = vld [vmem:[%s0 + $0xa8] sm:$0xff]
  %v38 = vld [vmem:[%s0 + $0xb0] sm:$0xff]
  %v39 = vld [vmem:[%s0 + $0xb8] sm:$0xff]
  %v40 = vld [vmem:[%s0 + $0xc0] sm:$0xff]
  %v41 = vld [vmem:[%s0 + $0xc8] sm:$0xff]
  %v42 = vld [vmem:[%s0 + $0xd0] sm:$0xff]
  %v43 = vld [vmem:[%s0 + $0xd8] sm:$0xff]
  %v44 = vld [vmem:[%s0 + $0xe0] sm:$0xff]
  %v45 = vld [vmem:[%s0 + $0xe8] sm:$0xff]
  %v46 = vld [vmem:[%s0 + $0xf0] sm:$0xff]
  %v47 = vld [vmem:[%s0 + $0xf8] sm:$0xff]
  %v48 = vld [vmem:[%s0 + $0x100] sm:$0xff]
  %v49 = vld [vmem:[%s0 + $0x108] sm:$0xff]
  %v50 = vld [vmem:[%s0 + $0x110] sm:$0xff]
  %v51 = vld [vmem:[%s0 + $0x118] sm:$0xff]
  %v52 = vld [vmem:[%s0 + $0x120] sm:$0xff]
  %v53 = vld [vmem:[%s0 + $0x128] sm:$0xff]
  %v54 = vld [vmem:[%s0 + $0x130] sm:$0xff]
  %v55 = vld [vmem:[%s0 + $0x138] sm:$0xff]
  %v56 = vld [vmem:[%s0 + $0x140] sm:$0xff]
  %v57 = vld [vmem:[%s0 + $0x148] sm:$0xff]
  %v58 = vld [vmem:[%s0 + $0x150] sm:$0xff]
  %v59 = vld [vmem:[%s0 + $0x158] sm:$0xff]
  %v60 = vld [vmem:[%s0 + $0x160] sm:$0xff]
  %v61 = vld [vmem:[%s0 + $0x168] sm:$0xff]
  %v62 = vld [vmem:[%s0 + $0x170] sm:$0xff]
  %v63 = vld [vmem:[%s0 + $0x178] sm:$0xff]
  %v64 = vld [vmem:[%s0 + $0x180] sm:$0xff]
  %v65 = vld [vmem:[%s0 + $0x188] sm:$0xff]
  %v66 = vld [vmem:[%s0 + $0x190] sm:$0xff]
  %v67 = vld [vmem:[%s0 + $0x198] sm:$0xff]
  %v68 = vld [vmem:[%s0 + $0x1a0] sm:$0xff]
  %v69 = vld [vmem:[%s0 + $0x1a8] sm:$0xff]
  %v70 = vld [vmem:[%s0 + $0x1b0] sm:$0xff]
  %v71 = vld [vmem:[%s0 + $0x1b8] sm:$0xff]
  %v72 = vld [vmem:[%s0 + $0x1c0] sm:$0xff]
  %v73 = vld [vmem:[%s0 + $0x1c8] sm:$0xff]
  %v74 = vld [vmem:[%s0 + $0x1d0] sm:$0xff]
  %v75 = vld [vmem:[%s0 + $0x1d8] sm:$0xff]
  %v76 = vld [vmem:[%s0 + $0x1e0] sm:$0xff]
  %v77 = vld [vmem:[%s0 + $0x1e8] sm:$0xff]
  %v78 = vld [vmem:[%s0 + $0x1f0] sm:$0xff]
  %v79 = vld [vmem:[%s0 + $0x1f8] sm:$0xff]
  %v80 = vld [vmem:[%s0 + $0x200] sm:$0xff]
  %v81 = vld [vmem:[%s0 + $0x208] sm:$0xff]
  %v82 = vld [vmem:[%s0 + $0x210] sm:$0xff]
  %v83 = vld [vmem:[%s0 + $0x218] sm:$0xff]
  %v84 = vld [vmem:[%s0 + $0x220] sm:$0xff]
  %v85 = vld [vmem:[%s0 + $0x228] sm:$0xff]
  %v86 = vld [vmem:[%s0 + $0x230] sm:$0xff]
  %v87 = vld [vmem:[%s0 + $0x238] sm:$0xff]
  %v88 = vld [vmem:[%s0 + $0x240] sm:$0xff]
  %v89 = vld [vmem:[%s0 + $0x248] sm:$0xff]
  %v90 = vld [vmem:[%s0 + $0x250] sm:$0xff]
  %v91 = vld [vmem:[%s0 + $0x258] sm:$0xff]
  %v92 = vld [vmem:[%s0 + $0x260] sm:$0xff]
  %v93 = vld [vmem:[%s0 + $0x268] sm:$0xff]
  %v94 = vld [vmem:[%s0 + $0x270] sm:$0xff]
  %v95 = vld [vmem:[%s0 + $0x278] sm:$0xff]
  %v96 = vld [vmem:[%s0 + $0x280] sm:$0xff]
  %v97 = vld [vmem:[%s0 + $0x288] sm:$0xff]
  %v98 = vld [vmem:[%s0 + $0x290] sm:$0xff]
  %v99 = vld [vmem:[%s0 + $0x298] sm:$0xff]
  %v100 = vld [vmem:[%s0 + $0x2a0] sm:$0xff]
  %v101 = vld [vmem:[%s0 + $0x2a8] sm:$0xff]
  %v102 = vld [vmem:[%s0 + $0x2b0] sm:$0xff]
  %v103 = vld [vmem:[%s0 + $0x2b8] sm:$0xff]
  %v104 = vld [vmem:[%s0 + $0x2c0] sm:$0xff]
  %v105 = vld [vmem:[%s0 + $0x2c8] sm:$0xff]
  %v106 = vld [vmem:[%s0 + $0x2d0] sm:$0xff]
  %v107 = vld [vmem:[%s0 + $0x2d8] sm:$0xff]
  %v108 = vld [vmem:[%s0 + $0x2e0] sm:$0xff]
  %v109 = vld [vmem:[%s0 + $0x2e8] sm:$0xff]
  %v110 = vld [vmem:[%s0 + $0x2f0] sm:$0xff]
  %v111 = vld [vmem:[%s0 + $0x2f8] sm:$0xff]
  %v112 = vld [vmem:[%s0 + $0x300] sm:$0xff]
  %v113 = vld [vmem:[%s0 + $0x308] sm:$0xff]
  %v114 = vld [vmem:[%s0 + $0x310] sm:$0xff]
  %v115 = vld [vmem:[%s0 + $0x318] sm:$0xff]
  %v116 = vld [vmem:[%s0 + $0x320] sm:$0xff]
  %v117 = vld [vmem:[%s0 + $0x328] sm:$0xff]
  %v118 = vld [vmem:[%s0 + $0x330] sm:$0xff]
  %v119 = vld [vmem:[%s0 + $0x338] sm:$0xff]
  %v120 = vld [vmem:[%s0 + $0x340] sm:$0xff]
  %v121 = vld [vmem:[%s0 + $0x348] sm:$0xff]
  %v122 = vld [vmem:[%s0 + $0x350] sm:$0xff]
  %v123 = vld [vmem:[%s0 + $0x358] sm:$0xff]
  %v124 = vld [vmem:[%s0 + $0x360] sm:$0xff]
  %v125 = vld [vmem:[%s0 + $0x368] sm:$0xff]
  %v126 = vld [vmem:[%s0 + $0x370] sm:$0xff]
  %v127 = vld [vmem:[%s0 + $0x378] sm:$0xff]
  %v128 = vld [vmem:[%s0 + $0x380] sm:$0xff]
  %v129 = vld [vmem:[%s0 + $0x388] sm:$0xff]
  %v130 = vld [vmem:[%s0 + $0x390] sm:$0xff]
  %v131 = vld [vmem:[%s0 + $0x398] sm:$0xff]
  %v132 = vld [vmem:[%s0 + $0x3a0] sm:$0xff]
  %v133 = vld [vmem:[%s0 + $0x3a8] sm:$0xff]
  %v134 = vld [vmem:[%s0 + $0x3b0] sm:$0xff]
  %v135 = vld [vmem:[%s0 + $0x3b8] sm:$0xff]
  %v136 = vld [vmem:[%s0 + $0x3c0] sm:$0xff]
  %v137 = vld [vmem:[%s0 + $0x3c8] sm:$0xff]
  %v138 = vld [vmem:[%s0 + $0x3d0] sm:$0xff]
  %v139 = vld [vmem:[%s0 + $0x3d8] sm:$0xff]
  %v140 = vld [vmem:[%s0 + $0x3e0] sm:$0xff]
  %v141 = vld [vmem:[%s0 + $0x3e8] sm:$0xff]
  %v142 = vld [vmem:[%s0 + $0x3f0] sm:$0xff]
  %v143 = vld [vmem:[%s0 + $0x3f8] sm:$0xff]
  %v144 = vld [vmem:[%s0 + $0x400] sm:$0xff]
  %v145 = vld [vmem:[%s0 + $0x408] sm:$0xff]
  %v146 = vld [vmem:[%s0 + $0x410] sm:$0xff]
  %v147 = vld [vmem:[%s0 + $0x418] sm:$0xff]
  %v148 = vld [vmem:[%s0 + $0x420] sm:$0xff]
  %v149 = vld [vmem:[%s0 + $0x428] sm:$0xff]
  %v150 = vld [vmem:[%s0 + $0x430] sm:$0xff]
  %v151 = vld [vmem:[%s0 + $0x438] sm:$0xff]
  %v152 = vld [vmem:[%s0 + $0x440] sm:$0xff]
  %v153 = vld [vmem:[%s0 + $0x448] sm:$0xff]
  %v154 = vld [vmem:[%s0 + $0x450] sm:$0xff]
  %v155 = vld [vmem:[%s0 + $0x458] sm:$0xff]
  %v156 = vld [vmem:[%s0 + $0x460] sm:$0xff]
  %v157 = vld [vmem:[%s0 + $0x468] sm:$0xff]
  %v158 = vld [vmem:[%s0 + $0x470] sm:$0xff]
  %v159 = vld [vmem:[%s0 + $0x478] sm:$0xff]
  %v160 = vld [vmem:[%s0 + $0x480] sm:$0xff]
  %v161 = vld [vmem:[%s0 + $0x488] sm:$0xff]
  %v162 = vld [vmem:[%s0 + $0x490] sm:$0xff]
  %v163 = vld [vmem:[%s0 + $0x498] sm:$0xff]
  %v164 = vld [vmem:[%s0 + $0x4a0] sm:$0xff]
  %v165 = vld [vmem:[%s0 + $0x4a8] sm:$0xff]
  %v166 = vld [vmem:[%s0 + $0x4b0] sm:$0xff]
  %v167 = vld [vmem:[%s0 + $0x4b8] sm:$0xff]
  %v168 = vld [vmem:[%s0 + $0x4c0] sm:$0xff]
  %v169 = vld [vmem:[%s0 + $0x4c8] sm:$0xff]
  %v170 = vld [vmem:[%s0 + $0x4d0] sm:$0xff]
  %v171 = vld [vmem:[%s0 + $0x4d8] sm:$0xff]
  %v172 = vld [vmem:[%s0 + $0x4e0] sm:$0xff]
  %v173 = vld [vmem:[%s0 + $0x4e8] sm:$0xff]
  %v174 = vld [vmem:[%s0 + $0x4f0] sm:$0xff]
  %v175 = vld [vmem:[%s0 + $0x4f8] sm:$0xff]
  %v176 = vld [vmem:[%s0 + $0x500] sm:$0xff]
  %v177 = vld [vmem:[%s0 + $0x508] sm:$0xff]
  %v178 = vld [vmem:[%s0 + $0x510] sm:$0xff]
  %v179 = vld [vmem:[%s0 + $0x518] sm:$0xff]
  %v180 = vld [vmem:[%s0 + $0x520] sm:$0xff]
  %v181 = vld [vmem:[%s0 + $0x528] sm:$0xff]
  %v182 = vld [vmem:[%s0 + $0x530] sm:$0xff]
  %v183 = vld [vmem:[%s0 + $0x538] sm:$0xff]
  %v184 = vld [vmem:[%s0 + $0x540] sm:$0xff]
  %v185 = vld [vmem:[%s0 + $0x548] sm:$0xff]
  %v186 = vld [vmem:[%s0 + $0x550] sm:$0xff]
  %v187 = vld [vmem:[%s0 + $0x558] sm:$0xff]
  %v188 = vld [vmem:[%s0 + $0x560] sm:$0xff]
  %v189 = vld [vmem:[%s0 + $0x568] sm:$0xff]
  %v190 = vld [vmem:[%s0 + $0x570] sm:$0xff]
  %v191 = vld [vmem:[%s0 + $0x578] sm:$0xff]
  %v192 = vld [vmem:[%s0 + $0x580] sm:$0xff]
  %v193 = vld [vmem:[%s0 + $0x588] sm:$0xff]
  %v194 = vld [vmem:[%s0 + $0x590] sm:$0xff]
  %v195 = vld [vmem:[%s0 + $0x598] sm:$0xff]
  %v196 = vld [vmem:[%s0 + $0x5a0] sm:$0xff]
  %v197 = vld [vmem:[%s0 + $0x5a8] sm:$0xff]
  %v198 = vld [vmem:[%s0 + $0x5b0] sm:$0xff]
  %v199 = vld [vmem:[%s0 + $0x5b8] sm:$0xff]
  %v200 = vld [vmem:[%s0 + $0x5c0] sm:$0xff]
  %v201 = vld [vmem:[%s0 + $0x5c8] sm:$0xff]
  %v202 = vld [vmem:[%s0 + $0x5d0] sm:$0xff]
  %v203 = vld [vmem:[%s0 + $0x5d8] sm:$0xff]
  %v204 = vld [vmem:[%s0 + $0x5e0] sm:$0xff]
  %v205 = vld [vmem:[%s0 + $0x5e8] sm:$0xff]
  %v206 = vld [vmem:[%s0 + $0x5f0] sm:$0xff]
  %v207 = vld [vmem:[%s0 + $0x5f8] sm:$0xff]
  %v208 = vld [vmem:[%s0 + $0x600] sm:$0xff]
  %v209 = vld [vmem:[%s0 + $0x608] sm:$0xff]
  %v210 = vld [vmem:[%s0 + $0x610] sm:$0xff]
  %v211 = vld [vmem:[%s0 + $0x618] sm:$0xff]
  %v212 = vld [vmem:[%s0 + $0x620] sm:$0xff]
  %v213 = vld [vmem:[%s0 + $0x628] sm:$0xff]
  %v214 = vld [vmem:[%s0 + $0x630] sm:$0xff]
  %v215 = vld [vmem:[%s0 + $0x638] sm:$0xff]
  %v216 = vld [vmem:[%s0 + $0x640] sm:$0xff]
  %v217 = vld [vmem:[%s0 + $0x648] sm:$0xff]
  %v218 = vld [vmem:[%s0 + $0x650] sm:$0xff]
  %v219 = vld [vmem:[%s0 + $0x658] sm:$0xff]
  %v220 = vld [vmem:[%s0 + $0x660] sm:$0xff]
  %v221 = vld [vmem:[%s0 + $0x668] sm:$0xff]
  %v222 = vld [vmem:[%s0 + $0x670] sm:$0xff]
  %v223 = vld [vmem:[%s0 + $0x678] sm:$0xff]
  %v224 = vld [vmem:[%s0 + $0x680] sm:$0xff]
  %v225 = vld [vmem:[%s0 + $0x688] sm:$0xff]
  %v226 = vld [vmem:[%s0 + $0x690] sm:$0xff]
  %v227 = vld [vmem:[%s0 + $0x698] sm:$0xff]
  %v228 = vld [vmem:[%s0 + $0x6a0] sm:$0xff]
  %v229 = vld [vmem:[%s0 + $0x6a8] sm:$0xff]
  %v230 = vld [vmem:[%s0 + $0x6b0] sm:$0xff]
  %v231 = vld [vmem:[%s0 + $0x6b8] sm:$0xff]
  %v232 = vld [vmem:[%s0 + $0x6c0] sm:$0xff]
  %v233 = vld [vmem:[%s0 + $0x6c8] sm:$0xff]
  %v234 = vld [vmem:[%s0 + $0x6d0] sm:$0xff]
  %v235 = vld [vmem:[%s0 + $0x6d8] sm:$0xff]
  %v236 = vld [vmem:[%s0 + $0x6e0] sm:$0xff]
  %v237 = vld [vmem:[%s0 + $0x6e8] sm:$0xff]
  %v238 = vld [vmem:[%s0 + $0x6f0] sm:$0xff]
  %v239 = vld [vmem:[%s0 + $0x6f8] sm:$0xff]
  %v240 = vld [vmem:[%s0 + $0x700] sm:$0xff]
  %v241 = vld [vmem:[%s0 + $0x708] sm:$0xff]
  %v242 = vld [vmem:[%s0 + $0x710] sm:$0xff]
  %v243 = vld [vmem:[%s0 + $0x718] sm:$0xff]
  %v244 = vld [vmem:[%s0 + $0x720] sm:$0xff]
  %v245 = vld [vmem:[%s0 + $0x728] sm:$0xff]
  %v246 = vld [vmem:[%s0 + $0x730] sm:$0xff]
  %v247 = vld [vmem:[%s0 + $0x738] sm:$0xff]
  %v248 = vld [vmem:[%s0 + $0x740] sm:$0xff]
  %v249 = vld [vmem:[%s0 + $0x748] sm:$0xff]
  %v250 = vld [vmem:[%s0 + $0x750] sm:$0xff]
  %v251 = vld [vmem:[%s0 + $0x758] sm:$0xff]
  %v252 = vld [vmem:[%s0 + $0x760] sm:$0xff]
  %v253 = vld [vmem:[%s0 + $0x768] sm:$0xff]
  %v254 = vld [vmem:[%s0 + $0x770] sm:$0xff]
  %v255 = vld [vmem:[%s0 + $0x778] sm:$0xff]
  %v256 = vld [vmem:[%s0 + $0x780] sm:$0xff]
  %v257 = vld [vmem:[%s0 + $0x788] sm:$0xff]
  %v258 = vld [vmem:[%s0 + $0x790] sm:$0xff]
  %v259 = vld [vmem:[%s0 + $0x798] sm:$0xff]
  %v260 = vld [vmem:[%s0 + $0x7a0] sm:$0xff]
  %v261 = vld [vmem:[%s0 + $0x7a8] sm:$0xff]
  %v262 = vld [vmem:[%s0 + $0x7b0] sm:$0xff]
  %v263 = vld [vmem:[%s0 + $0x7b8] sm:$0xff]
  %v264 = vld [vmem:[%s0 + $0x7c0] sm:$0xff]
  %v265 = vld [vmem:[%s0 + $0x7c8] sm:$0xff]
  %v266 = vld [vmem:[%s0 + $0x7d0] sm:$0xff]
  %v267 = vld [vmem:[%s0 + $0x7d8] sm:$0xff]
  %v268 = vld [vmem:[%s0 + $0x7e0] sm:$0xff]
  %v269 = vld [vmem:[%s0 + $0x7e8] sm:$0xff]
  %v270 = vld [vmem:[%s0 + $0x7f0] sm:$0xff]
  %v271 = vld [vmem:[%s0 + $0x7f8] sm:$0xff]
  %v272 = vld [vmem:[%s0 + $0x800] sm:$0xff]
  %v273 = vld [vmem:[%s0 + $0x808] sm:$0xff]
  %v274 = vld [vmem:[%s0 + $0x810] sm:$0xff]
  %v275 = vld [vmem:[%s0 + $0x818] sm:$0xff]
  %v276 = vld [vmem:[%s0 + $0x820] sm:$0xff]
  %v277 = vld [vmem:[%s0 + $0x828] sm:$0xff]
  %v278 = vld [vmem:[%s0 + $0x830] sm:$0xff]
  %v279 = vld [vmem:[%s0 + $0x838] sm:$0xff]
  %v280 = vld [vmem:[%s0 + $0x840] sm:$0xff]
  %v281 = vld [vmem:[%s0 + $0x848] sm:$0xff]
  %v282 = vld [vmem:[%s0 + $0x850] sm:$0xff]
  %v283 = vld [vmem:[%s0 + $0x858] sm:$0xff]
  %v284 = vld [vmem:[%s0 + $0x860] sm:$0xff]
  %v285 = vld [vmem:[%s0 + $0x868] sm:$0xff]
  %v286 = vld [vmem:[%s0 + $0x870] sm:$0xff]
  %v287 = vld [vmem:[%s0 + $0x878] sm:$0xff]
  %v288 = vld [vmem:[%s0 + $0x880] sm:$0xff]
  %v289 = vld [vmem:[%s0 + $0x888] sm:$0xff]
  %v290 = vld [vmem:[%s0 + $0x890] sm:$0xff]
  %v291 = vld [vmem:[%s0 + $0x898] sm:$0xff]
  %v292 = vld [vmem:[%s0 + $0x8a0] sm:$0xff]
  %v293 = vld [vmem:[%s0 + $0x8a8] sm:$0xff]
  %v294 = vld [vmem:[%s0 + $0x8b0] sm:$0xff]
  %v295 = vld [vmem:[%s0 + $0x8b8] sm:$0xff]
  %v296 = vld [vmem:[%s0 + $0x8c0] sm:$0xff]
  %v297 = vld [vmem:[%s0 + $0x8c8] sm:$0xff]
  %v298 = vld [vmem:[%s0 + $0x8d0] sm:$0xff]
  %v299 = vld [vmem:[%s0 + $0x8d8] sm:$0xff]
  %v300 = vld [vmem:[%s0 + $0x8e0] sm:$0xff]
  %v301 = vld [vmem:[%s0 + $0x8e8] sm:$0xff]
  %v302 = vld [vmem:[%s0 + $0x8f0] sm:$0xff]
  %v303 = vld [vmem:[%s0 + $0x8f8] sm:$0xff]
  %v304 = vld [vmem:[%s0 + $0x900] sm:$0xff]
  %v305 = vld [vmem:[%s0 + $0x908] sm:$0xff]
  %v306 = vld [vmem:[%s0 + $0x910] sm:$0xff]
  %v307 = vld [vmem:[%s0 + $0x918] sm:$0xff]
  %v308 = vld [vmem:[%s0 + $0x920] sm:$0xff]
  %v309 = vld [vmem:[%s0 + $0x928] sm:$0xff]
  %v310 = vld [vmem:[%s0 + $0x930] sm:$0xff]
  %v311 = vld [vmem:[%s0 + $0x938] sm:$0xff]
  %v312 = vld [vmem:[%s0 + $0x940] sm:$0xff]
  %v313 = vld [vmem:[%s0 + $0x948] sm:$0xff]
  %v314 = vld [vmem:[%s0 + $0x950] sm:$0xff]
  %v315 = vld [vmem:[%s0 + $0x958] sm:$0xff]
  %v316 = vld [vmem:[%s0 + $0x960] sm:$0xff]
  %v317 = vld [vmem:[%s0 + $0x968] sm:$0xff]
  %v318 = vld [vmem:[%s0 + $0x970] sm:$0xff]
  %v319 = vld [vmem:[%s0 + $0x978] sm:$0xff]
  %v320 = vld [vmem:[%s0 + $0x980] sm:$0xff]
  %v321 = vld [vmem:[%s0 + $0x988] sm:$0xff]
  %v322 = vld [vmem:[%s0 + $0x990] sm:$0xff]
  %v323 = vld [vmem:[%s0 + $0x998] sm:$0xff]
  %v324 = vld [vmem:[%s0 + $0x9a0] sm:$0xff]
  %v325 = vld [vmem:[%s0 + $0x9a8] sm:$0xff]
  %v326 = vld [vmem:[%s0 + $0x9b0] sm:$0xff]
  %v327 = vld [vmem:[%s0 + $0x9b8] sm:$0xff]
  %v328 = vld [vmem:[%s0 + $0x9c0] sm:$0xff]
  %v329 = vld [vmem:[%s0 + $0x9c8] sm:$0xff]
  %v330 = vld [vmem:[%s0 + $0x9d0] sm:$0xff]
  %v331 = vld [vmem:[%s0 + $0x9d8] sm:$0xff]
  %v332 = vld [vmem:[%s0 + $0x9e0] sm:$0xff]
  %v333 = vld [vmem:[%s0 + $0x9e8] sm:$0xff]
  %v334 = vld [vmem:[%s0 + $0x9f0] sm:$0xff]
  %v335 = vld [vmem:[%s0 + $0x9f8] sm:$0xff]
  %v336 = vld [vmem:[%s0 + $0xa00] sm:$0xff]
  %v337 = vld [vmem:[%s0 + $0xa08] sm:$0xff]
  %v338 = vld [vmem:[%s0 + $0xa10] sm:$0xff]
  %v339 = vld [vmem:[%s0 + $0xa18] sm:$0xff]
  %v340 = vld [vmem:[%s0 + $0xa20] sm:$0xff]
  %vm341 = vcmask 588800
  %v343 = vsel %vm341, %v15, 0
  %345 = vmatprep.subr.mxu0 %v17
  %346 = vmatpush1.msra.mxu0 %v16
  %347 = vmatprep.subr.mxu0 %v30
  %348 = vmatpush1.msra.mxu0 %v29
  %349 = vmatprep.subr.mxu0 %v43
  %350 = vmatpush1.msra.mxu0 %v42
  %351 = vmatprep.subr.mxu0 %v56
  %352 = vmatpush1.msra.mxu0 %v55
  %353 = vmatprep.subr.mxu0 %v69
  %354 = vmatpush1.msra.mxu0 %v68
  %355 = vmatprep.subr.mxu0 %v82
  %356 = vmatpush1.msra.mxu0 %v81
  %357 = vmatprep.subr.mxu0 %v95
  %358 = vmatpush1.msra.mxu0 %v94
  %359 = vmatprep.subr.mxu0 %v108
  %360 = vmatpush1.msra.mxu0 %v107
  %361 = vmatprep.subr.mxu0 %v121
  %362 = vmatpush1.msra.mxu0 %v120
  %363 = vmatprep.subr.mxu0 %v134
  %364 = vmatpush1.msra.mxu0 %v133
  %365 = vmatprep.subr.mxu0 %v147
  %366 = vmatpush1.msra.mxu0 %v146
  %367 = vmatprep.subr.mxu0 %v160
  %368 = vmatpush1.msra.mxu0 %v159
  %369 = vmatprep.subr.mxu0 %v173
  %370 = vmatpush1.msra.mxu0 %v172
  %371 = vmatprep.subr.mxu0 %v186
  %372 = vmatpush1.msra.mxu0 %v185
  %373 = vmatprep.subr.mxu0 %v199
  %374 = vmatpush1.msra.mxu0 %v198
  %375 = vmatprep.subr.mxu0 %v212
  %376 = vmatpush1.msra.mxu0 %v211
  %377 = vmatprep.subr.mxu0 %v225
  %378 = vmatpush1.msra.mxu0 %v224
  %379 = vmatprep.subr.mxu0 %v238
  %380 = vmatpush1.msra.mxu0 %v237
  %381 = vmatprep.subr.mxu0 %v251
  %382 = vmatpush1.msra.mxu0 %v250
  %383 = vmatprep.subr.mxu0 %v264
  %384 = vmatpush1.msra.mxu0 %v263
  %385 = vmatprep.subr.mxu0 %v277
  %386 = vmatpush1.msra.mxu0 %v276
  %387 = vmatprep.subr.mxu0 %v290
  %388 = vmatpush1.msra.mxu0 %v289
  %389 = vmatprep.subr.mxu0 %v303
  %390 = vmatpush1.msra.mxu0 %v302
  %391 = vmatprep.subr.mxu0 %v316
  %392 = vmatpush1.msra.mxu0 %v315
  %393 = vmatprep.subr.mxu0 %v329
  %394 = vmatpush1.msra.mxu0 %v328
  %395 = vmatprep.subr.mxu0 0.0
  %396 = vmatpush1.msra.mxu0 0.0
  %397 = vmatprep.subr.mxu0 0.0
  %398 = vmatpush1.msra.mxu0 0.0
  %399 = vmatprep.subr.mxu0 0.0
  %400 = vmatpush1.msra.mxu0 0.0
  %401 = vmatprep.subr.mxu0 0.0
  %402 = vmatpush1.msra.mxu0 0.0
  %403 = vmatprep.subr.mxu0 0.0
  %404 = vmatpush1.msra.mxu0 0.0
  %405 = vmatprep.subr.mxu0 0.0
  %406 = vmatpush1.msra.mxu0 0.0
  %407 = vmatprep.subr.mxu0 0.0
  %408 = vmatpush1.msra.mxu0 0.0
  %409 = vmatprep.mubr.f32.mxu0 %v343
  %410 = vmatmul.mubr.f32.gmra.mrb[0].mxu0 %v14
  %v411 = vpop.f32.mrb[0].mxu0
  %v412 = vadd.f32 0.0, %v411
  %v413 = vpop.f32.mrb[0].mxu0
  %v414 = vadd.f32 0.0, %v413
  %415 = vdwg.mxu0
  %416 = vmatprep.subr.mxu0 %v19
  %417 = vmatpush1.msra.mxu0 %v18
  %418 = vmatprep.subr.mxu0 %v32
  %419 = vmatpush1.msra.mxu0 %v31
  %420 = vmatprep.subr.mxu0 %v45
  %421 = vmatpush1.msra.mxu0 %v44
  %422 = vmatprep.subr.mxu0 %v58
  %423 = vmatpush1.msra.mxu0 %v57
  %424 = vmatprep.subr.mxu0 %v71
  %425 = vmatpush1.msra.mxu0 %v70
  %426 = vmatprep.subr.mxu0 %v84
  %427 = vmatpush1.msra.mxu0 %v83
  %428 = vmatprep.subr.mxu0 %v97
  %429 = vmatpush1.msra.mxu0 %v96
  %430 = vmatprep.subr.mxu0 %v110
  %431 = vmatpush1.msra.mxu0 %v109
  %432 = vmatprep.subr.mxu0 %v123
  %433 = vmatpush1.msra.mxu0 %v122
  %434 = vmatprep.subr.mxu0 %v136
  %435 = vmatpush1.msra.mxu0 %v135
  %436 = vmatprep.subr.mxu0 %v149
  %437 = vmatpush1.msra.mxu0 %v148
  %438 = vmatprep.subr.mxu0 %v162
  %439 = vmatpush1.msra.mxu0 %v161
  %440 = vmatprep.subr.mxu0 %v175
  %441 = vmatpush1.msra.mxu0 %v174
  %442 = vmatprep.subr.mxu0 %v188
  %443 = vmatpush1.msra.mxu0 %v187
  %444 = vmatprep.subr.mxu0 %v201
  %445 = vmatpush1.msra.mxu0 %v200
  %446 = vmatprep.subr.mxu0 %v214
  %447 = vmatpush1.msra.mxu0 %v213
  %448 = vmatprep.subr.mxu0 %v227
  %449 = vmatpush1.msra.mxu0 %v226
  %450 = vmatprep.subr.mxu0 %v240
  %451 = vmatpush1.msra.mxu0 %v239
  %452 = vmatprep.subr.mxu0 %v253
  %453 = vmatpush1.msra.mxu0 %v252
  %454 = vmatprep.subr.mxu0 %v266
  %455 = vmatpush1.msra.mxu0 %v265
  %456 = vmatprep.subr.mxu0 %v279
  %457 = vmatpush1.msra.mxu0 %v278
  %458 = vmatprep.subr.mxu0 %v292
  %459 = vmatpush1.msra.mxu0 %v291
  %460 = vmatprep.subr.mxu0 %v305
  %461 = vmatpush1.msra.mxu0 %v304
  %462 = vmatprep.subr.mxu0 %v318
  %463 = vmatpush1.msra.mxu0 %v317
  %464 = vmatprep.subr.mxu0 %v331
  %465 = vmatpush1.msra.mxu0 %v330
  %466 = vmatprep.subr.mxu0 0.0
  %467 = vmatpush1.msra.mxu0 0.0
  %468 = vmatprep.subr.mxu0 0.0
  %469 = vmatpush1.msra.mxu0 0.0
  %470 = vmatprep.subr.mxu0 0.0
  %471 = vmatpush1.msra.mxu0 0.0
  %472 = vmatprep.subr.mxu0 0.0
  %473 = vmatpush1.msra.mxu0 0.0
  %474 = vmatprep.subr.mxu0 0.0
  %475 = vmatpush1.msra.mxu0 0.0
  %476 = vmatprep.subr.mxu0 0.0
  %477 = vmatpush1.msra.mxu0 0.0
  %478 = vmatprep.subr.mxu0 0.0
  %479 = vmatpush1.msra.mxu0 0.0
  %480 = vmatprep.mubr.f32.mxu0 %v343
  %481 = vmatmul.mubr.f32.gmra.mrb[0].mxu0 %v14
  %v482 = vpop.f32.mrb[0].mxu0
  %v483 = vadd.f32 0.0, %v482
  %v484 = vpop.f32.mrb[0].mxu0
  %v485 = vadd.f32 0.0, %v484
  %486 = vdwg.mxu0
  %487 = vmatprep.subr.mxu0 %v21
  %488 = vmatpush1.msra.mxu0 %v20
  %489 = vmatprep.subr.mxu0 %v34
  %490 = vmatpush1.msra.mxu0 %v33
  %491 = vmatprep.subr.mxu0 %v47
  %492 = vmatpush1.msra.mxu0 %v46
  %493 = vmatprep.subr.mxu0 %v60
  %494 = vmatpush1.msra.mxu0 %v59
  %495 = vmatprep.subr.mxu0 %v73
  %496 = vmatpush1.msra.mxu0 %v72
  %497 = vmatprep.subr.mxu0 %v86
  %498 = vmatpush1.msra.mxu0 %v85
  %499 = vmatprep.subr.mxu0 %v99
  %500 = vmatpush1.msra.mxu0 %v98
  %501 = vmatprep.subr.mxu0 %v112
  %502 = vmatpush1.msra.mxu0 %v111
  %503 = vmatprep.subr.mxu0 %v125
  %504 = vmatpush1.msra.mxu0 %v124
  %505 = vmatprep.subr.mxu0 %v138
  %506 = vmatpush1.msra.mxu0 %v137
  %507 = vmatprep.subr.mxu0 %v151
  %508 = vmatpush1.msra.mxu0 %v150
  %509 = vmatprep.subr.mxu0 %v164
  %510 = vmatpush1.msra.mxu0 %v163
  %511 = vmatprep.subr.mxu0 %v177
  %512 = vmatpush1.msra.mxu0 %v176
  %513 = vmatprep.subr.mxu0 %v190
  %514 = vmatpush1.msra.mxu0 %v189
  %515 = vmatprep.subr.mxu0 %v203
  %516 = vmatpush1.msra.mxu0 %v202
  %517 = vmatprep.subr.mxu0 %v216
  %518 = vmatpush1.msra.mxu0 %v215
  %519 = vmatprep.subr.mxu0 %v229
  %520 = vmatpush1.msra.mxu0 %v228
  %521 = vmatprep.subr.mxu0 %v242
  %522 = vmatpush1.msra.mxu0 %v241
  %523 = vmatprep.subr.mxu0 %v255
  %524 = vmatpush1.msra.mxu0 %v254
  %525 = vmatprep.subr.mxu0 %v268
  %526 = vmatpush1.msra.mxu0 %v267
  %527 = vmatprep.subr.mxu0 %v281
  %528 = vmatpush1.msra.mxu0 %v280
  %529 = vmatprep.subr.mxu0 %v294
  %530 = vmatpush1.msra.mxu0 %v293
  %531 = vmatprep.subr.mxu0 %v307
  %532 = vmatpush1.msra.mxu0 %v306
  %533 = vmatprep.subr.mxu0 %v320
  %534 = vmatpush1.msra.mxu0 %v319
  %535 = vmatprep.subr.mxu0 %v333
  %536 = vmatpush1.msra.mxu0 %v332
  %537 = vmatprep.subr.mxu0 0.0
  %538 = vmatpush1.msra.mxu0 0.0
  %539 = vmatprep.subr.mxu0 0.0
  %540 = vmatpush1.msra.mxu0 0.0
  %541 = vmatprep.subr.mxu0 0.0
  %542 = vmatpush1.msra.mxu0 0.0
  %543 = vmatprep.subr.mxu0 0.0
  %544 = vmatpush1.msra.mxu0 0.0
  %545 = vmatprep.subr.mxu0 0.0
  %546 = vmatpush1.msra.mxu0 0.0
  %547 = vmatprep.subr.mxu0 0.0
  %548 = vmatpush1.msra.mxu0 0.0
  %549 = vmatprep.subr.mxu0 0.0
  %550 = vmatpush1.msra.mxu0 0.0
  %551 = vmatprep.mubr.f32.mxu0 %v343
  %552 = vmatmul.mubr.f32.gmra.mrb[0].mxu0 %v14
  %v553 = vpop.f32.mrb[0].mxu0
  %v554 = vadd.f32 0.0, %v553
  %v555 = vpop.f32.mrb[0].mxu0
  %v556 = vadd.f32 0.0, %v555
  %557 = vdwg.mxu0
  %558 = vmatprep.subr.mxu0 %v23
  %559 = vmatpush1.msra.mxu0 %v22
  %560 = vmatprep.subr.mxu0 %v36
  %561 = vmatpush1.msra.mxu0 %v35
  %562 = vmatprep.subr.mxu0 %v49
  %563 = vmatpush1.msra.mxu0 %v48
  %564 = vmatprep.subr.mxu0 %v62
  %565 = vmatpush1.msra.mxu0 %v61
  %566 = vmatprep.subr.mxu0 %v75
  %567 = vmatpush1.msra.mxu0 %v74
  %568 = vmatprep.subr.mxu0 %v88
  %569 = vmatpush1.msra.mxu0 %v87
  %570 = vmatprep.subr.mxu0 %v101
  %571 = vmatpush1.msra.mxu0 %v100
  %572 = vmatprep.subr.mxu0 %v114
  %573 = vmatpush1.msra.mxu0 %v113
  %574 = vmatprep.subr.mxu0 %v127
  %575 = vmatpush1.msra.mxu0 %v126
  %576 = vmatprep.subr.mxu0 %v140
  %577 = vmatpush1.msra.mxu0 %v139
  %578 = vmatprep.subr.mxu0 %v153
  %579 = vmatpush1.msra.mxu0 %v152
  %580 = vmatprep.subr.mxu0 %v166
  %581 = vmatpush1.msra.mxu0 %v165
  %582 = vmatprep.subr.mxu0 %v179
  %583 = vmatpush1.msra.mxu0 %v178
  %584 = vmatprep.subr.mxu0 %v192
  %585 = vmatpush1.msra.mxu0 %v191
  %586 = vmatprep.subr.mxu0 %v205
  %587 = vmatpush1.msra.mxu0 %v204
  %588 = vmatprep.subr.mxu0 %v218
  %589 = vmatpush1.msra.mxu0 %v217
  %590 = vmatprep.subr.mxu0 %v231
  %591 = vmatpush1.msra.mxu0 %v230
  %592 = vmatprep.subr.mxu0 %v244
  %593 = vmatpush1.msra.mxu0 %v243
  %594 = vmatprep.subr.mxu0 %v257
  %595 = vmatpush1.msra.mxu0 %v256
  %596 = vmatprep.subr.mxu0 %v270
  %597 = vmatpush1.msra.mxu0 %v269
  %598 = vmatprep.subr.mxu0 %v283
  %599 = vmatpush1.msra.mxu0 %v282
  %600 = vmatprep.subr.mxu0 %v296
  %601 = vmatpush1.msra.mxu0 %v295
  %602 = vmatprep.subr.mxu0 %v309
  %603 = vmatpush1.msra.mxu0 %v308
  %604 = vmatprep.subr.mxu0 %v322
  %605 = vmatpush1.msra.mxu0 %v321
  %606 = vmatprep.subr.mxu0 %v335
  %607 = vmatpush1.msra.mxu0 %v334
  %608 = vmatprep.subr.mxu0 0.0
  %609 = vmatpush1.msra.mxu0 0.0
  %610 = vmatprep.subr.mxu0 0.0
  %611 = vmatpush1.msra.mxu0 0.0
  %612 = vmatprep.subr.mxu0 0.0
  %613 = vmatpush1.msra.mxu0 0.0
  %614 = vmatprep.subr.mxu0 0.0
  %615 = vmatpush1.msra.mxu0 0.0
  %616 = vmatprep.subr.mxu0 0.0
  %617 = vmatpush1.msra.mxu0 0.0
  %618 = vmatprep.subr.mxu0 0.0
  %619 = vmatpush1.msra.mxu0 0.0
  %620 = vmatprep.subr.mxu0 0.0
  %621 = vmatpush1.msra.mxu0 0.0
  %622 = vmatprep.mubr.f32.mxu0 %v343
  %623 = vmatmul.mubr.f32.gmra.mrb[0].mxu0 %v14
  %v624 = vpop.f32.mrb[0].mxu0
  %v625 = vadd.f32 0.0, %v624
  %v626 = vpop.f32.mrb[0].mxu0
  %v627 = vadd.f32 0.0, %v626
  %628 = vdwg.mxu0
  %629 = vmatprep.subr.mxu0 %v25
  %630 = vmatpush1.msra.mxu0 %v24
  %631 = vmatprep.subr.mxu0 %v38
  %632 = vmatpush1.msra.mxu0 %v37
  %633 = vmatprep.subr.mxu0 %v51
  %634 = vmatpush1.msra.mxu0 %v50
  %635 = vmatprep.subr.mxu0 %v64
  %636 = vmatpush1.msra.mxu0 %v63
  %637 = vmatprep.subr.mxu0 %v77
  %638 = vmatpush1.msra.mxu0 %v76
  %639 = vmatprep.subr.mxu0 %v90
  %640 = vmatpush1.msra.mxu0 %v89
  %641 = vmatprep.subr.mxu0 %v103
  %642 = vmatpush1.msra.mxu0 %v102
  %643 = vmatprep.subr.mxu0 %v116
  %644 = vmatpush1.msra.mxu0 %v115
  %645 = vmatprep.subr.mxu0 %v129
  %646 = vmatpush1.msra.mxu0 %v128
  %647 = vmatprep.subr.mxu0 %v142
  %648 = vmatpush1.msra.mxu0 %v141
  %649 = vmatprep.subr.mxu0 %v155
  %650 = vmatpush1.msra.mxu0 %v154
  %651 = vmatprep.subr.mxu0 %v168
  %652 = vmatpush1.msra.mxu0 %v167
  %653 = vmatprep.subr.mxu0 %v181
  %654 = vmatpush1.msra.mxu0 %v180
  %655 = vmatprep.subr.mxu0 %v194
  %656 = vmatpush1.msra.mxu0 %v193
  %657 = vmatprep.subr.mxu0 %v207
  %658 = vmatpush1.msra.mxu0 %v206
  %659 = vmatprep.subr.mxu0 %v220
  %660 = vmatpush1.msra.mxu0 %v219
  %661 = vmatprep.subr.mxu0 %v233
  %662 = vmatpush1.msra.mxu0 %v232
  %663 = vmatprep.subr.mxu0 %v246
  %664 = vmatpush1.msra.mxu0 %v245
  %665 = vmatprep.subr.mxu0 %v259
  %666 = vmatpush1.msra.mxu0 %v258
  %667 = vmatprep.subr.mxu0 %v272
  %668 = vmatpush1.msra.mxu0 %v271
  %669 = vmatprep.subr.mxu0 %v285
  %670 = vmatpush1.msra.mxu0 %v284
  %671 = vmatprep.subr.mxu0 %v298
  %672 = vmatpush1.msra.mxu0 %v297
  %673 = vmatprep.subr.mxu0 %v311
  %674 = vmatpush1.msra.mxu0 %v310
  %675 = vmatprep.subr.mxu0 %v324
  %676 = vmatpush1.msra.mxu0 %v323
  %677 = vmatprep.subr.mxu0 %v337
  %678 = vmatpush1.msra.mxu0 %v336
  %679 = vmatprep.subr.mxu0 0.0
  %680 = vmatpush1.msra.mxu0 0.0
  %681 = vmatprep.subr.mxu0 0.0
  %682 = vmatpush1.msra.mxu0 0.0
  %683 = vmatprep.subr.mxu0 0.0
  %684 = vmatpush1.msra.mxu0 0.0
  %685 = vmatprep.subr.mxu0 0.0
  %686 = vmatpush1.msra.mxu0 0.0
  %687 = vmatprep.subr.mxu0 0.0
  %688 = vmatpush1.msra.mxu0 0.0
  %689 = vmatprep.subr.mxu0 0.0
  %690 = vmatpush1.msra.mxu0 0.0
  %691 = vmatprep.subr.mxu0 0.0
  %692 = vmatpush1.msra.mxu0 0.0
  %693 = vmatprep.mubr.f32.mxu0 %v343
  %694 = vmatmul.mubr.f32.gmra.mrb[0].mxu0 %v14
  %v695 = vpop.f32.mrb[0].mxu0
  %v696 = vadd.f32 0.0, %v695
  %v697 = vpop.f32.mrb[0].mxu0
  %v698 = vadd.f32 0.0, %v697
  %699 = vdwg.mxu0
  %700 = vmatprep.subr.mxu0 %v27
  %701 = vmatpush1.msra.mxu0 %v26
  %702 = vmatprep.subr.mxu0 %v40
  %703 = vmatpush1.msra.mxu0 %v39
  %704 = vmatprep.subr.mxu0 %v53
  %705 = vmatpush1.msra.mxu0 %v52
  %706 = vmatprep.subr.mxu0 %v66
  %707 = vmatpush1.msra.mxu0 %v65
  %708 = vmatprep.subr.mxu0 %v79
  %709 = vmatpush1.msra.mxu0 %v78
  %710 = vmatprep.subr.mxu0 %v92
  %711 = vmatpush1.msra.mxu0 %v91
  %712 = vmatprep.subr.mxu0 %v105
  %713 = vmatpush1.msra.mxu0 %v104
  %714 = vmatprep.subr.mxu0 %v118
  %715 = vmatpush1.msra.mxu0 %v117
  %716 = vmatprep.subr.mxu0 %v131
  %717 = vmatpush1.msra.mxu0 %v130
  %718 = vmatprep.subr.mxu0 %v144
  %719 = vmatpush1.msra.mxu0 %v143
  %720 = vmatprep.subr.mxu0 %v157
  %721 = vmatpush1.msra.mxu0 %v156
  %722 = vmatprep.subr.mxu0 %v170
  %723 = vmatpush1.msra.mxu0 %v169
  %724 = vmatprep.subr.mxu0 %v183
  %725 = vmatpush1.msra.mxu0 %v182
  %726 = vmatprep.subr.mxu0 %v196
  %727 = vmatpush1.msra.mxu0 %v195
  %728 = vmatprep.subr.mxu0 %v209
  %729 = vmatpush1.msra.mxu0 %v208
  %730 = vmatprep.subr.mxu0 %v222
  %731 = vmatpush1.msra.mxu0 %v221
  %732 = vmatprep.subr.mxu0 %v235
  %733 = vmatpush1.msra.mxu0 %v234
  %734 = vmatprep.subr.mxu0 %v248
  %735 = vmatpush1.msra.mxu0 %v247
  %736 = vmatprep.subr.mxu0 %v261
  %737 = vmatpush1.msra.mxu0 %v260
  %738 = vmatprep.subr.mxu0 %v274
  %739 = vmatpush1.msra.mxu0 %v273
  %740 = vmatprep.subr.mxu0 %v287
  %741 = vmatpush1.msra.mxu0 %v286
  %742 = vmatprep.subr.mxu0 %v300
  %743 = vmatpush1.msra.mxu0 %v299
  %744 = vmatprep.subr.mxu0 %v313
  %745 = vmatpush1.msra.mxu0 %v312
  %746 = vmatprep.subr.mxu0 %v326
  %747 = vmatpush1.msra.mxu0 %v325
  %748 = vmatprep.subr.mxu0 %v339
  %749 = vmatpush1.msra.mxu0 %v338
  %750 = vmatprep.subr.mxu0 0.0
  %751 = vmatpush1.msra.mxu0 0.0
  %752 = vmatprep.subr.mxu0 0.0
  %753 = vmatpush1.msra.mxu0 0.0
  %754 = vmatprep.subr.mxu0 0.0
  %755 = vmatpush1.msra.mxu0 0.0
  %756 = vmatprep.subr.mxu0 0.0
  %757 = vmatpush1.msra.mxu0 0.0
  %758 = vmatprep.subr.mxu0 0.0
  %759 = vmatpush1.msra.mxu0 0.0
  %760 = vmatprep.subr.mxu0 0.0
  %761 = vmatpush1.msra.mxu0 0.0
  %762 = vmatprep.subr.mxu0 0.0
  %763 = vmatpush1.msra.mxu0 0.0
  %764 = vmatprep.mubr.f32.mxu0 %v343
  %765 = vmatmul.mubr.f32.gmra.mrb[0].mxu0 %v14
  %v766 = vpop.f32.mrb[0].mxu0
  %v767 = vadd.f32 0.0, %v766
  %v768 = vpop.f32.mrb[0].mxu0
  %v769 = vadd.f32 0.0, %v768
  %770 = vdwg.mxu0
  %771 = vmatprep.subr.mxu0 0.0
  %772 = vmatpush1.msra.mxu0 %v28
  %773 = vmatprep.subr.mxu0 0.0
  %774 = vmatpush1.msra.mxu0 %v41
  %775 = vmatprep.subr.mxu0 0.0
  %776 = vmatpush1.msra.mxu0 %v54
  %777 = vmatprep.subr.mxu0 0.0
  %778 = vmatpush1.msra.mxu0 %v67
  %779 = vmatprep.subr.mxu0 0.0
  %780 = vmatpush1.msra.mxu0 %v80
  %781 = vmatprep.subr.mxu0 0.0
  %782 = vmatpush1.msra.mxu0 %v93
  %783 = vmatprep.subr.mxu0 0.0
  %784 = vmatpush1.msra.mxu0 %v106
  %785 = vmatprep.subr.mxu0 0.0
  %786 = vmatpush1.msra.mxu0 %v119
  %787 = vmatprep.subr.mxu0 0.0
  %788 = vmatpush1.msra.mxu0 %v132
  %789 = vmatprep.subr.mxu0 0.0
  %790 = vmatpush1.msra.mxu0 %v145
  %791 = vmatprep.subr.mxu0 0.0
  %792 = vmatpush1.msra.mxu0 %v158
  %793 = vmatprep.subr.mxu0 0.0
  %794 = vmatpush1.msra.mxu0 %v171
  %795 = vmatprep.subr.mxu0 0.0
  %796 = vmatpush1.msra.mxu0 %v184
  %797 = vmatprep.subr.mxu0 0.0
  %798 = vmatpush1.msra.mxu0 %v197
  %799 = vmatprep.subr.mxu0 0.0
  %800 = vmatpush1.msra.mxu0 %v210
  %801 = vmatprep.subr.mxu0 0.0
  %802 = vmatpush1.msra.mxu0 %v223
  %803 = vmatprep.subr.mxu0 0.0
  %804 = vmatpush1.msra.mxu0 %v236
  %805 = vmatprep.subr.mxu0 0.0
  %806 = vmatpush1.msra.mxu0 %v249
  %807 = vmatprep.subr.mxu0 0.0
  %808 = vmatpush1.msra.mxu0 %v262
  %809 = vmatprep.subr.mxu0 0.0
  %810 = vmatpush1.msra.mxu0 %v275
  %811 = vmatprep.subr.mxu0 0.0
  %812 = vmatpush1.msra.mxu0 %v288
  %813 = vmatprep.subr.mxu0 0.0
  %814 = vmatpush1.msra.mxu0 %v301
  %815 = vmatprep.subr.mxu0 0.0
  %816 = vmatpush1.msra.mxu0 %v314
  %817 = vmatprep.subr.mxu0 0.0
  %818 = vmatpush1.msra.mxu0 %v327
  %819 = vmatprep.subr.mxu0 0.0
  %820 = vmatpush1.msra.mxu0 %v340
  %821 = vmatprep.subr.mxu0 0.0
  %822 = vmatpush1.msra.mxu0 0.0
  %823 = vmatprep.subr.mxu0 0.0
  %824 = vmatpush1.msra.mxu0 0.0
  %825 = vmatprep.subr.mxu0 0.0
  %826 = vmatpush1.msra.mxu0 0.0
  %827 = vmatprep.subr.mxu0 0.0
  %828 = vmatpush1.msra.mxu0 0.0
  %829 = vmatprep.subr.mxu0 0.0
  %830 = vmatpush1.msra.mxu0 0.0
  %831 = vmatprep.subr.mxu0 0.0
  %832 = vmatpush1.msra.mxu0 0.0
  %833 = vmatprep.subr.mxu0 0.0
  %834 = vmatpush1.msra.mxu0 0.0
  %835 = vmatprep.mubr.f32.mxu0 %v343
  %836 = vmatmul.mubr.f32.gmra.mrb[0].mxu0 %v14
  %v837 = vpop.f32.mrb[0].mxu0
  %v838 = vadd.f32 0.0, %v837
  %v839 = vpop.f32.mrb[0].mxu0
  %840 = vdwg.mxu0
  %v841 = vadd.f32 %v412, %v414
  %v842 = vadd.f32 %v841, %v483
  %v843 = vadd.f32 %v842, %v485
  %v844 = vadd.f32 %v843, %v554
  %v845 = vadd.f32 %v844, %v556
  %v846 = vadd.f32 %v845, %v625
  %v847 = vadd.f32 %v846, %v627
  %v848 = vadd.f32 %v847, %v696
  %v849 = vadd.f32 %v848, %v698
  %v850 = vadd.f32 %v849, %v767
  %v851 = vadd.f32 %v850, %v769
  %vm852 = vcmask 261120
  %v853 = vsel %vm852, %v838, 0.0
  %v854 = vadd.f32 %v851, %v853
  %855 = vadd.xlane.f32.xlu0 %v854
  %v856 = vpop.xlane.xlu0 %855
  %v857 = vmul.f32 %v412, %v412
  %v858 = vmul.f32 %v414, %v414
  %v859 = vmul.f32 %v483, %v483
  %v860 = vmul.f32 %v485, %v485
  %v861 = vmul.f32 %v554, %v554
  %v862 = vmul.f32 %v556, %v556
  %v863 = vmul.f32 %v625, %v625
  %v864 = vmul.f32 %v627, %v627
  %v865 = vmul.f32 %v696, %v696
  %v866 = vmul.f32 %v698, %v698
  %v867 = vmul.f32 %v767, %v767
  %v868 = vmul.f32 %v769, %v769
  %v869 = vmul.f32 %v838, %v838
  %v870 = vadd.f32 %v857, %v858
  %v871 = vadd.f32 %v870, %v859
  %v872 = vadd.f32 %v871, %v860
  %v873 = vadd.f32 %v872, %v861
  %v874 = vadd.f32 %v873, %v862
  %v875 = vadd.f32 %v874, %v863
  %v876 = vadd.f32 %v875, %v864
  %v877 = vadd.f32 %v876, %v865
  %v878 = vadd.f32 %v877, %v866
  %v879 = vadd.f32 %v878, %v867
  %v880 = vadd.f32 %v879, %v868
  %v881 = vsel %vm852, %v869, 0.0
  %v882 = vadd.f32 %v880, %v881
  %883 = vadd.xlane.f32.xlu0 %v882
  %v884 = vpop.xlane.xlu0 %883
  %v885 = vmul.f32 %v856, 0.0006377551
  %v886 = vmul.f32 %v884, 0.0006377551
  %v887 = vmul.f32 %v885, %v885
  %v888 = vsub.f32 %v886, %v887
  %v889 = vld [vmem:[%s2] sm:$0xff]
  %v890 = vadd.f32 %v888, 1e-05
  %v891 = vrsqrt.pop %v890
  %v892 = vmul.f32 %v889, %v891
  %v893 = vmul.f32 %v885, %v892
  %895 = vrot.lane.b32.xlu0 %v893, 1
  %v896 = vpop.permute.xlu0 %895
  %v898 = vsub.f32 %v889, %v896
  %900 = vset.pattern.permute.xlu0 0
  %901 = vperm.xlu0 %900, %v892
  %v902 = vpop.permute.xlu0 %901
  %v904 = vmul.f32 %v412, %v902
  %v905 = vmul.f32 %v414, %v902
  %v906 = vmul.f32 %v483, %v902
  %v907 = vmul.f32 %v485, %v902
  %v908 = vmul.f32 %v554, %v902
  %v909 = vmul.f32 %v556, %v902
  %v910 = vmul.f32 %v625, %v902
  %v911 = vmul.f32 %v627, %v902
  %v912 = vmul.f32 %v696, %v902
  %v913 = vmul.f32 %v698, %v902
  %v914 = vmul.f32 %v767, %v902
  %v915 = vmul.f32 %v769, %v902
  %v916 = vmul.f32 %v838, %v902
  %918 = vset.pattern.permute.xlu0 1
  %919 = vperm.xlu0 %918, %v898
  %v920 = vpop.permute.xlu0 %919
  %v922 = vadd.f32 %v904, %v920
  %v923 = vadd.f32 %v905, %v920
  %v924 = vadd.f32 %v906, %v920
  %v925 = vadd.f32 %v907, %v920
  %v926 = vadd.f32 %v908, %v920
  %v927 = vadd.f32 %v909, %v920
  %v928 = vadd.f32 %v910, %v920
  %v929 = vadd.f32 %v911, %v920
  %v930 = vadd.f32 %v912, %v920
  %v931 = vadd.f32 %v913, %v920
  %v932 = vadd.f32 %v914, %v920
  %v933 = vadd.f32 %v915, %v920
  %v934 = vadd.f32 %v916, %v920
  %vm935 = vcmp.ge.f32.partialorder %v922, 0.0
  %vm936 = vcmp.ge.f32.partialorder %v923, 0.0
  %vm937 = vcmp.ge.f32.partialorder %v924, 0.0
  %vm938 = vcmp.ge.f32.partialorder %v925, 0.0
  %vm939 = vcmp.ge.f32.partialorder %v926, 0.0
  %vm940 = vcmp.ge.f32.partialorder %v927, 0.0
  %vm941 = vcmp.ge.f32.partialorder %v928, 0.0
  %vm942 = vcmp.ge.f32.partialorder %v929, 0.0
  %vm943 = vcmp.ge.f32.partialorder %v930, 0.0
  %vm944 = vcmp.ge.f32.partialorder %v931, 0.0
  %vm945 = vcmp.ge.f32.partialorder %v932, 0.0
  %vm946 = vcmp.ge.f32.partialorder %v933, 0.0
  %vm947 = vcmp.ge.f32.partialorder %v934, 0.0
  %949 = vset.pattern.permute.xlu0 2
  %950 = vperm.xlu0 %949, %v889
  %v951 = vpop.permute.xlu0 %950
  %v953 = vmul.f32 %v951, %v922
  %v954 = vmul.f32 %v951, %v923
  %v955 = vmul.f32 %v951, %v924
  %v956 = vmul.f32 %v951, %v925
  %v957 = vmul.f32 %v951, %v926
  %v958 = vmul.f32 %v951, %v927
  %v959 = vmul.f32 %v951, %v928
  %v960 = vmul.f32 %v951, %v929
  %v961 = vmul.f32 %v951, %v930
  %v962 = vmul.f32 %v951, %v931
  %v963 = vmul.f32 %v951, %v932
  %v964 = vmul.f32 %v951, %v933
  %v965 = vmul.f32 %v951, %v934
  %v966 = vsel %vm935, %v922, %v953
  %v967 = vsel %vm936, %v923, %v954
  %v968 = vsel %vm937, %v924, %v955
  %v969 = vsel %vm938, %v925, %v956
  %v970 = vsel %vm939, %v926, %v957
  %v971 = vsel %vm940, %v927, %v958
  %v972 = vsel %vm941, %v928, %v959
  %v973 = vsel %vm942, %v929, %v960
  %v974 = vsel %vm943, %v930, %v961
  %v975 = vsel %vm944, %v931, %v962
  %v976 = vsel %vm945, %v932, %v963
  %v977 = vsel %vm946, %v933, %v964
  %v978 = vsel %vm947, %v934, %v965
  %979 = vst [vmem:[%s3] sm:$0xff] %v966
  %980 = vst [vmem:[%s3 + $0x8] sm:$0xff] %v967
  %981 = vst [vmem:[%s3 + $0x10] sm:$0xff] %v968
  %982 = vst [vmem:[%s3 + $0x18] sm:$0xff] %v969
  %983 = vst [vmem:[%s3 + $0x20] sm:$0xff] %v970
  %984 = vst [vmem:[%s3 + $0x28] sm:$0xff] %v971
  %985 = vst [vmem:[%s3 + $0x30] sm:$0xff] %v972
  %986 = vst [vmem:[%s3 + $0x38] sm:$0xff] %v973
  %987 = vst [vmem:[%s3 + $0x40] sm:$0xff] %v974
  %988 = vst [vmem:[%s3 + $0x48] sm:$0xff] %v975
  %989 = vst [vmem:[%s3 + $0x50] sm:$0xff] %v976
  %990 = vst [vmem:[%s3 + $0x58] sm:$0xff] %v977
  %991 = vst.msk [vmem:[%s3 + $0x60] sm:$0xff] %vm852, %v978
  // Predicated region
  $region14: #{vae_conv_forward.22} parent=0 // pred_check
    _
  $region15: #{vae_conv_forward.22} parent=0 // pred_check_branch
    %993 = sbr.rel (0) target = $region17
  $region16: #{vae_conv_forward.22} parent=0 // pred_region
    _
  $region17: #{vae_conv_forward.22} parent=0 // pred_fallthru
    _
  // Predicated region
  $region18: #{vae_conv_forward.22} parent=0 // pred_check
    _
  $region19: #{vae_conv_forward.22} parent=0 // pred_check_branch
    %995 = sbr.rel (0) target = $region21
  $region20: #{vae_conv_forward.22} parent=0 // pred_region
    _
  $region21: #{vae_conv_forward.22} parent=0 // pred_fallthru
    _

// kernel: vae_conv_forward.23
$region0: #{vae_conv_forward.23}
  #allocation0 [shape = 'u32[]', space=smem, size = 0x4, offset = 0x4, fixed_abs, tag = 'smem constant byte address 0x4 - core index']
  #allocation1 [shape = 'u32[144,128]{1,0:T(1,128)}', space=vmem, size = 0x12000, scoped, tag = 'internal scratch']
  #allocation2 [shape = 'f32[1,1]{1,0:T(1,128)S(1)}', space=vmem, size = 0x200, scoped, tag = 'scoped memory for vae_conv_forward.23']
  %s0 = inlined_call_operand.vmem [shape: f32[72,1568], index: 0, kind: input, shape index: {}]
  %s1 = inlined_call_operand.vmem [shape: f32[1,72], index: 1, kind: input, shape index: {}]
  %s2 = inlined_call_operand.<no memory space> [shape: f32[1,1], index: 2, kind: input, shape index: {}]
  %s3 = inlined_call_operand.vmem [shape: f32[1,1568], index: 3, kind: output, shape index: {}]
  %s4 = sld [smem:[#allocation0]]
  $region22: #{vae_conv_forward.23} parent=0
    _
  %s6 = ssub.s32 1, %s4
  %s7 = scalar_select 0, %s6, %s4
  %v8 = vstv %s2
  %9 = vst [vmem:[#allocation2] sm:$0x1] %v8
  // Predicated region
  $region2: #{vae_conv_forward.23} parent=0 // pred_check
    _
  $region3: #{vae_conv_forward.23} parent=0 // pred_check_branch
    %11 = sbr.rel (0) target = $region5
  $region4: #{vae_conv_forward.23} parent=0 // pred_region
    _
  $region5: #{vae_conv_forward.23} parent=0 // pred_fallthru
    _
  // Predicated region
  $region6: #{vae_conv_forward.23} parent=0 // pred_check
    _
  $region7: #{vae_conv_forward.23} parent=0 // pred_check_branch
    %13 = sbr.rel (0) target = $region9
  $region8: #{vae_conv_forward.23} parent=0 // pred_region
    _
  $region9: #{vae_conv_forward.23} parent=0 // pred_fallthru
    _
  // Predicated region
  $region10: #{vae_conv_forward.23} parent=0 // pred_check
    _
  $region11: #{vae_conv_forward.23} parent=0 // pred_check_branch
    %15 = sbr.rel (0) target = $region13
  $region12: #{vae_conv_forward.23} parent=0 // pred_region
    _
  $region13: #{vae_conv_forward.23} parent=0 // pred_fallthru
    _
  %v16 = vld [vmem:[%s1] sm:$0x1]
  %v17 = vld [vmem:[%s0] sm:$0xff]
  %v18 = vld [vmem:[%s0 + $0x8] sm:$0xff]
  %v19 = vld [vmem:[%s0 + $0x10] sm:$0xff]
  %v20 = vld [vmem:[%s0 + $0x18] sm:$0xff]
  %v21 = vld [vmem:[%s0 + $0x20] sm:$0xff]
  %v22 = vld [vmem:[%s0 + $0x28] sm:$0xff]
  %v23 = vld [vmem:[%s0 + $0x30] sm:$0xff]
  %v24 = vld [vmem:[%s0 + $0x38] sm:$0xff]
  %v25 = vld [vmem:[%s0 + $0x40] sm:$0xff]
  %v26 = vld [vmem:[%s0 + $0x48] sm:$0xff]
  %v27 = vld [vmem:[%s0 + $0x50] sm:$0xff]
  %v28 = vld [vmem:[%s0 + $0x58] sm:$0xff]
  %v29 = vld [vmem:[%s0 + $0x60] sm:$0xff]
  %v30 = vld [vmem:[%s0 + $0x68] sm:$0xff]
  %v31 = vld [vmem:[%s0 + $0x70] sm:$0xff]
  %v32 = vld [vmem:[%s0 + $0x78] sm:$0xff]
  %v33 = vld [vmem:[%s0 + $0x80] sm:$0xff]
  %v34 = vld [vmem:[%s0 + $0x88] sm:$0xff]
  %v35 = vld [vmem:[%s0 + $0x90] sm:$0xff]
  %v36 = vld [vmem:[%s0 + $0x98] sm:$0xff]
  %v37 = vld [vmem:[%s0 + $0xa0] sm:$0xff]
  %v38 = vld [vmem:[%s0 + $0xa8] sm:$0xff]
  %v39 = vld [vmem:[%s0 + $0xb0] sm:$0xff]
  %v40 = vld [vmem:[%s0 + $0xb8] sm:$0xff]
  %v41 = vld [vmem:[%s0 + $0xc0] sm:$0xff]
  %v42 = vld [vmem:[%s0 + $0xc8] sm:$0xff]
  %v43 = vld [vmem:[%s0 + $0xd0] sm:$0xff]
  %v44 = vld [vmem:[%s0 + $0xd8] sm:$0xff]
  %v45 = vld [vmem:[%s0 + $0xe0] sm:$0xff]
  %v46 = vld [vmem:[%s0 + $0xe8] sm:$0xff]
  %v47 = vld [vmem:[%s0 + $0xf0] sm:$0xff]
  %v48 = vld [vmem:[%s0 + $0xf8] sm:$0xff]
  %v49 = vld [vmem:[%s0 + $0x100] sm:$0xff]
  %v50 = vld [vmem:[%s0 + $0x108] sm:$0xff]
  %v51 = vld [vmem:[%s0 + $0x110] sm:$0xff]
  %v52 = vld [vmem:[%s0 + $0x118] sm:$0xff]
  %v53 = vld [vmem:[%s0 + $0x120] sm:$0xff]
  %v54 = vld [vmem:[%s0 + $0x128] sm:$0xff]
  %v55 = vld [vmem:[%s0 + $0x130] sm:$0xff]
  %v56 = vld [vmem:[%s0 + $0x138] sm:$0xff]
  %v57 = vld [vmem:[%s0 + $0x140] sm:$0xff]
  %v58 = vld [vmem:[%s0 + $0x148] sm:$0xff]
  %v59 = vld [vmem:[%s0 + $0x150] sm:$0xff]
  %v60 = vld [vmem:[%s0 + $0x158] sm:$0xff]
  %v61 = vld [vmem:[%s0 + $0x160] sm:$0xff]
  %v62 = vld [vmem:[%s0 + $0x168] sm:$0xff]
  %v63 = vld [vmem:[%s0 + $0x170] sm:$0xff]
  %v64 = vld [vmem:[%s0 + $0x178] sm:$0xff]
  %v65 = vld [vmem:[%s0 + $0x180] sm:$0xff]
  %v66 = vld [vmem:[%s0 + $0x188] sm:$0xff]
  %v67 = vld [vmem:[%s0 + $0x190] sm:$0xff]
  %v68 = vld [vmem:[%s0 + $0x198] sm:$0xff]
  %v69 = vld [vmem:[%s0 + $0x1a0] sm:$0xff]
  %v70 = vld [vmem:[%s0 + $0x1a8] sm:$0xff]
  %v71 = vld [vmem:[%s0 + $0x1b0] sm:$0xff]
  %v72 = vld [vmem:[%s0 + $0x1b8] sm:$0xff]
  %v73 = vld [vmem:[%s0 + $0x1c0] sm:$0xff]
  %v74 = vld [vmem:[%s0 + $0x1c8] sm:$0xff]
  %v75 = vld [vmem:[%s0 + $0x1d0] sm:$0xff]
  %v76 = vld [vmem:[%s0 + $0x1d8] sm:$0xff]
  %v77 = vld [vmem:[%s0 + $0x1e0] sm:$0xff]
  %v78 = vld [vmem:[%s0 + $0x1e8] sm:$0xff]
  %v79 = vld [vmem:[%s0 + $0x1f0] sm:$0xff]
  %v80 = vld [vmem:[%s0 + $0x1f8] sm:$0xff]
  %v81 = vld [vmem:[%s0 + $0x200] sm:$0xff]
  %v82 = vld [vmem:[%s0 + $0x208] sm:$0xff]
  %v83 = vld [vmem:[%s0 + $0x210] sm:$0xff]
  %v84 = vld [vmem:[%s0 + $0x218] sm:$0xff]
  %v85 = vld [vmem:[%s0 + $0x220] sm:$0xff]
  %v86 = vld [vmem:[%s0 + $0x228] sm:$0xff]
  %v87 = vld [vmem:[%s0 + $0x230] sm:$0xff]
  %v88 = vld [vmem:[%s0 + $0x238] sm:$0xff]
  %v89 = vld [vmem:[%s0 + $0x240] sm:$0xff]
  %v90 = vld [vmem:[%s0 + $0x248] sm:$0xff]
  %v91 = vld [vmem:[%s0 + $0x250] sm:$0xff]
  %v92 = vld [vmem:[%s0 + $0x258] sm:$0xff]
  %v93 = vld [vmem:[%s0 + $0x260] sm:$0xff]
  %v94 = vld [vmem:[%s0 + $0x268] sm:$0xff]
  %v95 = vld [vmem:[%s0 + $0x270] sm:$0xff]
  %v96 = vld [vmem:[%s0 + $0x278] sm:$0xff]
  %v97 = vld [vmem:[%s0 + $0x280] sm:$0xff]
  %v98 = vld [vmem:[%s0 + $0x288] sm:$0xff]
  %v99 = vld [vmem:[%s0 + $0x290] sm:$0xff]
  %v100 = vld [vmem:[%s0 + $0x298] sm:$0xff]
  %v101 = vld [vmem:[%s0 + $0x2a0] sm:$0xff]
  %v102 = vld [vmem:[%s0 + $0x2a8] sm:$0xff]
  %v103 = vld [vmem:[%s0 + $0x2b0] sm:$0xff]
  %v104 = vld [vmem:[%s0 + $0x2b8] sm:$0xff]
  %v105 = vld [vmem:[%s0 + $0x2c0] sm:$0xff]
  %v106 = vld [vmem:[%s0 + $0x2c8] sm:$0xff]
  %v107 = vld [vmem:[%s0 + $0x2d0] sm:$0xff]
  %v108 = vld [vmem:[%s0 + $0x2d8] sm:$0xff]
  %v109 = vld [vmem:[%s0 + $0x2e0] sm:$0xff]
  %v110 = vld [vmem:[%s0 + $0x2e8] sm:$0xff]
  %v111 = vld [vmem:[%s0 + $0x2f0] sm:$0xff]
  %v112 = vld [vmem:[%s0 + $0x2f8] sm:$0xff]
  %v113 = vld [vmem:[%s0 + $0x300] sm:$0xff]
  %v114 = vld [vmem:[%s0 + $0x308] sm:$0xff]
  %v115 = vld [vmem:[%s0 + $0x310] sm:$0xff]
  %v116 = vld [vmem:[%s0 + $0x318] sm:$0xff]
  %v117 = vld [vmem:[%s0 + $0x320] sm:$0xff]
  %v118 = vld [vmem:[%s0 + $0x328] sm:$0xff]
  %v119 = vld [vmem:[%s0 + $0x330] sm:$0xff]
  %v120 = vld [vmem:[%s0 + $0x338] sm:$0xff]
  %v121 = vld [vmem:[%s0 + $0x340] sm:$0xff]
  %v122 = vld [vmem:[%s0 + $0x348] sm:$0xff]
  %v123 = vld [vmem:[%s0 + $0x350] sm:$0xff]
  %v124 = vld [vmem:[%s0 + $0x358] sm:$0xff]
  %v125 = vld [vmem:[%s0 + $0x360] sm:$0xff]
  %v126 = vld [vmem:[%s0 + $0x368] sm:$0xff]
  %v127 = vld [vmem:[%s0 + $0x370] sm:$0xff]
  %v128 = vld [vmem:[%s0 + $0x378] sm:$0xff]
  %v129 = vld [vmem:[%s0 + $0x380] sm:$0xff]
  %v130 = vld [vmem:[%s0 + $0x388] sm:$0xff]
  %v131 = vld [vmem:[%s0 + $0x390] sm:$0xff]
  %v132 = vld [vmem:[%s0 + $0x398] sm:$0xff]
  %v133 = vld [vmem:[%s0 + $0x3a0] sm:$0xff]
  %v134 = vld [vmem:[#allocation2] sm:$0x1]
  %136 = vset.pattern.permute.xlu0 0
  %137 = vperm.xlu0 %136, %v134
  %v138 = vpop.permute.xlu0 %137
  %v140 = vlaneseq
  %v141 = vshrl.u32 %v140, 7
  %v142 = vsub.s32 0, %v141
  %v143 = vrot.slane %v138, %v142
  %vm144 = vcmask 588800
  %v146 = vsel %vm144, %v16, 0
  %148 = vmatprep.subr.mxu0 %v18
  %149 = vmatpush1.msra.mxu0 %v17
  %150 = vmatprep.subr.mxu0 %v31
  %151 = vmatpush1.msra.mxu0 %v30
  %152 = vmatprep.subr.mxu0 %v44
  %153 = vmatpush1.msra.mxu0 %v43
  %154 = vmatprep.subr.mxu0 %v57
  %155 = vmatpush1.msra.mxu0 %v56
  %156 = vmatprep.subr.mxu0 %v70
  %157 = vmatpush1.msra.mxu0 %v69
  %158 = vmatprep.subr.mxu0 %v83
  %159 = vmatpush1.msra.mxu0 %v82
  %160 = vmatprep.subr.mxu0 %v96
  %161 = vmatpush1.msra.mxu0 %v95
  %162 = vmatprep.subr.mxu0 %v109
  %163 = vmatpush1.msra.mxu0 %v108
  %164 = vmatprep.subr.mxu0 %v122
  %165 = vmatpush1.msra.mxu0 %v121
  %166 = vmatprep.subr.mxu0 0.0
  %167 = vmatpush1.msra.mxu0 0.0
  %168 = vmatprep.subr.mxu0 0.0
  %169 = vmatpush1.msra.mxu0 0.0
  %170 = vmatprep.subr.mxu0 0.0
  %171 = vmatpush1.msra.mxu0 0.0
  %172 = vmatprep.subr.mxu0 0.0
  %173 = vmatpush1.msra.mxu0 0.0
  %174 = vmatprep.subr.mxu0 0.0
  %175 = vmatpush1.msra.mxu0 0.0
  %176 = vmatprep.subr.mxu0 0.0
  %177 = vmatpush1.msra.mxu0 0.0
  %178 = vmatprep.subr.mxu0 0.0
  %179 = vmatpush1.msra.mxu0 0.0
  %180 = vmatprep.subr.mxu0 0.0
  %181 = vmatpush1.msra.mxu0 0.0
  %182 = vmatprep.subr.mxu0 0.0
  %183 = vmatpush1.msra.mxu0 0.0
  %184 = vmatprep.subr.mxu0 0.0
  %185 = vmatpush1.msra.mxu0 0.0
  %186 = vmatprep.subr.mxu0 0.0
  %187 = vmatpush1.msra.mxu0 0.0
  %188 = vmatprep.subr.mxu0 0.0
  %189 = vmatpush1.msra.mxu0 0.0
  %190 = vmatprep.subr.mxu0 0.0
  %191 = vmatpush1.msra.mxu0 0.0
  %192 = vmatprep.subr.mxu0 0.0
  %193 = vmatpush1.msra.mxu0 0.0
  %194 = vmatprep.subr.mxu0 0.0
  %195 = vmatpush1.msra.mxu0 0.0
  %196 = vmatprep.subr.mxu0 0.0
  %197 = vmatpush1.msra.mxu0 0.0
  %198 = vmatprep.subr.mxu0 0.0
  %199 = vmatpush1.msra.mxu0 0.0
  %200 = vmatprep.subr.mxu0 0.0
  %201 = vmatpush1.msra.mxu0 0.0
  %202 = vmatprep.subr.mxu0 0.0
  %203 = vmatpush1.msra.mxu0 0.0
  %204 = vmatprep.subr.mxu0 0.0
  %205 = vmatpush1.msra.mxu0 0.0
  %206 = vmatprep.subr.mxu0 0.0
  %207 = vmatpush1.msra.mxu0 0.0
  %208 = vmatprep.subr.mxu0 0.0
  %209 = vmatpush1.msra.mxu0 0.0
  %210 = vmatprep.subr.mxu0 0.0
  %211 = vmatpush1.msra.mxu0 0.0
  %212 = vmatprep.mubr.f32.mxu0 0.0
  %213 = vmatmul.mubr.f32.gmra.mrb[0].mxu0 %v146
  %v214 = vpop.f32.mrb[0].mxu0
  %v215 = vadd.f32 %v143, %v214
  %v216 = vpop.f32.mrb[0].mxu0
  %v217 = vadd.f32 %v143, %v216
  %218 = vdwg.mxu0
  %219 = vmatprep.subr.mxu0 %v20
  %220 = vmatpush1.msra.mxu0 %v19
  %221 = vmatprep.subr.mxu0 %v33
  %222 = vmatpush1.msra.mxu0 %v32
  %223 = vmatprep.subr.mxu0 %v46
  %224 = vmatpush1.msra.mxu0 %v45
  %225 = vmatprep.subr.mxu0 %v59
  %226 = vmatpush1.msra.mxu0 %v58
  %227 = vmatprep.subr.mxu0 %v72
  %228 = vmatpush1.msra.mxu0 %v71
  %229 = vmatprep.subr.mxu0 %v85
  %230 = vmatpush1.msra.mxu0 %v84
  %231 = vmatprep.subr.mxu0 %v98
  %232 = vmatpush1.msra.mxu0 %v97
  %233 = vmatprep.subr.mxu0 %v111
  %234 = vmatpush1.msra.mxu0 %v110
  %235 = vmatprep.subr.mxu0 %v124
  %236 = vmatpush1.msra.mxu0 %v123
  %237 = vmatprep.subr.mxu0 0.0
  %238 = vmatpush1.msra.mxu0 0.0
  %239 = vmatprep.subr.mxu0 0.0
  %240 = vmatpush1.msra.mxu0 0.0
  %241 = vmatprep.subr.mxu0 0.0
  %242 = vmatpush1.msra.mxu0 0.0
  %243 = vmatprep.subr.mxu0 0.0
  %244 = vmatpush1.msra.mxu0 0.0
  %245 = vmatprep.subr.mxu0 0.0
  %246 = vmatpush1.msra.mxu0 0.0
  %247 = vmatprep.subr.mxu0 0.0
  %248 = vmatpush1.msra.mxu0 0.0
  %249 = vmatprep.subr.mxu0 0.0
  %250 = vmatpush1.msra.mxu0 0.0
  %251 = vmatprep.subr.mxu0 0.0
  %252 = vmatpush1.msra.mxu0 0.0
  %253 = vmatprep.subr.mxu0 0.0
  %254 = vmatpush1.msra.mxu0 0.0
  %255 = vmatprep.subr.mxu0 0.0
  %256 = vmatpush1.msra.mxu0 0.0
  %257 = vmatprep.subr.mxu0 0.0
  %258 = vmatpush1.msra.mxu0 0.0
  %259 = vmatprep.subr.mxu0 0.0
  %260 = vmatpush1.msra.mxu0 0.0
  %261 = vmatprep.subr.mxu0 0.0
  %262 = vmatpush1.msra.mxu0 0.0
  %263 = vmatprep.subr.mxu0 0.0
  %264 = vmatpush1.msra.mxu0 0.0
  %265 = vmatprep.subr.mxu0 0.0
  %266 = vmatpush1.msra.mxu0 0.0
  %267 = vmatprep.subr.mxu0 0.0
  %268 = vmatpush1.msra.mxu0 0.0
  %269 = vmatprep.subr.mxu0 0.0
  %270 = vmatpush1.msra.mxu0 0.0
  %271 = vmatprep.subr.mxu0 0.0
  %272 = vmatpush1.msra.mxu0 0.0
  %273 = vmatprep.subr.mxu0 0.0
  %274 = vmatpush1.msra.mxu0 0.0
  %275 = vmatprep.subr.mxu0 0.0
  %276 = vmatpush1.msra.mxu0 0.0
  %277 = vmatprep.subr.mxu0 0.0
  %278 = vmatpush1.msra.mxu0 0.0
  %279 = vmatprep.subr.mxu0 0.0
  %280 = vmatpush1.msra.mxu0 0.0
  %281 = vmatprep.subr.mxu0 0.0
  %282 = vmatpush1.msra.mxu0 0.0
  %283 = vmatprep.mubr.f32.mxu0 0.0
  %284 = vmatmul.mubr.f32.gmra.mrb[0].mxu0 %v146
  %v285 = vpop.f32.mrb[0].mxu0
  %v286 = vadd.f32 %v143, %v285
  %v287 = vpop.f32.mrb[0].mxu0
  %v288 = vadd.f32 %v143, %v287
  %289 = vdwg.mxu0
  %290 = vmatprep.subr.mxu0 %v22
  %291 = vmatpush1.msra.mxu0 %v21
  %292 = vmatprep.subr.mxu0 %v35
  %293 = vmatpush1.msra.mxu0 %v34
  %294 = vmatprep.subr.mxu0 %v48
  %295 = vmatpush1.msra.mxu0 %v47
  %296 = vmatprep.subr.mxu0 %v61
  %297 = vmatpush1.msra.mxu0 %v60
  %298 = vmatprep.subr.mxu0 %v74
  %299 = vmatpush1.msra.mxu0 %v73
  %300 = vmatprep.subr.mxu0 %v87
  %301 = vmatpush1.msra.mxu0 %v86
  %302 = vmatprep.subr.mxu0 %v100
  %303 = vmatpush1.msra.mxu0 %v99
  %304 = vmatprep.subr.mxu0 %v113
  %305 = vmatpush1.msra.mxu0 %v112
  %306 = vmatprep.subr.mxu0 %v126
  %307 = vmatpush1.msra.mxu0 %v125
  %308 = vmatprep.subr.mxu0 0.0
  %309 = vmatpush1.msra.mxu0 0.0
  %310 = vmatprep.subr.mxu0 0.0
  %311 = vmatpush1.msra.mxu0 0.0
  %312 = vmatprep.subr.mxu0 0.0
  %313 = vmatpush1.msra.mxu0 0.0
  %314 = vmatprep.subr.mxu0 0.0
  %315 = vmatpush1.msra.mxu0 0.0
  %316 = vmatprep.subr.mxu0 0.0
  %317 = vmatpush1.msra.mxu0 0.0
  %318 = vmatprep.subr.mxu0 0.0
  %319 = vmatpush1.msra.mxu0 0.0
  %320 = vmatprep.subr.mxu0 0.0
  %321 = vmatpush1.msra.mxu0 0.0
  %322 = vmatprep.subr.mxu0 0.0
  %323 = vmatpush1.msra.mxu0 0.0
  %324 = vmatprep.subr.mxu0 0.0
  %325 = vmatpush1.msra.mxu0 0.0
  %326 = vmatprep.subr.mxu0 0.0
  %327 = vmatpush1.msra.mxu0 0.0
  %328 = vmatprep.subr.mxu0 0.0
  %329 = vmatpush1.msra.mxu0 0.0
  %330 = vmatprep.subr.mxu0 0.0
  %331 = vmatpush1.msra.mxu0 0.0
  %332 = vmatprep.subr.mxu0 0.0
  %333 = vmatpush1.msra.mxu0 0.0
  %334 = vmatprep.subr.mxu0 0.0
  %335 = vmatpush1.msra.mxu0 0.0
  %336 = vmatprep.subr.mxu0 0.0
  %337 = vmatpush1.msra.mxu0 0.0
  %338 = vmatprep.subr.mxu0 0.0
  %339 = vmatpush1.msra.mxu0 0.0
  %340 = vmatprep.subr.mxu0 0.0
  %341 = vmatpush1.msra.mxu0 0.0
  %342 = vmatprep.subr.mxu0 0.0
  %343 = vmatpush1.msra.mxu0 0.0
  %344 = vmatprep.subr.mxu0 0.0
  %345 = vmatpush1.msra.mxu0 0.0
  %346 = vmatprep.subr.mxu0 0.0
  %347 = vmatpush1.msra.mxu0 0.0
  %348 = vmatprep.subr.mxu0 0.0
  %349 = vmatpush1.msra.mxu0 0.0
  %350 = vmatprep.subr.mxu0 0.0
  %351 = vmatpush1.msra.mxu0 0.0
  %352 = vmatprep.subr.mxu0 0.0
  %353 = vmatpush1.msra.mxu0 0.0
  %354 = vmatprep.mubr.f32.mxu0 0.0
  %355 = vmatmul.mubr.f32.gmra.mrb[0].mxu0 %v146
  %v356 = vpop.f32.mrb[0].mxu0
  %v357 = vadd.f32 %v143, %v356
  %v358 = vpop.f32.mrb[0].mxu0
  %v359 = vadd.f32 %v143, %v358
  %360 = vdwg.mxu0
  %361 = vmatprep.subr.mxu0 %v24
  %362 = vmatpush1.msra.mxu0 %v23
  %363 = vmatprep.subr.mxu0 %v37
  %364 = vmatpush1.msra.mxu0 %v36
  %365 = vmatprep.subr.mxu0 %v50
  %366 = vmatpush1.msra.mxu0 %v49
  %367 = vmatprep.subr.mxu0 %v63
  %368 = vmatpush1.msra.mxu0 %v62
  %369 = vmatprep.subr.mxu0 %v76
  %370 = vmatpush1.msra.mxu0 %v75
  %371 = vmatprep.subr.mxu0 %v89
  %372 = vmatpush1.msra.mxu0 %v88
  %373 = vmatprep.subr.mxu0 %v102
  %374 = vmatpush1.msra.mxu0 %v101
  %375 = vmatprep.subr.mxu0 %v115
  %376 = vmatpush1.msra.mxu0 %v114
  %377 = vmatprep.subr.mxu0 %v128
  %378 = vmatpush1.msra.mxu0 %v127
  %379 = vmatprep.subr.mxu0 0.0
  %380 = vmatpush1.msra.mxu0 0.0
  %381 = vmatprep.subr.mxu0 0.0
  %382 = vmatpush1.msra.mxu0 0.0
  %383 = vmatprep.subr.mxu0 0.0
  %384 = vmatpush1.msra.mxu0 0.0
  %385 = vmatprep.subr.mxu0 0.0
  %386 = vmatpush1.msra.mxu0 0.0
  %387 = vmatprep.subr.mxu0 0.0
  %388 = vmatpush1.msra.mxu0 0.0
  %389 = vmatprep.subr.mxu0 0.0
  %390 = vmatpush1.msra.mxu0 0.0
  %391 = vmatprep.subr.mxu0 0.0
  %392 = vmatpush1.msra.mxu0 0.0
  %393 = vmatprep.subr.mxu0 0.0
  %394 = vmatpush1.msra.mxu0 0.0
  %395 = vmatprep.subr.mxu0 0.0
  %396 = vmatpush1.msra.mxu0 0.0
  %397 = vmatprep.subr.mxu0 0.0
  %398 = vmatpush1.msra.mxu0 0.0
  %399 = vmatprep.subr.mxu0 0.0
  %400 = vmatpush1.msra.mxu0 0.0
  %401 = vmatprep.subr.mxu0 0.0
  %402 = vmatpush1.msra.mxu0 0.0
  %403 = vmatprep.subr.mxu0 0.0
  %404 = vmatpush1.msra.mxu0 0.0
  %405 = vmatprep.subr.mxu0 0.0
  %406 = vmatpush1.msra.mxu0 0.0
  %407 = vmatprep.subr.mxu0 0.0
  %408 = vmatpush1.msra.mxu0 0.0
  %409 = vmatprep.subr.mxu0 0.0
  %410 = vmatpush1.msra.mxu0 0.0
  %411 = vmatprep.subr.mxu0 0.0
  %412 = vmatpush1.msra.mxu0 0.0
  %413 = vmatprep.subr.mxu0 0.0
  %414 = vmatpush1.msra.mxu0 0.0
  %415 = vmatprep.subr.mxu0 0.0
  %416 = vmatpush1.msra.mxu0 0.0
  %417 = vmatprep.subr.mxu0 0.0
  %418 = vmatpush1.msra.mxu0 0.0
  %419 = vmatprep.subr.mxu0 0.0
  %420 = vmatpush1.msra.mxu0 0.0
  %421 = vmatprep.subr.mxu0 0.0
  %422 = vmatpush1.msra.mxu0 0.0
  %423 = vmatprep.subr.mxu0 0.0
  %424 = vmatpush1.msra.mxu0 0.0
  %425 = vmatprep.mubr.f32.mxu0 0.0
  %426 = vmatmul.mubr.f32.gmra.mrb[0].mxu0 %v146
  %v427 = vpop.f32.mrb[0].mxu0
  %v428 = vadd.f32 %v143, %v427
  %v429 = vpop.f32.mrb[0].mxu0
  %v430 = vadd.f32 %v143, %v429
  %431 = vdwg.mxu0
  %432 = vmatprep.subr.mxu0 %v26
  %433 = vmatpush1.msra.mxu0 %v25
  %434 = vmatprep.subr.mxu0 %v39
  %435 = vmatpush1.msra.mxu0 %v38
  %436 = vmatprep.subr.mxu0 %v52
  %437 = vmatpush1.msra.mxu0 %v51
  %438 = vmatprep.subr.mxu0 %v65
  %439 = vmatpush1.msra.mxu0 %v64
  %440 = vmatprep.subr.mxu0 %v78
  %441 = vmatpush1.msra.mxu0 %v77
  %442 = vmatprep.subr.mxu0 %v91
  %443 = vmatpush1.msra.mxu0 %v90
  %444 = vmatprep.subr.mxu0 %v104
  %445 = vmatpush1.msra.mxu0 %v103
  %446 = vmatprep.subr.mxu0 %v117
  %447 = vmatpush1.msra.mxu0 %v116
  %448 = vmatprep.subr.mxu0 %v130
  %449 = vmatpush1.msra.mxu0 %v129
  %450 = vmatprep.subr.mxu0 0.0
  %451 = vmatpush1.msra.mxu0 0.0
  %452 = vmatprep.subr.mxu0 0.0
  %453 = vmatpush1.msra.mxu0 0.0
  %454 = vmatprep.subr.mxu0 0.0
  %455 = vmatpush1.msra.mxu0 0.0
  %456 = vmatprep.subr.mxu0 0.0
  %457 = vmatpush1.msra.mxu0 0.0
  %458 = vmatprep.subr.mxu0 0.0
  %459 = vmatpush1.msra.mxu0 0.0
  %460 = vmatprep.subr.mxu0 0.0
  %461 = vmatpush1.msra.mxu0 0.0
  %462 = vmatprep.subr.mxu0 0.0
  %463 = vmatpush1.msra.mxu0 0.0
  %464 = vmatprep.subr.mxu0 0.0
  %465 = vmatpush1.msra.mxu0 0.0
  %466 = vmatprep.subr.mxu0 0.0
  %467 = vmatpush1.msra.mxu0 0.0
  %468 = vmatprep.subr.mxu0 0.0
  %469 = vmatpush1.msra.mxu0 0.0
  %470 = vmatprep.subr.mxu0 0.0
  %471 = vmatpush1.msra.mxu0 0.0
  %472 = vmatprep.subr.mxu0 0.0
  %473 = vmatpush1.msra.mxu0 0.0
  %474 = vmatprep.subr.mxu0 0.0
  %475 = vmatpush1.msra.mxu0 0.0
  %476 = vmatprep.subr.mxu0 0.0
  %477 = vmatpush1.msra.mxu0 0.0
  %478 = vmatprep.subr.mxu0 0.0
  %479 = vmatpush1.msra.mxu0 0.0
  %480 = vmatprep.subr.mxu0 0.0
  %481 = vmatpush1.msra.mxu0 0.0
  %482 = vmatprep.subr.mxu0 0.0
  %483 = vmatpush1.msra.mxu0 0.0
  %484 = vmatprep.subr.mxu0 0.0
  %485 = vmatpush1.msra.mxu0 0.0
  %486 = vmatprep.subr.mxu0 0.0
  %487 = vmatpush1.msra.mxu0 0.0
  %488 = vmatprep.subr.mxu0 0.0
  %489 = vmatpush1.msra.mxu0 0.0
  %490 = vmatprep.subr.mxu0 0.0
  %491 = vmatpush1.msra.mxu0 0.0
  %492 = vmatprep.subr.mxu0 0.0
  %493 = vmatpush1.msra.mxu0 0.0
  %494 = vmatprep.subr.mxu0 0.0
  %495 = vmatpush1.msra.mxu0 0.0
  %496 = vmatprep.mubr.f32.mxu0 0.0
  %497 = vmatmul.mubr.f32.gmra.mrb[0].mxu0 %v146
  %v498 = vpop.f32.mrb[0].mxu0
  %v499 = vadd.f32 %v143, %v498
  %v500 = vpop.f32.mrb[0].mxu0
  %v501 = vadd.f32 %v143, %v500
  %502 = vdwg.mxu0
  %503 = vmatprep.subr.mxu0 %v28
  %504 = vmatpush1.msra.mxu0 %v27
  %505 = vmatprep.subr.mxu0 %v41
  %506 = vmatpush1.msra.mxu0 %v40
  %507 = vmatprep.subr.mxu0 %v54
  %508 = vmatpush1.msra.mxu0 %v53
  %509 = vmatprep.subr.mxu0 %v67
  %510 = vmatpush1.msra.mxu0 %v66
  %511 = vmatprep.subr.mxu0 %v80
  %512 = vmatpush1.msra.mxu0 %v79
  %513 = vmatprep.subr.mxu0 %v93
  %514 = vmatpush1.msra.mxu0 %v92
  %515 = vmatprep.subr.mxu0 %v106
  %516 = vmatpush1.msra.mxu0 %v105
  %517 = vmatprep.subr.mxu0 %v119
  %518 = vmatpush1.msra.mxu0 %v118
  %519 = vmatprep.subr.mxu0 %v132
  %520 = vmatpush1.msra.mxu0 %v131
  %521 = vmatprep.subr.mxu0 0.0
  %522 = vmatpush1.msra.mxu0 0.0
  %523 = vmatprep.subr.mxu0 0.0
  %524 = vmatpush1.msra.mxu0 0.0
  %525 = vmatprep.subr.mxu0 0.0
  %526 = vmatpush1.msra.mxu0 0.0
  %527 = vmatprep.subr.mxu0 0.0
  %528 = vmatpush1.msra.mxu0 0.0
  %529 = vmatprep.subr.mxu0 0.0
  %530 = vmatpush1.msra.mxu0 0.0
  %531 = vmatprep.subr.mxu0 0.0
  %532 = vmatpush1.msra.mxu0 0.0
  %533 = vmatprep.subr.mxu0 0.0
  %534 = vmatpush1.msra.mxu0 0.0
  %535 = vmatprep.subr.mxu0 0.0
  %536 = vmatpush1.msra.mxu0 0.0
  %537 = vmatprep.subr.mxu0 0.0
  %538 = vmatpush1.msra.mxu0 0.0
  %539 = vmatprep.subr.mxu0 0.0
  %540 = vmatpush1.msra.mxu0 0.0
  %541 = vmatprep.subr.mxu0 0.0
  %542 = vmatpush1.msra.mxu0 0.0
  %543 = vmatprep.subr.mxu0 0.0
  %544 = vmatpush1.msra.mxu0 0.0
  %545 = vmatprep.subr.mxu0 0.0
  %546 = vmatpush1.msra.mxu0 0.0
  %547 = vmatprep.subr.mxu0 0.0
  %548 = vmatpush1.msra.mxu0 0.0
  %549 = vmatprep.subr.mxu0 0.0
  %550 = vmatpush1.msra.mxu0 0.0
  %551 = vmatprep.subr.mxu0 0.0
  %552 = vmatpush1.msra.mxu0 0.0
  %553 = vmatprep.subr.mxu0 0.0
  %554 = vmatpush1.msra.mxu0 0.0
  %555 = vmatprep.subr.mxu0 0.0
  %556 = vmatpush1.msra.mxu0 0.0
  %557 = vmatprep.subr.mxu0 0.0
  %558 = vmatpush1.msra.mxu0 0.0
  %559 = vmatprep.subr.mxu0 0.0
  %560 = vmatpush1.msra.mxu0 0.0
  %561 = vmatprep.subr.mxu0 0.0
  %562 = vmatpush1.msra.mxu0 0.0
  %563 = vmatprep.subr.mxu0 0.0
  %564 = vmatpush1.msra.mxu0 0.0
  %565 = vmatprep.subr.mxu0 0.0
  %566 = vmatpush1.msra.mxu0 0.0
  %567 = vmatprep.mubr.f32.mxu0 0.0
  %568 = vmatmul.mubr.f32.gmra.mrb[0].mxu0 %v146
  %v569 = vpop.f32.mrb[0].mxu0
  %v570 = vadd.f32 %v143, %v569
  %v571 = vpop.f32.mrb[0].mxu0
  %v572 = vadd.f32 %v143, %v571
  %573 = vdwg.mxu0
  %574 = vmatprep.subr.mxu0 0.0
  %575 = vmatpush1.msra.mxu0 %v29
  %576 = vmatprep.subr.mxu0 0.0
  %577 = vmatpush1.msra.mxu0 %v42
  %578 = vmatprep.subr.mxu0 0.0
  %579 = vmatpush1.msra.mxu0 %v55
  %580 = vmatprep.subr.mxu0 0.0
  %581 = vmatpush1.msra.mxu0 %v68
  %582 = vmatprep.subr.mxu0 0.0
  %583 = vmatpush1.msra.mxu0 %v81
  %584 = vmatprep.subr.mxu0 0.0
  %585 = vmatpush1.msra.mxu0 %v94
  %586 = vmatprep.subr.mxu0 0.0
  %587 = vmatpush1.msra.mxu0 %v107
  %588 = vmatprep.subr.mxu0 0.0
  %589 = vmatpush1.msra.mxu0 %v120
  %590 = vmatprep.subr.mxu0 0.0
  %591 = vmatpush1.msra.mxu0 %v133
  %592 = vmatprep.subr.mxu0 0.0
  %593 = vmatpush1.msra.mxu0 0.0
  %594 = vmatprep.subr.mxu0 0.0
  %595 = vmatpush1.msra.mxu0 0.0
  %596 = vmatprep.subr.mxu0 0.0
  %597 = vmatpush1.msra.mxu0 0.0
  %598 = vmatprep.subr.mxu0 0.0
  %599 = vmatpush1.msra.mxu0 0.0
  %600 = vmatprep.subr.mxu0 0.0
  %601 = vmatpush1.msra.mxu0 0.0
  %602 = vmatprep.subr.mxu0 0.0
  %603 = vmatpush1.msra.mxu0 0.0
  %604 = vmatprep.subr.mxu0 0.0
  %605 = vmatpush1.msra.mxu0 0.0
  %606 = vmatprep.subr.mxu0 0.0
  %607 = vmatpush1.msra.mxu0 0.0
  %608 = vmatprep.subr.mxu0 0.0
  %609 = vmatpush1.msra.mxu0 0.0
  %610 = vmatprep.subr.mxu0 0.0
  %611 = vmatpush1.msra.mxu0 0.0
  %612 = vmatprep.subr.mxu0 0.0
  %613 = vmatpush1.msra.mxu0 0.0
  %614 = vmatprep.subr.mxu0 0.0
  %615 = vmatpush1.msra.mxu0 0.0
  %616 = vmatprep.subr.mxu0 0.0
  %617 = vmatpush1.msra.mxu0 0.0
  %618 = vmatprep.subr.mxu0 0.0
  %619 = vmatpush1.msra.mxu0 0.0
  %620 = vmatprep.subr.mxu0 0.0
  %621 = vmatpush1.msra.mxu0 0.0
  %622 = vmatprep.subr.mxu0 0.0
  %623 = vmatpush1.msra.mxu0 0.0
  %624 = vmatprep.subr.mxu0 0.0
  %625 = vmatpush1.msra.mxu0 0.0
  %626 = vmatprep.subr.mxu0 0.0
  %627 = vmatpush1.msra.mxu0 0.0
  %628 = vmatprep.subr.mxu0 0.0
  %629 = vmatpush1.msra.mxu0 0.0
  %630 = vmatprep.subr.mxu0 0.0
  %631 = vmatpush1.msra.mxu0 0.0
  %632 = vmatprep.subr.mxu0 0.0
  %633 = vmatpush1.msra.mxu0 0.0
  %634 = vmatprep.subr.mxu0 0.0
  %635 = vmatpush1.msra.mxu0 0.0
  %636 = vmatprep.subr.mxu0 0.0
  %637 = vmatpush1.msra.mxu0 0.0
  %638 = vmatprep.mubr.f32.mxu0 0.0
  %639 = vmatmul.mubr.f32.gmra.mrb[0].mxu0 %v146
  %v640 = vpop.f32.mrb[0].mxu0
  %v641 = vadd.f32 %v143, %v640
  %v642 = vpop.f32.mrb[0].mxu0
  %643 = vdwg.mxu0
  %v644 = vxor.u32 %v215, 2147483648
  %v645 = vxor.u32 %v217, 2147483648
  %v646 = vxor.u32 %v286, 2147483648
  %v647 = vxor.u32 %v288, 2147483648
  %v648 = vxor.u32 %v357, 2147483648
  %v649 = vxor.u32 %v359, 2147483648
  %v650 = vxor.u32 %v428, 2147483648
  %v651 = vxor.u32 %v430, 2147483648
  %v652 = vxor.u32 %v499, 2147483648
  %v653 = vxor.u32 %v501, 2147483648
  %v654 = vxor.u32 %v570, 2147483648
  %v655 = vxor.u32 %v572, 2147483648
  %v656 = vxor.u32 %v641, 2147483648
  %v657 = vmul.f32 %v644, 1.442695
  %v658 = vpow.pop %v657
  %v659 = vmul.f32 %v645, 1.442695
  %v660 = vpow.pop %v659
  %v661 = vmul.f32 %v646, 1.442695
  %v662 = vpow.pop %v661
  %v663 = vmul.f32 %v647, 1.442695
  %v664 = vpow.pop %v663
  %v665 = vmul.f32 %v648, 1.442695
  %v666 = vpow.pop %v665
  %v667 = vmul.f32 %v649, 1.442695
  %v668 = vpow.pop %v667
  %v669 = vmul.f32 %v650, 1.442695
  %v670 = vpow.pop %v669
  %v671 = vmul.f32 %v651, 1.442695
  %v672 = vpow.pop %v671
  %v673 = vmul.f32 %v652, 1.442695
  %v674 = vpow.pop %v673
  %v675 = vmul.f32 %v653, 1.442695
  %v676 = vpow.pop %v675
  %v677 = vmul.f32 %v654, 1.442695
  %v678 = vpow.pop %v677
  %v679 = vmul.f32 %v655, 1.442695
  %v680 = vpow.pop %v679
  %v681 = vmul.f32 %v656, 1.442695
  %v682 = vpow.pop %v681
  %v683 = vadd.f32 %v658, 1.0
  %v684 = vadd.f32 %v660, 1.0
  %v685 = vadd.f32 %v662, 1.0
  %v686 = vadd.f32 %v664, 1.0
  %v687 = vadd.f32 %v666, 1.0
  %v688 = vadd.f32 %v668, 1.0
  %v689 = vadd.f32 %v670, 1.0
  %v690 = vadd.f32 %v672, 1.0
  %v691 = vadd.f32 %v674, 1.0
  %v692 = vadd.f32 %v676, 1.0
  %v693 = vadd.f32 %v678, 1.0
  %v694 = vadd.f32 %v680, 1.0
  %v695 = vadd.f32 %v682, 1.0
  %v696 = vrcp.pop %v683
  %v697 = vmul.f32 1.0, %v696
  %v698 = vrcp.pop %v684
  %v699 = vmul.f32 1.0, %v698
  %v700 = vrcp.pop %v685
  %v701 = vmul.f32 1.0, %v700
  %v702 = vrcp.pop %v686
  %v703 = vmul.f32 1.0, %v702
  %v704 = vrcp.pop %v687
  %v705 = vmul.f32 1.0, %v704
  %v706 = vrcp.pop %v688
  %v707 = vmul.f32 1.0, %v706
  %v708 = vrcp.pop %v689
  %v709 = vmul.f32 1.0, %v708
  %v710 = vrcp.pop %v690
  %v711 = vmul.f32 1.0, %v710
  %v712 = vrcp.pop %v691
  %v713 = vmul.f32 1.0, %v712
  %v714 = vrcp.pop %v692
  %v715 = vmul.f32 1.0, %v714
  %v716 = vrcp.pop %v693
  %v717 = vmul.f32 1.0, %v716
  %v718 = vrcp.pop %v694
  %v719 = vmul.f32 1.0, %v718
  %v720 = vrcp.pop %v695
  %v721 = vmul.f32 1.0, %v720
  %v735 = vcombine.low %v697, %v699
  %v736 = vcombine.low %v701, %v703
  %v737 = vcombine.low %v705, %v707
  %v738 = vcombine.low %v709, %v711
  %v740 = vunpack.c.l.s4 1966171168
  %v741 = vunpack.c.0.s8 %v740
  %v742 = vlaneseq
  %v743 = vshrl.u32 %v742, 7
  %v744 = vsub.s32 %v741, %v743
  %v745 = vrot.slane %v735, %v744
  %v747 = vunpack.c.l.s4 1966171168
  %v748 = vunpack.c.0.s8 %v747
  %v749 = vlaneseq
  %v750 = vshrl.u32 %v749, 7
  %v751 = vsub.s32 %v748, %v750
  %v752 = vrot.slane %v736, %v751
  %v754 = vunpack.c.l.s4 1966171168
  %v755 = vunpack.c.0.s8 %v754
  %v756 = vlaneseq
  %v757 = vshrl.u32 %v756, 7
  %v758 = vsub.s32 %v755, %v757
  %v759 = vrot.slane %v737, %v758
  %v761 = vunpack.c.l.s4 1966171168
  %v762 = vunpack.c.0.s8 %v761
  %v763 = vlaneseq
  %v764 = vshrl.u32 %v763, 7
  %v765 = vsub.s32 %v762, %v764
  %v766 = vrot.slane %v738, %v765
  %v767 = vcombine.low %v745, %v752
  %v768 = vcombine.low %v759, %v766
  %v770 = vunpack.c.l.s4 1966171168
  %v771 = vunpack.c.0.s8 %v770
  %v772 = vlaneseq
  %v773 = vshrl.u32 %v772, 7
  %v774 = vsub.s32 %v771, %v773
  %v775 = vrot.slane %v767, %v774
  %v777 = vunpack.c.l.s4 1966171168
  %v778 = vunpack.c.0.s8 %v777
  %v779 = vlaneseq
  %v780 = vshrl.u32 %v779, 7
  %v781 = vsub.s32 %v778, %v780
  %v782 = vrot.slane %v768, %v781
  %v783 = vcombine.low %v775, %v782
  %v784 = vcombine.low %v713, %v715
  %v785 = vcombine.low %v717, %v719
  %v787 = vunpack.c.l.s4 1966171168
  %v788 = vunpack.c.0.s8 %v787
  %v789 = vlaneseq
  %v790 = vshrl.u32 %v789, 7
  %v791 = vsub.s32 %v788, %v790
  %v792 = vrot.slane %v784, %v791
  %v794 = vunpack.c.l.s4 1966171168
  %v795 = vunpack.c.0.s8 %v794
  %v796 = vlaneseq
  %v797 = vshrl.u32 %v796, 7
  %v798 = vsub.s32 %v795, %v797
  %v799 = vrot.slane %v785, %v798
  %v801 = vunpack.c.l.s4 1966171168
  %v802 = vunpack.c.0.s8 %v801
  %v803 = vlaneseq
  %v804 = vshrl.u32 %v803, 7
  %v805 = vsub.s32 %v802, %v804
  %v806 = vrot.slane %v721, %v805
  %v807 = vcombine.low %v792, %v799
  %v809 = vunpack.c.l.s4 1966171168
  %v810 = vunpack.c.0.s8 %v809
  %v811 = vlaneseq
  %v812 = vshrl.u32 %v811, 7
  %v813 = vsub.s32 %v810, %v812
  %v814 = vrot.slane %v807, %v813
  %v816 = vunpack.c.l.s4 1966171168
  %v817 = vunpack.c.0.s8 %v816
  %v818 = vlaneseq
  %v819 = vshrl.u32 %v818, 7
  %v820 = vsub.s32 %v817, %v819
  %v821 = vrot.slane %v806, %v820
  %v822 = vcombine.low %v814, %v821
  %825 = vst [vmem:[%s3] sm:$0xff] %v783
  %v826 = vlaneseq
  %vm827 = vcmp.ge.s32.totalorder %v826, 0
  %vm828 = vcmp.lt.s32.totalorder %v826, 544
  %vm829 = vmand %vm827, %vm828
  %830 = vst.msk [vmem:[%s3 + $0x8] sm:$0x1f] %vm829, %v822
  // Predicated region
  $region14: #{vae_conv_forward.23} parent=0 // pred_check
    _
  $region15: #{vae_conv_forward.23} parent=0 // pred_check_branch
    %832 = sbr.rel (0) target = $region17
  $region16: #{vae_conv_forward.23} parent=0 // pred_region
    _
  $region17: #{vae_conv_forward.23} parent=0 // pred_fallthru
    _
  // Predicated region
  $region18: #{vae_conv_forward.23} parent=0 // pred_check
    _
  $region19: #{vae_conv_forward.23} parent=0 // pred_check_branch
    %834 = sbr.rel (0) target = $region21
  $region20: #{vae_conv_forward.23} parent=0 // pred_region
    _
  $region21: #{vae_conv_forward.23} parent=0 // pred_fallthru
    _

</llo_original>
